<compile_context>
chip_gen: v7x
topology: tpu7x:2x2x1
jax: 0.10.0
libtpu: 0.0.40
codegen_flags: <defaults>
</compile_context>

<pallas_src>
import functools
import math

import numpy as np
import jax
import jax.numpy as jnp
from jax import lax
from jax.experimental import pallas as pl
from jax.experimental.pallas import tpu as pltpu


# ----------------------------------------------------------------------------
# shared in-kernel helpers
# ----------------------------------------------------------------------------
def _ln_f(x, g, b, eps):
    u = jnp.mean(x, axis=-1, keepdims=True)
    s = jnp.mean((x - u) ** 2, axis=-1, keepdims=True)
    return g * ((x - u) / jnp.sqrt(s + eps)) + b


def _stacked_head_attn(q, k2, v2, bias2, s_len, scale):
    """2-head attention with heads stacked on the key axis.

    q: (Sq, D); k2/v2: (2*Sk, D) = [head0-masked ; head1-masked];
    bias2: (1, 2*Sk). Score tensor is lane-dense (Sq, 2*Sk); softmax is taken
    independently over the two lane halves (one exp pass for both heads)."""
    sc = lax.dot_general(q, k2, (((1,), (1,)), ((), ())),
                         preferred_element_type=jnp.float32) * scale + bias2
    lane2 = lax.broadcasted_iota(jnp.int32, (1, 2 * s_len), 1)
    left = lane2 < s_len
    neg = jnp.float32(-1e30)
    m0 = jnp.max(jnp.where(left, sc, neg), axis=-1, keepdims=True)
    m1 = jnp.max(jnp.where(left, neg, sc), axis=-1, keepdims=True)
    e = jnp.exp(sc - jnp.where(left, m0, m1))
    l0 = jnp.sum(jnp.where(left, e, 0.0), axis=-1, keepdims=True)
    l1 = jnp.sum(jnp.where(left, 0.0, e), axis=-1, keepdims=True)
    p = e / jnp.where(left, l0, l1)
    return jnp.dot(p, v2, preferred_element_type=jnp.float32)


# ----------------------------------------------------------------------------
# Kernel 1: residue embedding + self-attention encoder + pooled protein feature
# ----------------------------------------------------------------------------
def _res_enc_kernel(w_ref, pe_ref, m_ref, wqkv_ref, wo_ref,
                    eg_ref, eb_ref, ag_ref, ab_ref, pg_ref, pb_ref,
                    kv_out, pf_out, *, n_heads, eps_attn, eps_pool):
    s_len, d = w_ref.shape[1], w_ref.shape[2]
    dh = d // n_heads
    scale = 1.0 / math.sqrt(dh)
    x = _ln_f(w_ref[0] + pe_ref[0], eg_ref[...], eb_ref[...], eps_attn)
    qkv = jnp.dot(x, wqkv_ref[...], preferred_element_type=jnp.float32)  # (S,3D)
    q, k, v = qkv[:, :d], qkv[:, d:2 * d], qkv[:, 2 * d:]
    lane_d = lax.broadcasted_iota(jnp.int32, (1, d), 1)
    hm0 = (lane_d < dh).astype(jnp.float32)
    hm1 = 1.0 - hm0
    k2 = jnp.concatenate([k * hm0, k * hm1], axis=0)                     # (2S,D)
    v2 = jnp.concatenate([v * hm0, v * hm1], axis=0)
    bias = jnp.where(m_ref[0] > 0, 0.0, -1e9)                            # (1,S)
    bias2 = jnp.concatenate([bias, bias], axis=1)                        # (1,2S)
    attn = _stacked_head_attn(q, k2, v2, bias2, s_len, scale)
    o = jnp.dot(attn, wo_ref[...], preferred_element_type=jnp.float32)
    y = _ln_f(x + o, ag_ref[...], ab_ref[...], eps_attn)
    pooled = jnp.max(y, axis=0, keepdims=True)                           # amax
    pf_out[0] = _ln_f(pooled, pg_ref[...], pb_ref[...], eps_pool)
    kv_out[0] = jnp.concatenate([k, v], axis=1)                          # (S,2D)


def residues_encoder(words, pe, key_mask, att_p, emb_g, emb_b, pool_g, pool_b,
                     *, n_heads=2, eps_attn=1e-12, eps_pool=1e-5):
    b, s, d = words.shape
    mask3 = key_mask.reshape(b, 1, s).astype(jnp.float32)
    row = lambda t: t.reshape(1, d).astype(jnp.float32)
    wqkv = jnp.concatenate([att_p['wq'], att_p['wk'], att_p['wv']],
                           axis=1).astype(jnp.float32)
    kern = functools.partial(_res_enc_kernel, n_heads=n_heads,
                             eps_attn=eps_attn, eps_pool=eps_pool)
    kv, pf = pl.pallas_call(
        kern,
        out_shape=(jax.ShapeDtypeStruct((b, s, 2 * d), jnp.float32),
                   jax.ShapeDtypeStruct((b, 1, d), jnp.float32)),
        grid=(b,),
        in_specs=[
            pl.BlockSpec((1, s, d), lambda i: (i, 0, 0)),   # word embeddings
            pl.BlockSpec((1, s, d), lambda i: (0, 0, 0)),   # positional enc
            pl.BlockSpec((1, 1, s), lambda i: (i, 0, 0)),   # key mask
            pl.BlockSpec((d, 3 * d), lambda i: (0, 0)),     # fused Wq|Wk|Wv
            pl.BlockSpec((d, d), lambda i: (0, 0)),         # Wo
            pl.BlockSpec((1, d), lambda i: (0, 0)),         # emb LN gamma
            pl.BlockSpec((1, d), lambda i: (0, 0)),         # emb LN beta
            pl.BlockSpec((1, d), lambda i: (0, 0)),         # attn LN gamma
            pl.BlockSpec((1, d), lambda i: (0, 0)),         # attn LN beta
            pl.BlockSpec((1, d), lambda i: (0, 0)),         # pool LN gamma
            pl.BlockSpec((1, d), lambda i: (0, 0)),         # pool LN beta
        ],
        out_specs=(pl.BlockSpec((1, s, 2 * d), lambda i: (i, 0, 0)),
                   pl.BlockSpec((1, 1, d), lambda i: (i, 0, 0))),
        compiler_params=pltpu.CompilerParams(dimension_semantics=("parallel",)),
    )(words.astype(jnp.float32), pe.astype(jnp.float32), mask3,
      wqkv, att_p['wo'].astype(jnp.float32),
      row(emb_g), row(emb_b), row(att_p['ln_g']), row(att_p['ln_b']),
      row(pool_g), row(pool_b))
    return kv, pf


# ----------------------------------------------------------------------------
# Kernel 2: atom-embedding LN + two GAT layers + fused skeleton gather
# ----------------------------------------------------------------------------
def _gat_skel_kernel(w_ref, adj_ref, ord_ref, eg_ref, eb_ref,
                     w1_ref, a1q_ref, a1k_ref, w2_ref, a2q_ref, a2k_ref,
                     sk_out, *, eps):
    n = w_ref.shape[1]
    x = _ln_f(w_ref[0], eg_ref[...], eb_ref[...], eps)
    adj = adj_ref[0]

    def one_gat(h, wt_ref, aq_ref, ak_ref):
        wh = jnp.dot(h, wt_ref[...], preferred_element_type=jnp.float32)
        # e[i, j] = leaky_relu(Wh[i].a1 + Wh[j].a2, 0.1)
        s1 = jnp.sum(wh * aq_ref[...], axis=-1, keepdims=True)           # (N,1)
        s2 = lax.dot_general(ak_ref[...], wh, (((1,), (1,)), ((), ())),
                             preferred_element_type=jnp.float32)         # (1,N)
        e = s1 + s2
        e = jnp.where(e >= 0, e, 0.1 * e)
        att = jnp.where(adj > 0, e, jnp.float32(-9e15))
        att = att - jnp.max(att, axis=-1, keepdims=True)
        p = jnp.exp(att)
        p = p / jnp.sum(p, axis=-1, keepdims=True)
        hp = jnp.dot(p, wh, preferred_element_type=jnp.float32)
        return jnp.where(hp > 0, hp, jnp.exp(jnp.minimum(hp, 0.0)) - 1.0)  # ELU

    feat = one_gat(one_gat(x, w1_ref, a1q_ref, a1k_ref),
                   w2_ref, a2q_ref, a2k_ref)

    # ---- fused skeleton gather (reference: extract_skeletons_feature) ------
    col = lax.broadcasted_iota(jnp.int32, (n, n), 1)
    onehot = (ord_ref[0] == col).astype(jnp.float32)                     # (N,N)
    valid = jnp.sum(onehot, axis=-1, keepdims=True)                      # (N,1)
    rowi = lax.broadcasted_iota(jnp.int32, (n, 1), 0)
    lastr = rowi == (n - 1)
    coli = lax.broadcasted_iota(jnp.int32, (1, n), 1)
    adj_last = jnp.sum(jnp.where(lastr, adj, 0.0), axis=0, keepdims=True)
    diag = jnp.sum(jnp.where(coli == (n - 1), adj_last, 0.0),
                   axis=1, keepdims=True)                                # (1,1)
    x_last = jnp.sum(jnp.where(lastr, x, 0.0), axis=0, keepdims=True)
    f_last = jnp.sum(jnp.where(lastr, feat, 0.0), axis=0, keepdims=True)
    initv = jnp.where(diag > 0, x_last, f_last)                          # (1,D)
    sk_out[0] = (jnp.dot(onehot, feat, preferred_element_type=jnp.float32)
                 + (1.0 - valid) * initv)


def gat_skeletons(atom_words, adjacency, order, emb_g, emb_b, w1, a1, w2, a2,
                  *, eps=1e-12):
    b, n, d = atom_words.shape
    row = lambda t: t.reshape(1, d).astype(jnp.float32)
    a1q = a1[:d, 0].reshape(1, d).astype(jnp.float32)
    a1k = a1[d:, 0].reshape(1, d).astype(jnp.float32)
    a2q = a2[:d, 0].reshape(1, d).astype(jnp.float32)
    a2k = a2[d:, 0].reshape(1, d).astype(jnp.float32)
    return pl.pallas_call(
        functools.partial(_gat_skel_kernel, eps=eps),
        out_shape=jax.ShapeDtypeStruct((b, n, d), jnp.float32),
        grid=(b,),
        in_specs=[
            pl.BlockSpec((1, n, d), lambda i: (i, 0, 0)),
            pl.BlockSpec((1, n, n), lambda i: (i, 0, 0)),
            pl.BlockSpec((1, n, 1), lambda i: (i, 0, 0)),   # gather order
            pl.BlockSpec((1, d), lambda i: (0, 0)),
            pl.BlockSpec((1, d), lambda i: (0, 0)),
            pl.BlockSpec((d, d), lambda i: (0, 0)),
            pl.BlockSpec((1, d), lambda i: (0, 0)),
            pl.BlockSpec((1, d), lambda i: (0, 0)),
            pl.BlockSpec((d, d), lambda i: (0, 0)),
            pl.BlockSpec((1, d), lambda i: (0, 0)),
            pl.BlockSpec((1, d), lambda i: (0, 0)),
        ],
        out_specs=pl.BlockSpec((1, n, d), lambda i: (i, 0, 0)),
        compiler_params=pltpu.CompilerParams(dimension_semantics=("parallel",)),
    )(atom_words.astype(jnp.float32), adjacency.astype(jnp.float32), order,
      row(emb_g), row(emb_b),
      w1.astype(jnp.float32), a1q, a1k, w2.astype(jnp.float32), a2q, a2k)


def skeleton_order(marks, max_len_skel):
    """Marked-atoms-first gather order; depends only on `marks` (kernel input),
    so it is off the Pallas critical path under jit."""
    # TODO(synk): output length is static (= NA) instead of the dynamic batch
    # max of marked-atom counts; padded rows reuse the init vector (matches
    # the reference when all atoms are marked).
    b, na = marks.shape
    col = jnp.arange(na)
    m = jnp.where(col[None, :] < max_len_skel, marks.astype(jnp.float32), 0.0)
    has_any = jnp.sum(m, axis=1, keepdims=True) > 0
    m = jnp.where(has_any, m, jnp.ones_like(m))
    counts = jnp.sum((m > 0).astype(jnp.int32), axis=1)
    order = jnp.argsort(jnp.where(m > 0, 0, 1).astype(jnp.int32),
                        axis=1, stable=True)
    order = jnp.where(col[None, :] < counts[:, None], order, -1)
    return order.astype(jnp.int32).reshape(b, na, 1)


# ----------------------------------------------------------------------------
# Kernel 3: 3-D modulation + channel/spatial attention + BN + both
#           cross-attention branches + pooled LN + output MLP head
# ----------------------------------------------------------------------------
def _drug_fused_kernel(sk_ref, pos_ref, div_ref, sall_ref, tw_ref,
                       kv_ref, m_ref, pf_ref,
                       wq2_ref, wo2_ref, ag2_ref, ab2_ref,
                       wq3_ref, wo3_ref, ag3_ref, ab3_ref,
                       pg_ref, pb_ref,
                       w1a_ref, w1b_ref, b1_ref, w2_ref, b2_ref, w3_ref, b3_ref,
                       scal_ref, o_ref, *, n_heads, eps_attn, eps_pool):
    n, d = sk_ref.shape[1], sk_ref.shape[2]
    s_len = kv_ref.shape[1]
    dh = d // n_heads
    scale = 1.0 / math.sqrt(dh)

    x = sk_ref[0]                                    # (N, D) skeleton features
    div = div_ref[...]                               # (1, D)
    lane_d = lax.broadcasted_iota(jnp.int32, (1, d), 1)
    even = (lane_d % 2) == 0

    # --- 3D branch: sin/cos positional modulation per coordinate channel ----
    chans = []
    for c in range(3):
        ang = pos_ref[0, c] * div                    # (N,1)*(1,D)
        pe = jnp.where(even, jnp.sin(ang), jnp.cos(ang))
        chans.append(x * pe)

    # channel attention: FC(3->6->3) folded to a 3x3 affine in the wrapper
    def gmax(a):
        return jnp.max(jnp.max(a, axis=1, keepdims=True), axis=0, keepdims=True)

    def gmean(a):
        return jnp.sum(jnp.sum(a, axis=1, keepdims=True), axis=0,
                       keepdims=True) * (1.0 / (n * d))

    sv = [gmax(ch) + gmean(ch) for ch in chans]      # three (1,1) "scalars"
    for c in range(3):
        a = (sv[0] * scal_ref[0 * 3 + c] + sv[1] * scal_ref[1 * 3 + c]
             + sv[2] * scal_ref[2 * 3 + c] + scal_ref[9 + c])
        chans[c] = chans[c] * jnp.maximum(a, 0.0)

    # spatial attention: 5x5 conv (padding=2); conv weights pre-folded into
    # the column shifts (tw_ref), row shifts are constants (sall_ref)
    cmax = jnp.maximum(jnp.maximum(chans[0], chans[1]), chans[2])
    cavg = (chans[0] + chans[1] + chans[2]) * (1.0 / 3.0)
    in_cat = jnp.concatenate([cmax, cavg], axis=1)   # (N, 2D)
    colr = jnp.dot(in_cat, tw_ref[...], preferred_element_type=jnp.float32)
    acc = jnp.zeros((n, d), jnp.float32)
    for dy in range(5):
        acc = acc + jnp.dot(sall_ref[dy * n:(dy + 1) * n, :],
                            colr[:, dy * d:(dy + 1) * d],
                            preferred_element_type=jnp.float32)
    gate = 1.0 / (1.0 + jnp.exp(-(acc + scal_ref[16])))

    # eval-mode BatchNorm folded to per-channel affine, then channel sum
    sk3d = (chans[0] * scal_ref[12] + chans[1] * scal_ref[13]
            + chans[2] * scal_ref[14]) * gate + scal_ref[15]

    # --- shared residue K/V for both cross-attention branches ---------------
    kv = kv_ref[0]                                   # (S, 2D)
    k = kv[:, :d]
    v = kv[:, d:]
    hm0 = (lane_d < dh).astype(jnp.float32)
    hm1 = 1.0 - hm0
    k2 = jnp.concatenate([k * hm0, k * hm1], axis=0)
    v2 = jnp.concatenate([v * hm0, v * hm1], axis=0)
    bias = jnp.where(m_ref[0] > 0, 0.0, -1e9)
    bias2 = jnp.concatenate([bias, bias], axis=1)

    def cross(xq, wq_ref, wo_ref, ag_ref, ab_ref):
        q = jnp.dot(xq, wq_ref[...], preferred_element_type=jnp.float32)
        at = _stacked_head_attn(q, k2, v2, bias2, s_len, scale)
        o = jnp.dot(at, wo_ref[...], preferred_element_type=jnp.float32)
        y = _ln_f(xq + o, ag_ref[...], ab_ref[...], eps_attn)
        pooled = jnp.max(y, axis=0, keepdims=True)
        return _ln_f(pooled, pg_ref[...], pb_ref[...], eps_pool)

    drug = (cross(x, wq2_ref, wo2_ref, ag2_ref, ab2_ref)
            + cross(sk3d, wq3_ref, wo3_ref, ag3_ref, ab3_ref))

    # --- output MLP head (per batch element; concat avoided by split W1) ----
    prot = pf_ref[0]                                 # (1, D)
    h = (jnp.dot(prot, w1a_ref[...], preferred_element_type=jnp.float32)
         + jnp.dot(drug, w1b_ref[...], preferred_element_type=jnp.float32)
         + b1_ref[...])
    h = jnp.maximum(h, 0.0)
    h = jnp.dot(h, w2_ref[...], preferred_element_type=jnp.float32) + b2_ref[...]
    h = jnp.maximum(h, 0.0)
    o_ref[0] = (jnp.dot(h, w3_ref[...], preferred_element_type=jnp.float32)
                + b3_ref[...])


def drug_branches_and_head(sk, positions, kv, residues_mask, protein_feature,
                           params, head, split, *, n_heads=2,
                           eps_attn=1e-12, eps_pool=1e-5):
    b, n, d = sk.shape
    s = kv.shape[1]
    f32 = lambda t: t.astype(jnp.float32)
    row = lambda t: t.reshape(1, d).astype(jnp.float32)

    # constants / folded parameters (depend only on inputs & params)
    dvals = np.exp(np.arange(0, d, 2, dtype=np.float64)
                   * (-math.log(10000.0) / d))
    div_full = jnp.asarray(np.repeat(dvals, 2)[None, :], jnp.float32)    # (1,D)
    pos_bc = jnp.transpose(positions * 10.0, (0, 2, 1))[..., None]       # (B,3,N,1)
    mask3 = residues_mask.reshape(b, 1, s).astype(jnp.float32)

    # shift matrices: S[dy][r,c]=1 iff c==r+dy-2 ; T[dx][r,c]=1 iff r==c+dx-2
    s_np = np.zeros((5 * n, n), np.float32)
    t_np = np.zeros((5, d, d), np.float32)
    for off in range(5):
        for r in range(n):
            c = r + off - 2
            if 0 <= c < n:
                s_np[off * n + r, c] = 1.0
        for c in range(d):
            r = c + off - 2
            if 0 <= r < d:
                t_np[off, r, c] = 1.0
    sall = jnp.asarray(s_np)
    conv_w = f32(params['conv_w'])[0]                                    # (2,5,5)
    tw_big = jnp.einsum('cyx,xrj->cryj', conv_w,
                        jnp.asarray(t_np)).reshape(2 * d, 5 * d)

    # channel-attention FC (Linear(3,6)->Linear(6,3), no activation) folded
    M = f32(params['fc1_w']) @ f32(params['fc2_w'])                      # (3,3)
    cvec = f32(params['fc1_b']) @ f32(params['fc2_w']) + f32(params['fc2_b'])
    # eval-mode BatchNorm folded to per-channel affine
    bn_scale = f32(params['bn_g']) / jnp.sqrt(f32(params['bn_var']) + 1e-5)
    bn_shift = jnp.sum(f32(params['bn_b']) - f32(params['bn_mean']) * bn_scale)
    scal = jnp.concatenate([M.reshape(-1), 2.0 * cvec.reshape(-1),
                            bn_scale.reshape(-1), bn_shift.reshape(1),
                            f32(params['conv_b']).reshape(-1)])          # (17,)

    w1 = f32(head['w1'])
    w1a, w1b = w1[:split], w1[split:]
    b1 = head['b1'].reshape(1, -1).astype(jnp.float32)
    w2 = f32(head['w2'])
    b2 = head['b2'].reshape(1, -1).astype(jnp.float32)
    w3 = f32(head['w3'])
    b3 = head['b3'].reshape(1, -1).astype(jnp.float32)
    h1, h2, n_out = w1.shape[1], w2.shape[1], w3.shape[1]

    att_l, att_r = params['att_l'], params['att_r']
    bc = lambda shp: pl.BlockSpec(shp, lambda *_: (0,) * len(shp))

    kern = functools.partial(_drug_fused_kernel, n_heads=n_heads,
                             eps_attn=eps_attn, eps_pool=eps_pool)
    out = pl.pallas_call(
        kern,
        out_shape=jax.ShapeDtypeStruct((b, 1, n_out), jnp.float32),
        grid=(b,),
        in_specs=[
            pl.BlockSpec((1, n, d), lambda i: (i, 0, 0)),        # skeletons
            pl.BlockSpec((1, 3, n, 1), lambda i: (i, 0, 0, 0)),  # positions
            bc((1, d)),                                          # div
            bc((5 * n, n)),                                      # row shifts
            bc((2 * d, 5 * d)),                                  # folded conv
            pl.BlockSpec((1, s, 2 * d), lambda i: (i, 0, 0)),    # residue K|V
            pl.BlockSpec((1, 1, s), lambda i: (i, 0, 0)),        # residue mask
            pl.BlockSpec((1, 1, d), lambda i: (i, 0, 0)),        # protein feat
            bc((d, d)), bc((d, d)), bc((1, d)), bc((1, d)),      # att_l
            bc((d, d)), bc((d, d)), bc((1, d)), bc((1, d)),      # att_r
            bc((1, d)), bc((1, d)),                              # pooled LN
            bc(w1a.shape), bc(w1b.shape), bc((1, h1)),           # MLP layer 1
            bc((h1, h2)), bc((1, h2)),                           # MLP layer 2
            bc((h2, n_out)), bc((1, n_out)),                     # MLP layer 3
            pl.BlockSpec(memory_space=pltpu.MemorySpace.SMEM),   # scalars
        ],
        out_specs=pl.BlockSpec((1, 1, n_out), lambda i: (i, 0, 0)),
        compiler_params=pltpu.CompilerParams(dimension_semantics=("parallel",)),
    )(f32(sk), f32(pos_bc), div_full, sall, tw_big, f32(kv), mask3,
      f32(protein_feature),
      f32(att_l['wq']), f32(att_l['wo']), row(att_l['ln_g']), row(att_l['ln_b']),
      f32(att_r['wq']), f32(att_r['wo']), row(att_r['ln_g']), row(att_r['ln_b']),
      row(params['ln_g']), row(params['ln_b']),
      w1a, w1b, b1, w2, b2, w3, b3, scal)
    return out.reshape(b, n_out)


# ----------------------------------------------------------------------------
# positional-encoding constant
# ----------------------------------------------------------------------------
def _sin_cos_pe(seq_len, emb_size):
    div = np.exp(np.arange(0, emb_size, 2, dtype=np.float64)
                 * (-math.log(10000.0) / emb_size))
    pos = np.arange(seq_len, dtype=np.float64)[:, None]
    angle = pos * np.repeat(div, 2)[None, :]
    pe = np.where(np.arange(emb_size)[None, :] % 2 == 0,
                  np.sin(angle), np.cos(angle))
    return jnp.asarray(pe[None, :, :], jnp.float32)                      # (1,S,D)


# ----------------------------------------------------------------------------
# CMDSS forward (fully jax.jit-able, 3 Pallas launches)
# ----------------------------------------------------------------------------
def cmdss_forward(params, atoms, adjacency, positions, residues,
                  residues_mask, marks, *, cfg, task='interaction'):
    dr = cfg['residues_dim']
    b, s = residues.shape

    # residues branch: embedding + PE + LN + self-attn encoder + pooled LN
    words = params['emb_res'][residues]
    pe = _sin_cos_pe(s, dr)
    kv_res, protein_feature = residues_encoder(
        words, pe, residues_mask, params['att_m'],
        params['emb_res_ln_g'], params['emb_res_ln_b'],
        params['ln_g'], params['ln_b'])

    # drug graph branch: embedding LN + GAT x2 + fused skeleton gather
    atom_words = params['emb_atoms'][atoms]
    order = skeleton_order(marks, cfg['max_length_skeleton'])
    skeletons_feature = gat_skeletons(
        atom_words, adjacency, order,
        params['emb_atoms_ln_g'], params['emb_atoms_ln_b'],
        params['gat1_W'], params['gat1_a'], params['gat2_W'], params['gat2_a'])

    # 2D + 3D drug branches + BN + channel sum + MLP head (single kernel)
    head = params['out_int'] if task == 'interaction' else params['out_aff']
    return drug_branches_and_head(
        skeletons_feature, positions, kv_res, residues_mask, protein_feature,
        params, head, dr)


# ----------------------------------------------------------------------------
# deterministic parameter init
# ----------------------------------------------------------------------------
def _xavier(key, shape, gain=1.414):
    a = gain * math.sqrt(6.0 / (shape[0] + shape[1]))
    return jax.random.uniform(key, shape, jnp.float32, -a, a)


def _attn_params(key, d):
    ks = jax.random.split(key, 4)
    sc = 1.0 / math.sqrt(d)
    return {
        'wq': sc * jax.random.normal(ks[0], (d, d), jnp.float32),
        'wk': sc * jax.random.normal(ks[1], (d, d), jnp.float32),
        'wv': sc * jax.random.normal(ks[2], (d, d), jnp.float32),
        'wo': sc * jax.random.normal(ks[3], (d, d), jnp.float32),
        'ln_g': jnp.ones((d,), jnp.float32),
        'ln_b': jnp.zeros((d,), jnp.float32),
    }


def _mlp_params(key, dims):
    out = {}
    ks = jax.random.split(key, len(dims) - 1)
    for i in range(len(dims) - 1):
        sc = 1.0 / math.sqrt(dims[i])
        out[f'w{i+1}'] = sc * jax.random.normal(ks[i], (dims[i], dims[i + 1]),
                                                jnp.float32)
        out[f'b{i+1}'] = jnp.zeros((dims[i + 1],), jnp.float32)
    return out


def init_params(key, l_drugs_dict, l_proteins_dict, cfg):
    d, dr = cfg['atom_dim'], cfg['residues_dim']
    ks = jax.random.split(key, 16)
    return {
        'emb_atoms': jax.random.normal(ks[0], (l_drugs_dict + 1, d), jnp.float32),
        'emb_atoms_ln_g': jnp.ones((d,), jnp.float32),
        'emb_atoms_ln_b': jnp.zeros((d,), jnp.float32),
        'gat1_W': _xavier(ks[1], (d, d)), 'gat1_a': _xavier(ks[2], (2 * d, 1)),
        'gat2_W': _xavier(ks[3], (d, d)), 'gat2_a': _xavier(ks[4], (2 * d, 1)),
        'emb_res': jax.random.normal(ks[5], (l_proteins_dict + 1, dr), jnp.float32),
        'emb_res_ln_g': jnp.ones((dr,), jnp.float32),
        'emb_res_ln_b': jnp.zeros((dr,), jnp.float32),
        'fc1_w': 0.3 * jax.random.normal(ks[6], (3, 6), jnp.float32),
        'fc1_b': jnp.zeros((6,), jnp.float32),
        'fc2_w': 0.3 * jax.random.normal(ks[7], (6, 3), jnp.float32),
        'fc2_b': jnp.zeros((3,), jnp.float32),
        'conv_w': 0.1 * jax.random.normal(ks[8], (1, 2, 5, 5), jnp.float32),
        'conv_b': jnp.zeros((1,), jnp.float32),
        'bn_g': jnp.ones((3,), jnp.float32),
        'bn_b': jnp.zeros((3,), jnp.float32),
        'bn_mean': jnp.zeros((3,), jnp.float32),
        'bn_var': jnp.ones((3,), jnp.float32),
        'att_m': _attn_params(ks[9], dr),
        'att_l': _attn_params(ks[10], d),
        'att_r': _attn_params(ks[11], d),
        'ln_g': jnp.ones((dr,), jnp.float32),
        'ln_b': jnp.zeros((dr,), jnp.float32),
        'out_int': _mlp_params(ks[12], (d + dr, 512, 32, 2)),
        'out_aff': _mlp_params(ks[13], (d + dr, 1024, 64, 1)),
    }


# ----------------------------------------------------------------------------
# main
# ----------------------------------------------------------------------------
if __name__ == "__main__":
    cfg = dict(atom_dim=32, residues_dim=32, max_length_skeleton=16,
               max_length_residue=64, batch_size=2)
    B, NA, NR = 2, 16, 64
    L_DRUGS, L_PROT = 20, 25

    key = jax.random.PRNGKey(0)
    k_atoms, k_adj, k_pos, k_res, k_params = jax.random.split(key, 5)

    atoms = jax.random.randint(k_atoms, (B, NA), 1, L_DRUGS + 1, dtype=jnp.int32)
    adj_rand = (jax.random.uniform(k_adj, (B, NA, NA)) > 0.6).astype(jnp.float32)
    adjacency = jnp.clip(adj_rand + jnp.transpose(adj_rand, (0, 2, 1))
                         + jnp.eye(NA)[None], 0.0, 1.0)
    positions = jax.random.uniform(k_pos, (B, NA, 3), jnp.float32)
    residues = jax.random.randint(k_res, (B, NR), 1, L_PROT + 1, dtype=jnp.int32)
    residues_mask = jnp.ones((B, NR), jnp.float32).at[1, NR - 8:].set(0.0)
    marks = jnp.ones((B, NA), jnp.float32)      # all atoms are skeleton atoms

    params = init_params(k_params, L_DRUGS, L_PROT, cfg)

    fwd = jax.jit(functools.partial(cmdss_forward, cfg=cfg, task='interaction'))
    out = jax.block_until_ready(fwd(params, atoms, adjacency, positions,
                                    residues, residues_mask, marks))
    assert out.shape == (B, 2) and bool(jnp.all(jnp.isfinite(out)))
    print("KERNEL_OK")
</pallas_src>

<mosaic_0001>
module attributes {stable_mosaic.version = 11 : i64} {
  func.func @_gat_skel_kernel(%arg0: i32, %arg1: memref<1x16x32xf32, #tpu.memory_space<vmem>>, %arg2: memref<1x16x16xf32, #tpu.memory_space<vmem>>, %arg3: memref<1x16x1xi32, #tpu.memory_space<vmem>>, %arg4: memref<1x32xf32, #tpu.memory_space<vmem>>, %arg5: memref<1x32xf32, #tpu.memory_space<vmem>>, %arg6: memref<32x32xf32, #tpu.memory_space<vmem>>, %arg7: memref<1x32xf32, #tpu.memory_space<vmem>>, %arg8: memref<1x32xf32, #tpu.memory_space<vmem>>, %arg9: memref<32x32xf32, #tpu.memory_space<vmem>>, %arg10: memref<1x32xf32, #tpu.memory_space<vmem>>, %arg11: memref<1x32xf32, #tpu.memory_space<vmem>>, %arg12: memref<1x16x32xf32, #tpu.memory_space<vmem>>) attributes {dimension_semantics = [#tpu.dimension_semantics<parallel>], iteration_bounds = array<i64: 2>, scalar_prefetch = 0 : i64, scratch_operands = 0 : i64, tpu.core_type = #tpu.core_type<tc>, window_params = [{transform_indices = @transform_0, window_bounds = array<i64: 1, 16, 32>}, {transform_indices = @transform_1, window_bounds = array<i64: 1, 16, 16>}, {transform_indices = @transform_2, window_bounds = array<i64: 1, 16, 1>}, {pipeline_mode = #tpu.pipeline_mode<synchronous>, transform_indices = @transform_3, window_bounds = array<i64: 1, 32>}, {pipeline_mode = #tpu.pipeline_mode<synchronous>, transform_indices = @transform_4, window_bounds = array<i64: 1, 32>}, {pipeline_mode = #tpu.pipeline_mode<synchronous>, transform_indices = @transform_5, window_bounds = array<i64: 32, 32>}, {pipeline_mode = #tpu.pipeline_mode<synchronous>, transform_indices = @transform_6, window_bounds = array<i64: 1, 32>}, {pipeline_mode = #tpu.pipeline_mode<synchronous>, transform_indices = @transform_7, window_bounds = array<i64: 1, 32>}, {pipeline_mode = #tpu.pipeline_mode<synchronous>, transform_indices = @transform_8, window_bounds = array<i64: 32, 32>}, {pipeline_mode = #tpu.pipeline_mode<synchronous>, transform_indices = @transform_9, window_bounds = array<i64: 1, 32>}, {pipeline_mode = #tpu.pipeline_mode<synchronous>, transform_indices = @transform_10, window_bounds = array<i64: 1, 32>}, {transform_indices = @transform_11, window_bounds = array<i64: 1, 16, 32>}]} {
    %c0 = arith.constant 0 : index
    %c0_0 = arith.constant 0 : index
    %c0_1 = arith.constant 0 : index
    %0 = vector.load %arg1[%c0, %c0_0, %c0_1] : memref<1x16x32xf32, #tpu.memory_space<vmem>>, vector<1x16x32xf32>
    %1 = vector.shape_cast %0 : vector<1x16x32xf32> to vector<16x32xf32>
    %c0_2 = arith.constant 0 : index
    %c0_3 = arith.constant 0 : index
    %2 = vector.load %arg4[%c0_2, %c0_3] : memref<1x32xf32, #tpu.memory_space<vmem>>, vector<1x32xf32>
    %c0_4 = arith.constant 0 : index
    %c0_5 = arith.constant 0 : index
    %3 = vector.load %arg5[%c0_4, %c0_5] : memref<1x32xf32, #tpu.memory_space<vmem>>, vector<1x32xf32>
    %cst = arith.constant dense<0.000000e+00> : vector<16xf32>
    %4 = vector.multi_reduction <add>, %1, %cst [1] : vector<16x32xf32> to vector<16xf32>
    %5 = vector.shape_cast %4 : vector<16xf32> to vector<16x1xf32>
    %cst_6 = arith.constant 3.200000e+01 : f32
    %6 = vector.broadcast %cst_6 : f32 to vector<16x1xf32>
    %7 = arith.divf %5, %6 : vector<16x1xf32>
    %8 = vector.broadcast %7 : vector<16x1xf32> to vector<16x32xf32>
    %9 = arith.subf %1, %8 : vector<16x32xf32>
    %10 = arith.mulf %9, %9 : vector<16x32xf32>
    %cst_7 = arith.constant dense<0.000000e+00> : vector<16xf32>
    %11 = vector.multi_reduction <add>, %10, %cst_7 [1] : vector<16x32xf32> to vector<16xf32>
    %12 = vector.shape_cast %11 : vector<16xf32> to vector<16x1xf32>
    %cst_8 = arith.constant 3.200000e+01 : f32
    %13 = vector.broadcast %cst_8 : f32 to vector<16x1xf32>
    %14 = arith.divf %12, %13 : vector<16x1xf32>
    %15 = vector.broadcast %7 : vector<16x1xf32> to vector<16x32xf32>
    %16 = arith.subf %1, %15 : vector<16x32xf32>
    %cst_9 = arith.constant 9.99999996E-13 : f32
    %17 = vector.broadcast %cst_9 : f32 to vector<16x1xf32>
    %18 = arith.addf %14, %17 : vector<16x1xf32>
    %19 = math.sqrt %18 : vector<16x1xf32>
    %20 = vector.broadcast %19 : vector<16x1xf32> to vector<16x32xf32>
    %21 = arith.divf %16, %20 : vector<16x32xf32>
    %22 = vector.broadcast %2 : vector<1x32xf32> to vector<16x32xf32>
    %23 = arith.mulf %22, %21 : vector<16x32xf32>
    %24 = vector.broadcast %3 : vector<1x32xf32> to vector<16x32xf32>
    %25 = arith.addf %23, %24 : vector<16x32xf32>
    %c0_10 = arith.constant 0 : index
    %c0_11 = arith.constant 0 : index
    %c0_12 = arith.constant 0 : index
    %26 = vector.load %arg2[%c0_10, %c0_11, %c0_12] : memref<1x16x16xf32, #tpu.memory_space<vmem>>, vector<1x16x16xf32>
    %27 = vector.shape_cast %26 : vector<1x16x16xf32> to vector<16x16xf32>
    %c0_13 = arith.constant 0 : index
    %c0_14 = arith.constant 0 : index
    %28 = vector.load %arg6[%c0_13, %c0_14] : memref<32x32xf32, #tpu.memory_space<vmem>>, vector<32x32xf32>
    %cst_15 = arith.constant dense<0.000000e+00> : vector<16x32xf32>
    %29 = tpu.matmul %25, %28, %cst_15 {dimension_numbers = #tpu.dot_dimension_numbers<[1], [0], [0], [1], [0, 0, 1, 1], [], []>} : vector<16x32xf32>, vector<32x32xf32>, vector<16x32xf32> -> vector<16x32xf32>
    %c0_16 = arith.constant 0 : index
    %c0_17 = arith.constant 0 : index
    %30 = vector.load %arg7[%c0_16, %c0_17] : memref<1x32xf32, #tpu.memory_space<vmem>>, vector<1x32xf32>
    %31 = vector.broadcast %30 : vector<1x32xf32> to vector<16x32xf32>
    %32 = arith.mulf %29, %31 : vector<16x32xf32>
    %cst_18 = arith.constant dense<0.000000e+00> : vector<16xf32>
    %33 = vector.multi_reduction <add>, %32, %cst_18 [1] : vector<16x32xf32> to vector<16xf32>
    %34 = vector.shape_cast %33 : vector<16xf32> to vector<16x1xf32>
    %c0_19 = arith.constant 0 : index
    %c0_20 = arith.constant 0 : index
    %35 = vector.load %arg8[%c0_19, %c0_20] : memref<1x32xf32, #tpu.memory_space<vmem>>, vector<1x32xf32>
    %cst_21 = arith.constant dense<0.000000e+00> : vector<1x16xf32>
    %36 = tpu.matmul %35, %29, %cst_21 {dimension_numbers = #tpu.dot_dimension_numbers<[1], [1], [0], [0], [0, 0, 1, 0], [], []>} : vector<1x32xf32>, vector<16x32xf32>, vector<1x16xf32> -> vector<1x16xf32>
    %37 = vector.broadcast %34 : vector<16x1xf32> to vector<16x16xf32>
    %38 = vector.broadcast %36 : vector<1x16xf32> to vector<16x16xf32>
    %39 = arith.addf %37, %38 : vector<16x16xf32>
    %cst_22 = arith.constant 0.000000e+00 : f32
    %40 = vector.broadcast %cst_22 : f32 to vector<16x16xf32>
    %41 = arith.cmpf oge, %39, %40 : vector<16x16xf32>
    %cst_23 = arith.constant 1.000000e-01 : f32
    %42 = vector.broadcast %cst_23 : f32 to vector<16x16xf32>
    %43 = arith.mulf %42, %39 : vector<16x16xf32>
    %44 = arith.select %41, %39, %43 : vector<16x16xi1>, vector<16x16xf32>
    %cst_24 = arith.constant 0.000000e+00 : f32
    %45 = vector.broadcast %cst_24 : f32 to vector<16x16xf32>
    %46 = arith.cmpf ogt, %27, %45 : vector<16x16xf32>
    %cst_25 = arith.constant -9.000000e+15 : f32
    %47 = vector.broadcast %cst_25 : f32 to vector<16x16xf32>
    %48 = arith.select %46, %44, %47 : vector<16x16xi1>, vector<16x16xf32>
    %cst_26 = arith.constant dense<0xFF800000> : vector<16xf32>
    %49 = vector.multi_reduction <maximumf>, %48, %cst_26 [1] : vector<16x16xf32> to vector<16xf32>
    %50 = vector.shape_cast %49 : vector<16xf32> to vector<16x1xf32>
    %51 = vector.broadcast %50 : vector<16x1xf32> to vector<16x16xf32>
    %52 = arith.subf %48, %51 : vector<16x16xf32>
    %53 = math.exp %52 : vector<16x16xf32>
    %cst_27 = arith.constant dense<0.000000e+00> : vector<16xf32>
    %54 = vector.multi_reduction <add>, %53, %cst_27 [1] : vector<16x16xf32> to vector<16xf32>
    %55 = vector.shape_cast %54 : vector<16xf32> to vector<16x1xf32>
    %56 = vector.broadcast %55 : vector<16x1xf32> to vector<16x16xf32>
    %57 = arith.divf %53, %56 : vector<16x16xf32>
    %cst_28 = arith.constant dense<0.000000e+00> : vector<16x32xf32>
    %58 = tpu.matmul %57, %29, %cst_28 {dimension_numbers = #tpu.dot_dimension_numbers<[1], [0], [0], [1], [0, 0, 1, 1], [], []>} : vector<16x16xf32>, vector<16x32xf32>, vector<16x32xf32> -> vector<16x32xf32>
    %cst_29 = arith.constant 0.000000e+00 : f32
    %59 = vector.broadcast %cst_29 : f32 to vector<16x32xf32>
    %60 = arith.cmpf ogt, %58, %59 : vector<16x32xf32>
    %cst_30 = arith.constant 0.000000e+00 : f32
    %61 = vector.broadcast %cst_30 : f32 to vector<16x32xf32>
    %62 = arith.minimumf %58, %61 : vector<16x32xf32>
    %63 = math.exp %62 : vector<16x32xf32>
    %cst_31 = arith.constant 1.000000e+00 : f32
    %64 = vector.broadcast %cst_31 : f32 to vector<16x32xf32>
    %65 = arith.subf %63, %64 : vector<16x32xf32>
    %66 = arith.select %60, %58, %65 : vector<16x32xi1>, vector<16x32xf32>
    %c0_32 = arith.constant 0 : index
    %c0_33 = arith.constant 0 : index
    %67 = vector.load %arg9[%c0_32, %c0_33] : memref<32x32xf32, #tpu.memory_space<vmem>>, vector<32x32xf32>
    %cst_34 = arith.constant dense<0.000000e+00> : vector<16x32xf32>
    %68 = tpu.matmul %66, %67, %cst_34 {dimension_numbers = #tpu.dot_dimension_numbers<[1], [0], [0], [1], [0, 0, 1, 1], [], []>} : vector<16x32xf32>, vector<32x32xf32>, vector<16x32xf32> -> vector<16x32xf32>
    %c0_35 = arith.constant 0 : index
    %c0_36 = arith.constant 0 : index
    %69 = vector.load %arg10[%c0_35, %c0_36] : memref<1x32xf32, #tpu.memory_space<vmem>>, vector<1x32xf32>
    %70 = vector.broadcast %69 : vector<1x32xf32> to vector<16x32xf32>
    %71 = arith.mulf %68, %70 : vector<16x32xf32>
    %cst_37 = arith.constant dense<0.000000e+00> : vector<16xf32>
    %72 = vector.multi_reduction <add>, %71, %cst_37 [1] : vector<16x32xf32> to vector<16xf32>
    %73 = vector.shape_cast %72 : vector<16xf32> to vector<16x1xf32>
    %c0_38 = arith.constant 0 : index
    %c0_39 = arith.constant 0 : index
    %74 = vector.load %arg11[%c0_38, %c0_39] : memref<1x32xf32, #tpu.memory_space<vmem>>, vector<1x32xf32>
    %cst_40 = arith.constant dense<0.000000e+00> : vector<1x16xf32>
    %75 = tpu.matmul %74, %68, %cst_40 {dimension_numbers = #tpu.dot_dimension_numbers<[1], [1], [0], [0], [0, 0, 1, 0], [], []>} : vector<1x32xf32>, vector<16x32xf32>, vector<1x16xf32> -> vector<1x16xf32>
    %76 = vector.broadcast %73 : vector<16x1xf32> to vector<16x16xf32>
    %77 = vector.broadcast %75 : vector<1x16xf32> to vector<16x16xf32>
    %78 = arith.addf %76, %77 : vector<16x16xf32>
    %cst_41 = arith.constant 0.000000e+00 : f32
    %79 = vector.broadcast %cst_41 : f32 to vector<16x16xf32>
    %80 = arith.cmpf oge, %78, %79 : vector<16x16xf32>
    %cst_42 = arith.constant 1.000000e-01 : f32
    %81 = vector.broadcast %cst_42 : f32 to vector<16x16xf32>
    %82 = arith.mulf %81, %78 : vector<16x16xf32>
    %83 = arith.select %80, %78, %82 : vector<16x16xi1>, vector<16x16xf32>
    %cst_43 = arith.constant 0.000000e+00 : f32
    %84 = vector.broadcast %cst_43 : f32 to vector<16x16xf32>
    %85 = arith.cmpf ogt, %27, %84 : vector<16x16xf32>
    %cst_44 = arith.constant -9.000000e+15 : f32
    %86 = vector.broadcast %cst_44 : f32 to vector<16x16xf32>
    %87 = arith.select %85, %83, %86 : vector<16x16xi1>, vector<16x16xf32>
    %cst_45 = arith.constant dense<0xFF800000> : vector<16xf32>
    %88 = vector.multi_reduction <maximumf>, %87, %cst_45 [1] : vector<16x16xf32> to vector<16xf32>
    %89 = vector.shape_cast %88 : vector<16xf32> to vector<16x1xf32>
    %90 = vector.broadcast %89 : vector<16x1xf32> to vector<16x16xf32>
    %91 = arith.subf %87, %90 : vector<16x16xf32>
    %92 = math.exp %91 : vector<16x16xf32>
    %cst_46 = arith.constant dense<0.000000e+00> : vector<16xf32>
    %93 = vector.multi_reduction <add>, %92, %cst_46 [1] : vector<16x16xf32> to vector<16xf32>
    %94 = vector.shape_cast %93 : vector<16xf32> to vector<16x1xf32>
    %95 = vector.broadcast %94 : vector<16x1xf32> to vector<16x16xf32>
    %96 = arith.divf %92, %95 : vector<16x16xf32>
    %cst_47 = arith.constant dense<0.000000e+00> : vector<16x32xf32>
    %97 = tpu.matmul %96, %68, %cst_47 {dimension_numbers = #tpu.dot_dimension_numbers<[1], [0], [0], [1], [0, 0, 1, 1], [], []>} : vector<16x16xf32>, vector<16x32xf32>, vector<16x32xf32> -> vector<16x32xf32>
    %cst_48 = arith.constant 0.000000e+00 : f32
    %98 = vector.broadcast %cst_48 : f32 to vector<16x32xf32>
    %99 = arith.cmpf ogt, %97, %98 : vector<16x32xf32>
    %cst_49 = arith.constant 0.000000e+00 : f32
    %100 = vector.broadcast %cst_49 : f32 to vector<16x32xf32>
    %101 = arith.minimumf %97, %100 : vector<16x32xf32>
    %102 = math.exp %101 : vector<16x32xf32>
    %cst_50 = arith.constant 1.000000e+00 : f32
    %103 = vector.broadcast %cst_50 : f32 to vector<16x32xf32>
    %104 = arith.subf %102, %103 : vector<16x32xf32>
    %105 = arith.select %99, %97, %104 : vector<16x32xi1>, vector<16x32xf32>
    %106 = tpu.iota {dimensions = array<i32: 1>} : vector<16x16xi32>
    %c0_51 = arith.constant 0 : index
    %c0_52 = arith.constant 0 : index
    %c0_53 = arith.constant 0 : index
    %107 = vector.load %arg3[%c0_51, %c0_52, %c0_53] : memref<1x16x1xi32, #tpu.memory_space<vmem>>, vector<1x16x1xi32>
    %108 = vector.shape_cast %107 : vector<1x16x1xi32> to vector<16x1xi32>
    %109 = vector.broadcast %108 : vector<16x1xi32> to vector<16x16xi32>
    %110 = arith.cmpi eq, %109, %106 : vector<16x16xi32>
    %111 = arith.extui %110 : vector<16x16xi1> to vector<16x16xi32>
    %112 = arith.sitofp %111 : vector<16x16xi32> to vector<16x16xf32>
    %cst_54 = arith.constant dense<0.000000e+00> : vector<16xf32>
    %113 = vector.multi_reduction <add>, %112, %cst_54 [1] : vector<16x16xf32> to vector<16xf32>
    %114 = vector.shape_cast %113 : vector<16xf32> to vector<16x1xf32>
    %115 = tpu.iota {dimensions = array<i32: 0>} : vector<16x1xi32>
    %c15_i32 = arith.constant 15 : i32
    %116 = vector.broadcast %c15_i32 : i32 to vector<16x1xi32>
    %117 = arith.cmpi eq, %115, %116 : vector<16x1xi32>
    %118 = tpu.iota {dimensions = array<i32: 1>} : vector<1x16xi32>
    %cst_55 = arith.constant 0.000000e+00 : f32
    %119 = vector.shape_cast %117 : vector<16x1xi1> to vector<16x1xi1>
    %120 = vector.broadcast %119 : vector<16x1xi1> to vector<16x16xi1>
    %121 = vector.broadcast %cst_55 : f32 to vector<16x16xf32>
    %122 = arith.select %120, %27, %121 : vector<16x16xi1>, vector<16x16xf32>
    %cst_56 = arith.constant dense<0.000000e+00> : vector<16xf32>
    %123 = vector.multi_reduction <add>, %122, %cst_56 [0] : vector<16x16xf32> to vector<16xf32>
    %124 = vector.shape_cast %123 : vector<16xf32> to vector<1x16xf32>
    %c15_i32_57 = arith.constant 15 : i32
    %125 = vector.broadcast %c15_i32_57 : i32 to vector<1x16xi32>
    %126 = arith.cmpi eq, %118, %125 : vector<1x16xi32>
    %cst_58 = arith.constant 0.000000e+00 : f32
    %127 = vector.broadcast %cst_58 : f32 to vector<1x16xf32>
    %128 = arith.select %126, %124, %127 : vector<1x16xi1>, vector<1x16xf32>
    %cst_59 = arith.constant dense<0.000000e+00> : vector<1xf32>
    %129 = vector.multi_reduction <add>, %128, %cst_59 [1] : vector<1x16xf32> to vector<1xf32>
    %130 = vector.shape_cast %129 : vector<1xf32> to vector<1x1xf32>
    %cst_60 = arith.constant 0.000000e+00 : f32
    %131 = vector.shape_cast %117 : vector<16x1xi1> to vector<16x1xi1>
    %132 = vector.broadcast %131 : vector<16x1xi1> to vector<16x32xi1>
    %133 = vector.broadcast %cst_60 : f32 to vector<16x32xf32>
    %134 = arith.select %132, %25, %133 : vector<16x32xi1>, vector<16x32xf32>
    %cst_61 = arith.constant dense<0.000000e+00> : vector<32xf32>
    %135 = vector.multi_reduction <add>, %134, %cst_61 [0] : vector<16x32xf32> to vector<32xf32>
    %136 = vector.shape_cast %135 : vector<32xf32> to vector<1x32xf32>
    %cst_62 = arith.constant 0.000000e+00 : f32
    %137 = vector.shape_cast %117 : vector<16x1xi1> to vector<16x1xi1>
    %138 = vector.broadcast %137 : vector<16x1xi1> to vector<16x32xi1>
    %139 = vector.broadcast %cst_62 : f32 to vector<16x32xf32>
    %140 = arith.select %138, %105, %139 : vector<16x32xi1>, vector<16x32xf32>
    %cst_63 = arith.constant dense<0.000000e+00> : vector<32xf32>
    %141 = vector.multi_reduction <add>, %140, %cst_63 [0] : vector<16x32xf32> to vector<32xf32>
    %142 = vector.shape_cast %141 : vector<32xf32> to vector<1x32xf32>
    %cst_64 = arith.constant 0.000000e+00 : f32
    %143 = vector.broadcast %cst_64 : f32 to vector<1x1xf32>
    %144 = arith.cmpf ogt, %130, %143 : vector<1x1xf32>
    %145 = vector.shape_cast %144 : vector<1x1xi1> to vector<1x1xi1>
    %146 = vector.broadcast %145 : vector<1x1xi1> to vector<1x32xi1>
    %147 = arith.select %146, %136, %142 : vector<1x32xi1>, vector<1x32xf32>
    %cst_65 = arith.constant dense<0.000000e+00> : vector<16x32xf32>
    %148 = tpu.matmul %112, %105, %cst_65 {dimension_numbers = #tpu.dot_dimension_numbers<[1], [0], [0], [1], [0, 0, 1, 1], [], []>} : vector<16x16xf32>, vector<16x32xf32>, vector<16x32xf32> -> vector<16x32xf32>
    %cst_66 = arith.constant 1.000000e+00 : f32
    %149 = vector.broadcast %cst_66 : f32 to vector<16x1xf32>
    %150 = arith.subf %149, %114 : vector<16x1xf32>
    %151 = vector.broadcast %150 : vector<16x1xf32> to vector<16x32xf32>
    %152 = vector.broadcast %147 : vector<1x32xf32> to vector<16x32xf32>
    %153 = arith.mulf %151, %152 : vector<16x32xf32>
    %154 = arith.addf %148, %153 : vector<16x32xf32>
    %c0_67 = arith.constant 0 : index
    %c0_68 = arith.constant 0 : index
    %c0_69 = arith.constant 0 : index
    %155 = vector.load %arg12[%c0_67, %c0_68, %c0_69] : memref<1x16x32xf32, #tpu.memory_space<vmem>>, vector<1x16x32xf32>
    %156 = vector.shape_cast %155 : vector<1x16x32xf32> to vector<16x32xf32>
    %157 = vector.shape_cast %154 : vector<16x32xf32> to vector<1x16x32xf32>
    tpu.vector_store %arg12[%c0_67, %c0_68, %c0_69], %157 {strides = array<i32>} : memref<1x16x32xf32, #tpu.memory_space<vmem>>, vector<1x16x32xf32>,
    return
  }
  func.func @transform_0(%arg0: i32) -> (i32, i32, i32) {
    %c0_i32 = arith.constant 0 : i32
    %c0_i32_0 = arith.constant 0 : i32
    %c0_i32_1 = arith.constant 0 : i32
    return %arg0, %c0_i32, %c0_i32_0 : i32, i32, i32
  }
  func.func @transform_1(%arg0: i32) -> (i32, i32, i32) {
    %c0_i32 = arith.constant 0 : i32
    %c0_i32_0 = arith.constant 0 : i32
    %c0_i32_1 = arith.constant 0 : i32
    return %arg0, %c0_i32, %c0_i32_0 : i32, i32, i32
  }
  func.func @transform_2(%arg0: i32) -> (i32, i32, i32) {
    %c0_i32 = arith.constant 0 : i32
    %c0_i32_0 = arith.constant 0 : i32
    %c0_i32_1 = arith.constant 0 : i32
    return %arg0, %c0_i32, %c0_i32_0 : i32, i32, i32
  }
  func.func @transform_3(%arg0: i32) -> (i32, i32) {
    %c0_i32 = arith.constant 0 : i32
    %c0_i32_0 = arith.constant 0 : i32
    %c0_i32_1 = arith.constant 0 : i32
    return %c0_i32, %c0_i32_0 : i32, i32
  }
  func.func @transform_4(%arg0: i32) -> (i32, i32) {
    %c0_i32 = arith.constant 0 : i32
    %c0_i32_0 = arith.constant 0 : i32
    %c0_i32_1 = arith.constant 0 : i32
    return %c0_i32, %c0_i32_0 : i32, i32
  }
  func.func @transform_5(%arg0: i32) -> (i32, i32) {
    %c0_i32 = arith.constant 0 : i32
    %c0_i32_0 = arith.constant 0 : i32
    %c0_i32_1 = arith.constant 0 : i32
    return %c0_i32, %c0_i32_0 : i32, i32
  }
  func.func @transform_6(%arg0: i32) -> (i32, i32) {
    %c0_i32 = arith.constant 0 : i32
    %c0_i32_0 = arith.constant 0 : i32
    %c0_i32_1 = arith.constant 0 : i32
    return %c0_i32, %c0_i32_0 : i32, i32
  }
  func.func @transform_7(%arg0: i32) -> (i32, i32) {
    %c0_i32 = arith.constant 0 : i32
    %c0_i32_0 = arith.constant 0 : i32
    %c0_i32_1 = arith.constant 0 : i32
    return %c0_i32, %c0_i32_0 : i32, i32
  }
  func.func @transform_8(%arg0: i32) -> (i32, i32) {
    %c0_i32 = arith.constant 0 : i32
    %c0_i32_0 = arith.constant 0 : i32
    %c0_i32_1 = arith.constant 0 : i32
    return %c0_i32, %c0_i32_0 : i32, i32
  }
  func.func @transform_9(%arg0: i32) -> (i32, i32) {
    %c0_i32 = arith.constant 0 : i32
    %c0_i32_0 = arith.constant 0 : i32
    %c0_i32_1 = arith.constant 0 : i32
    return %c0_i32, %c0_i32_0 : i32, i32
  }
  func.func @transform_10(%arg0: i32) -> (i32, i32) {
    %c0_i32 = arith.constant 0 : i32
    %c0_i32_0 = arith.constant 0 : i32
    %c0_i32_1 = arith.constant 0 : i32
    return %c0_i32, %c0_i32_0 : i32, i32
  }
  func.func @transform_11(%arg0: i32) -> (i32, i32, i32) {
    %c0_i32 = arith.constant 0 : i32
    %c0_i32_0 = arith.constant 0 : i32
    %c0_i32_1 = arith.constant 0 : i32
    return %arg0, %c0_i32, %c0_i32_0 : i32, i32, i32
  }
}

module attributes {stable_mosaic.version = 11 : i64} {
  func.func @_res_enc_kernel(%arg0: i32, %arg1: memref<1x64x32xf32, #tpu.memory_space<vmem>>, %arg2: memref<1x64x32xf32, #tpu.memory_space<vmem>>, %arg3: memref<1x1x64xf32, #tpu.memory_space<vmem>>, %arg4: memref<32x96xf32, #tpu.memory_space<vmem>>, %arg5: memref<32x32xf32, #tpu.memory_space<vmem>>, %arg6: memref<1x32xf32, #tpu.memory_space<vmem>>, %arg7: memref<1x32xf32, #tpu.memory_space<vmem>>, %arg8: memref<1x32xf32, #tpu.memory_space<vmem>>, %arg9: memref<1x32xf32, #tpu.memory_space<vmem>>, %arg10: memref<1x32xf32, #tpu.memory_space<vmem>>, %arg11: memref<1x32xf32, #tpu.memory_space<vmem>>, %arg12: memref<1x64x64xf32, #tpu.memory_space<vmem>>, %arg13: memref<1x1x32xf32, #tpu.memory_space<vmem>>) attributes {dimension_semantics = [#tpu.dimension_semantics<parallel>], iteration_bounds = array<i64: 2>, scalar_prefetch = 0 : i64, scratch_operands = 0 : i64, tpu.core_type = #tpu.core_type<tc>, window_params = [{transform_indices = @transform_0, window_bounds = array<i64: 1, 64, 32>}, {pipeline_mode = #tpu.pipeline_mode<synchronous>, transform_indices = @transform_1, window_bounds = array<i64: 1, 64, 32>}, {transform_indices = @transform_2, window_bounds = array<i64: 1, 1, 64>}, {pipeline_mode = #tpu.pipeline_mode<synchronous>, transform_indices = @transform_3, window_bounds = array<i64: 32, 96>}, {pipeline_mode = #tpu.pipeline_mode<synchronous>, transform_indices = @transform_4, window_bounds = array<i64: 32, 32>}, {pipeline_mode = #tpu.pipeline_mode<synchronous>, transform_indices = @transform_5, window_bounds = array<i64: 1, 32>}, {pipeline_mode = #tpu.pipeline_mode<synchronous>, transform_indices = @transform_6, window_bounds = array<i64: 1, 32>}, {pipeline_mode = #tpu.pipeline_mode<synchronous>, transform_indices = @transform_7, window_bounds = array<i64: 1, 32>}, {pipeline_mode = #tpu.pipeline_mode<synchronous>, transform_indices = @transform_8, window_bounds = array<i64: 1, 32>}, {pipeline_mode = #tpu.pipeline_mode<synchronous>, transform_indices = @transform_9, window_bounds = array<i64: 1, 32>}, {pipeline_mode = #tpu.pipeline_mode<synchronous>, transform_indices = @transform_10, window_bounds = array<i64: 1, 32>}, {transform_indices = @transform_11, window_bounds = array<i64: 1, 64, 64>}, {transform_indices = @transform_12, window_bounds = array<i64: 1, 1, 32>}]} {
    %c0 = arith.constant 0 : index
    %c0_0 = arith.constant 0 : index
    %c0_1 = arith.constant 0 : index
    %0 = vector.load %arg1[%c0, %c0_0, %c0_1] : memref<1x64x32xf32, #tpu.memory_space<vmem>>, vector<1x64x32xf32>
    %1 = vector.shape_cast %0 : vector<1x64x32xf32> to vector<64x32xf32>
    %c0_2 = arith.constant 0 : index
    %c0_3 = arith.constant 0 : index
    %c0_4 = arith.constant 0 : index
    %2 = vector.load %arg2[%c0_2, %c0_3, %c0_4] : memref<1x64x32xf32, #tpu.memory_space<vmem>>, vector<1x64x32xf32>
    %3 = vector.shape_cast %2 : vector<1x64x32xf32> to vector<64x32xf32>
    %4 = arith.addf %1, %3 : vector<64x32xf32>
    %c0_5 = arith.constant 0 : index
    %c0_6 = arith.constant 0 : index
    %5 = vector.load %arg6[%c0_5, %c0_6] : memref<1x32xf32, #tpu.memory_space<vmem>>, vector<1x32xf32>
    %c0_7 = arith.constant 0 : index
    %c0_8 = arith.constant 0 : index
    %6 = vector.load %arg7[%c0_7, %c0_8] : memref<1x32xf32, #tpu.memory_space<vmem>>, vector<1x32xf32>
    %cst = arith.constant dense<0.000000e+00> : vector<64xf32>
    %7 = vector.multi_reduction <add>, %4, %cst [1] : vector<64x32xf32> to vector<64xf32>
    %8 = vector.shape_cast %7 : vector<64xf32> to vector<64x1xf32>
    %cst_9 = arith.constant 3.200000e+01 : f32
    %9 = vector.broadcast %cst_9 : f32 to vector<64x1xf32>
    %10 = arith.divf %8, %9 : vector<64x1xf32>
    %11 = vector.broadcast %10 : vector<64x1xf32> to vector<64x32xf32>
    %12 = arith.subf %4, %11 : vector<64x32xf32>
    %13 = arith.mulf %12, %12 : vector<64x32xf32>
    %cst_10 = arith.constant dense<0.000000e+00> : vector<64xf32>
    %14 = vector.multi_reduction <add>, %13, %cst_10 [1] : vector<64x32xf32> to vector<64xf32>
    %15 = vector.shape_cast %14 : vector<64xf32> to vector<64x1xf32>
    %cst_11 = arith.constant 3.200000e+01 : f32
    %16 = vector.broadcast %cst_11 : f32 to vector<64x1xf32>
    %17 = arith.divf %15, %16 : vector<64x1xf32>
    %18 = vector.broadcast %10 : vector<64x1xf32> to vector<64x32xf32>
    %19 = arith.subf %4, %18 : vector<64x32xf32>
    %cst_12 = arith.constant 9.99999996E-13 : f32
    %20 = vector.broadcast %cst_12 : f32 to vector<64x1xf32>
    %21 = arith.addf %17, %20 : vector<64x1xf32>
    %22 = math.sqrt %21 : vector<64x1xf32>
    %23 = vector.broadcast %22 : vector<64x1xf32> to vector<64x32xf32>
    %24 = arith.divf %19, %23 : vector<64x32xf32>
    %25 = vector.broadcast %5 : vector<1x32xf32> to vector<64x32xf32>
    %26 = arith.mulf %25, %24 : vector<64x32xf32>
    %27 = vector.broadcast %6 : vector<1x32xf32> to vector<64x32xf32>
    %28 = arith.addf %26, %27 : vector<64x32xf32>
    %c0_13 = arith.constant 0 : index
    %c0_14 = arith.constant 0 : index
    %29 = vector.load %arg4[%c0_13, %c0_14] : memref<32x96xf32, #tpu.memory_space<vmem>>, vector<32x96xf32>
    %cst_15 = arith.constant dense<0.000000e+00> : vector<64x96xf32>
    %30 = tpu.matmul %28, %29, %cst_15 {dimension_numbers = #tpu.dot_dimension_numbers<[1], [0], [0], [1], [0, 0, 1, 1], [], []>} : vector<64x32xf32>, vector<32x96xf32>, vector<64x96xf32> -> vector<64x96xf32>
    %31 = vector.extract_strided_slice %30 {offsets = [0, 0], sizes = [64, 32], strides = [1, 1]} : vector<64x96xf32> to vector<64x32xf32>
    %32 = vector.extract_strided_slice %30 {offsets = [0, 32], sizes = [64, 32], strides = [1, 1]} : vector<64x96xf32> to vector<64x32xf32>
    %33 = vector.extract_strided_slice %30 {offsets = [0, 64], sizes = [64, 32], strides = [1, 1]} : vector<64x96xf32> to vector<64x32xf32>
    %34 = tpu.iota {dimensions = array<i32: 1>} : vector<1x32xi32>
    %c16_i32 = arith.constant 16 : i32
    %35 = vector.broadcast %c16_i32 : i32 to vector<1x32xi32>
    %36 = arith.cmpi slt, %34, %35 : vector<1x32xi32>
    %37 = arith.extui %36 : vector<1x32xi1> to vector<1x32xi32>
    %38 = arith.sitofp %37 : vector<1x32xi32> to vector<1x32xf32>
    %cst_16 = arith.constant 1.000000e+00 : f32
    %39 = vector.broadcast %cst_16 : f32 to vector<1x32xf32>
    %40 = arith.subf %39, %38 : vector<1x32xf32>
    %41 = vector.broadcast %38 : vector<1x32xf32> to vector<64x32xf32>
    %42 = arith.mulf %32, %41 : vector<64x32xf32>
    %43 = vector.broadcast %40 : vector<1x32xf32> to vector<64x32xf32>
    %44 = arith.mulf %32, %43 : vector<64x32xf32>
    %45 = tpu.concatenate %42, %44 in 0 : vector<64x32xf32>, vector<64x32xf32> -> vector<128x32xf32>
    %46 = vector.broadcast %38 : vector<1x32xf32> to vector<64x32xf32>
    %47 = arith.mulf %33, %46 : vector<64x32xf32>
    %48 = vector.broadcast %40 : vector<1x32xf32> to vector<64x32xf32>
    %49 = arith.mulf %33, %48 : vector<64x32xf32>
    %50 = tpu.concatenate %47, %49 in 0 : vector<64x32xf32>, vector<64x32xf32> -> vector<128x32xf32>
    %c0_17 = arith.constant 0 : index
    %c0_18 = arith.constant 0 : index
    %c0_19 = arith.constant 0 : index
    %51 = vector.load %arg3[%c0_17, %c0_18, %c0_19] : memref<1x1x64xf32, #tpu.memory_space<vmem>>, vector<1x1x64xf32>
    %52 = vector.shape_cast %51 : vector<1x1x64xf32> to vector<1x64xf32>
    %cst_20 = arith.constant 0.000000e+00 : f32
    %53 = vector.broadcast %cst_20 : f32 to vector<1x64xf32>
    %54 = arith.cmpf ogt, %52, %53 : vector<1x64xf32>
    %cst_21 = arith.constant 0.000000e+00 : f32
    %cst_22 = arith.constant -1.000000e+09 : f32
    %55 = vector.broadcast %cst_21 : f32 to vector<1x64xf32>
    %56 = vector.broadcast %cst_22 : f32 to vector<1x64xf32>
    %57 = arith.select %54, %55, %56 : vector<1x64xi1>, vector<1x64xf32>
    %58 = tpu.concatenate %57, %57 in 1 : vector<1x64xf32>, vector<1x64xf32> -> vector<1x128xf32>
    %cst_23 = arith.constant dense<0.000000e+00> : vector<64x128xf32>
    %59 = tpu.matmul %31, %45, %cst_23 {dimension_numbers = #tpu.dot_dimension_numbers<[1], [1], [0], [0], [0, 0, 1, 0], [], []>} : vector<64x32xf32>, vector<128x32xf32>, vector<64x128xf32> -> vector<64x128xf32>
    %cst_24 = arith.constant 2.500000e-01 : f32
    %60 = vector.broadcast %cst_24 : f32 to vector<64x128xf32>
    %61 = arith.mulf %59, %60 : vector<64x128xf32>
    %62 = vector.broadcast %58 : vector<1x128xf32> to vector<64x128xf32>
    %63 = arith.addf %61, %62 : vector<64x128xf32>
    %64 = tpu.iota {dimensions = array<i32: 1>} : vector<1x128xi32>
    %c64_i32 = arith.constant 64 : i32
    %65 = vector.broadcast %c64_i32 : i32 to vector<1x128xi32>
    %66 = arith.cmpi slt, %64, %65 : vector<1x128xi32>
    %cst_25 = arith.constant -1.000000e+30 : f32
    %67 = vector.shape_cast %66 : vector<1x128xi1> to vector<1x128xi1>
    %68 = vector.broadcast %67 : vector<1x128xi1> to vector<64x128xi1>
    %69 = vector.broadcast %cst_25 : f32 to vector<64x128xf32>
    %70 = arith.select %68, %63, %69 : vector<64x128xi1>, vector<64x128xf32>
    %cst_26 = arith.constant dense<0xFF800000> : vector<64xf32>
    %71 = vector.multi_reduction <maximumf>, %70, %cst_26 [1] : vector<64x128xf32> to vector<64xf32>
    %72 = vector.shape_cast %71 : vector<64xf32> to vector<64x1xf32>
    %cst_27 = arith.constant -1.000000e+30 : f32
    %73 = vector.shape_cast %66 : vector<1x128xi1> to vector<1x128xi1>
    %74 = vector.broadcast %73 : vector<1x128xi1> to vector<64x128xi1>
    %75 = vector.broadcast %cst_27 : f32 to vector<64x128xf32>
    %76 = arith.select %74, %75, %63 : vector<64x128xi1>, vector<64x128xf32>
    %cst_28 = arith.constant dense<0xFF800000> : vector<64xf32>
    %77 = vector.multi_reduction <maximumf>, %76, %cst_28 [1] : vector<64x128xf32> to vector<64xf32>
    %78 = vector.shape_cast %77 : vector<64xf32> to vector<64x1xf32>
    %79 = vector.shape_cast %66 : vector<1x128xi1> to vector<1x128xi1>
    %80 = vector.broadcast %79 : vector<1x128xi1> to vector<64x128xi1>
    %81 = vector.shape_cast %72 : vector<64x1xf32> to vector<64x1xf32>
    %82 = vector.broadcast %81 : vector<64x1xf32> to vector<64x128xf32>
    %83 = vector.shape_cast %78 : vector<64x1xf32> to vector<64x1xf32>
    %84 = vector.broadcast %83 : vector<64x1xf32> to vector<64x128xf32>
    %85 = arith.select %80, %82, %84 : vector<64x128xi1>, vector<64x128xf32>
    %86 = arith.subf %63, %85 : vector<64x128xf32>
    %87 = math.exp %86 : vector<64x128xf32>
    %cst_29 = arith.constant 0.000000e+00 : f32
    %88 = vector.shape_cast %66 : vector<1x128xi1> to vector<1x128xi1>
    %89 = vector.broadcast %88 : vector<1x128xi1> to vector<64x128xi1>
    %90 = vector.broadcast %cst_29 : f32 to vector<64x128xf32>
    %91 = arith.select %89, %87, %90 : vector<64x128xi1>, vector<64x128xf32>
    %cst_30 = arith.constant dense<0.000000e+00> : vector<64xf32>
    %92 = vector.multi_reduction <add>, %91, %cst_30 [1] : vector<64x128xf32> to vector<64xf32>
    %93 = vector.shape_cast %92 : vector<64xf32> to vector<64x1xf32>
    %cst_31 = arith.constant 0.000000e+00 : f32
    %94 = vector.shape_cast %66 : vector<1x128xi1> to vector<1x128xi1>
    %95 = vector.broadcast %94 : vector<1x128xi1> to vector<64x128xi1>
    %96 = vector.broadcast %cst_31 : f32 to vector<64x128xf32>
    %97 = arith.select %95, %96, %87 : vector<64x128xi1>, vector<64x128xf32>
    %cst_32 = arith.constant dense<0.000000e+00> : vector<64xf32>
    %98 = vector.multi_reduction <add>, %97, %cst_32 [1] : vector<64x128xf32> to vector<64xf32>
    %99 = vector.shape_cast %98 : vector<64xf32> to vector<64x1xf32>
    %100 = vector.shape_cast %66 : vector<1x128xi1> to vector<1x128xi1>
    %101 = vector.broadcast %100 : vector<1x128xi1> to vector<64x128xi1>
    %102 = vector.shape_cast %93 : vector<64x1xf32> to vector<64x1xf32>
    %103 = vector.broadcast %102 : vector<64x1xf32> to vector<64x128xf32>
    %104 = vector.shape_cast %99 : vector<64x1xf32> to vector<64x1xf32>
    %105 = vector.broadcast %104 : vector<64x1xf32> to vector<64x128xf32>
    %106 = arith.select %101, %103, %105 : vector<64x128xi1>, vector<64x128xf32>
    %107 = arith.divf %87, %106 : vector<64x128xf32>
    %cst_33 = arith.constant dense<0.000000e+00> : vector<64x32xf32>
    %108 = tpu.matmul %107, %50, %cst_33 {dimension_numbers = #tpu.dot_dimension_numbers<[1], [0], [0], [1], [0, 0, 1, 1], [], []>} : vector<64x128xf32>, vector<128x32xf32>, vector<64x32xf32> -> vector<64x32xf32>
    %c0_34 = arith.constant 0 : index
    %c0_35 = arith.constant 0 : index
    %109 = vector.load %arg5[%c0_34, %c0_35] : memref<32x32xf32, #tpu.memory_space<vmem>>, vector<32x32xf32>
    %cst_36 = arith.constant dense<0.000000e+00> : vector<64x32xf32>
    %110 = tpu.matmul %108, %109, %cst_36 {dimension_numbers = #tpu.dot_dimension_numbers<[1], [0], [0], [1], [0, 0, 1, 1], [], []>} : vector<64x32xf32>, vector<32x32xf32>, vector<64x32xf32> -> vector<64x32xf32>
    %111 = arith.addf %28, %110 : vector<64x32xf32>
    %c0_37 = arith.constant 0 : index
    %c0_38 = arith.constant 0 : index
    %112 = vector.load %arg8[%c0_37, %c0_38] : memref<1x32xf32, #tpu.memory_space<vmem>>, vector<1x32xf32>
    %c0_39 = arith.constant 0 : index
    %c0_40 = arith.constant 0 : index
    %113 = vector.load %arg9[%c0_39, %c0_40] : memref<1x32xf32, #tpu.memory_space<vmem>>, vector<1x32xf32>
    %cst_41 = arith.constant dense<0.000000e+00> : vector<64xf32>
    %114 = vector.multi_reduction <add>, %111, %cst_41 [1] : vector<64x32xf32> to vector<64xf32>
    %115 = vector.shape_cast %114 : vector<64xf32> to vector<64x1xf32>
    %cst_42 = arith.constant 3.200000e+01 : f32
    %116 = vector.broadcast %cst_42 : f32 to vector<64x1xf32>
    %117 = arith.divf %115, %116 : vector<64x1xf32>
    %118 = vector.broadcast %117 : vector<64x1xf32> to vector<64x32xf32>
    %119 = arith.subf %111, %118 : vector<64x32xf32>
    %120 = arith.mulf %119, %119 : vector<64x32xf32>
    %cst_43 = arith.constant dense<0.000000e+00> : vector<64xf32>
    %121 = vector.multi_reduction <add>, %120, %cst_43 [1] : vector<64x32xf32> to vector<64xf32>
    %122 = vector.shape_cast %121 : vector<64xf32> to vector<64x1xf32>
    %cst_44 = arith.constant 3.200000e+01 : f32
    %123 = vector.broadcast %cst_44 : f32 to vector<64x1xf32>
    %124 = arith.divf %122, %123 : vector<64x1xf32>
    %125 = vector.broadcast %117 : vector<64x1xf32> to vector<64x32xf32>
    %126 = arith.subf %111, %125 : vector<64x32xf32>
    %cst_45 = arith.constant 9.99999996E-13 : f32
    %127 = vector.broadcast %cst_45 : f32 to vector<64x1xf32>
    %128 = arith.addf %124, %127 : vector<64x1xf32>
    %129 = math.sqrt %128 : vector<64x1xf32>
    %130 = vector.broadcast %129 : vector<64x1xf32> to vector<64x32xf32>
    %131 = arith.divf %126, %130 : vector<64x32xf32>
    %132 = vector.broadcast %112 : vector<1x32xf32> to vector<64x32xf32>
    %133 = arith.mulf %132, %131 : vector<64x32xf32>
    %134 = vector.broadcast %113 : vector<1x32xf32> to vector<64x32xf32>
    %135 = arith.addf %133, %134 : vector<64x32xf32>
    %cst_46 = arith.constant dense<0xFF800000> : vector<32xf32>
    %136 = vector.multi_reduction <maximumf>, %135, %cst_46 [0] : vector<64x32xf32> to vector<32xf32>
    %137 = vector.shape_cast %136 : vector<32xf32> to vector<1x32xf32>
    %c0_47 = arith.constant 0 : index
    %c0_48 = arith.constant 0 : index
    %138 = vector.load %arg10[%c0_47, %c0_48] : memref<1x32xf32, #tpu.memory_space<vmem>>, vector<1x32xf32>
    %c0_49 = arith.constant 0 : index
    %c0_50 = arith.constant 0 : index
    %139 = vector.load %arg11[%c0_49, %c0_50] : memref<1x32xf32, #tpu.memory_space<vmem>>, vector<1x32xf32>
    %cst_51 = arith.constant dense<0.000000e+00> : vector<1xf32>
    %140 = vector.multi_reduction <add>, %137, %cst_51 [1] : vector<1x32xf32> to vector<1xf32>
    %141 = vector.shape_cast %140 : vector<1xf32> to vector<1x1xf32>
    %cst_52 = arith.constant 3.200000e+01 : f32
    %142 = vector.broadcast %cst_52 : f32 to vector<1x1xf32>
    %143 = arith.divf %141, %142 : vector<1x1xf32>
    %144 = vector.broadcast %143 : vector<1x1xf32> to vector<1x32xf32>
    %145 = arith.subf %137, %144 : vector<1x32xf32>
    %146 = arith.mulf %145, %145 : vector<1x32xf32>
    %cst_53 = arith.constant dense<0.000000e+00> : vector<1xf32>
    %147 = vector.multi_reduction <add>, %146, %cst_53 [1] : vector<1x32xf32> to vector<1xf32>
    %148 = vector.shape_cast %147 : vector<1xf32> to vector<1x1xf32>
    %cst_54 = arith.constant 3.200000e+01 : f32
    %149 = vector.broadcast %cst_54 : f32 to vector<1x1xf32>
    %150 = arith.divf %148, %149 : vector<1x1xf32>
    %151 = vector.broadcast %143 : vector<1x1xf32> to vector<1x32xf32>
    %152 = arith.subf %137, %151 : vector<1x32xf32>
    %cst_55 = arith.constant 9.99999974E-6 : f32
    %153 = vector.broadcast %cst_55 : f32 to vector<1x1xf32>
    %154 = arith.addf %150, %153 : vector<1x1xf32>
    %155 = math.sqrt %154 : vector<1x1xf32>
    %156 = vector.broadcast %155 : vector<1x1xf32> to vector<1x32xf32>
    %157 = arith.divf %152, %156 : vector<1x32xf32>
    %158 = arith.mulf %138, %157 : vector<1x32xf32>
    %159 = arith.addf %158, %139 : vector<1x32xf32>
    %c0_56 = arith.constant 0 : index
    %c0_57 = arith.constant 0 : index
    %c0_58 = arith.constant 0 : index
    %160 = vector.load %arg13[%c0_56, %c0_57, %c0_58] : memref<1x1x32xf32, #tpu.memory_space<vmem>>, vector<1x1x32xf32>
    %161 = vector.shape_cast %160 : vector<1x1x32xf32> to vector<1x32xf32>
    %162 = vector.shape_cast %159 : vector<1x32xf32> to vector<1x1x32xf32>
    tpu.vector_store %arg13[%c0_56, %c0_57, %c0_58], %162 {strides = array<i32>} : memref<1x1x32xf32, #tpu.memory_space<vmem>>, vector<1x1x32xf32>,
    %163 = tpu.concatenate %32, %33 in 1 : vector<64x32xf32>, vector<64x32xf32> -> vector<64x64xf32>
    %c0_59 = arith.constant 0 : index
    %c0_60 = arith.constant 0 : index
    %c0_61 = arith.constant 0 : index
    %164 = vector.load %arg12[%c0_59, %c0_60, %c0_61] : memref<1x64x64xf32, #tpu.memory_space<vmem>>, vector<1x64x64xf32>
    %165 = vector.shape_cast %164 : vector<1x64x64xf32> to vector<64x64xf32>
    %166 = vector.shape_cast %163 : vector<64x64xf32> to vector<1x64x64xf32>
    tpu.vector_store %arg12[%c0_59, %c0_60, %c0_61], %166 {strides = array<i32>} : memref<1x64x64xf32, #tpu.memory_space<vmem>>, vector<1x64x64xf32>,
    return
  }
  func.func @transform_0(%arg0: i32) -> (i32, i32, i32) {
    %c0_i32 = arith.constant 0 : i32
    %c0_i32_0 = arith.constant 0 : i32
    %c0_i32_1 = arith.constant 0 : i32
    return %arg0, %c0_i32, %c0_i32_0 : i32, i32, i32
  }
  func.func @transform_1(%arg0: i32) -> (i32, i32, i32) {
    %c0_i32 = arith.constant 0 : i32
    %c0_i32_0 = arith.constant 0 : i32
    %c0_i32_1 = arith.constant 0 : i32
    %c0_i32_2 = arith.constant 0 : i32
    return %c0_i32, %c0_i32_0, %c0_i32_1 : i32, i32, i32
  }
  func.func @transform_2(%arg0: i32) -> (i32, i32, i32) {
    %c0_i32 = arith.constant 0 : i32
    %c0_i32_0 = arith.constant 0 : i32
    %c0_i32_1 = arith.constant 0 : i32
    return %arg0, %c0_i32, %c0_i32_0 : i32, i32, i32
  }
  func.func @transform_3(%arg0: i32) -> (i32, i32) {
    %c0_i32 = arith.constant 0 : i32
    %c0_i32_0 = arith.constant 0 : i32
    %c0_i32_1 = arith.constant 0 : i32
    return %c0_i32, %c0_i32_0 : i32, i32
  }
  func.func @transform_4(%arg0: i32) -> (i32, i32) {
    %c0_i32 = arith.constant 0 : i32
    %c0_i32_0 = arith.constant 0 : i32
    %c0_i32_1 = arith.constant 0 : i32
    return %c0_i32, %c0_i32_0 : i32, i32
  }
  func.func @transform_5(%arg0: i32) -> (i32, i32) {
    %c0_i32 = arith.constant 0 : i32
    %c0_i32_0 = arith.constant 0 : i32
    %c0_i32_1 = arith.constant 0 : i32
    return %c0_i32, %c0_i32_0 : i32, i32
  }
  func.func @transform_6(%arg0: i32) -> (i32, i32) {
    %c0_i32 = arith.constant 0 : i32
    %c0_i32_0 = arith.constant 0 : i32
    %c0_i32_1 = arith.constant 0 : i32
    return %c0_i32, %c0_i32_0 : i32, i32
  }
  func.func @transform_7(%arg0: i32) -> (i32, i32) {
    %c0_i32 = arith.constant 0 : i32
    %c0_i32_0 = arith.constant 0 : i32
    %c0_i32_1 = arith.constant 0 : i32
    return %c0_i32, %c0_i32_0 : i32, i32
  }
  func.func @transform_8(%arg0: i32) -> (i32, i32) {
    %c0_i32 = arith.constant 0 : i32
    %c0_i32_0 = arith.constant 0 : i32
    %c0_i32_1 = arith.constant 0 : i32
    return %c0_i32, %c0_i32_0 : i32, i32
  }
  func.func @transform_9(%arg0: i32) -> (i32, i32) {
    %c0_i32 = arith.constant 0 : i32
    %c0_i32_0 = arith.constant 0 : i32
    %c0_i32_1 = arith.constant 0 : i32
    return %c0_i32, %c0_i32_0 : i32, i32
  }
  func.func @transform_10(%arg0: i32) -> (i32, i32) {
    %c0_i32 = arith.constant 0 : i32
    %c0_i32_0 = arith.constant 0 : i32
    %c0_i32_1 = arith.constant 0 : i32
    return %c0_i32, %c0_i32_0 : i32, i32
  }
  func.func @transform_11(%arg0: i32) -> (i32, i32, i32) {
    %c0_i32 = arith.constant 0 : i32
    %c0_i32_0 = arith.constant 0 : i32
    %c0_i32_1 = arith.constant 0 : i32
    return %arg0, %c0_i32, %c0_i32_0 : i32, i32, i32
  }
  func.func @transform_12(%arg0: i32) -> (i32, i32, i32) {
    %c0_i32 = arith.constant 0 : i32
    %c0_i32_0 = arith.constant 0 : i32
    %c0_i32_1 = arith.constant 0 : i32
    return %arg0, %c0_i32, %c0_i32_0 : i32, i32, i32
  }
}

module attributes {stable_mosaic.version = 11 : i64} {
  func.func @_drug_fused_kernel(%arg0: i32, %arg1: memref<1x16x32xf32, #tpu.memory_space<vmem>>, %arg2: memref<1x3x16x1xf32, #tpu.memory_space<vmem>>, %arg3: memref<1x32xf32, #tpu.memory_space<vmem>>, %arg4: memref<80x16xf32, #tpu.memory_space<vmem>>, %arg5: memref<64x160xf32, #tpu.memory_space<vmem>>, %arg6: memref<1x64x64xf32, #tpu.memory_space<vmem>>, %arg7: memref<1x1x64xf32, #tpu.memory_space<vmem>>, %arg8: memref<1x1x32xf32, #tpu.memory_space<vmem>>, %arg9: memref<32x32xf32, #tpu.memory_space<vmem>>, %arg10: memref<32x32xf32, #tpu.memory_space<vmem>>, %arg11: memref<1x32xf32, #tpu.memory_space<vmem>>, %arg12: memref<1x32xf32, #tpu.memory_space<vmem>>, %arg13: memref<32x32xf32, #tpu.memory_space<vmem>>, %arg14: memref<32x32xf32, #tpu.memory_space<vmem>>, %arg15: memref<1x32xf32, #tpu.memory_space<vmem>>, %arg16: memref<1x32xf32, #tpu.memory_space<vmem>>, %arg17: memref<1x32xf32, #tpu.memory_space<vmem>>, %arg18: memref<1x32xf32, #tpu.memory_space<vmem>>, %arg19: memref<32x512xf32, #tpu.memory_space<vmem>>, %arg20: memref<32x512xf32, #tpu.memory_space<vmem>>, %arg21: memref<1x512xf32, #tpu.memory_space<vmem>>, %arg22: memref<512x32xf32, #tpu.memory_space<vmem>>, %arg23: memref<1x32xf32, #tpu.memory_space<vmem>>, %arg24: memref<32x2xf32, #tpu.memory_space<vmem>>, %arg25: memref<1x2xf32, #tpu.memory_space<vmem>>, %arg26: memref<17xf32, #tpu.memory_space<smem>>, %arg27: memref<1x1x2xf32, #tpu.memory_space<vmem>>) attributes {dimension_semantics = [#tpu.dimension_semantics<parallel>], iteration_bounds = array<i64: 2>, scalar_prefetch = 0 : i64, scratch_operands = 0 : i64, tpu.core_type = #tpu.core_type<tc>, window_params = [{transform_indices = @transform_0, window_bounds = array<i64: 1, 16, 32>}, {transform_indices = @transform_1, window_bounds = array<i64: 1, 3, 16, 1>}, {pipeline_mode = #tpu.pipeline_mode<synchronous>, transform_indices = @transform_2, window_bounds = array<i64: 1, 32>}, {pipeline_mode = #tpu.pipeline_mode<synchronous>, transform_indices = @transform_3, window_bounds = array<i64: 80, 16>}, {pipeline_mode = #tpu.pipeline_mode<synchronous>, transform_indices = @transform_4, window_bounds = array<i64: 64, 160>}, {transform_indices = @transform_5, window_bounds = array<i64: 1, 64, 64>}, {transform_indices = @transform_6, window_bounds = array<i64: 1, 1, 64>}, {transform_indices = @transform_7, window_bounds = array<i64: 1, 1, 32>}, {pipeline_mode = #tpu.pipeline_mode<synchronous>, transform_indices = @transform_8, window_bounds = array<i64: 32, 32>}, {pipeline_mode = #tpu.pipeline_mode<synchronous>, transform_indices = @transform_9, window_bounds = array<i64: 32, 32>}, {pipeline_mode = #tpu.pipeline_mode<synchronous>, transform_indices = @transform_10, window_bounds = array<i64: 1, 32>}, {pipeline_mode = #tpu.pipeline_mode<synchronous>, transform_indices = @transform_11, window_bounds = array<i64: 1, 32>}, {pipeline_mode = #tpu.pipeline_mode<synchronous>, transform_indices = @transform_12, window_bounds = array<i64: 32, 32>}, {pipeline_mode = #tpu.pipeline_mode<synchronous>, transform_indices = @transform_13, window_bounds = array<i64: 32, 32>}, {pipeline_mode = #tpu.pipeline_mode<synchronous>, transform_indices = @transform_14, window_bounds = array<i64: 1, 32>}, {pipeline_mode = #tpu.pipeline_mode<synchronous>, transform_indices = @transform_15, window_bounds = array<i64: 1, 32>}, {pipeline_mode = #tpu.pipeline_mode<synchronous>, transform_indices = @transform_16, window_bounds = array<i64: 1, 32>}, {pipeline_mode = #tpu.pipeline_mode<synchronous>, transform_indices = @transform_17, window_bounds = array<i64: 1, 32>}, {pipeline_mode = #tpu.pipeline_mode<synchronous>, transform_indices = @transform_18, window_bounds = array<i64: 32, 512>}, {pipeline_mode = #tpu.pipeline_mode<synchronous>, transform_indices = @transform_19, window_bounds = array<i64: 32, 512>}, {pipeline_mode = #tpu.pipeline_mode<synchronous>, transform_indices = @transform_20, window_bounds = array<i64: 1, 512>}, {pipeline_mode = #tpu.pipeline_mode<synchronous>, transform_indices = @transform_21, window_bounds = array<i64: 512, 32>}, {pipeline_mode = #tpu.pipeline_mode<synchronous>, transform_indices = @transform_22, window_bounds = array<i64: 1, 32>}, {pipeline_mode = #tpu.pipeline_mode<synchronous>, transform_indices = @transform_23, window_bounds = array<i64: 32, 2>}, {pipeline_mode = #tpu.pipeline_mode<synchronous>, transform_indices = @transform_24, window_bounds = array<i64: 1, 2>}, {transform_indices = @transform_25, window_bounds = array<i64: 17>}, {transform_indices = @transform_26, window_bounds = array<i64: 1, 1, 2>}]} {
    %c0 = arith.constant 0 : index
    %c0_0 = arith.constant 0 : index
    %c0_1 = arith.constant 0 : index
    %0 = vector.load %arg1[%c0, %c0_0, %c0_1] : memref<1x16x32xf32, #tpu.memory_space<vmem>>, vector<1x16x32xf32>
    %1 = vector.shape_cast %0 : vector<1x16x32xf32> to vector<16x32xf32>
    %c0_2 = arith.constant 0 : index
    %c0_3 = arith.constant 0 : index
    %2 = vector.load %arg3[%c0_2, %c0_3] : memref<1x32xf32, #tpu.memory_space<vmem>>, vector<1x32xf32>
    %3 = tpu.iota {dimensions = array<i32: 1>} : vector<1x32xi32>
    %c2_i32 = arith.constant 2 : i32
    %c0_i32 = arith.constant 0 : i32
    %4 = arith.cmpi eq, %c2_i32, %c0_i32 : i32
    %c1_i32 = arith.constant 1 : i32
    %5 = arith.select %4, %c1_i32, %c2_i32 : i32
    %6 = vector.broadcast %5 : i32 to vector<1x32xi32>
    %7 = arith.remsi %3, %6 : vector<1x32xi32>
    %c0_i32_4 = arith.constant 0 : i32
    %8 = vector.broadcast %c0_i32_4 : i32 to vector<1x32xi32>
    %9 = arith.cmpi ne, %7, %8 : vector<1x32xi32>
    %c0_i32_5 = arith.constant 0 : i32
    %10 = vector.broadcast %c0_i32_5 : i32 to vector<1x32xi32>
    %11 = arith.cmpi slt, %7, %10 : vector<1x32xi32>
    %c0_i32_6 = arith.constant 0 : i32
    %12 = arith.cmpi slt, %5, %c0_i32_6 : i32
    %13 = vector.broadcast %12 : i1 to vector<1x32xi1>
    %14 = vector.broadcast %13 : vector<1x32xi1> to vector<1x32xi1>
    %15 = arith.xori %11, %14 : vector<1x32xi1>
    %16 = arith.andi %15, %9 : vector<1x32xi1>
    %17 = vector.broadcast %5 : i32 to vector<1x32xi32>
    %18 = arith.addi %7, %17 : vector<1x32xi32>
    %19 = arith.select %16, %18, %7 : vector<1x32xi1>, vector<1x32xi32>
    %c0_i32_7 = arith.constant 0 : i32
    %20 = vector.broadcast %c0_i32_7 : i32 to vector<1x32xi32>
    %21 = arith.cmpi eq, %19, %20 : vector<1x32xi32>
    %c0_8 = arith.constant 0 : index
    %c0_9 = arith.constant 0 : index
    %c0_10 = arith.constant 0 : index
    %c0_11 = arith.constant 0 : index
    %22 = vector.load %arg2[%c0_8, %c0_9, %c0_10, %c0_11] : memref<1x3x16x1xf32, #tpu.memory_space<vmem>>, vector<1x1x16x1xf32>
    %23 = vector.shape_cast %22 : vector<1x1x16x1xf32> to vector<16x1xf32>
    %24 = vector.broadcast %23 : vector<16x1xf32> to vector<16x32xf32>
    %25 = vector.broadcast %2 : vector<1x32xf32> to vector<16x32xf32>
    %26 = arith.mulf %24, %25 : vector<16x32xf32>
    %27 = math.sin %26 : vector<16x32xf32>
    %28 = math.cos %26 : vector<16x32xf32>
    %29 = vector.shape_cast %21 : vector<1x32xi1> to vector<1x32xi1>
    %30 = vector.broadcast %29 : vector<1x32xi1> to vector<16x32xi1>
    %31 = arith.select %30, %27, %28 : vector<16x32xi1>, vector<16x32xf32>
    %32 = arith.mulf %1, %31 : vector<16x32xf32>
    %c0_12 = arith.constant 0 : index
    %c1 = arith.constant 1 : index
    %c0_13 = arith.constant 0 : index
    %c0_14 = arith.constant 0 : index
    %33 = vector.load %arg2[%c0_12, %c1, %c0_13, %c0_14] : memref<1x3x16x1xf32, #tpu.memory_space<vmem>>, vector<1x1x16x1xf32>
    %34 = vector.shape_cast %33 : vector<1x1x16x1xf32> to vector<16x1xf32>
    %35 = vector.broadcast %34 : vector<16x1xf32> to vector<16x32xf32>
    %36 = vector.broadcast %2 : vector<1x32xf32> to vector<16x32xf32>
    %37 = arith.mulf %35, %36 : vector<16x32xf32>
    %38 = math.sin %37 : vector<16x32xf32>
    %39 = math.cos %37 : vector<16x32xf32>
    %40 = vector.shape_cast %21 : vector<1x32xi1> to vector<1x32xi1>
    %41 = vector.broadcast %40 : vector<1x32xi1> to vector<16x32xi1>
    %42 = arith.select %41, %38, %39 : vector<16x32xi1>, vector<16x32xf32>
    %43 = arith.mulf %1, %42 : vector<16x32xf32>
    %c0_15 = arith.constant 0 : index
    %c2 = arith.constant 2 : index
    %c0_16 = arith.constant 0 : index
    %c0_17 = arith.constant 0 : index
    %44 = vector.load %arg2[%c0_15, %c2, %c0_16, %c0_17] : memref<1x3x16x1xf32, #tpu.memory_space<vmem>>, vector<1x1x16x1xf32>
    %45 = vector.shape_cast %44 : vector<1x1x16x1xf32> to vector<16x1xf32>
    %46 = vector.broadcast %45 : vector<16x1xf32> to vector<16x32xf32>
    %47 = vector.broadcast %2 : vector<1x32xf32> to vector<16x32xf32>
    %48 = arith.mulf %46, %47 : vector<16x32xf32>
    %49 = math.sin %48 : vector<16x32xf32>
    %50 = math.cos %48 : vector<16x32xf32>
    %51 = vector.shape_cast %21 : vector<1x32xi1> to vector<1x32xi1>
    %52 = vector.broadcast %51 : vector<1x32xi1> to vector<16x32xi1>
    %53 = arith.select %52, %49, %50 : vector<16x32xi1>, vector<16x32xf32>
    %54 = arith.mulf %1, %53 : vector<16x32xf32>
    %cst = arith.constant dense<0xFF800000> : vector<16xf32>
    %55 = vector.multi_reduction <maximumf>, %32, %cst [1] : vector<16x32xf32> to vector<16xf32>
    %56 = vector.shape_cast %55 : vector<16xf32> to vector<16x1xf32>
    %cst_18 = arith.constant dense<0xFF800000> : vector<1xf32>
    %57 = vector.multi_reduction <maximumf>, %56, %cst_18 [0] : vector<16x1xf32> to vector<1xf32>
    %58 = vector.shape_cast %57 : vector<1xf32> to vector<1x1xf32>
    %cst_19 = arith.constant dense<0.000000e+00> : vector<16xf32>
    %59 = vector.multi_reduction <add>, %32, %cst_19 [1] : vector<16x32xf32> to vector<16xf32>
    %60 = vector.shape_cast %59 : vector<16xf32> to vector<16x1xf32>
    %cst_20 = arith.constant dense<0.000000e+00> : vector<1xf32>
    %61 = vector.multi_reduction <add>, %60, %cst_20 [0] : vector<16x1xf32> to vector<1xf32>
    %62 = vector.shape_cast %61 : vector<1xf32> to vector<1x1xf32>
    %cst_21 = arith.constant 0.001953125 : f32
    %63 = vector.broadcast %cst_21 : f32 to vector<1x1xf32>
    %64 = arith.mulf %62, %63 : vector<1x1xf32>
    %65 = arith.addf %58, %64 : vector<1x1xf32>
    %cst_22 = arith.constant dense<0xFF800000> : vector<16xf32>
    %66 = vector.multi_reduction <maximumf>, %43, %cst_22 [1] : vector<16x32xf32> to vector<16xf32>
    %67 = vector.shape_cast %66 : vector<16xf32> to vector<16x1xf32>
    %cst_23 = arith.constant dense<0xFF800000> : vector<1xf32>
    %68 = vector.multi_reduction <maximumf>, %67, %cst_23 [0] : vector<16x1xf32> to vector<1xf32>
    %69 = vector.shape_cast %68 : vector<1xf32> to vector<1x1xf32>
    %cst_24 = arith.constant dense<0.000000e+00> : vector<16xf32>
    %70 = vector.multi_reduction <add>, %43, %cst_24 [1] : vector<16x32xf32> to vector<16xf32>
    %71 = vector.shape_cast %70 : vector<16xf32> to vector<16x1xf32>
    %cst_25 = arith.constant dense<0.000000e+00> : vector<1xf32>
    %72 = vector.multi_reduction <add>, %71, %cst_25 [0] : vector<16x1xf32> to vector<1xf32>
    %73 = vector.shape_cast %72 : vector<1xf32> to vector<1x1xf32>
    %cst_26 = arith.constant 0.001953125 : f32
    %74 = vector.broadcast %cst_26 : f32 to vector<1x1xf32>
    %75 = arith.mulf %73, %74 : vector<1x1xf32>
    %76 = arith.addf %69, %75 : vector<1x1xf32>
    %cst_27 = arith.constant dense<0xFF800000> : vector<16xf32>
    %77 = vector.multi_reduction <maximumf>, %54, %cst_27 [1] : vector<16x32xf32> to vector<16xf32>
    %78 = vector.shape_cast %77 : vector<16xf32> to vector<16x1xf32>
    %cst_28 = arith.constant dense<0xFF800000> : vector<1xf32>
    %79 = vector.multi_reduction <maximumf>, %78, %cst_28 [0] : vector<16x1xf32> to vector<1xf32>
    %80 = vector.shape_cast %79 : vector<1xf32> to vector<1x1xf32>
    %cst_29 = arith.constant dense<0.000000e+00> : vector<16xf32>
    %81 = vector.multi_reduction <add>, %54, %cst_29 [1] : vector<16x32xf32> to vector<16xf32>
    %82 = vector.shape_cast %81 : vector<16xf32> to vector<16x1xf32>
    %cst_30 = arith.constant dense<0.000000e+00> : vector<1xf32>
    %83 = vector.multi_reduction <add>, %82, %cst_30 [0] : vector<16x1xf32> to vector<1xf32>
    %84 = vector.shape_cast %83 : vector<1xf32> to vector<1x1xf32>
    %cst_31 = arith.constant 0.001953125 : f32
    %85 = vector.broadcast %cst_31 : f32 to vector<1x1xf32>
    %86 = arith.mulf %84, %85 : vector<1x1xf32>
    %87 = arith.addf %80, %86 : vector<1x1xf32>
    %c0_32 = arith.constant 0 : index
    %88 = memref.load %arg26[%c0_32] : memref<17xf32, #tpu.memory_space<smem>>
    %89 = vector.broadcast %88 : f32 to vector<1x1xf32>
    %90 = arith.mulf %65, %89 : vector<1x1xf32>
    %c3 = arith.constant 3 : index
    %91 = memref.load %arg26[%c3] : memref<17xf32, #tpu.memory_space<smem>>
    %92 = vector.broadcast %91 : f32 to vector<1x1xf32>
    %93 = arith.mulf %76, %92 : vector<1x1xf32>
    %94 = arith.addf %90, %93 : vector<1x1xf32>
    %c6 = arith.constant 6 : index
    %95 = memref.load %arg26[%c6] : memref<17xf32, #tpu.memory_space<smem>>
    %96 = vector.broadcast %95 : f32 to vector<1x1xf32>
    %97 = arith.mulf %87, %96 : vector<1x1xf32>
    %98 = arith.addf %94, %97 : vector<1x1xf32>
    %c9 = arith.constant 9 : index
    %99 = memref.load %arg26[%c9] : memref<17xf32, #tpu.memory_space<smem>>
    %100 = vector.broadcast %99 : f32 to vector<1x1xf32>
    %101 = arith.addf %98, %100 : vector<1x1xf32>
    %cst_33 = arith.constant 0.000000e+00 : f32
    %102 = vector.broadcast %cst_33 : f32 to vector<1x1xf32>
    %103 = arith.maximumf %101, %102 : vector<1x1xf32>
    %104 = vector.broadcast %103 : vector<1x1xf32> to vector<16x32xf32>
    %105 = arith.mulf %32, %104 : vector<16x32xf32>
    %c1_34 = arith.constant 1 : index
    %106 = memref.load %arg26[%c1_34] : memref<17xf32, #tpu.memory_space<smem>>
    %107 = vector.broadcast %106 : f32 to vector<1x1xf32>
    %108 = arith.mulf %65, %107 : vector<1x1xf32>
    %c4 = arith.constant 4 : index
    %109 = memref.load %arg26[%c4] : memref<17xf32, #tpu.memory_space<smem>>
    %110 = vector.broadcast %109 : f32 to vector<1x1xf32>
    %111 = arith.mulf %76, %110 : vector<1x1xf32>
    %112 = arith.addf %108, %111 : vector<1x1xf32>
    %c7 = arith.constant 7 : index
    %113 = memref.load %arg26[%c7] : memref<17xf32, #tpu.memory_space<smem>>
    %114 = vector.broadcast %113 : f32 to vector<1x1xf32>
    %115 = arith.mulf %87, %114 : vector<1x1xf32>
    %116 = arith.addf %112, %115 : vector<1x1xf32>
    %c10 = arith.constant 10 : index
    %117 = memref.load %arg26[%c10] : memref<17xf32, #tpu.memory_space<smem>>
    %118 = vector.broadcast %117 : f32 to vector<1x1xf32>
    %119 = arith.addf %116, %118 : vector<1x1xf32>
    %cst_35 = arith.constant 0.000000e+00 : f32
    %120 = vector.broadcast %cst_35 : f32 to vector<1x1xf32>
    %121 = arith.maximumf %119, %120 : vector<1x1xf32>
    %122 = vector.broadcast %121 : vector<1x1xf32> to vector<16x32xf32>
    %123 = arith.mulf %43, %122 : vector<16x32xf32>
    %c2_36 = arith.constant 2 : index
    %124 = memref.load %arg26[%c2_36] : memref<17xf32, #tpu.memory_space<smem>>
    %125 = vector.broadcast %124 : f32 to vector<1x1xf32>
    %126 = arith.mulf %65, %125 : vector<1x1xf32>
    %c5 = arith.constant 5 : index
    %127 = memref.load %arg26[%c5] : memref<17xf32, #tpu.memory_space<smem>>
    %128 = vector.broadcast %127 : f32 to vector<1x1xf32>
    %129 = arith.mulf %76, %128 : vector<1x1xf32>
    %130 = arith.addf %126, %129 : vector<1x1xf32>
    %c8 = arith.constant 8 : index
    %131 = memref.load %arg26[%c8] : memref<17xf32, #tpu.memory_space<smem>>
    %132 = vector.broadcast %131 : f32 to vector<1x1xf32>
    %133 = arith.mulf %87, %132 : vector<1x1xf32>
    %134 = arith.addf %130, %133 : vector<1x1xf32>
    %c11 = arith.constant 11 : index
    %135 = memref.load %arg26[%c11] : memref<17xf32, #tpu.memory_space<smem>>
    %136 = vector.broadcast %135 : f32 to vector<1x1xf32>
    %137 = arith.addf %134, %136 : vector<1x1xf32>
    %cst_37 = arith.constant 0.000000e+00 : f32
    %138 = vector.broadcast %cst_37 : f32 to vector<1x1xf32>
    %139 = arith.maximumf %137, %138 : vector<1x1xf32>
    %140 = vector.broadcast %139 : vector<1x1xf32> to vector<16x32xf32>
    %141 = arith.mulf %54, %140 : vector<16x32xf32>
    %142 = arith.maximumf %105, %123 : vector<16x32xf32>
    %143 = arith.maximumf %142, %141 : vector<16x32xf32>
    %144 = arith.addf %105, %123 : vector<16x32xf32>
    %145 = arith.addf %144, %141 : vector<16x32xf32>
    %cst_38 = arith.constant 0.333333343 : f32
    %146 = vector.broadcast %cst_38 : f32 to vector<16x32xf32>
    %147 = arith.mulf %145, %146 : vector<16x32xf32>
    %148 = tpu.concatenate %143, %147 in 1 : vector<16x32xf32>, vector<16x32xf32> -> vector<16x64xf32>
    %c0_39 = arith.constant 0 : index
    %c0_40 = arith.constant 0 : index
    %149 = vector.load %arg5[%c0_39, %c0_40] : memref<64x160xf32, #tpu.memory_space<vmem>>, vector<64x160xf32>
    %cst_41 = arith.constant dense<0.000000e+00> : vector<16x160xf32>
    %150 = tpu.matmul %148, %149, %cst_41 {dimension_numbers = #tpu.dot_dimension_numbers<[1], [0], [0], [1], [0, 0, 1, 1], [], []>} : vector<16x64xf32>, vector<64x160xf32>, vector<16x160xf32> -> vector<16x160xf32>
    %cst_42 = arith.constant 0.000000e+00 : f32
    %151 = vector.broadcast %cst_42 : f32 to vector<16x32xf32>
    %c0_43 = arith.constant 0 : index
    %c0_44 = arith.constant 0 : index
    %152 = vector.load %arg4[%c0_43, %c0_44] : memref<80x16xf32, #tpu.memory_space<vmem>>, vector<16x16xf32>
    %153 = vector.extract_strided_slice %150 {offsets = [0, 0], sizes = [16, 32], strides = [1, 1]} : vector<16x160xf32> to vector<16x32xf32>
    %cst_45 = arith.constant dense<0.000000e+00> : vector<16x32xf32>
    %154 = tpu.matmul %152, %153, %cst_45 {dimension_numbers = #tpu.dot_dimension_numbers<[1], [0], [0], [1], [0, 0, 1, 1], [], []>} : vector<16x16xf32>, vector<16x32xf32>, vector<16x32xf32> -> vector<16x32xf32>
    %155 = arith.addf %151, %154 : vector<16x32xf32>
    %c16 = arith.constant 16 : index
    %c0_46 = arith.constant 0 : index
    %156 = vector.load %arg4[%c16, %c0_46] : memref<80x16xf32, #tpu.memory_space<vmem>>, vector<16x16xf32>
    %157 = vector.extract_strided_slice %150 {offsets = [0, 32], sizes = [16, 32], strides = [1, 1]} : vector<16x160xf32> to vector<16x32xf32>
    %cst_47 = arith.constant dense<0.000000e+00> : vector<16x32xf32>
    %158 = tpu.matmul %156, %157, %cst_47 {dimension_numbers = #tpu.dot_dimension_numbers<[1], [0], [0], [1], [0, 0, 1, 1], [], []>} : vector<16x16xf32>, vector<16x32xf32>, vector<16x32xf32> -> vector<16x32xf32>
    %159 = arith.addf %155, %158 : vector<16x32xf32>
    %c32 = arith.constant 32 : index
    %c0_48 = arith.constant 0 : index
    %160 = vector.load %arg4[%c32, %c0_48] : memref<80x16xf32, #tpu.memory_space<vmem>>, vector<16x16xf32>
    %161 = vector.extract_strided_slice %150 {offsets = [0, 64], sizes = [16, 32], strides = [1, 1]} : vector<16x160xf32> to vector<16x32xf32>
    %cst_49 = arith.constant dense<0.000000e+00> : vector<16x32xf32>
    %162 = tpu.matmul %160, %161, %cst_49 {dimension_numbers = #tpu.dot_dimension_numbers<[1], [0], [0], [1], [0, 0, 1, 1], [], []>} : vector<16x16xf32>, vector<16x32xf32>, vector<16x32xf32> -> vector<16x32xf32>
    %163 = arith.addf %159, %162 : vector<16x32xf32>
    %c48 = arith.constant 48 : index
    %c0_50 = arith.constant 0 : index
    %164 = vector.load %arg4[%c48, %c0_50] : memref<80x16xf32, #tpu.memory_space<vmem>>, vector<16x16xf32>
    %165 = vector.extract_strided_slice %150 {offsets = [0, 96], sizes = [16, 32], strides = [1, 1]} : vector<16x160xf32> to vector<16x32xf32>
    %cst_51 = arith.constant dense<0.000000e+00> : vector<16x32xf32>
    %166 = tpu.matmul %164, %165, %cst_51 {dimension_numbers = #tpu.dot_dimension_numbers<[1], [0], [0], [1], [0, 0, 1, 1], [], []>} : vector<16x16xf32>, vector<16x32xf32>, vector<16x32xf32> -> vector<16x32xf32>
    %167 = arith.addf %163, %166 : vector<16x32xf32>
    %c64 = arith.constant 64 : index
    %c0_52 = arith.constant 0 : index
    %168 = vector.load %arg4[%c64, %c0_52] : memref<80x16xf32, #tpu.memory_space<vmem>>, vector<16x16xf32>
    %169 = vector.extract_strided_slice %150 {offsets = [0, 128], sizes = [16, 32], strides = [1, 1]} : vector<16x160xf32> to vector<16x32xf32>
    %cst_53 = arith.constant dense<0.000000e+00> : vector<16x32xf32>
    %170 = tpu.matmul %168, %169, %cst_53 {dimension_numbers = #tpu.dot_dimension_numbers<[1], [0], [0], [1], [0, 0, 1, 1], [], []>} : vector<16x16xf32>, vector<16x32xf32>, vector<16x32xf32> -> vector<16x32xf32>
    %171 = arith.addf %167, %170 : vector<16x32xf32>
    %c16_54 = arith.constant 16 : index
    %172 = memref.load %arg26[%c16_54] : memref<17xf32, #tpu.memory_space<smem>>
    %173 = vector.broadcast %172 : f32 to vector<16x32xf32>
    %174 = arith.addf %171, %173 : vector<16x32xf32>
    %cst_55 = arith.constant 0.000000e+00 : f32
    %175 = vector.broadcast %cst_55 : f32 to vector<16x32xf32>
    %176 = arith.subf %175, %174 : vector<16x32xf32>
    %177 = math.exp %176 : vector<16x32xf32>
    %cst_56 = arith.constant 1.000000e+00 : f32
    %178 = vector.broadcast %cst_56 : f32 to vector<16x32xf32>
    %179 = arith.addf %178, %177 : vector<16x32xf32>
    %cst_57 = arith.constant 1.000000e+00 : f32
    %180 = vector.broadcast %cst_57 : f32 to vector<16x32xf32>
    %181 = arith.divf %180, %179 : vector<16x32xf32>
    %c12 = arith.constant 12 : index
    %182 = memref.load %arg26[%c12] : memref<17xf32, #tpu.memory_space<smem>>
    %183 = vector.broadcast %182 : f32 to vector<16x32xf32>
    %184 = arith.mulf %105, %183 : vector<16x32xf32>
    %c13 = arith.constant 13 : index
    %185 = memref.load %arg26[%c13] : memref<17xf32, #tpu.memory_space<smem>>
    %186 = vector.broadcast %185 : f32 to vector<16x32xf32>
    %187 = arith.mulf %123, %186 : vector<16x32xf32>
    %188 = arith.addf %184, %187 : vector<16x32xf32>
    %c14 = arith.constant 14 : index
    %189 = memref.load %arg26[%c14] : memref<17xf32, #tpu.memory_space<smem>>
    %190 = vector.broadcast %189 : f32 to vector<16x32xf32>
    %191 = arith.mulf %141, %190 : vector<16x32xf32>
    %192 = arith.addf %188, %191 : vector<16x32xf32>
    %193 = arith.mulf %192, %181 : vector<16x32xf32>
    %c15 = arith.constant 15 : index
    %194 = memref.load %arg26[%c15] : memref<17xf32, #tpu.memory_space<smem>>
    %195 = vector.broadcast %194 : f32 to vector<16x32xf32>
    %196 = arith.addf %193, %195 : vector<16x32xf32>
    %c0_58 = arith.constant 0 : index
    %c0_59 = arith.constant 0 : index
    %c0_60 = arith.constant 0 : index
    %197 = vector.load %arg6[%c0_58, %c0_59, %c0_60] : memref<1x64x64xf32, #tpu.memory_space<vmem>>, vector<1x64x64xf32>
    %198 = vector.shape_cast %197 : vector<1x64x64xf32> to vector<64x64xf32>
    %199 = vector.extract_strided_slice %198 {offsets = [0, 0], sizes = [64, 32], strides = [1, 1]} : vector<64x64xf32> to vector<64x32xf32>
    %200 = vector.extract_strided_slice %198 {offsets = [0, 32], sizes = [64, 32], strides = [1, 1]} : vector<64x64xf32> to vector<64x32xf32>
    %c16_i32 = arith.constant 16 : i32
    %201 = vector.broadcast %c16_i32 : i32 to vector<1x32xi32>
    %202 = arith.cmpi slt, %3, %201 : vector<1x32xi32>
    %203 = arith.extui %202 : vector<1x32xi1> to vector<1x32xi32>
    %204 = arith.sitofp %203 : vector<1x32xi32> to vector<1x32xf32>
    %cst_61 = arith.constant 1.000000e+00 : f32
    %205 = vector.broadcast %cst_61 : f32 to vector<1x32xf32>
    %206 = arith.subf %205, %204 : vector<1x32xf32>
    %207 = vector.broadcast %204 : vector<1x32xf32> to vector<64x32xf32>
    %208 = arith.mulf %199, %207 : vector<64x32xf32>
    %209 = vector.broadcast %206 : vector<1x32xf32> to vector<64x32xf32>
    %210 = arith.mulf %199, %209 : vector<64x32xf32>
    %211 = tpu.concatenate %208, %210 in 0 : vector<64x32xf32>, vector<64x32xf32> -> vector<128x32xf32>
    %212 = vector.broadcast %204 : vector<1x32xf32> to vector<64x32xf32>
    %213 = arith.mulf %200, %212 : vector<64x32xf32>
    %214 = vector.broadcast %206 : vector<1x32xf32> to vector<64x32xf32>
    %215 = arith.mulf %200, %214 : vector<64x32xf32>
    %216 = tpu.concatenate %213, %215 in 0 : vector<64x32xf32>, vector<64x32xf32> -> vector<128x32xf32>
    %c0_62 = arith.constant 0 : index
    %c0_63 = arith.constant 0 : index
    %c0_64 = arith.constant 0 : index
    %217 = vector.load %arg7[%c0_62, %c0_63, %c0_64] : memref<1x1x64xf32, #tpu.memory_space<vmem>>, vector<1x1x64xf32>
    %218 = vector.shape_cast %217 : vector<1x1x64xf32> to vector<1x64xf32>
    %cst_65 = arith.constant 0.000000e+00 : f32
    %219 = vector.broadcast %cst_65 : f32 to vector<1x64xf32>
    %220 = arith.cmpf ogt, %218, %219 : vector<1x64xf32>
    %cst_66 = arith.constant 0.000000e+00 : f32
    %cst_67 = arith.constant -1.000000e+09 : f32
    %221 = vector.broadcast %cst_66 : f32 to vector<1x64xf32>
    %222 = vector.broadcast %cst_67 : f32 to vector<1x64xf32>
    %223 = arith.select %220, %221, %222 : vector<1x64xi1>, vector<1x64xf32>
    %224 = tpu.concatenate %223, %223 in 1 : vector<1x64xf32>, vector<1x64xf32> -> vector<1x128xf32>
    %c0_68 = arith.constant 0 : index
    %c0_69 = arith.constant 0 : index
    %225 = vector.load %arg9[%c0_68, %c0_69] : memref<32x32xf32, #tpu.memory_space<vmem>>, vector<32x32xf32>
    %cst_70 = arith.constant dense<0.000000e+00> : vector<16x32xf32>
    %226 = tpu.matmul %1, %225, %cst_70 {dimension_numbers = #tpu.dot_dimension_numbers<[1], [0], [0], [1], [0, 0, 1, 1], [], []>} : vector<16x32xf32>, vector<32x32xf32>, vector<16x32xf32> -> vector<16x32xf32>
    %cst_71 = arith.constant dense<0.000000e+00> : vector<16x128xf32>
    %227 = tpu.matmul %226, %211, %cst_71 {dimension_numbers = #tpu.dot_dimension_numbers<[1], [1], [0], [0], [0, 0, 1, 0], [], []>} : vector<16x32xf32>, vector<128x32xf32>, vector<16x128xf32> -> vector<16x128xf32>
    %cst_72 = arith.constant 2.500000e-01 : f32
    %228 = vector.broadcast %cst_72 : f32 to vector<16x128xf32>
    %229 = arith.mulf %227, %228 : vector<16x128xf32>
    %230 = vector.broadcast %224 : vector<1x128xf32> to vector<16x128xf32>
    %231 = arith.addf %229, %230 : vector<16x128xf32>
    %232 = tpu.iota {dimensions = array<i32: 1>} : vector<1x128xi32>
    %c64_i32 = arith.constant 64 : i32
    %233 = vector.broadcast %c64_i32 : i32 to vector<1x128xi32>
    %234 = arith.cmpi slt, %232, %233 : vector<1x128xi32>
    %cst_73 = arith.constant -1.000000e+30 : f32
    %235 = vector.shape_cast %234 : vector<1x128xi1> to vector<1x128xi1>
    %236 = vector.broadcast %235 : vector<1x128xi1> to vector<16x128xi1>
    %237 = vector.broadcast %cst_73 : f32 to vector<16x128xf32>
    %238 = arith.select %236, %231, %237 : vector<16x128xi1>, vector<16x128xf32>
    %cst_74 = arith.constant dense<0xFF800000> : vector<16xf32>
    %239 = vector.multi_reduction <maximumf>, %238, %cst_74 [1] : vector<16x128xf32> to vector<16xf32>
    %240 = vector.shape_cast %239 : vector<16xf32> to vector<16x1xf32>
    %cst_75 = arith.constant -1.000000e+30 : f32
    %241 = vector.shape_cast %234 : vector<1x128xi1> to vector<1x128xi1>
    %242 = vector.broadcast %241 : vector<1x128xi1> to vector<16x128xi1>
    %243 = vector.broadcast %cst_75 : f32 to vector<16x128xf32>
    %244 = arith.select %242, %243, %231 : vector<16x128xi1>, vector<16x128xf32>
    %cst_76 = arith.constant dense<0xFF800000> : vector<16xf32>
    %245 = vector.multi_reduction <maximumf>, %244, %cst_76 [1] : vector<16x128xf32> to vector<16xf32>
    %246 = vector.shape_cast %245 : vector<16xf32> to vector<16x1xf32>
    %247 = vector.shape_cast %234 : vector<1x128xi1> to vector<1x128xi1>
    %248 = vector.broadcast %247 : vector<1x128xi1> to vector<16x128xi1>
    %249 = vector.shape_cast %240 : vector<16x1xf32> to vector<16x1xf32>
    %250 = vector.broadcast %249 : vector<16x1xf32> to vector<16x128xf32>
    %251 = vector.shape_cast %246 : vector<16x1xf32> to vector<16x1xf32>
    %252 = vector.broadcast %251 : vector<16x1xf32> to vector<16x128xf32>
    %253 = arith.select %248, %250, %252 : vector<16x128xi1>, vector<16x128xf32>
    %254 = arith.subf %231, %253 : vector<16x128xf32>
    %255 = math.exp %254 : vector<16x128xf32>
    %cst_77 = arith.constant 0.000000e+00 : f32
    %256 = vector.shape_cast %234 : vector<1x128xi1> to vector<1x128xi1>
    %257 = vector.broadcast %256 : vector<1x128xi1> to vector<16x128xi1>
    %258 = vector.broadcast %cst_77 : f32 to vector<16x128xf32>
    %259 = arith.select %257, %255, %258 : vector<16x128xi1>, vector<16x128xf32>
    %cst_78 = arith.constant dense<0.000000e+00> : vector<16xf32>
    %260 = vector.multi_reduction <add>, %259, %cst_78 [1] : vector<16x128xf32> to vector<16xf32>
    %261 = vector.shape_cast %260 : vector<16xf32> to vector<16x1xf32>
    %cst_79 = arith.constant 0.000000e+00 : f32
    %262 = vector.shape_cast %234 : vector<1x128xi1> to vector<1x128xi1>
    %263 = vector.broadcast %262 : vector<1x128xi1> to vector<16x128xi1>
    %264 = vector.broadcast %cst_79 : f32 to vector<16x128xf32>
    %265 = arith.select %263, %264, %255 : vector<16x128xi1>, vector<16x128xf32>
    %cst_80 = arith.constant dense<0.000000e+00> : vector<16xf32>
    %266 = vector.multi_reduction <add>, %265, %cst_80 [1] : vector<16x128xf32> to vector<16xf32>
    %267 = vector.shape_cast %266 : vector<16xf32> to vector<16x1xf32>
    %268 = vector.shape_cast %234 : vector<1x128xi1> to vector<1x128xi1>
    %269 = vector.broadcast %268 : vector<1x128xi1> to vector<16x128xi1>
    %270 = vector.shape_cast %261 : vector<16x1xf32> to vector<16x1xf32>
    %271 = vector.broadcast %270 : vector<16x1xf32> to vector<16x128xf32>
    %272 = vector.shape_cast %267 : vector<16x1xf32> to vector<16x1xf32>
    %273 = vector.broadcast %272 : vector<16x1xf32> to vector<16x128xf32>
    %274 = arith.select %269, %271, %273 : vector<16x128xi1>, vector<16x128xf32>
    %275 = arith.divf %255, %274 : vector<16x128xf32>
    %cst_81 = arith.constant dense<0.000000e+00> : vector<16x32xf32>
    %276 = tpu.matmul %275, %216, %cst_81 {dimension_numbers = #tpu.dot_dimension_numbers<[1], [0], [0], [1], [0, 0, 1, 1], [], []>} : vector<16x128xf32>, vector<128x32xf32>, vector<16x32xf32> -> vector<16x32xf32>
    %c0_82 = arith.constant 0 : index
    %c0_83 = arith.constant 0 : index
    %277 = vector.load %arg10[%c0_82, %c0_83] : memref<32x32xf32, #tpu.memory_space<vmem>>, vector<32x32xf32>
    %cst_84 = arith.constant dense<0.000000e+00> : vector<16x32xf32>
    %278 = tpu.matmul %276, %277, %cst_84 {dimension_numbers = #tpu.dot_dimension_numbers<[1], [0], [0], [1], [0, 0, 1, 1], [], []>} : vector<16x32xf32>, vector<32x32xf32>, vector<16x32xf32> -> vector<16x32xf32>
    %279 = arith.addf %1, %278 : vector<16x32xf32>
    %c0_85 = arith.constant 0 : index
    %c0_86 = arith.constant 0 : index
    %280 = vector.load %arg11[%c0_85, %c0_86] : memref<1x32xf32, #tpu.memory_space<vmem>>, vector<1x32xf32>
    %c0_87 = arith.constant 0 : index
    %c0_88 = arith.constant 0 : index
    %281 = vector.load %arg12[%c0_87, %c0_88] : memref<1x32xf32, #tpu.memory_space<vmem>>, vector<1x32xf32>
    %cst_89 = arith.constant dense<0.000000e+00> : vector<16xf32>
    %282 = vector.multi_reduction <add>, %279, %cst_89 [1] : vector<16x32xf32> to vector<16xf32>
    %283 = vector.shape_cast %282 : vector<16xf32> to vector<16x1xf32>
    %cst_90 = arith.constant 3.200000e+01 : f32
    %284 = vector.broadcast %cst_90 : f32 to vector<16x1xf32>
    %285 = arith.divf %283, %284 : vector<16x1xf32>
    %286 = vector.broadcast %285 : vector<16x1xf32> to vector<16x32xf32>
    %287 = arith.subf %279, %286 : vector<16x32xf32>
    %288 = arith.mulf %287, %287 : vector<16x32xf32>
    %cst_91 = arith.constant dense<0.000000e+00> : vector<16xf32>
    %289 = vector.multi_reduction <add>, %288, %cst_91 [1] : vector<16x32xf32> to vector<16xf32>
    %290 = vector.shape_cast %289 : vector<16xf32> to vector<16x1xf32>
    %cst_92 = arith.constant 3.200000e+01 : f32
    %291 = vector.broadcast %cst_92 : f32 to vector<16x1xf32>
    %292 = arith.divf %290, %291 : vector<16x1xf32>
    %293 = vector.broadcast %285 : vector<16x1xf32> to vector<16x32xf32>
    %294 = arith.subf %279, %293 : vector<16x32xf32>
    %cst_93 = arith.constant 9.99999996E-13 : f32
    %295 = vector.broadcast %cst_93 : f32 to vector<16x1xf32>
    %296 = arith.addf %292, %295 : vector<16x1xf32>
    %297 = math.sqrt %296 : vector<16x1xf32>
    %298 = vector.broadcast %297 : vector<16x1xf32> to vector<16x32xf32>
    %299 = arith.divf %294, %298 : vector<16x32xf32>
    %300 = vector.broadcast %280 : vector<1x32xf32> to vector<16x32xf32>
    %301 = arith.mulf %300, %299 : vector<16x32xf32>
    %302 = vector.broadcast %281 : vector<1x32xf32> to vector<16x32xf32>
    %303 = arith.addf %301, %302 : vector<16x32xf32>
    %cst_94 = arith.constant dense<0xFF800000> : vector<32xf32>
    %304 = vector.multi_reduction <maximumf>, %303, %cst_94 [0] : vector<16x32xf32> to vector<32xf32>
    %305 = vector.shape_cast %304 : vector<32xf32> to vector<1x32xf32>
    %c0_95 = arith.constant 0 : index
    %c0_96 = arith.constant 0 : index
    %306 = vector.load %arg17[%c0_95, %c0_96] : memref<1x32xf32, #tpu.memory_space<vmem>>, vector<1x32xf32>
    %c0_97 = arith.constant 0 : index
    %c0_98 = arith.constant 0 : index
    %307 = vector.load %arg18[%c0_97, %c0_98] : memref<1x32xf32, #tpu.memory_space<vmem>>, vector<1x32xf32>
    %cst_99 = arith.constant dense<0.000000e+00> : vector<1xf32>
    %308 = vector.multi_reduction <add>, %305, %cst_99 [1] : vector<1x32xf32> to vector<1xf32>
    %309 = vector.shape_cast %308 : vector<1xf32> to vector<1x1xf32>
    %cst_100 = arith.constant 3.200000e+01 : f32
    %310 = vector.broadcast %cst_100 : f32 to vector<1x1xf32>
    %311 = arith.divf %309, %310 : vector<1x1xf32>
    %312 = vector.broadcast %311 : vector<1x1xf32> to vector<1x32xf32>
    %313 = arith.subf %305, %312 : vector<1x32xf32>
    %314 = arith.mulf %313, %313 : vector<1x32xf32>
    %cst_101 = arith.constant dense<0.000000e+00> : vector<1xf32>
    %315 = vector.multi_reduction <add>, %314, %cst_101 [1] : vector<1x32xf32> to vector<1xf32>
    %316 = vector.shape_cast %315 : vector<1xf32> to vector<1x1xf32>
    %cst_102 = arith.constant 3.200000e+01 : f32
    %317 = vector.broadcast %cst_102 : f32 to vector<1x1xf32>
    %318 = arith.divf %316, %317 : vector<1x1xf32>
    %319 = vector.broadcast %311 : vector<1x1xf32> to vector<1x32xf32>
    %320 = arith.subf %305, %319 : vector<1x32xf32>
    %cst_103 = arith.constant 9.99999974E-6 : f32
    %321 = vector.broadcast %cst_103 : f32 to vector<1x1xf32>
    %322 = arith.addf %318, %321 : vector<1x1xf32>
    %323 = math.sqrt %322 : vector<1x1xf32>
    %324 = vector.broadcast %323 : vector<1x1xf32> to vector<1x32xf32>
    %325 = arith.divf %320, %324 : vector<1x32xf32>
    %326 = arith.mulf %306, %325 : vector<1x32xf32>
    %327 = arith.addf %326, %307 : vector<1x32xf32>
    %c0_104 = arith.constant 0 : index
    %c0_105 = arith.constant 0 : index
    %328 = vector.load %arg13[%c0_104, %c0_105] : memref<32x32xf32, #tpu.memory_space<vmem>>, vector<32x32xf32>
    %cst_106 = arith.constant dense<0.000000e+00> : vector<16x32xf32>
    %329 = tpu.matmul %196, %328, %cst_106 {dimension_numbers = #tpu.dot_dimension_numbers<[1], [0], [0], [1], [0, 0, 1, 1], [], []>} : vector<16x32xf32>, vector<32x32xf32>, vector<16x32xf32> -> vector<16x32xf32>
    %cst_107 = arith.constant dense<0.000000e+00> : vector<16x128xf32>
    %330 = tpu.matmul %329, %211, %cst_107 {dimension_numbers = #tpu.dot_dimension_numbers<[1], [1], [0], [0], [0, 0, 1, 0], [], []>} : vector<16x32xf32>, vector<128x32xf32>, vector<16x128xf32> -> vector<16x128xf32>
    %cst_108 = arith.constant 2.500000e-01 : f32
    %331 = vector.broadcast %cst_108 : f32 to vector<16x128xf32>
    %332 = arith.mulf %330, %331 : vector<16x128xf32>
    %333 = vector.broadcast %224 : vector<1x128xf32> to vector<16x128xf32>
    %334 = arith.addf %332, %333 : vector<16x128xf32>
    %335 = tpu.iota {dimensions = array<i32: 1>} : vector<1x128xi32>
    %c64_i32_109 = arith.constant 64 : i32
    %336 = vector.broadcast %c64_i32_109 : i32 to vector<1x128xi32>
    %337 = arith.cmpi slt, %335, %336 : vector<1x128xi32>
    %cst_110 = arith.constant -1.000000e+30 : f32
    %338 = vector.shape_cast %337 : vector<1x128xi1> to vector<1x128xi1>
    %339 = vector.broadcast %338 : vector<1x128xi1> to vector<16x128xi1>
    %340 = vector.broadcast %cst_110 : f32 to vector<16x128xf32>
    %341 = arith.select %339, %334, %340 : vector<16x128xi1>, vector<16x128xf32>
    %cst_111 = arith.constant dense<0xFF800000> : vector<16xf32>
    %342 = vector.multi_reduction <maximumf>, %341, %cst_111 [1] : vector<16x128xf32> to vector<16xf32>
    %343 = vector.shape_cast %342 : vector<16xf32> to vector<16x1xf32>
    %cst_112 = arith.constant -1.000000e+30 : f32
    %344 = vector.shape_cast %337 : vector<1x128xi1> to vector<1x128xi1>
    %345 = vector.broadcast %344 : vector<1x128xi1> to vector<16x128xi1>
    %346 = vector.broadcast %cst_112 : f32 to vector<16x128xf32>
    %347 = arith.select %345, %346, %334 : vector<16x128xi1>, vector<16x128xf32>
    %cst_113 = arith.constant dense<0xFF800000> : vector<16xf32>
    %348 = vector.multi_reduction <maximumf>, %347, %cst_113 [1] : vector<16x128xf32> to vector<16xf32>
    %349 = vector.shape_cast %348 : vector<16xf32> to vector<16x1xf32>
    %350 = vector.shape_cast %337 : vector<1x128xi1> to vector<1x128xi1>
    %351 = vector.broadcast %350 : vector<1x128xi1> to vector<16x128xi1>
    %352 = vector.shape_cast %343 : vector<16x1xf32> to vector<16x1xf32>
    %353 = vector.broadcast %352 : vector<16x1xf32> to vector<16x128xf32>
    %354 = vector.shape_cast %349 : vector<16x1xf32> to vector<16x1xf32>
    %355 = vector.broadcast %354 : vector<16x1xf32> to vector<16x128xf32>
    %356 = arith.select %351, %353, %355 : vector<16x128xi1>, vector<16x128xf32>
    %357 = arith.subf %334, %356 : vector<16x128xf32>
    %358 = math.exp %357 : vector<16x128xf32>
    %cst_114 = arith.constant 0.000000e+00 : f32
    %359 = vector.shape_cast %337 : vector<1x128xi1> to vector<1x128xi1>
    %360 = vector.broadcast %359 : vector<1x128xi1> to vector<16x128xi1>
    %361 = vector.broadcast %cst_114 : f32 to vector<16x128xf32>
    %362 = arith.select %360, %358, %361 : vector<16x128xi1>, vector<16x128xf32>
    %cst_115 = arith.constant dense<0.000000e+00> : vector<16xf32>
    %363 = vector.multi_reduction <add>, %362, %cst_115 [1] : vector<16x128xf32> to vector<16xf32>
    %364 = vector.shape_cast %363 : vector<16xf32> to vector<16x1xf32>
    %cst_116 = arith.constant 0.000000e+00 : f32
    %365 = vector.shape_cast %337 : vector<1x128xi1> to vector<1x128xi1>
    %366 = vector.broadcast %365 : vector<1x128xi1> to vector<16x128xi1>
    %367 = vector.broadcast %cst_116 : f32 to vector<16x128xf32>
    %368 = arith.select %366, %367, %358 : vector<16x128xi1>, vector<16x128xf32>
    %cst_117 = arith.constant dense<0.000000e+00> : vector<16xf32>
    %369 = vector.multi_reduction <add>, %368, %cst_117 [1] : vector<16x128xf32> to vector<16xf32>
    %370 = vector.shape_cast %369 : vector<16xf32> to vector<16x1xf32>
    %371 = vector.shape_cast %337 : vector<1x128xi1> to vector<1x128xi1>
    %372 = vector.broadcast %371 : vector<1x128xi1> to vector<16x128xi1>
    %373 = vector.shape_cast %364 : vector<16x1xf32> to vector<16x1xf32>
    %374 = vector.broadcast %373 : vector<16x1xf32> to vector<16x128xf32>
    %375 = vector.shape_cast %370 : vector<16x1xf32> to vector<16x1xf32>
    %376 = vector.broadcast %375 : vector<16x1xf32> to vector<16x128xf32>
    %377 = arith.select %372, %374, %376 : vector<16x128xi1>, vector<16x128xf32>
    %378 = arith.divf %358, %377 : vector<16x128xf32>
    %cst_118 = arith.constant dense<0.000000e+00> : vector<16x32xf32>
    %379 = tpu.matmul %378, %216, %cst_118 {dimension_numbers = #tpu.dot_dimension_numbers<[1], [0], [0], [1], [0, 0, 1, 1], [], []>} : vector<16x128xf32>, vector<128x32xf32>, vector<16x32xf32> -> vector<16x32xf32>
    %c0_119 = arith.constant 0 : index
    %c0_120 = arith.constant 0 : index
    %380 = vector.load %arg14[%c0_119, %c0_120] : memref<32x32xf32, #tpu.memory_space<vmem>>, vector<32x32xf32>
    %cst_121 = arith.constant dense<0.000000e+00> : vector<16x32xf32>
    %381 = tpu.matmul %379, %380, %cst_121 {dimension_numbers = #tpu.dot_dimension_numbers<[1], [0], [0], [1], [0, 0, 1, 1], [], []>} : vector<16x32xf32>, vector<32x32xf32>, vector<16x32xf32> -> vector<16x32xf32>
    %382 = arith.addf %196, %381 : vector<16x32xf32>
    %c0_122 = arith.constant 0 : index
    %c0_123 = arith.constant 0 : index
    %383 = vector.load %arg15[%c0_122, %c0_123] : memref<1x32xf32, #tpu.memory_space<vmem>>, vector<1x32xf32>
    %c0_124 = arith.constant 0 : index
    %c0_125 = arith.constant 0 : index
    %384 = vector.load %arg16[%c0_124, %c0_125] : memref<1x32xf32, #tpu.memory_space<vmem>>, vector<1x32xf32>
    %cst_126 = arith.constant dense<0.000000e+00> : vector<16xf32>
    %385 = vector.multi_reduction <add>, %382, %cst_126 [1] : vector<16x32xf32> to vector<16xf32>
    %386 = vector.shape_cast %385 : vector<16xf32> to vector<16x1xf32>
    %cst_127 = arith.constant 3.200000e+01 : f32
    %387 = vector.broadcast %cst_127 : f32 to vector<16x1xf32>
    %388 = arith.divf %386, %387 : vector<16x1xf32>
    %389 = vector.broadcast %388 : vector<16x1xf32> to vector<16x32xf32>
    %390 = arith.subf %382, %389 : vector<16x32xf32>
    %391 = arith.mulf %390, %390 : vector<16x32xf32>
    %cst_128 = arith.constant dense<0.000000e+00> : vector<16xf32>
    %392 = vector.multi_reduction <add>, %391, %cst_128 [1] : vector<16x32xf32> to vector<16xf32>
    %393 = vector.shape_cast %392 : vector<16xf32> to vector<16x1xf32>
    %cst_129 = arith.constant 3.200000e+01 : f32
    %394 = vector.broadcast %cst_129 : f32 to vector<16x1xf32>
    %395 = arith.divf %393, %394 : vector<16x1xf32>
    %396 = vector.broadcast %388 : vector<16x1xf32> to vector<16x32xf32>
    %397 = arith.subf %382, %396 : vector<16x32xf32>
    %cst_130 = arith.constant 9.99999996E-13 : f32
    %398 = vector.broadcast %cst_130 : f32 to vector<16x1xf32>
    %399 = arith.addf %395, %398 : vector<16x1xf32>
    %400 = math.sqrt %399 : vector<16x1xf32>
    %401 = vector.broadcast %400 : vector<16x1xf32> to vector<16x32xf32>
    %402 = arith.divf %397, %401 : vector<16x32xf32>
    %403 = vector.broadcast %383 : vector<1x32xf32> to vector<16x32xf32>
    %404 = arith.mulf %403, %402 : vector<16x32xf32>
    %405 = vector.broadcast %384 : vector<1x32xf32> to vector<16x32xf32>
    %406 = arith.addf %404, %405 : vector<16x32xf32>
    %cst_131 = arith.constant dense<0xFF800000> : vector<32xf32>
    %407 = vector.multi_reduction <maximumf>, %406, %cst_131 [0] : vector<16x32xf32> to vector<32xf32>
    %408 = vector.shape_cast %407 : vector<32xf32> to vector<1x32xf32>
    %c0_132 = arith.constant 0 : index
    %c0_133 = arith.constant 0 : index
    %409 = vector.load %arg17[%c0_132, %c0_133] : memref<1x32xf32, #tpu.memory_space<vmem>>, vector<1x32xf32>
    %c0_134 = arith.constant 0 : index
    %c0_135 = arith.constant 0 : index
    %410 = vector.load %arg18[%c0_134, %c0_135] : memref<1x32xf32, #tpu.memory_space<vmem>>, vector<1x32xf32>
    %cst_136 = arith.constant dense<0.000000e+00> : vector<1xf32>
    %411 = vector.multi_reduction <add>, %408, %cst_136 [1] : vector<1x32xf32> to vector<1xf32>
    %412 = vector.shape_cast %411 : vector<1xf32> to vector<1x1xf32>
    %cst_137 = arith.constant 3.200000e+01 : f32
    %413 = vector.broadcast %cst_137 : f32 to vector<1x1xf32>
    %414 = arith.divf %412, %413 : vector<1x1xf32>
    %415 = vector.broadcast %414 : vector<1x1xf32> to vector<1x32xf32>
    %416 = arith.subf %408, %415 : vector<1x32xf32>
    %417 = arith.mulf %416, %416 : vector<1x32xf32>
    %cst_138 = arith.constant dense<0.000000e+00> : vector<1xf32>
    %418 = vector.multi_reduction <add>, %417, %cst_138 [1] : vector<1x32xf32> to vector<1xf32>
    %419 = vector.shape_cast %418 : vector<1xf32> to vector<1x1xf32>
    %cst_139 = arith.constant 3.200000e+01 : f32
    %420 = vector.broadcast %cst_139 : f32 to vector<1x1xf32>
    %421 = arith.divf %419, %420 : vector<1x1xf32>
    %422 = vector.broadcast %414 : vector<1x1xf32> to vector<1x32xf32>
    %423 = arith.subf %408, %422 : vector<1x32xf32>
    %cst_140 = arith.constant 9.99999974E-6 : f32
    %424 = vector.broadcast %cst_140 : f32 to vector<1x1xf32>
    %425 = arith.addf %421, %424 : vector<1x1xf32>
    %426 = math.sqrt %425 : vector<1x1xf32>
    %427 = vector.broadcast %426 : vector<1x1xf32> to vector<1x32xf32>
    %428 = arith.divf %423, %427 : vector<1x32xf32>
    %429 = arith.mulf %409, %428 : vector<1x32xf32>
    %430 = arith.addf %429, %410 : vector<1x32xf32>
    %431 = arith.addf %327, %430 : vector<1x32xf32>
    %c0_141 = arith.constant 0 : index
    %c0_142 = arith.constant 0 : index
    %c0_143 = arith.constant 0 : index
    %432 = vector.load %arg8[%c0_141, %c0_142, %c0_143] : memref<1x1x32xf32, #tpu.memory_space<vmem>>, vector<1x1x32xf32>
    %433 = vector.shape_cast %432 : vector<1x1x32xf32> to vector<1x32xf32>
    %c0_144 = arith.constant 0 : index
    %c0_145 = arith.constant 0 : index
    %434 = vector.load %arg19[%c0_144, %c0_145] : memref<32x512xf32, #tpu.memory_space<vmem>>, vector<32x512xf32>
    %cst_146 = arith.constant dense<0.000000e+00> : vector<1x512xf32>
    %435 = tpu.matmul %433, %434, %cst_146 {dimension_numbers = #tpu.dot_dimension_numbers<[1], [0], [0], [1], [0, 0, 1, 1], [], []>} : vector<1x32xf32>, vector<32x512xf32>, vector<1x512xf32> -> vector<1x512xf32>
    %c0_147 = arith.constant 0 : index
    %c0_148 = arith.constant 0 : index
    %436 = vector.load %arg20[%c0_147, %c0_148] : memref<32x512xf32, #tpu.memory_space<vmem>>, vector<32x512xf32>
    %cst_149 = arith.constant dense<0.000000e+00> : vector<1x512xf32>
    %437 = tpu.matmul %431, %436, %cst_149 {dimension_numbers = #tpu.dot_dimension_numbers<[1], [0], [0], [1], [0, 0, 1, 1], [], []>} : vector<1x32xf32>, vector<32x512xf32>, vector<1x512xf32> -> vector<1x512xf32>
    %438 = arith.addf %435, %437 : vector<1x512xf32>
    %c0_150 = arith.constant 0 : index
    %c0_151 = arith.constant 0 : index
    %439 = vector.load %arg21[%c0_150, %c0_151] : memref<1x512xf32, #tpu.memory_space<vmem>>, vector<1x512xf32>
    %440 = arith.addf %438, %439 : vector<1x512xf32>
    %cst_152 = arith.constant 0.000000e+00 : f32
    %441 = vector.broadcast %cst_152 : f32 to vector<1x512xf32>
    %442 = arith.maximumf %440, %441 : vector<1x512xf32>
    %c0_153 = arith.constant 0 : index
    %c0_154 = arith.constant 0 : index
    %443 = vector.load %arg22[%c0_153, %c0_154] : memref<512x32xf32, #tpu.memory_space<vmem>>, vector<512x32xf32>
    %cst_155 = arith.constant dense<0.000000e+00> : vector<1x32xf32>
    %444 = tpu.matmul %442, %443, %cst_155 {dimension_numbers = #tpu.dot_dimension_numbers<[1], [0], [0], [1], [0, 0, 1, 1], [], []>} : vector<1x512xf32>, vector<512x32xf32>, vector<1x32xf32> -> vector<1x32xf32>
    %c0_156 = arith.constant 0 : index
    %c0_157 = arith.constant 0 : index
    %445 = vector.load %arg23[%c0_156, %c0_157] : memref<1x32xf32, #tpu.memory_space<vmem>>, vector<1x32xf32>
    %446 = arith.addf %444, %445 : vector<1x32xf32>
    %cst_158 = arith.constant 0.000000e+00 : f32
    %447 = vector.broadcast %cst_158 : f32 to vector<1x32xf32>
    %448 = arith.maximumf %446, %447 : vector<1x32xf32>
    %c0_159 = arith.constant 0 : index
    %c0_160 = arith.constant 0 : index
    %449 = vector.load %arg24[%c0_159, %c0_160] : memref<32x2xf32, #tpu.memory_space<vmem>>, vector<32x2xf32>
    %cst_161 = arith.constant dense<0.000000e+00> : vector<1x2xf32>
    %450 = tpu.matmul %448, %449, %cst_161 {dimension_numbers = #tpu.dot_dimension_numbers<[1], [0], [0], [1], [0, 0, 1, 1], [], []>} : vector<1x32xf32>, vector<32x2xf32>, vector<1x2xf32> -> vector<1x2xf32>
    %c0_162 = arith.constant 0 : index
    %c0_163 = arith.constant 0 : index
    %451 = vector.load %arg25[%c0_162, %c0_163] : memref<1x2xf32, #tpu.memory_space<vmem>>, vector<1x2xf32>
    %452 = arith.addf %450, %451 : vector<1x2xf32>
    %c0_164 = arith.constant 0 : index
    %c0_165 = arith.constant 0 : index
    %c0_166 = arith.constant 0 : index
    %453 = vector.load %arg27[%c0_164, %c0_165, %c0_166] : memref<1x1x2xf32, #tpu.memory_space<vmem>>, vector<1x1x2xf32>
    %454 = vector.shape_cast %453 : vector<1x1x2xf32> to vector<1x2xf32>
    %455 = vector.shape_cast %452 : vector<1x2xf32> to vector<1x1x2xf32>
    tpu.vector_store %arg27[%c0_164, %c0_165, %c0_166], %455 {strides = array<i32>} : memref<1x1x2xf32, #tpu.memory_space<vmem>>, vector<1x1x2xf32>,
    return
  }
  func.func @transform_0(%arg0: i32) -> (i32, i32, i32) {
    %c0_i32 = arith.constant 0 : i32
    %c0_i32_0 = arith.constant 0 : i32
    %c0_i32_1 = arith.constant 0 : i32
    return %arg0, %c0_i32, %c0_i32_0 : i32, i32, i32
  }
  func.func @transform_1(%arg0: i32) -> (i32, i32, i32, i32) {
    %c0_i32 = arith.constant 0 : i32
    %c0_i32_0 = arith.constant 0 : i32
    %c0_i32_1 = arith.constant 0 : i32
    %c0_i32_2 = arith.constant 0 : i32
    return %arg0, %c0_i32, %c0_i32_0, %c0_i32_1 : i32, i32, i32, i32
  }
  func.func @transform_2(%arg0: i32) -> (i32, i32) {
    %c0_i32 = arith.constant 0 : i32
    %c0_i32_0 = arith.constant 0 : i32
    %c0_i32_1 = arith.constant 0 : i32
    return %c0_i32, %c0_i32_0 : i32, i32
  }
  func.func @transform_3(%arg0: i32) -> (i32, i32) {
    %c0_i32 = arith.constant 0 : i32
    %c0_i32_0 = arith.constant 0 : i32
    %c0_i32_1 = arith.constant 0 : i32
    return %c0_i32, %c0_i32_0 : i32, i32
  }
  func.func @transform_4(%arg0: i32) -> (i32, i32) {
    %c0_i32 = arith.constant 0 : i32
    %c0_i32_0 = arith.constant 0 : i32
    %c0_i32_1 = arith.constant 0 : i32
    return %c0_i32, %c0_i32_0 : i32, i32
  }
  func.func @transform_5(%arg0: i32) -> (i32, i32, i32) {
    %c0_i32 = arith.constant 0 : i32
    %c0_i32_0 = arith.constant 0 : i32
    %c0_i32_1 = arith.constant 0 : i32
    return %arg0, %c0_i32, %c0_i32_0 : i32, i32, i32
  }
  func.func @transform_6(%arg0: i32) -> (i32, i32, i32) {
    %c0_i32 = arith.constant 0 : i32
    %c0_i32_0 = arith.constant 0 : i32
    %c0_i32_1 = arith.constant 0 : i32
    return %arg0, %c0_i32, %c0_i32_0 : i32, i32, i32
  }
  func.func @transform_7(%arg0: i32) -> (i32, i32, i32) {
    %c0_i32 = arith.constant 0 : i32
    %c0_i32_0 = arith.constant 0 : i32
    %c0_i32_1 = arith.constant 0 : i32
    return %arg0, %c0_i32, %c0_i32_0 : i32, i32, i32
  }
  func.func @transform_8(%arg0: i32) -> (i32, i32) {
    %c0_i32 = arith.constant 0 : i32
    %c0_i32_0 = arith.constant 0 : i32
    %c0_i32_1 = arith.constant 0 : i32
    return %c0_i32, %c0_i32_0 : i32, i32
  }
  func.func @transform_9(%arg0: i32) -> (i32, i32) {
    %c0_i32 = arith.constant 0 : i32
    %c0_i32_0 = arith.constant 0 : i32
    %c0_i32_1 = arith.constant 0 : i32
    return %c0_i32, %c0_i32_0 : i32, i32
  }
  func.func @transform_10(%arg0: i32) -> (i32, i32) {
    %c0_i32 = arith.constant 0 : i32
    %c0_i32_0 = arith.constant 0 : i32
    %c0_i32_1 = arith.constant 0 : i32
    return %c0_i32, %c0_i32_0 : i32, i32
  }
  func.func @transform_11(%arg0: i32) -> (i32, i32) {
    %c0_i32 = arith.constant 0 : i32
    %c0_i32_0 = arith.constant 0 : i32
    %c0_i32_1 = arith.constant 0 : i32
    return %c0_i32, %c0_i32_0 : i32, i32
  }
  func.func @transform_12(%arg0: i32) -> (i32, i32) {
    %c0_i32 = arith.constant 0 : i32
    %c0_i32_0 = arith.constant 0 : i32
    %c0_i32_1 = arith.constant 0 : i32
    return %c0_i32, %c0_i32_0 : i32, i32
  }
  func.func @transform_13(%arg0: i32) -> (i32, i32) {
    %c0_i32 = arith.constant 0 : i32
    %c0_i32_0 = arith.constant 0 : i32
    %c0_i32_1 = arith.constant 0 : i32
    return %c0_i32, %c0_i32_0 : i32, i32
  }
  func.func @transform_14(%arg0: i32) -> (i32, i32) {
    %c0_i32 = arith.constant 0 : i32
    %c0_i32_0 = arith.constant 0 : i32
    %c0_i32_1 = arith.constant 0 : i32
    return %c0_i32, %c0_i32_0 : i32, i32
  }
  func.func @transform_15(%arg0: i32) -> (i32, i32) {
    %c0_i32 = arith.constant 0 : i32
    %c0_i32_0 = arith.constant 0 : i32
    %c0_i32_1 = arith.constant 0 : i32
    return %c0_i32, %c0_i32_0 : i32, i32
  }
  func.func @transform_16(%arg0: i32) -> (i32, i32) {
    %c0_i32 = arith.constant 0 : i32
    %c0_i32_0 = arith.constant 0 : i32
    %c0_i32_1 = arith.constant 0 : i32
    return %c0_i32, %c0_i32_0 : i32, i32
  }
  func.func @transform_17(%arg0: i32) -> (i32, i32) {
    %c0_i32 = arith.constant 0 : i32
    %c0_i32_0 = arith.constant 0 : i32
    %c0_i32_1 = arith.constant 0 : i32
    return %c0_i32, %c0_i32_0 : i32, i32
  }
  func.func @transform_18(%arg0: i32) -> (i32, i32) {
    %c0_i32 = arith.constant 0 : i32
    %c0_i32_0 = arith.constant 0 : i32
    %c0_i32_1 = arith.constant 0 : i32
    return %c0_i32, %c0_i32_0 : i32, i32
  }
  func.func @transform_19(%arg0: i32) -> (i32, i32) {
    %c0_i32 = arith.constant 0 : i32
    %c0_i32_0 = arith.constant 0 : i32
    %c0_i32_1 = arith.constant 0 : i32
    return %c0_i32, %c0_i32_0 : i32, i32
  }
  func.func @transform_20(%arg0: i32) -> (i32, i32) {
    %c0_i32 = arith.constant 0 : i32
    %c0_i32_0 = arith.constant 0 : i32
    %c0_i32_1 = arith.constant 0 : i32
    return %c0_i32, %c0_i32_0 : i32, i32
  }
  func.func @transform_21(%arg0: i32) -> (i32, i32) {
    %c0_i32 = arith.constant 0 : i32
    %c0_i32_0 = arith.constant 0 : i32
    %c0_i32_1 = arith.constant 0 : i32
    return %c0_i32, %c0_i32_0 : i32, i32
  }
  func.func @transform_22(%arg0: i32) -> (i32, i32) {
    %c0_i32 = arith.constant 0 : i32
    %c0_i32_0 = arith.constant 0 : i32
    %c0_i32_1 = arith.constant 0 : i32
    return %c0_i32, %c0_i32_0 : i32, i32
  }
  func.func @transform_23(%arg0: i32) -> (i32, i32) {
    %c0_i32 = arith.constant 0 : i32
    %c0_i32_0 = arith.constant 0 : i32
    %c0_i32_1 = arith.constant 0 : i32
    return %c0_i32, %c0_i32_0 : i32, i32
  }
  func.func @transform_24(%arg0: i32) -> (i32, i32) {
    %c0_i32 = arith.constant 0 : i32
    %c0_i32_0 = arith.constant 0 : i32
    %c0_i32_1 = arith.constant 0 : i32
    return %c0_i32, %c0_i32_0 : i32, i32
  }
  func.func @transform_25(%arg0: i32) -> i32 {
    %c0_i32 = arith.constant 0 : i32
    %c0_i32_0 = arith.constant 0 : i32
    return %c0_i32 : i32
  }
  func.func @transform_26(%arg0: i32) -> (i32, i32, i32) {
    %c0_i32 = arith.constant 0 : i32
    %c0_i32_0 = arith.constant 0 : i32
    %c0_i32_1 = arith.constant 0 : i32
    return %arg0, %c0_i32, %c0_i32_0 : i32, i32, i32
  }
}

</mosaic_0001>

<llo_original>
// kernel: cmdss_forward.4
$region0: #{cmdss_forward.4}
  #allocation0 [shape = 'u32[]', space=smem, size = 0x4, offset = 0x4, fixed_abs, tag = 'smem constant byte address 0x4 - core index']
  #allocation1 [shape = 'u32[144,128]{1,0:T(1,128)}', space=vmem, size = 0x12000, scoped, tag = 'internal scratch']
  %s0 = inlined_call_operand.vmem [shape: f32[2,16,32], index: 0, kind: input, shape index: {}]
  %s1 = inlined_call_operand.vmem [shape: f32[2,16,16], index: 1, kind: input, shape index: {}]
  %s2 = inlined_call_operand.vmem [shape: s32[2,16,1], index: 2, kind: input, shape index: {}]
  %s3 = inlined_call_operand.vmem [shape: f32[1,32], index: 3, kind: input, shape index: {}]
  %s4 = inlined_call_operand.vmem [shape: f32[1,32], index: 4, kind: input, shape index: {}]
  %s5 = inlined_call_operand.vmem [shape: f32[32,32], index: 5, kind: input, shape index: {}]
  %s6 = inlined_call_operand.vmem [shape: f32[1,32], index: 6, kind: input, shape index: {}]
  %s7 = inlined_call_operand.vmem [shape: f32[1,32], index: 7, kind: input, shape index: {}]
  %s8 = inlined_call_operand.vmem [shape: f32[32,32], index: 8, kind: input, shape index: {}]
  %s9 = inlined_call_operand.vmem [shape: f32[1,32], index: 9, kind: input, shape index: {}]
  %s10 = inlined_call_operand.vmem [shape: f32[1,32], index: 10, kind: input, shape index: {}]
  %s11 = inlined_call_operand.vmem [shape: f32[2,16,32], index: 11, kind: output, shape index: {}]
  %s12 = sld [smem:[#allocation0]]
  $region77: #{cmdss_forward.4} parent=0
    _
  %s14 = ssub.s32 1, %s12
  %s15 = scalar_select 0, %s14, %s12
  loop: start=0, step=1, limit=4
  $region2: #{cmdss_forward.4} parent=0 // loop_pre_header
    _
  $region3: #{cmdss_forward.4} parent=0 // loop_header
    %s17 = sphi 0, %s21
    %p18 = scmp.ge.s32.totalorder %s17, 4
    %s27 = sphi 0, %s29
    %s30 = sphi 0, %s27
    %s31 = sphi 0, %s30
    %s47 = sphi 0, %s31
    %s53 = sphi 0, %s55
    %s56 = sphi 0, %s53
    %s57 = sphi 0, %s56
    %s73 = sphi 0, %s57
    %s79 = sphi 0, %s81
    %s82 = sphi 0, %s79
    %s83 = sphi 0, %s82
    %s99 = sphi 0, %s83
    %s103 = sphi 0, %s103
    %s105 = sphi 0, %s103
    %s106 = sphi 0, %s105
    %s120 = sphi 0, %s106
    %s124 = sphi 0, %s124
    %s126 = sphi 0, %s124
    %s127 = sphi 0, %s126
    %s141 = sphi 0, %s127
    %s145 = sphi 0, %s145
    %s147 = sphi 0, %s145
    %s148 = sphi 0, %s147
    %s162 = sphi 0, %s148
    %s166 = sphi 0, %s166
    %s168 = sphi 0, %s166
    %s169 = sphi 0, %s168
    %s183 = sphi 0, %s169
    %s187 = sphi 0, %s187
    %s189 = sphi 0, %s187
    %s190 = sphi 0, %s189
    %s204 = sphi 0, %s190
    %s208 = sphi 0, %s208
    %s210 = sphi 0, %s208
    %s211 = sphi 0, %s210
    %s225 = sphi 0, %s211
    %s229 = sphi 0, %s229
    %s231 = sphi 0, %s229
    %s232 = sphi 0, %s231
    %s246 = sphi 0, %s232
    %s250 = sphi 0, %s250
    %s252 = sphi 0, %s250
    %s253 = sphi 0, %s252
    %s267 = sphi 0, %s253
    %s273 = sphi 0, %s275
    %s276 = sphi 0, %s273
    %s277 = sphi 0, %s276
    %s293 = sphi 0, %s277
  $region4: #{cmdss_forward.4} parent=0 // loop_header_branch
    %20 = sbr.rel (%p18) target = $region8
  $region5: #{cmdss_forward.4} parent=0 // loop_body
    %s22 = ssub.s32 %s17, 1
    %s23 = ssub.s32 %s17, 2
    %s24 = sadd.s32 %s17, 1
    %s25 = ssub.s32 %s17, %s24
    %p26 = scmp.eq.s32.totalorder %s25, 0
    %s28 = sadd.s32 %s27, 1
    %s29 = scalar_select %p26, %s27, %s28
    %p32 = pneg %p26
    %p33 = scmp.eq.s32.totalorder %s17, 1
    %p34 = por %p32, %p33
    %p35 = scmp.ne.s32.totalorder %s27, %s30
    %p36 = scmp.eq.s32.totalorder %s17, 0
    %p37 = por %p35, %p36
    %p38 = scmp.ne.s32.totalorder %s27, %s30
    %p39 = scmp.eq.s32.totalorder %s22, 1
    %p40 = por %p38, %p39
    %p41 = scmp.ne.s32.totalorder %s30, %s31
    %p42 = scmp.eq.s32.totalorder %s22, 0
    %p43 = por %p41, %p42
    %p44 = scmp.ne.s32.totalorder %s30, %s31
    %p45 = scmp.eq.s32.totalorder %s23, 1
    %p46 = por %p44, %p45
    %p48 = scmp.ne.s32.totalorder %s31, %s47
    %p49 = scmp.eq.s32.totalorder %s23, 0
    %p50 = por %p48, %p49
    %s51 = ssub.s32 %s17, %s24
    %p52 = scmp.eq.s32.totalorder %s51, 0
    %s54 = sadd.s32 %s53, 1
    %s55 = scalar_select %p52, %s53, %s54
    %p58 = pneg %p52
    %p59 = scmp.eq.s32.totalorder %s17, 1
    %p60 = por %p58, %p59
    %p61 = scmp.ne.s32.totalorder %s53, %s56
    %p62 = scmp.eq.s32.totalorder %s17, 0
    %p63 = por %p61, %p62
    %p64 = scmp.ne.s32.totalorder %s53, %s56
    %p65 = scmp.eq.s32.totalorder %s22, 1
    %p66 = por %p64, %p65
    %p67 = scmp.ne.s32.totalorder %s56, %s57
    %p68 = scmp.eq.s32.totalorder %s22, 0
    %p69 = por %p67, %p68
    %p70 = scmp.ne.s32.totalorder %s56, %s57
    %p71 = scmp.eq.s32.totalorder %s23, 1
    %p72 = por %p70, %p71
    %p74 = scmp.ne.s32.totalorder %s57, %s73
    %p75 = scmp.eq.s32.totalorder %s23, 0
    %p76 = por %p74, %p75
    %s77 = ssub.s32 %s17, %s24
    %p78 = scmp.eq.s32.totalorder %s77, 0
    %s80 = sadd.s32 %s79, 1
    %s81 = scalar_select %p78, %s79, %s80
    %p84 = pneg %p78
    %p85 = scmp.eq.s32.totalorder %s17, 1
    %p86 = por %p84, %p85
    %p87 = scmp.ne.s32.totalorder %s79, %s82
    %p88 = scmp.eq.s32.totalorder %s17, 0
    %p89 = por %p87, %p88
    %p90 = scmp.ne.s32.totalorder %s79, %s82
    %p91 = scmp.eq.s32.totalorder %s22, 1
    %p92 = por %p90, %p91
    %p93 = scmp.ne.s32.totalorder %s82, %s83
    %p94 = scmp.eq.s32.totalorder %s22, 0
    %p95 = por %p93, %p94
    %p96 = scmp.ne.s32.totalorder %s82, %s83
    %p97 = scmp.eq.s32.totalorder %s23, 1
    %p98 = por %p96, %p97
    %p100 = scmp.ne.s32.totalorder %s83, %s99
    %p101 = scmp.eq.s32.totalorder %s23, 0
    %p102 = por %p100, %p101
    %s104 = sadd.s32 %s103, 1
    %p107 = scmp.eq.s32.totalorder %s17, 1
    %p108 = scmp.ne.s32.totalorder %s103, %s105
    %p109 = scmp.eq.s32.totalorder %s17, 0
    %p110 = por %p108, %p109
    %p111 = scmp.ne.s32.totalorder %s103, %s105
    %p112 = scmp.eq.s32.totalorder %s22, 1
    %p113 = por %p111, %p112
    %p114 = scmp.ne.s32.totalorder %s105, %s106
    %p115 = scmp.eq.s32.totalorder %s22, 0
    %p116 = por %p114, %p115
    %p117 = scmp.ne.s32.totalorder %s105, %s106
    %p118 = scmp.eq.s32.totalorder %s23, 1
    %p119 = por %p117, %p118
    %p121 = scmp.ne.s32.totalorder %s106, %s120
    %p122 = scmp.eq.s32.totalorder %s23, 0
    %p123 = por %p121, %p122
    %s125 = sadd.s32 %s124, 1
    %p128 = scmp.eq.s32.totalorder %s17, 1
    %p129 = scmp.ne.s32.totalorder %s124, %s126
    %p130 = scmp.eq.s32.totalorder %s17, 0
    %p131 = por %p129, %p130
    %p132 = scmp.ne.s32.totalorder %s124, %s126
    %p133 = scmp.eq.s32.totalorder %s22, 1
    %p134 = por %p132, %p133
    %p135 = scmp.ne.s32.totalorder %s126, %s127
    %p136 = scmp.eq.s32.totalorder %s22, 0
    %p137 = por %p135, %p136
    %p138 = scmp.ne.s32.totalorder %s126, %s127
    %p139 = scmp.eq.s32.totalorder %s23, 1
    %p140 = por %p138, %p139
    %p142 = scmp.ne.s32.totalorder %s127, %s141
    %p143 = scmp.eq.s32.totalorder %s23, 0
    %p144 = por %p142, %p143
    %s146 = sadd.s32 %s145, 1
    %p149 = scmp.eq.s32.totalorder %s17, 1
    %p150 = scmp.ne.s32.totalorder %s145, %s147
    %p151 = scmp.eq.s32.totalorder %s17, 0
    %p152 = por %p150, %p151
    %p153 = scmp.ne.s32.totalorder %s145, %s147
    %p154 = scmp.eq.s32.totalorder %s22, 1
    %p155 = por %p153, %p154
    %p156 = scmp.ne.s32.totalorder %s147, %s148
    %p157 = scmp.eq.s32.totalorder %s22, 0
    %p158 = por %p156, %p157
    %p159 = scmp.ne.s32.totalorder %s147, %s148
    %p160 = scmp.eq.s32.totalorder %s23, 1
    %p161 = por %p159, %p160
    %p163 = scmp.ne.s32.totalorder %s148, %s162
    %p164 = scmp.eq.s32.totalorder %s23, 0
    %p165 = por %p163, %p164
    %s167 = sadd.s32 %s166, 1
    %p170 = scmp.eq.s32.totalorder %s17, 1
    %p171 = scmp.ne.s32.totalorder %s166, %s168
    %p172 = scmp.eq.s32.totalorder %s17, 0
    %p173 = por %p171, %p172
    %p174 = scmp.ne.s32.totalorder %s166, %s168
    %p175 = scmp.eq.s32.totalorder %s22, 1
    %p176 = por %p174, %p175
    %p177 = scmp.ne.s32.totalorder %s168, %s169
    %p178 = scmp.eq.s32.totalorder %s22, 0
    %p179 = por %p177, %p178
    %p180 = scmp.ne.s32.totalorder %s168, %s169
    %p181 = scmp.eq.s32.totalorder %s23, 1
    %p182 = por %p180, %p181
    %p184 = scmp.ne.s32.totalorder %s169, %s183
    %p185 = scmp.eq.s32.totalorder %s23, 0
    %p186 = por %p184, %p185
    %s188 = sadd.s32 %s187, 1
    %p191 = scmp.eq.s32.totalorder %s17, 1
    %p192 = scmp.ne.s32.totalorder %s187, %s189
    %p193 = scmp.eq.s32.totalorder %s17, 0
    %p194 = por %p192, %p193
    %p195 = scmp.ne.s32.totalorder %s187, %s189
    %p196 = scmp.eq.s32.totalorder %s22, 1
    %p197 = por %p195, %p196
    %p198 = scmp.ne.s32.totalorder %s189, %s190
    %p199 = scmp.eq.s32.totalorder %s22, 0
    %p200 = por %p198, %p199
    %p201 = scmp.ne.s32.totalorder %s189, %s190
    %p202 = scmp.eq.s32.totalorder %s23, 1
    %p203 = por %p201, %p202
    %p205 = scmp.ne.s32.totalorder %s190, %s204
    %p206 = scmp.eq.s32.totalorder %s23, 0
    %p207 = por %p205, %p206
    %s209 = sadd.s32 %s208, 1
    %p212 = scmp.eq.s32.totalorder %s17, 1
    %p213 = scmp.ne.s32.totalorder %s208, %s210
    %p214 = scmp.eq.s32.totalorder %s17, 0
    %p215 = por %p213, %p214
    %p216 = scmp.ne.s32.totalorder %s208, %s210
    %p217 = scmp.eq.s32.totalorder %s22, 1
    %p218 = por %p216, %p217
    %p219 = scmp.ne.s32.totalorder %s210, %s211
    %p220 = scmp.eq.s32.totalorder %s22, 0
    %p221 = por %p219, %p220
    %p222 = scmp.ne.s32.totalorder %s210, %s211
    %p223 = scmp.eq.s32.totalorder %s23, 1
    %p224 = por %p222, %p223
    %p226 = scmp.ne.s32.totalorder %s211, %s225
    %p227 = scmp.eq.s32.totalorder %s23, 0
    %p228 = por %p226, %p227
    %s230 = sadd.s32 %s229, 1
    %p233 = scmp.eq.s32.totalorder %s17, 1
    %p234 = scmp.ne.s32.totalorder %s229, %s231
    %p235 = scmp.eq.s32.totalorder %s17, 0
    %p236 = por %p234, %p235
    %p237 = scmp.ne.s32.totalorder %s229, %s231
    %p238 = scmp.eq.s32.totalorder %s22, 1
    %p239 = por %p237, %p238
    %p240 = scmp.ne.s32.totalorder %s231, %s232
    %p241 = scmp.eq.s32.totalorder %s22, 0
    %p242 = por %p240, %p241
    %p243 = scmp.ne.s32.totalorder %s231, %s232
    %p244 = scmp.eq.s32.totalorder %s23, 1
    %p245 = por %p243, %p244
    %p247 = scmp.ne.s32.totalorder %s232, %s246
    %p248 = scmp.eq.s32.totalorder %s23, 0
    %p249 = por %p247, %p248
    %s251 = sadd.s32 %s250, 1
    %p254 = scmp.eq.s32.totalorder %s17, 1
    %p255 = scmp.ne.s32.totalorder %s250, %s252
    %p256 = scmp.eq.s32.totalorder %s17, 0
    %p257 = por %p255, %p256
    %p258 = scmp.ne.s32.totalorder %s250, %s252
    %p259 = scmp.eq.s32.totalorder %s22, 1
    %p260 = por %p258, %p259
    %p261 = scmp.ne.s32.totalorder %s252, %s253
    %p262 = scmp.eq.s32.totalorder %s22, 0
    %p263 = por %p261, %p262
    %p264 = scmp.ne.s32.totalorder %s252, %s253
    %p265 = scmp.eq.s32.totalorder %s23, 1
    %p266 = por %p264, %p265
    %p268 = scmp.ne.s32.totalorder %s253, %s267
    %p269 = scmp.eq.s32.totalorder %s23, 0
    %p270 = por %p268, %p269
    %s271 = ssub.s32 %s17, %s24
    %p272 = scmp.eq.s32.totalorder %s271, 0
    %s274 = sadd.s32 %s273, 1
    %s275 = scalar_select %p272, %s273, %s274
    %p278 = pneg %p272
    %p279 = scmp.eq.s32.totalorder %s17, 1
    %p280 = por %p278, %p279
    %p281 = scmp.ne.s32.totalorder %s273, %s276
    %p282 = scmp.eq.s32.totalorder %s17, 0
    %p283 = por %p281, %p282
    %p284 = scmp.ne.s32.totalorder %s273, %s276
    %p285 = scmp.eq.s32.totalorder %s22, 1
    %p286 = por %p284, %p285
    %p287 = scmp.ne.s32.totalorder %s276, %s277
    %p288 = scmp.eq.s32.totalorder %s22, 0
    %p289 = por %p287, %p288
    %p290 = scmp.ne.s32.totalorder %s276, %s277
    %p291 = scmp.eq.s32.totalorder %s23, 1
    %p292 = por %p290, %p291
    %p294 = scmp.ne.s32.totalorder %s277, %s293
    %p295 = scmp.eq.s32.totalorder %s23, 0
    %p296 = por %p294, %p295
    %p297 = scmp.le.s32.totalorder 1, %s17
    %p298 = scmp.lt.s32.totalorder %s17, 3
    %p299 = pnand %p297, %p298
    %p300 = pneg %p299
    // Predicated region
    $region9: #{cmdss_forward.4} parent=5 // pred_check
      _
    $region10: #{cmdss_forward.4} parent=5 // pred_check_branch
      %302 = sbr.rel (%p299) target = $region12
    $region11: #{cmdss_forward.4} parent=5 // pred_region
      %s303 = ssub.s32 %s17, 1
      // Predicated region
      $region13: #{cmdss_forward.4} parent=11 // pred_check
        %p304 = pneg %p116
      $region14: #{cmdss_forward.4} parent=11 // pred_check_branch
        %306 = sbr.rel (%p304) target = $region16
      $region15: #{cmdss_forward.4} parent=11 // pred_region
        _
      $region16: #{cmdss_forward.4} parent=11 // pred_fallthru
        _
      // Predicated region
      $region17: #{cmdss_forward.4} parent=11 // pred_check
        %p307 = pneg %p137
      $region18: #{cmdss_forward.4} parent=11 // pred_check_branch
        %309 = sbr.rel (%p307) target = $region20
      $region19: #{cmdss_forward.4} parent=11 // pred_region
        _
      $region20: #{cmdss_forward.4} parent=11 // pred_fallthru
        _
      // Predicated region
      $region21: #{cmdss_forward.4} parent=11 // pred_check
        %p310 = pneg %p158
      $region22: #{cmdss_forward.4} parent=11 // pred_check_branch
        %312 = sbr.rel (%p310) target = $region24
      $region23: #{cmdss_forward.4} parent=11 // pred_region
        _
      $region24: #{cmdss_forward.4} parent=11 // pred_fallthru
        _
      // Predicated region
      $region25: #{cmdss_forward.4} parent=11 // pred_check
        %p313 = pneg %p179
      $region26: #{cmdss_forward.4} parent=11 // pred_check_branch
        %315 = sbr.rel (%p313) target = $region28
      $region27: #{cmdss_forward.4} parent=11 // pred_region
        _
      $region28: #{cmdss_forward.4} parent=11 // pred_fallthru
        _
      // Predicated region
      $region29: #{cmdss_forward.4} parent=11 // pred_check
        %p316 = pneg %p200
      $region30: #{cmdss_forward.4} parent=11 // pred_check_branch
        %318 = sbr.rel (%p316) target = $region32
      $region31: #{cmdss_forward.4} parent=11 // pred_region
        _
      $region32: #{cmdss_forward.4} parent=11 // pred_fallthru
        _
      // Predicated region
      $region33: #{cmdss_forward.4} parent=11 // pred_check
        %p319 = pneg %p221
      $region34: #{cmdss_forward.4} parent=11 // pred_check_branch
        %321 = sbr.rel (%p319) target = $region36
      $region35: #{cmdss_forward.4} parent=11 // pred_region
        _
      $region36: #{cmdss_forward.4} parent=11 // pred_fallthru
        _
      // Predicated region
      $region37: #{cmdss_forward.4} parent=11 // pred_check
        %p322 = pneg %p242
      $region38: #{cmdss_forward.4} parent=11 // pred_check_branch
        %324 = sbr.rel (%p322) target = $region40
      $region39: #{cmdss_forward.4} parent=11 // pred_region
        _
      $region40: #{cmdss_forward.4} parent=11 // pred_fallthru
        _
      // Predicated region
      $region41: #{cmdss_forward.4} parent=11 // pred_check
        %p325 = pneg %p263
      $region42: #{cmdss_forward.4} parent=11 // pred_check_branch
        %327 = sbr.rel (%p325) target = $region44
      $region43: #{cmdss_forward.4} parent=11 // pred_region
        _
      $region44: #{cmdss_forward.4} parent=11 // pred_fallthru
        _
    $region12: #{cmdss_forward.4} parent=5 // pred_fallthru
      _
    %p328 = scmp.lt.s32.totalorder %s17, 2
    // Predicated region
    $region45: #{cmdss_forward.4} parent=5 // pred_check
      %p329 = pneg %p328
    $region46: #{cmdss_forward.4} parent=5 // pred_check_branch
      %331 = sbr.rel (%p329) target = $region48
    $region47: #{cmdss_forward.4} parent=5 // pred_region
      // Predicated region
      $region49: #{cmdss_forward.4} parent=47 // pred_check
        %p332 = pneg %p37
      $region50: #{cmdss_forward.4} parent=47 // pred_check_branch
        %334 = sbr.rel (%p332) target = $region52
      $region51: #{cmdss_forward.4} parent=47 // pred_region
        %p335 = scmp.lt.s32.totalorder %s17, 1
        %s336 = scalar_select %p335, %s17, 1
        %s337 = smul.addr %s336, 2
        %s338 = smul.addr %s337, 8
        %s339 = scalar_lea.vmem %s0, %s338
      $region52: #{cmdss_forward.4} parent=47 // pred_fallthru
        _
      // Predicated region
      $region53: #{cmdss_forward.4} parent=47 // pred_check
        %p340 = pneg %p63
      $region54: #{cmdss_forward.4} parent=47 // pred_check_branch
        %342 = sbr.rel (%p340) target = $region56
      $region55: #{cmdss_forward.4} parent=47 // pred_region
        %p343 = scmp.lt.s32.totalorder %s17, 1
        %s344 = scalar_select %p343, %s17, 1
        %s345 = smul.addr %s344, 2
        %s346 = smul.addr %s345, 8
        %s347 = scalar_lea.vmem %s1, %s346
      $region56: #{cmdss_forward.4} parent=47 // pred_fallthru
        _
      // Predicated region
      $region57: #{cmdss_forward.4} parent=47 // pred_check
        %p348 = pneg %p89
      $region58: #{cmdss_forward.4} parent=47 // pred_check_branch
        %350 = sbr.rel (%p348) target = $region60
      $region59: #{cmdss_forward.4} parent=47 // pred_region
        %p351 = scmp.lt.s32.totalorder %s17, 1
        %s352 = scalar_select %p351, %s17, 1
        %s353 = smul.addr %s352, 2
        %s354 = smul.addr %s353, 8
        %s355 = scalar_lea.vmem %s2, %s354
      $region60: #{cmdss_forward.4} parent=47 // pred_fallthru
        _
    $region48: #{cmdss_forward.4} parent=5 // pred_fallthru
      _
    %p356 = scmp.le.s32.totalorder 1, %s17
    %p357 = scmp.lt.s32.totalorder %s17, 3
    %p358 = pnand %p356, %p357
    %p359 = pneg %p358
    // Predicated region
    $region61: #{cmdss_forward.4} parent=5 // pred_check
      _
    $region62: #{cmdss_forward.4} parent=5 // pred_check_branch
      %361 = sbr.rel (%p358) target = $region64
    $region63: #{cmdss_forward.4} parent=5 // pred_region
      %s362 = ssub.s32 %s17, 1
      %p363 = scmp.lt.s32.totalorder %s22, 1
      %s364 = scalar_select %p363, %s22, 1
      %s365 = smul.addr %s364, 2
      %s366 = smul.addr %s365, 8
      %s367 = scalar_lea.vmem %s0, %s366
      %p368 = pneg %p43
      %p369 = pneg %p40
      %p370 = scmp.lt.s32.totalorder %s22, 1
      %s371 = scalar_select %p370, %s22, 1
      %s372 = smul.addr %s371, 2
      %s373 = smul.addr %s372, 8
      %s374 = scalar_lea.vmem %s1, %s373
      %p375 = pneg %p69
      %p376 = pneg %p66
      %p377 = scmp.lt.s32.totalorder %s22, 1
      %s378 = scalar_select %p377, %s22, 1
      %s379 = smul.addr %s378, 2
      %s380 = smul.addr %s379, 8
      %s381 = scalar_lea.vmem %s2, %s380
      %p382 = pneg %p95
      %p383 = pneg %p92
      %p384 = pneg %p116
      %p385 = pneg %p113
      %p386 = pneg %p137
      %p387 = pneg %p134
      %p388 = pneg %p158
      %p389 = pneg %p155
      %p390 = pneg %p179
      %p391 = pneg %p176
      %p392 = pneg %p200
      %p393 = pneg %p197
      %p394 = pneg %p221
      %p395 = pneg %p218
      %p396 = pneg %p242
      %p397 = pneg %p239
      %p398 = pneg %p263
      %p399 = pneg %p260
      %p400 = pneg %p289
      %p401 = pneg %p286
      %p402 = scmp.lt.s32.totalorder %s22, 1
      %s403 = scalar_select %p402, %s22, 1
      %s404 = smul.addr %s403, 2
      %s405 = smul.addr %s404, 8
      %s406 = scalar_lea.vmem %s11, %s405
      %p407 = scmp.lt.s32.totalorder %s22, 1
      %s408 = scalar_select %p407, %s22, 1
      %s409 = smul.addr %s408, 2
      %s410 = smul.addr %s409, 8
      %s411 = scalar_lea.vmem %s0, %s410
      %p412 = scmp.lt.s32.totalorder %s22, 1
      %s413 = scalar_select %p412, %s22, 1
      %s414 = smul.addr %s413, 2
      %s415 = smul.addr %s414, 8
      %s416 = scalar_lea.vmem %s1, %s415
      %p417 = scmp.lt.s32.totalorder %s22, 1
      %s418 = scalar_select %p417, %s22, 1
      %s419 = smul.addr %s418, 2
      %s420 = smul.addr %s419, 8
      %s421 = scalar_lea.vmem %s2, %s420
      %p422 = scmp.lt.s32.totalorder %s22, 1
      %s423 = scalar_select %p422, %s22, 1
      %s424 = smul.addr %s423, 2
      %s425 = smul.addr %s424, 8
      %s426 = scalar_lea.vmem %s11, %s425
      %v427 = vld [vmem:[%s411] sm:$0xff]
      %v428 = vld [vmem:[%s411 + $0x8] sm:$0xff]
      %v429 = vld [vmem:[%s3] sm:$0x1]
      %v430 = vld [vmem:[%s4] sm:$0x1]
      %vm431 = vcmask 261120
      %v432 = vsel %vm431, %v427, 0.0
      %433 = vadd.xlane.f32.xlu0 %v432
      %v434 = vpop.xlane.xlu0 %433
      %v435 = vsel %vm431, %v428, 0.0
      %436 = vadd.xlane.f32.xlu0 %v435
      %v437 = vpop.xlane.xlu0 %436
      %v438 = vrcp.pop 32.0
      %v439 = vmul.f32 %v434, %v438
      %v440 = vmul.f32 %v437, %v438
      %v441 = vsub.f32 %v427, %v439
      %v442 = vsub.f32 %v428, %v440
      %v443 = vmul.f32 %v441, %v441
      %v444 = vmul.f32 %v442, %v442
      %v445 = vsel %vm431, %v443, 0.0
      %446 = vadd.xlane.f32.xlu0 %v445
      %v447 = vpop.xlane.xlu0 %446
      %v448 = vsel %vm431, %v444, 0.0
      %449 = vadd.xlane.f32.xlu0 %v448
      %v450 = vpop.xlane.xlu0 %449
      %v451 = vmul.f32 %v447, %v438
      %v452 = vmul.f32 %v450, %v438
      %v453 = vadd.f32 %v451, 1e-12
      %v454 = vadd.f32 %v452, 1e-12
      %v455 = vrsqrt.pop %v453
      %v456 = vmul.f32 %v453, %v455
      %vm457 = vcmp.eq.f32.partialorder %v453, inf
      %v458 = vsel %vm457, %v453, %v456
      %vm459 = vcmp.eq.f32.partialorder %v453, 0.0
      %v460 = vand.u32 %v453, 2147483648
      %v461 = vsel %vm459, %v460, %v458
      %v462 = vrsqrt.pop %v454
      %v463 = vmul.f32 %v454, %v462
      %vm464 = vcmp.eq.f32.partialorder %v454, inf
      %v465 = vsel %vm464, %v454, %v463
      %vm466 = vcmp.eq.f32.partialorder %v454, 0.0
      %v467 = vand.u32 %v454, 2147483648
      %v468 = vsel %vm466, %v467, %v465
      %v469 = vrcp.pop %v461
      %v470 = vmul.f32 %v441, %v469
      %v471 = vrcp.pop %v468
      %v472 = vmul.f32 %v442, %v471
      %v474 = vlaneseq
      %v475 = vshrl.u32 %v474, 7
      %v476 = vsub.s32 0, %v475
      %v477 = vrot.slane %v429, %v476
      %v479 = vmul.f32 %v477, %v470
      %v480 = vmul.f32 %v477, %v472
      %v482 = vlaneseq
      %v483 = vshrl.u32 %v482, 7
      %v484 = vsub.s32 0, %v483
      %v485 = vrot.slane %v430, %v484
      %v487 = vadd.f32 %v479, %v485
      %v488 = vadd.f32 %v480, %v485
      %v489 = vld [vmem:[%s416] sm:$0xff]
      %v490 = vld [vmem:[%s416 + $0x8] sm:$0xff]
      %v491 = vld [vmem:[%s5] sm:$0xff]
      %v492 = vld [vmem:[%s5 + $0x8] sm:$0xff]
      %v493 = vld [vmem:[%s5 + $0x10] sm:$0xff]
      %v494 = vld [vmem:[%s5 + $0x18] sm:$0xff]
      %v496 = vsel %vm431, %v487, 0
      %v499 = vsel %vm431, %v488, 0
      %501 = vmatprep.subr.mxu0 0.0
      %502 = vmatpush1.msra.mxu0 %v491
      %503 = vmatprep.subr.mxu0 0.0
      %504 = vmatpush1.msra.mxu0 %v492
      %505 = vmatprep.subr.mxu0 0.0
      %506 = vmatpush1.msra.mxu0 %v493
      %507 = vmatprep.subr.mxu0 0.0
      %508 = vmatpush1.msra.mxu0 %v494
      %509 = vmatprep.subr.mxu0 0.0
      %510 = vmatpush1.msra.mxu0 0.0
      %511 = vmatprep.subr.mxu0 0.0
      %512 = vmatpush1.msra.mxu0 0.0
      %513 = vmatprep.subr.mxu0 0.0
      %514 = vmatpush1.msra.mxu0 0.0
      %515 = vmatprep.subr.mxu0 0.0
      %516 = vmatpush1.msra.mxu0 0.0
      %517 = vmatprep.subr.mxu0 0.0
      %518 = vmatpush1.msra.mxu0 0.0
      %519 = vmatprep.subr.mxu0 0.0
      %520 = vmatpush1.msra.mxu0 0.0
      %521 = vmatprep.subr.mxu0 0.0
      %522 = vmatpush1.msra.mxu0 0.0
      %523 = vmatprep.subr.mxu0 0.0
      %524 = vmatpush1.msra.mxu0 0.0
      %525 = vmatprep.subr.mxu0 0.0
      %526 = vmatpush1.msra.mxu0 0.0
      %527 = vmatprep.subr.mxu0 0.0
      %528 = vmatpush1.msra.mxu0 0.0
      %529 = vmatprep.subr.mxu0 0.0
      %530 = vmatpush1.msra.mxu0 0.0
      %531 = vmatprep.subr.mxu0 0.0
      %532 = vmatpush1.msra.mxu0 0.0
      %533 = vmatprep.subr.mxu0 0.0
      %534 = vmatpush1.msra.mxu0 0.0
      %535 = vmatprep.subr.mxu0 0.0
      %536 = vmatpush1.msra.mxu0 0.0
      %537 = vmatprep.subr.mxu0 0.0
      %538 = vmatpush1.msra.mxu0 0.0
      %539 = vmatprep.subr.mxu0 0.0
      %540 = vmatpush1.msra.mxu0 0.0
      %541 = vmatprep.subr.mxu0 0.0
      %542 = vmatpush1.msra.mxu0 0.0
      %543 = vmatprep.subr.mxu0 0.0
      %544 = vmatpush1.msra.mxu0 0.0
      %545 = vmatprep.subr.mxu0 0.0
      %546 = vmatpush1.msra.mxu0 0.0
      %547 = vmatprep.subr.mxu0 0.0
      %548 = vmatpush1.msra.mxu0 0.0
      %549 = vmatprep.subr.mxu0 0.0
      %550 = vmatpush1.msra.mxu0 0.0
      %551 = vmatprep.subr.mxu0 0.0
      %552 = vmatpush1.msra.mxu0 0.0
      %553 = vmatprep.subr.mxu0 0.0
      %554 = vmatpush1.msra.mxu0 0.0
      %555 = vmatprep.subr.mxu0 0.0
      %556 = vmatpush1.msra.mxu0 0.0
      %557 = vmatprep.subr.mxu0 0.0
      %558 = vmatpush1.msra.mxu0 0.0
      %559 = vmatprep.subr.mxu0 0.0
      %560 = vmatpush1.msra.mxu0 0.0
      %561 = vmatprep.subr.mxu0 0.0
      %562 = vmatpush1.msra.mxu0 0.0
      %563 = vmatprep.subr.mxu0 0.0
      %564 = vmatpush1.msra.mxu0 0.0
      %565 = vmatprep.mubr.f32.mxu0 0.0
      %566 = vmatmul.mubr.f32.gmra.mrb[0].mxu0 %v496
      %v567 = vpop.f32.mrb[0].mxu0
      %v568 = vadd.f32 0.0, %v567
      %v569 = vpop.f32.mrb[0].mxu0
      %570 = vmatprep.mubr.f32.mxu0 0.0
      %571 = vmatmul.mubr.f32.gmra.mrb[0].mxu0 %v499
      %v572 = vpop.f32.mrb[0].mxu0
      %v573 = vadd.f32 0.0, %v572
      %v574 = vpop.f32.mrb[0].mxu0
      %575 = vdwg.mxu0
      %v576 = vld [vmem:[%s6] sm:$0x1]
      %v578 = vlaneseq
      %v579 = vshrl.u32 %v578, 7
      %v580 = vsub.s32 0, %v579
      %v581 = vrot.slane %v576, %v580
      %v583 = vmul.f32 %v568, %v581
      %v584 = vmul.f32 %v573, %v581
      %v585 = vsel %vm431, %v583, 0.0
      %586 = vadd.xlane.f32.xlu0 %v585
      %v587 = vpop.xlane.xlu0 %586
      %v588 = vsel %vm431, %v584, 0.0
      %589 = vadd.xlane.f32.xlu0 %v588
      %v590 = vpop.xlane.xlu0 %589
      %v591 = vld [vmem:[%s7] sm:$0x1]
      %v593 = vsel %vm431, %v591, 0
      %v596 = vsel %vm431, %v568, 0
      %v599 = vsel %vm431, %v573, 0
      %601 = vmatprep.subr.mxu0 0.0
      %602 = vmatpush1.xpose.msra.mxu0 %v596
      %603 = vmatprep.subr.mxu0 0.0
      %604 = vmatpush1.xpose.msra.mxu0 %v599
      %605 = vmatprep.subr.mxu0 0.0
      %606 = vmatpush1.xpose.msra.mxu0 0.0
      %607 = vmatprep.subr.mxu0 0.0
      %608 = vmatpush1.xpose.msra.mxu0 0.0
      %609 = vmatprep.subr.mxu0 0.0
      %610 = vmatpush1.xpose.msra.mxu0 0.0
      %611 = vmatprep.subr.mxu0 0.0
      %612 = vmatpush1.xpose.msra.mxu0 0.0
      %613 = vmatprep.subr.mxu0 0.0
      %614 = vmatpush1.xpose.msra.mxu0 0.0
      %615 = vmatprep.subr.mxu0 0.0
      %616 = vmatpush1.xpose.msra.mxu0 0.0
      %617 = vmatprep.subr.mxu0 0.0
      %618 = vmatpush1.xpose.msra.mxu0 0.0
      %619 = vmatprep.subr.mxu0 0.0
      %620 = vmatpush1.xpose.msra.mxu0 0.0
      %621 = vmatprep.subr.mxu0 0.0
      %622 = vmatpush1.xpose.msra.mxu0 0.0
      %623 = vmatprep.subr.mxu0 0.0
      %624 = vmatpush1.xpose.msra.mxu0 0.0
      %625 = vmatprep.subr.mxu0 0.0
      %626 = vmatpush1.xpose.msra.mxu0 0.0
      %627 = vmatprep.subr.mxu0 0.0
      %628 = vmatpush1.xpose.msra.mxu0 0.0
      %629 = vmatprep.subr.mxu0 0.0
      %630 = vmatpush1.xpose.msra.mxu0 0.0
      %631 = vmatprep.subr.mxu0 0.0
      %632 = vmatpush1.xpose.msra.mxu0 0.0
      %633 = vmatprep.subr.mxu0 0.0
      %634 = vmatpush1.xpose.msra.mxu0 0.0
      %635 = vmatprep.subr.mxu0 0.0
      %636 = vmatpush1.xpose.msra.mxu0 0.0
      %637 = vmatprep.subr.mxu0 0.0
      %638 = vmatpush1.xpose.msra.mxu0 0.0
      %639 = vmatprep.subr.mxu0 0.0
      %640 = vmatpush1.xpose.msra.mxu0 0.0
      %641 = vmatprep.subr.mxu0 0.0
      %642 = vmatpush1.xpose.msra.mxu0 0.0
      %643 = vmatprep.subr.mxu0 0.0
      %644 = vmatpush1.xpose.msra.mxu0 0.0
      %645 = vmatprep.subr.mxu0 0.0
      %646 = vmatpush1.xpose.msra.mxu0 0.0
      %647 = vmatprep.subr.mxu0 0.0
      %648 = vmatpush1.xpose.msra.mxu0 0.0
      %649 = vmatprep.subr.mxu0 0.0
      %650 = vmatpush1.xpose.msra.mxu0 0.0
      %651 = vmatprep.subr.mxu0 0.0
      %652 = vmatpush1.xpose.msra.mxu0 0.0
      %653 = vmatprep.subr.mxu0 0.0
      %654 = vmatpush1.xpose.msra.mxu0 0.0
      %655 = vmatprep.subr.mxu0 0.0
      %656 = vmatpush1.xpose.msra.mxu0 0.0
      %657 = vmatprep.subr.mxu0 0.0
      %658 = vmatpush1.xpose.msra.mxu0 0.0
      %659 = vmatprep.subr.mxu0 0.0
      %660 = vmatpush1.xpose.msra.mxu0 0.0
      %661 = vmatprep.subr.mxu0 0.0
      %662 = vmatpush1.xpose.msra.mxu0 0.0
      %663 = vmatprep.subr.mxu0 0.0
      %664 = vmatpush1.xpose.msra.mxu0 0.0
      %665 = vmatprep.mubr.f32.mxu0 0.0
      %666 = vmatmul.mubr.f32.gmra.mrb[0].mxu0 %v593
      %v667 = vpop.f32.mrb[0].mxu0
      %v668 = vadd.f32 0.0, %v667
      %v669 = vpop.f32.mrb[0].mxu0
      %670 = vdwg.mxu0
      %v671 = vlaneseq
      %v672 = vshrl.u32 %v671, 7
      %v673 = vsub.s32 0, %v672
      %v674 = vrot.slane %v668, %v673
      %v675 = vadd.f32 %v587, %v674
      %v676 = vadd.f32 %v590, %v674
      %vm677 = vcmp.ge.f32.partialorder %v675, 0.0
      %vm678 = vcmp.ge.f32.partialorder %v676, 0.0
      %v679 = vmul.f32 %v675, 0.1
      %v680 = vmul.f32 %v676, 0.1
      %v681 = vsel %vm677, %v675, %v679
      %v682 = vsel %vm678, %v676, %v680
      %vm683 = vcmp.gt.f32.partialorder %v489, 0.0
      %vm684 = vcmp.gt.f32.partialorder %v490, 0.0
      %v685 = vsel %vm683, %v681, -9e+15
      %v686 = vsel %vm684, %v682, -9e+15
      %vm687 = vcmask 130048
      %v688 = vsel %vm687, %v685, -inf
      %689 = vmax.xlane.f32.xlu0 %v688
      %v690 = vpop.xlane.xlu0 %689
      %v691 = vsel %vm687, %v686, -inf
      %692 = vmax.xlane.f32.xlu0 %v691
      %v693 = vpop.xlane.xlu0 %692
      %v694 = vsub.f32 %v685, %v690
      %v695 = vsub.f32 %v686, %v693
      %v696 = vmul.f32 %v694, 1.442695
      %v697 = vpow.pop %v696
      %v698 = vmul.f32 %v695, 1.442695
      %v699 = vpow.pop %v698
      %v700 = vsel %vm687, %v697, 0.0
      %701 = vadd.xlane.f32.xlu0 %v700
      %v702 = vpop.xlane.xlu0 %701
      %v703 = vsel %vm687, %v699, 0.0
      %704 = vadd.xlane.f32.xlu0 %v703
      %v705 = vpop.xlane.xlu0 %704
      %v706 = vrcp.pop %v702
      %v707 = vmul.f32 %v697, %v706
      %v708 = vrcp.pop %v705
      %v709 = vmul.f32 %v699, %v708
      %v711 = vsel %vm687, %v707, 0
      %v714 = vsel %vm687, %v709, 0
      %716 = vmatprep.subr.mxu0 0.0
      %717 = vmatpush1.msra.mxu0 %v568
      %718 = vmatprep.subr.mxu0 0.0
      %719 = vmatpush1.msra.mxu0 %v573
      %720 = vmatprep.subr.mxu0 0.0
      %721 = vmatpush1.msra.mxu0 0.0
      %722 = vmatprep.subr.mxu0 0.0
      %723 = vmatpush1.msra.mxu0 0.0
      %724 = vmatprep.subr.mxu0 0.0
      %725 = vmatpush1.msra.mxu0 0.0
      %726 = vmatprep.subr.mxu0 0.0
      %727 = vmatpush1.msra.mxu0 0.0
      %728 = vmatprep.subr.mxu0 0.0
      %729 = vmatpush1.msra.mxu0 0.0
      %730 = vmatprep.subr.mxu0 0.0
      %731 = vmatpush1.msra.mxu0 0.0
      %732 = vmatprep.subr.mxu0 0.0
      %733 = vmatpush1.msra.mxu0 0.0
      %734 = vmatprep.subr.mxu0 0.0
      %735 = vmatpush1.msra.mxu0 0.0
      %736 = vmatprep.subr.mxu0 0.0
      %737 = vmatpush1.msra.mxu0 0.0
      %738 = vmatprep.subr.mxu0 0.0
      %739 = vmatpush1.msra.mxu0 0.0
      %740 = vmatprep.subr.mxu0 0.0
      %741 = vmatpush1.msra.mxu0 0.0
      %742 = vmatprep.subr.mxu0 0.0
      %743 = vmatpush1.msra.mxu0 0.0
      %744 = vmatprep.subr.mxu0 0.0
      %745 = vmatpush1.msra.mxu0 0.0
      %746 = vmatprep.subr.mxu0 0.0
      %747 = vmatpush1.msra.mxu0 0.0
      %748 = vmatprep.subr.mxu0 0.0
      %749 = vmatpush1.msra.mxu0 0.0
      %750 = vmatprep.subr.mxu0 0.0
      %751 = vmatpush1.msra.mxu0 0.0
      %752 = vmatprep.subr.mxu0 0.0
      %753 = vmatpush1.msra.mxu0 0.0
      %754 = vmatprep.subr.mxu0 0.0
      %755 = vmatpush1.msra.mxu0 0.0
      %756 = vmatprep.subr.mxu0 0.0
      %757 = vmatpush1.msra.mxu0 0.0
      %758 = vmatprep.subr.mxu0 0.0
      %759 = vmatpush1.msra.mxu0 0.0
      %760 = vmatprep.subr.mxu0 0.0
      %761 = vmatpush1.msra.mxu0 0.0
      %762 = vmatprep.subr.mxu0 0.0
      %763 = vmatpush1.msra.mxu0 0.0
      %764 = vmatprep.subr.mxu0 0.0
      %765 = vmatpush1.msra.mxu0 0.0
      %766 = vmatprep.subr.mxu0 0.0
      %767 = vmatpush1.msra.mxu0 0.0
      %768 = vmatprep.subr.mxu0 0.0
      %769 = vmatpush1.msra.mxu0 0.0
      %770 = vmatprep.subr.mxu0 0.0
      %771 = vmatpush1.msra.mxu0 0.0
      %772 = vmatprep.subr.mxu0 0.0
      %773 = vmatpush1.msra.mxu0 0.0
      %774 = vmatprep.subr.mxu0 0.0
      %775 = vmatpush1.msra.mxu0 0.0
      %776 = vmatprep.subr.mxu0 0.0
      %777 = vmatpush1.msra.mxu0 0.0
      %778 = vmatprep.subr.mxu0 0.0
      %779 = vmatpush1.msra.mxu0 0.0
      %780 = vmatprep.mubr.f32.mxu0 0.0
      %781 = vmatmul.mubr.f32.gmra.mrb[0].mxu0 %v711
      %v782 = vpop.f32.mrb[0].mxu0
      %v783 = vadd.f32 0.0, %v782
      %v784 = vpop.f32.mrb[0].mxu0
      %785 = vmatprep.mubr.f32.mxu0 0.0
      %786 = vmatmul.mubr.f32.gmra.mrb[0].mxu0 %v714
      %v787 = vpop.f32.mrb[0].mxu0
      %v788 = vadd.f32 0.0, %v787
      %v789 = vpop.f32.mrb[0].mxu0
      %790 = vdwg.mxu0
      %vm791 = vcmp.gt.f32.partialorder %v783, 0.0
      %vm792 = vcmp.gt.f32.partialorder %v788, 0.0
      %v793 = vmin.f32 %v783, 0.0
      %v794 = vmin.f32 %v788, 0.0
      %v795 = vmul.f32 %v793, 1.442695
      %v796 = vpow.pop %v795
      %v797 = vmul.f32 %v794, 1.442695
      %v798 = vpow.pop %v797
      %v799 = vsub.f32 %v796, 1.0
      %v800 = vsub.f32 %v798, 1.0
      %v801 = vsel %vm791, %v783, %v799
      %v802 = vsel %vm792, %v788, %v800
      %v803 = vld [vmem:[%s8] sm:$0xff]
      %v804 = vld [vmem:[%s8 + $0x8] sm:$0xff]
      %v805 = vld [vmem:[%s8 + $0x10] sm:$0xff]
      %v806 = vld [vmem:[%s8 + $0x18] sm:$0xff]
      %v808 = vsel %vm431, %v801, 0
      %v811 = vsel %vm431, %v802, 0
      %813 = vmatprep.subr.mxu0 0.0
      %814 = vmatpush1.msra.mxu0 %v803
      %815 = vmatprep.subr.mxu0 0.0
      %816 = vmatpush1.msra.mxu0 %v804
      %817 = vmatprep.subr.mxu0 0.0
      %818 = vmatpush1.msra.mxu0 %v805
      %819 = vmatprep.subr.mxu0 0.0
      %820 = vmatpush1.msra.mxu0 %v806
      %821 = vmatprep.subr.mxu0 0.0
      %822 = vmatpush1.msra.mxu0 0.0
      %823 = vmatprep.subr.mxu0 0.0
      %824 = vmatpush1.msra.mxu0 0.0
      %825 = vmatprep.subr.mxu0 0.0
      %826 = vmatpush1.msra.mxu0 0.0
      %827 = vmatprep.subr.mxu0 0.0
      %828 = vmatpush1.msra.mxu0 0.0
      %829 = vmatprep.subr.mxu0 0.0
      %830 = vmatpush1.msra.mxu0 0.0
      %831 = vmatprep.subr.mxu0 0.0
      %832 = vmatpush1.msra.mxu0 0.0
      %833 = vmatprep.subr.mxu0 0.0
      %834 = vmatpush1.msra.mxu0 0.0
      %835 = vmatprep.subr.mxu0 0.0
      %836 = vmatpush1.msra.mxu0 0.0
      %837 = vmatprep.subr.mxu0 0.0
      %838 = vmatpush1.msra.mxu0 0.0
      %839 = vmatprep.subr.mxu0 0.0
      %840 = vmatpush1.msra.mxu0 0.0
      %841 = vmatprep.subr.mxu0 0.0
      %842 = vmatpush1.msra.mxu0 0.0
      %843 = vmatprep.subr.mxu0 0.0
      %844 = vmatpush1.msra.mxu0 0.0
      %845 = vmatprep.subr.mxu0 0.0
      %846 = vmatpush1.msra.mxu0 0.0
      %847 = vmatprep.subr.mxu0 0.0
      %848 = vmatpush1.msra.mxu0 0.0
      %849 = vmatprep.subr.mxu0 0.0
      %850 = vmatpush1.msra.mxu0 0.0
      %851 = vmatprep.subr.mxu0 0.0
      %852 = vmatpush1.msra.mxu0 0.0
      %853 = vmatprep.subr.mxu0 0.0
      %854 = vmatpush1.msra.mxu0 0.0
      %855 = vmatprep.subr.mxu0 0.0
      %856 = vmatpush1.msra.mxu0 0.0
      %857 = vmatprep.subr.mxu0 0.0
      %858 = vmatpush1.msra.mxu0 0.0
      %859 = vmatprep.subr.mxu0 0.0
      %860 = vmatpush1.msra.mxu0 0.0
      %861 = vmatprep.subr.mxu0 0.0
      %862 = vmatpush1.msra.mxu0 0.0
      %863 = vmatprep.subr.mxu0 0.0
      %864 = vmatpush1.msra.mxu0 0.0
      %865 = vmatprep.subr.mxu0 0.0
      %866 = vmatpush1.msra.mxu0 0.0
      %867 = vmatprep.subr.mxu0 0.0
      %868 = vmatpush1.msra.mxu0 0.0
      %869 = vmatprep.subr.mxu0 0.0
      %870 = vmatpush1.msra.mxu0 0.0
      %871 = vmatprep.subr.mxu0 0.0
      %872 = vmatpush1.msra.mxu0 0.0
      %873 = vmatprep.subr.mxu0 0.0
      %874 = vmatpush1.msra.mxu0 0.0
      %875 = vmatprep.subr.mxu0 0.0
      %876 = vmatpush1.msra.mxu0 0.0
      %877 = vmatprep.mubr.f32.mxu0 0.0
      %878 = vmatmul.mubr.f32.gmra.mrb[0].mxu0 %v808
      %v879 = vpop.f32.mrb[0].mxu0
      %v880 = vadd.f32 0.0, %v879
      %v881 = vpop.f32.mrb[0].mxu0
      %882 = vmatprep.mubr.f32.mxu0 0.0
      %883 = vmatmul.mubr.f32.gmra.mrb[0].mxu0 %v811
      %v884 = vpop.f32.mrb[0].mxu0
      %v885 = vadd.f32 0.0, %v884
      %v886 = vpop.f32.mrb[0].mxu0
      %887 = vdwg.mxu0
      %v888 = vld [vmem:[%s9] sm:$0x1]
      %v890 = vlaneseq
      %v891 = vshrl.u32 %v890, 7
      %v892 = vsub.s32 0, %v891
      %v893 = vrot.slane %v888, %v892
      %v895 = vmul.f32 %v880, %v893
      %v896 = vmul.f32 %v885, %v893
      %v897 = vsel %vm431, %v895, 0.0
      %898 = vadd.xlane.f32.xlu0 %v897
      %v899 = vpop.xlane.xlu0 %898
      %v900 = vsel %vm431, %v896, 0.0
      %901 = vadd.xlane.f32.xlu0 %v900
      %v902 = vpop.xlane.xlu0 %901
      %v903 = vld [vmem:[%s10] sm:$0x1]
      %v905 = vsel %vm431, %v903, 0
      %v908 = vsel %vm431, %v880, 0
      %v911 = vsel %vm431, %v885, 0
      %913 = vmatprep.subr.mxu0 0.0
      %914 = vmatpush1.xpose.msra.mxu0 %v908
      %915 = vmatprep.subr.mxu0 0.0
      %916 = vmatpush1.xpose.msra.mxu0 %v911
      %917 = vmatprep.subr.mxu0 0.0
      %918 = vmatpush1.xpose.msra.mxu0 0.0
      %919 = vmatprep.subr.mxu0 0.0
      %920 = vmatpush1.xpose.msra.mxu0 0.0
      %921 = vmatprep.subr.mxu0 0.0
      %922 = vmatpush1.xpose.msra.mxu0 0.0
      %923 = vmatprep.subr.mxu0 0.0
      %924 = vmatpush1.xpose.msra.mxu0 0.0
      %925 = vmatprep.subr.mxu0 0.0
      %926 = vmatpush1.xpose.msra.mxu0 0.0
      %927 = vmatprep.subr.mxu0 0.0
      %928 = vmatpush1.xpose.msra.mxu0 0.0
      %929 = vmatprep.subr.mxu0 0.0
      %930 = vmatpush1.xpose.msra.mxu0 0.0
      %931 = vmatprep.subr.mxu0 0.0
      %932 = vmatpush1.xpose.msra.mxu0 0.0
      %933 = vmatprep.subr.mxu0 0.0
      %934 = vmatpush1.xpose.msra.mxu0 0.0
      %935 = vmatprep.subr.mxu0 0.0
      %936 = vmatpush1.xpose.msra.mxu0 0.0
      %937 = vmatprep.subr.mxu0 0.0
      %938 = vmatpush1.xpose.msra.mxu0 0.0
      %939 = vmatprep.subr.mxu0 0.0
      %940 = vmatpush1.xpose.msra.mxu0 0.0
      %941 = vmatprep.subr.mxu0 0.0
      %942 = vmatpush1.xpose.msra.mxu0 0.0
      %943 = vmatprep.subr.mxu0 0.0
      %944 = vmatpush1.xpose.msra.mxu0 0.0
      %945 = vmatprep.subr.mxu0 0.0
      %946 = vmatpush1.xpose.msra.mxu0 0.0
      %947 = vmatprep.subr.mxu0 0.0
      %948 = vmatpush1.xpose.msra.mxu0 0.0
      %949 = vmatprep.subr.mxu0 0.0
      %950 = vmatpush1.xpose.msra.mxu0 0.0
      %951 = vmatprep.subr.mxu0 0.0
      %952 = vmatpush1.xpose.msra.mxu0 0.0
      %953 = vmatprep.subr.mxu0 0.0
      %954 = vmatpush1.xpose.msra.mxu0 0.0
      %955 = vmatprep.subr.mxu0 0.0
      %956 = vmatpush1.xpose.msra.mxu0 0.0
      %957 = vmatprep.subr.mxu0 0.0
      %958 = vmatpush1.xpose.msra.mxu0 0.0
      %959 = vmatprep.subr.mxu0 0.0
      %960 = vmatpush1.xpose.msra.mxu0 0.0
      %961 = vmatprep.subr.mxu0 0.0
      %962 = vmatpush1.xpose.msra.mxu0 0.0
      %963 = vmatprep.subr.mxu0 0.0
      %964 = vmatpush1.xpose.msra.mxu0 0.0
      %965 = vmatprep.subr.mxu0 0.0
      %966 = vmatpush1.xpose.msra.mxu0 0.0
      %967 = vmatprep.subr.mxu0 0.0
      %968 = vmatpush1.xpose.msra.mxu0 0.0
      %969 = vmatprep.subr.mxu0 0.0
      %970 = vmatpush1.xpose.msra.mxu0 0.0
      %971 = vmatprep.subr.mxu0 0.0
      %972 = vmatpush1.xpose.msra.mxu0 0.0
      %973 = vmatprep.subr.mxu0 0.0
      %974 = vmatpush1.xpose.msra.mxu0 0.0
      %975 = vmatprep.subr.mxu0 0.0
      %976 = vmatpush1.xpose.msra.mxu0 0.0
      %977 = vmatprep.mubr.f32.mxu0 0.0
      %978 = vmatmul.mubr.f32.gmra.mrb[0].mxu0 %v905
      %v979 = vpop.f32.mrb[0].mxu0
      %v980 = vadd.f32 0.0, %v979
      %v981 = vpop.f32.mrb[0].mxu0
      %982 = vdwg.mxu0
      %v983 = vlaneseq
      %v984 = vshrl.u32 %v983, 7
      %v985 = vsub.s32 0, %v984
      %v986 = vrot.slane %v980, %v985
      %v987 = vadd.f32 %v899, %v986
      %v988 = vadd.f32 %v902, %v986
      %vm989 = vcmp.ge.f32.partialorder %v987, 0.0
      %vm990 = vcmp.ge.f32.partialorder %v988, 0.0
      %v991 = vmul.f32 %v987, 0.1
      %v992 = vmul.f32 %v988, 0.1
      %v993 = vsel %vm989, %v987, %v991
      %v994 = vsel %vm990, %v988, %v992
      %v995 = vsel %vm683, %v993, -9e+15
      %v996 = vsel %vm684, %v994, -9e+15
      %v997 = vsel %vm687, %v995, -inf
      %998 = vmax.xlane.f32.xlu0 %v997
      %v999 = vpop.xlane.xlu0 %998
      %v1000 = vsel %vm687, %v996, -inf
      %1001 = vmax.xlane.f32.xlu0 %v1000
      %v1002 = vpop.xlane.xlu0 %1001
      %v1003 = vsub.f32 %v995, %v999
      %v1004 = vsub.f32 %v996, %v1002
      %v1005 = vmul.f32 %v1003, 1.442695
      %v1006 = vpow.pop %v1005
      %v1007 = vmul.f32 %v1004, 1.442695
      %v1008 = vpow.pop %v1007
      %v1009 = vsel %vm687, %v1006, 0.0
      %1010 = vadd.xlane.f32.xlu0 %v1009
      %v1011 = vpop.xlane.xlu0 %1010
      %v1012 = vsel %vm687, %v1008, 0.0
      %1013 = vadd.xlane.f32.xlu0 %v1012
      %v1014 = vpop.xlane.xlu0 %1013
      %v1015 = vrcp.pop %v1011
      %v1016 = vmul.f32 %v1006, %v1015
      %v1017 = vrcp.pop %v1014
      %v1018 = vmul.f32 %v1008, %v1017
      %v1020 = vsel %vm687, %v1016, 0
      %v1023 = vsel %vm687, %v1018, 0
      %1025 = vmatprep.subr.mxu0 0.0
      %1026 = vmatpush1.msra.mxu0 %v880
      %1027 = vmatprep.subr.mxu0 0.0
      %1028 = vmatpush1.msra.mxu0 %v885
      %1029 = vmatprep.subr.mxu0 0.0
      %1030 = vmatpush1.msra.mxu0 0.0
      %1031 = vmatprep.subr.mxu0 0.0
      %1032 = vmatpush1.msra.mxu0 0.0
      %1033 = vmatprep.subr.mxu0 0.0
      %1034 = vmatpush1.msra.mxu0 0.0
      %1035 = vmatprep.subr.mxu0 0.0
      %1036 = vmatpush1.msra.mxu0 0.0
      %1037 = vmatprep.subr.mxu0 0.0
      %1038 = vmatpush1.msra.mxu0 0.0
      %1039 = vmatprep.subr.mxu0 0.0
      %1040 = vmatpush1.msra.mxu0 0.0
      %1041 = vmatprep.subr.mxu0 0.0
      %1042 = vmatpush1.msra.mxu0 0.0
      %1043 = vmatprep.subr.mxu0 0.0
      %1044 = vmatpush1.msra.mxu0 0.0
      %1045 = vmatprep.subr.mxu0 0.0
      %1046 = vmatpush1.msra.mxu0 0.0
      %1047 = vmatprep.subr.mxu0 0.0
      %1048 = vmatpush1.msra.mxu0 0.0
      %1049 = vmatprep.subr.mxu0 0.0
      %1050 = vmatpush1.msra.mxu0 0.0
      %1051 = vmatprep.subr.mxu0 0.0
      %1052 = vmatpush1.msra.mxu0 0.0
      %1053 = vmatprep.subr.mxu0 0.0
      %1054 = vmatpush1.msra.mxu0 0.0
      %1055 = vmatprep.subr.mxu0 0.0
      %1056 = vmatpush1.msra.mxu0 0.0
      %1057 = vmatprep.subr.mxu0 0.0
      %1058 = vmatpush1.msra.mxu0 0.0
      %1059 = vmatprep.subr.mxu0 0.0
      %1060 = vmatpush1.msra.mxu0 0.0
      %1061 = vmatprep.subr.mxu0 0.0
      %1062 = vmatpush1.msra.mxu0 0.0
      %1063 = vmatprep.subr.mxu0 0.0
      %1064 = vmatpush1.msra.mxu0 0.0
      %1065 = vmatprep.subr.mxu0 0.0
      %1066 = vmatpush1.msra.mxu0 0.0
      %1067 = vmatprep.subr.mxu0 0.0
      %1068 = vmatpush1.msra.mxu0 0.0
      %1069 = vmatprep.subr.mxu0 0.0
      %1070 = vmatpush1.msra.mxu0 0.0
      %1071 = vmatprep.subr.mxu0 0.0
      %1072 = vmatpush1.msra.mxu0 0.0
      %1073 = vmatprep.subr.mxu0 0.0
      %1074 = vmatpush1.msra.mxu0 0.0
      %1075 = vmatprep.subr.mxu0 0.0
      %1076 = vmatpush1.msra.mxu0 0.0
      %1077 = vmatprep.subr.mxu0 0.0
      %1078 = vmatpush1.msra.mxu0 0.0
      %1079 = vmatprep.subr.mxu0 0.0
      %1080 = vmatpush1.msra.mxu0 0.0
      %1081 = vmatprep.subr.mxu0 0.0
      %1082 = vmatpush1.msra.mxu0 0.0
      %1083 = vmatprep.subr.mxu0 0.0
      %1084 = vmatpush1.msra.mxu0 0.0
      %1085 = vmatprep.subr.mxu0 0.0
      %1086 = vmatpush1.msra.mxu0 0.0
      %1087 = vmatprep.subr.mxu0 0.0
      %1088 = vmatpush1.msra.mxu0 0.0
      %1089 = vmatprep.mubr.f32.mxu0 0.0
      %1090 = vmatmul.mubr.f32.gmra.mrb[0].mxu0 %v1020
      %v1091 = vpop.f32.mrb[0].mxu0
      %v1092 = vadd.f32 0.0, %v1091
      %v1093 = vpop.f32.mrb[0].mxu0
      %1094 = vmatprep.mubr.f32.mxu0 0.0
      %1095 = vmatmul.mubr.f32.gmra.mrb[0].mxu0 %v1023
      %v1096 = vpop.f32.mrb[0].mxu0
      %v1097 = vadd.f32 0.0, %v1096
      %v1098 = vpop.f32.mrb[0].mxu0
      %1099 = vdwg.mxu0
      %vm1100 = vcmp.gt.f32.partialorder %v1092, 0.0
      %vm1101 = vcmp.gt.f32.partialorder %v1097, 0.0
      %v1102 = vmin.f32 %v1092, 0.0
      %v1103 = vmin.f32 %v1097, 0.0
      %v1104 = vmul.f32 %v1102, 1.442695
      %v1105 = vpow.pop %v1104
      %v1106 = vmul.f32 %v1103, 1.442695
      %v1107 = vpow.pop %v1106
      %v1108 = vsub.f32 %v1105, 1.0
      %v1109 = vsub.f32 %v1107, 1.0
      %v1110 = vsel %vm1100, %v1092, %v1108
      %v1111 = vsel %vm1101, %v1097, %v1109
      %v1112 = vlaneseq
      %v1113 = vand.u32 %v1112, 127
      %v1114 = vld [vmem:[%s421] sm:$0xff]
      %v1115 = vld [vmem:[%s421 + $0x8] sm:$0xff]
      %1116 = vset.pattern.permute.xlu0 0
      %1117 = vperm.xlu0 %1116, %v1114
      %v1118 = vpop.permute.xlu0 %1117
      %1119 = vset.pattern.permute.xlu0 0
      %1120 = vperm.xlu0 %1119, %v1115
      %v1121 = vpop.permute.xlu0 %1120
      %vm1122 = vcmp.eq.s32.totalorder %v1118, %v1113
      %vm1123 = vcmp.eq.s32.totalorder %v1121, %v1113
      %v1124 = vsel %vm1122, 1, 0
      %v1125 = vsel %vm1123, 1, 0
      %v1126 = vcvt.s32.f32 %v1124
      %v1127 = vcvt.s32.f32 %v1125
      %v1128 = vsel %vm687, %v1126, 0.0
      %1129 = vadd.xlane.f32.xlu0 %v1128
      %v1130 = vpop.xlane.xlu0 %1129
      %v1131 = vsel %vm687, %v1127, 0.0
      %1132 = vadd.xlane.f32.xlu0 %v1131
      %v1133 = vpop.xlane.xlu0 %1132
      %v1134 = vlaneseq
      %v1135 = vshrl.u32 %v1134, 7
      %v1136 = vadd.s32 %v1135, 8
      %vm1137 = vcmp.eq.s32.totalorder %v1135, 15
      %vm1138 = vcmp.eq.s32.totalorder %v1136, 15
      %v1139 = vsel %vm1137, 1, 0
      %v1140 = vsel %vm1138, 1, 0
      %vm1141 = vcmp.eq.s32.totalorder %v1139, 1
      %vm1142 = vcmp.eq.s32.totalorder %v1140, 1
      %v1143 = vsel %vm1141, %v489, 0.0
      %v1144 = vsel %vm1142, %v490, 0.0
      %v1145 = vsel %vm687, %v1143, 0.0
      %v1146 = vsel %vm687, %v1144, 0.0
      %v1147 = vadd.f32 %v1145, %v1146
      %v1148 = vrot.slane %v1147, 4
      %v1149 = vadd.f32 %v1147, %v1148
      %v1150 = vrot.slane %v1149, 2
      %v1151 = vadd.f32 %v1149, %v1150
      %v1152 = vrot.slane %v1151, 1
      %v1153 = vadd.f32 %v1151, %v1152
      %vm1154 = vcmp.eq.s32.totalorder %v1113, 15
      %v1155 = vsel %vm1154, %v1153, 0.0
      %v1156 = vsel %vm687, %v1155, 0.0
      %1157 = vadd.xlane.f32.xlu0 %v1156
      %v1158 = vpop.xlane.xlu0 %1157
      %v1159 = vsel %vm1141, %v487, 0.0
      %v1160 = vsel %vm1142, %v488, 0.0
      %v1161 = vsel %vm431, %v1159, 0.0
      %v1162 = vsel %vm431, %v1160, 0.0
      %v1163 = vadd.f32 %v1161, %v1162
      %v1164 = vrot.slane %v1163, 4
      %v1165 = vadd.f32 %v1163, %v1164
      %v1166 = vrot.slane %v1165, 2
      %v1167 = vadd.f32 %v1165, %v1166
      %v1168 = vrot.slane %v1167, 1
      %v1169 = vadd.f32 %v1167, %v1168
      %v1170 = vsel %vm1141, %v1110, 0.0
      %v1171 = vsel %vm1142, %v1111, 0.0
      %v1172 = vsel %vm431, %v1170, 0.0
      %v1173 = vsel %vm431, %v1171, 0.0
      %v1174 = vadd.f32 %v1172, %v1173
      %v1175 = vrot.slane %v1174, 4
      %v1176 = vadd.f32 %v1174, %v1175
      %v1177 = vrot.slane %v1176, 2
      %v1178 = vadd.f32 %v1176, %v1177
      %v1179 = vrot.slane %v1178, 1
      %v1180 = vadd.f32 %v1178, %v1179
      %vm1181 = vcmp.gt.f32.partialorder %v1158, 0.0
      %v1182 = vsel %vm1181, 1, 0
      %vm1183 = vcmp.eq.s32.totalorder %v1182, 1
      %v1184 = vsel %vm1183, %v1169, %v1180
      %v1185 = vsub.f32 1.0, %v1130
      %v1186 = vsub.f32 1.0, %v1133
      %v1187 = vmul.f32 %v1185, %v1184
      %v1188 = vmul.f32 %v1186, %v1184
      %v1190 = vsel %vm687, %v1126, 0
      %v1193 = vsel %vm687, %v1127, 0
      %1195 = vmatprep.subr.mxu0 0.0
      %1196 = vmatpush1.msra.mxu0 %v1110
      %1197 = vmatprep.subr.mxu0 0.0
      %1198 = vmatpush1.msra.mxu0 %v1111
      %1199 = vmatprep.subr.mxu0 0.0
      %1200 = vmatpush1.msra.mxu0 0.0
      %1201 = vmatprep.subr.mxu0 0.0
      %1202 = vmatpush1.msra.mxu0 0.0
      %1203 = vmatprep.subr.mxu0 0.0
      %1204 = vmatpush1.msra.mxu0 0.0
      %1205 = vmatprep.subr.mxu0 0.0
      %1206 = vmatpush1.msra.mxu0 0.0
      %1207 = vmatprep.subr.mxu0 0.0
      %1208 = vmatpush1.msra.mxu0 0.0
      %1209 = vmatprep.subr.mxu0 0.0
      %1210 = vmatpush1.msra.mxu0 0.0
      %1211 = vmatprep.subr.mxu0 0.0
      %1212 = vmatpush1.msra.mxu0 0.0
      %1213 = vmatprep.subr.mxu0 0.0
      %1214 = vmatpush1.msra.mxu0 0.0
      %1215 = vmatprep.subr.mxu0 0.0
      %1216 = vmatpush1.msra.mxu0 0.0
      %1217 = vmatprep.subr.mxu0 0.0
      %1218 = vmatpush1.msra.mxu0 0.0
      %1219 = vmatprep.subr.mxu0 0.0
      %1220 = vmatpush1.msra.mxu0 0.0
      %1221 = vmatprep.subr.mxu0 0.0
      %1222 = vmatpush1.msra.mxu0 0.0
      %1223 = vmatprep.subr.mxu0 0.0
      %1224 = vmatpush1.msra.mxu0 0.0
      %1225 = vmatprep.subr.mxu0 0.0
      %1226 = vmatpush1.msra.mxu0 0.0
      %1227 = vmatprep.subr.mxu0 0.0
      %1228 = vmatpush1.msra.mxu0 0.0
      %1229 = vmatprep.subr.mxu0 0.0
      %1230 = vmatpush1.msra.mxu0 0.0
      %1231 = vmatprep.subr.mxu0 0.0
      %1232 = vmatpush1.msra.mxu0 0.0
      %1233 = vmatprep.subr.mxu0 0.0
      %1234 = vmatpush1.msra.mxu0 0.0
      %1235 = vmatprep.subr.mxu0 0.0
      %1236 = vmatpush1.msra.mxu0 0.0
      %1237 = vmatprep.subr.mxu0 0.0
      %1238 = vmatpush1.msra.mxu0 0.0
      %1239 = vmatprep.subr.mxu0 0.0
      %1240 = vmatpush1.msra.mxu0 0.0
      %1241 = vmatprep.subr.mxu0 0.0
      %1242 = vmatpush1.msra.mxu0 0.0
      %1243 = vmatprep.subr.mxu0 0.0
      %1244 = vmatpush1.msra.mxu0 0.0
      %1245 = vmatprep.subr.mxu0 0.0
      %1246 = vmatpush1.msra.mxu0 0.0
      %1247 = vmatprep.subr.mxu0 0.0
      %1248 = vmatpush1.msra.mxu0 0.0
      %1249 = vmatprep.subr.mxu0 0.0
      %1250 = vmatpush1.msra.mxu0 0.0
      %1251 = vmatprep.subr.mxu0 0.0
      %1252 = vmatpush1.msra.mxu0 0.0
      %1253 = vmatprep.subr.mxu0 0.0
      %1254 = vmatpush1.msra.mxu0 0.0
      %1255 = vmatprep.subr.mxu0 0.0
      %1256 = vmatpush1.msra.mxu0 0.0
      %1257 = vmatprep.subr.mxu0 0.0
      %1258 = vmatpush1.msra.mxu0 0.0
      %1259 = vmatprep.mubr.f32.mxu0 0.0
      %1260 = vmatmul.mubr.f32.gmra.mrb[0].mxu0 %v1190
      %v1261 = vpop.f32.mrb[0].mxu0
      %v1262 = vadd.f32 %v1187, %v1261
      %v1263 = vpop.f32.mrb[0].mxu0
      %1264 = vmatprep.mubr.f32.mxu0 0.0
      %1265 = vmatmul.mubr.f32.gmra.mrb[0].mxu0 %v1193
      %v1266 = vpop.f32.mrb[0].mxu0
      %v1267 = vadd.f32 %v1188, %v1266
      %v1268 = vpop.f32.mrb[0].mxu0
      %1269 = vdwg.mxu0
      %1270 = vst.msk [vmem:[%s426] sm:$0xff] %vm431, %v1262
      %1271 = vst.msk [vmem:[%s426 + $0x8] sm:$0xff] %vm431, %v1267
      %p1272 = scmp.lt.s32.totalorder %s22, 1
      %s1273 = scalar_select %p1272, %s22, 1
      %s1274 = smul.addr %s1273, 2
      %s1275 = smul.addr %s1274, 8
      %s1276 = scalar_lea.vmem %s11, %s1275
      // Predicated region
      $region65: #{cmdss_forward.4} parent=63 // pred_check
        %p1277 = pneg %p286
      $region66: #{cmdss_forward.4} parent=63 // pred_check_branch
        %1279 = sbr.rel (%p1277) target = $region68
      $region67: #{cmdss_forward.4} parent=63 // pred_region
        _
      $region68: #{cmdss_forward.4} parent=63 // pred_fallthru
        _
    $region64: #{cmdss_forward.4} parent=5 // pred_fallthru
      _
    %p1280 = scmp.le.s32.totalorder 2, %s17
    // Predicated region
    $region69: #{cmdss_forward.4} parent=5 // pred_check
      %p1281 = pneg %p1280
    $region70: #{cmdss_forward.4} parent=5 // pred_check_branch
      %1283 = sbr.rel (%p1281) target = $region72
    $region71: #{cmdss_forward.4} parent=5 // pred_region
      %s1284 = ssub.s32 %s17, 2
      // Predicated region
      $region73: #{cmdss_forward.4} parent=71 // pred_check
        %p1285 = pneg %p292
      $region74: #{cmdss_forward.4} parent=71 // pred_check_branch
        %1287 = sbr.rel (%p1285) target = $region76
      $region75: #{cmdss_forward.4} parent=71 // pred_region
        %p1288 = scmp.lt.s32.totalorder %s23, 1
        %s1289 = scalar_select %p1288, %s23, 1
        %s1290 = smul.addr %s1289, 2
        %s1291 = smul.addr %s1290, 8
        %s1292 = scalar_lea.vmem %s11, %s1291
      $region76: #{cmdss_forward.4} parent=71 // pred_fallthru
        _
    $region72: #{cmdss_forward.4} parent=5 // pred_fallthru
      _
  $region6: #{cmdss_forward.4} parent=0 // loop_footer
    %s21 = sadd.s32 1, %s17
  $region7: #{cmdss_forward.4} parent=0 // loop_footer_branch
    %16 = sbr.rel target = $region3
  $region8: #{cmdss_forward.4} parent=0 // loop_exit
    _

// kernel: cmdss_forward.3
$region0: #{cmdss_forward.3}
  #allocation0 [shape = 'u32[]', space=smem, size = 0x4, offset = 0x4, fixed_abs, tag = 'smem constant byte address 0x4 - core index']
  #allocation1 [shape = 'u32[144,128]{1,0:T(1,128)}', space=vmem, size = 0x12000, scoped, tag = 'internal scratch']
  %s0 = inlined_call_operand.vmem [shape: f32[2,64,32], index: 0, kind: input, shape index: {}]
  %s1 = inlined_call_operand.vmem [shape: f32[1,64,32], index: 1, kind: input, shape index: {}]
  %s2 = inlined_call_operand.vmem [shape: f32[2,1,64], index: 2, kind: input, shape index: {}]
  %s3 = inlined_call_operand.vmem [shape: f32[32,96], index: 3, kind: input, shape index: {}]
  %s4 = inlined_call_operand.vmem [shape: f32[32,32], index: 4, kind: input, shape index: {}]
  %s5 = inlined_call_operand.vmem [shape: f32[1,32], index: 5, kind: input, shape index: {}]
  %s6 = inlined_call_operand.vmem [shape: f32[1,32], index: 6, kind: input, shape index: {}]
  %s7 = inlined_call_operand.vmem [shape: f32[1,32], index: 7, kind: input, shape index: {}]
  %s8 = inlined_call_operand.vmem [shape: f32[1,32], index: 8, kind: input, shape index: {}]
  %s9 = inlined_call_operand.vmem [shape: f32[1,32], index: 9, kind: input, shape index: {}]
  %s10 = inlined_call_operand.vmem [shape: f32[1,32], index: 10, kind: input, shape index: {}]
  %s11 = inlined_call_operand.vmem [shape: f32[2,64,64], index: 11, kind: output, shape index: {0}]
  %s12 = inlined_call_operand.vmem [shape: f32[2,1,32], index: 12, kind: output, shape index: {1}]
  %13 = xla_tuple %s11, %s12
  %s14 = sld [smem:[#allocation0]]
  $region85: #{cmdss_forward.3} parent=0
    _
  %s16 = ssub.s32 1, %s14
  %s17 = scalar_select 0, %s16, %s14
  loop: start=0, step=1, limit=4
  $region2: #{cmdss_forward.3} parent=0 // loop_pre_header
    _
  $region3: #{cmdss_forward.3} parent=0 // loop_header
    %s19 = sphi 0, %s23
    %p20 = scmp.ge.s32.totalorder %s19, 4
    %s29 = sphi 0, %s31
    %s32 = sphi 0, %s29
    %s33 = sphi 0, %s32
    %s49 = sphi 0, %s33
    %s53 = sphi 0, %s53
    %s55 = sphi 0, %s53
    %s56 = sphi 0, %s55
    %s70 = sphi 0, %s56
    %s76 = sphi 0, %s78
    %s79 = sphi 0, %s76
    %s80 = sphi 0, %s79
    %s96 = sphi 0, %s80
    %s100 = sphi 0, %s100
    %s102 = sphi 0, %s100
    %s103 = sphi 0, %s102
    %s117 = sphi 0, %s103
    %s121 = sphi 0, %s121
    %s123 = sphi 0, %s121
    %s124 = sphi 0, %s123
    %s138 = sphi 0, %s124
    %s142 = sphi 0, %s142
    %s144 = sphi 0, %s142
    %s145 = sphi 0, %s144
    %s159 = sphi 0, %s145
    %s163 = sphi 0, %s163
    %s165 = sphi 0, %s163
    %s166 = sphi 0, %s165
    %s180 = sphi 0, %s166
    %s184 = sphi 0, %s184
    %s186 = sphi 0, %s184
    %s187 = sphi 0, %s186
    %s201 = sphi 0, %s187
    %s205 = sphi 0, %s205
    %s207 = sphi 0, %s205
    %s208 = sphi 0, %s207
    %s222 = sphi 0, %s208
    %s226 = sphi 0, %s226
    %s228 = sphi 0, %s226
    %s229 = sphi 0, %s228
    %s243 = sphi 0, %s229
    %s247 = sphi 0, %s247
    %s249 = sphi 0, %s247
    %s250 = sphi 0, %s249
    %s264 = sphi 0, %s250
    %s270 = sphi 0, %s272
    %s273 = sphi 0, %s270
    %s274 = sphi 0, %s273
    %s290 = sphi 0, %s274
    %s296 = sphi 0, %s298
    %s299 = sphi 0, %s296
    %s300 = sphi 0, %s299
    %s316 = sphi 0, %s300
  $region4: #{cmdss_forward.3} parent=0 // loop_header_branch
    %22 = sbr.rel (%p20) target = $region8
  $region5: #{cmdss_forward.3} parent=0 // loop_body
    %s24 = ssub.s32 %s19, 1
    %s25 = ssub.s32 %s19, 2
    %s26 = sadd.s32 %s19, 1
    %s27 = ssub.s32 %s19, %s26
    %p28 = scmp.eq.s32.totalorder %s27, 0
    %s30 = sadd.s32 %s29, 1
    %s31 = scalar_select %p28, %s29, %s30
    %p34 = pneg %p28
    %p35 = scmp.eq.s32.totalorder %s19, 1
    %p36 = por %p34, %p35
    %p37 = scmp.ne.s32.totalorder %s29, %s32
    %p38 = scmp.eq.s32.totalorder %s19, 0
    %p39 = por %p37, %p38
    %p40 = scmp.ne.s32.totalorder %s29, %s32
    %p41 = scmp.eq.s32.totalorder %s24, 1
    %p42 = por %p40, %p41
    %p43 = scmp.ne.s32.totalorder %s32, %s33
    %p44 = scmp.eq.s32.totalorder %s24, 0
    %p45 = por %p43, %p44
    %p46 = scmp.ne.s32.totalorder %s32, %s33
    %p47 = scmp.eq.s32.totalorder %s25, 1
    %p48 = por %p46, %p47
    %p50 = scmp.ne.s32.totalorder %s33, %s49
    %p51 = scmp.eq.s32.totalorder %s25, 0
    %p52 = por %p50, %p51
    %s54 = sadd.s32 %s53, 1
    %p57 = scmp.eq.s32.totalorder %s19, 1
    %p58 = scmp.ne.s32.totalorder %s53, %s55
    %p59 = scmp.eq.s32.totalorder %s19, 0
    %p60 = por %p58, %p59
    %p61 = scmp.ne.s32.totalorder %s53, %s55
    %p62 = scmp.eq.s32.totalorder %s24, 1
    %p63 = por %p61, %p62
    %p64 = scmp.ne.s32.totalorder %s55, %s56
    %p65 = scmp.eq.s32.totalorder %s24, 0
    %p66 = por %p64, %p65
    %p67 = scmp.ne.s32.totalorder %s55, %s56
    %p68 = scmp.eq.s32.totalorder %s25, 1
    %p69 = por %p67, %p68
    %p71 = scmp.ne.s32.totalorder %s56, %s70
    %p72 = scmp.eq.s32.totalorder %s25, 0
    %p73 = por %p71, %p72
    %s74 = ssub.s32 %s19, %s26
    %p75 = scmp.eq.s32.totalorder %s74, 0
    %s77 = sadd.s32 %s76, 1
    %s78 = scalar_select %p75, %s76, %s77
    %p81 = pneg %p75
    %p82 = scmp.eq.s32.totalorder %s19, 1
    %p83 = por %p81, %p82
    %p84 = scmp.ne.s32.totalorder %s76, %s79
    %p85 = scmp.eq.s32.totalorder %s19, 0
    %p86 = por %p84, %p85
    %p87 = scmp.ne.s32.totalorder %s76, %s79
    %p88 = scmp.eq.s32.totalorder %s24, 1
    %p89 = por %p87, %p88
    %p90 = scmp.ne.s32.totalorder %s79, %s80
    %p91 = scmp.eq.s32.totalorder %s24, 0
    %p92 = por %p90, %p91
    %p93 = scmp.ne.s32.totalorder %s79, %s80
    %p94 = scmp.eq.s32.totalorder %s25, 1
    %p95 = por %p93, %p94
    %p97 = scmp.ne.s32.totalorder %s80, %s96
    %p98 = scmp.eq.s32.totalorder %s25, 0
    %p99 = por %p97, %p98
    %s101 = sadd.s32 %s100, 1
    %p104 = scmp.eq.s32.totalorder %s19, 1
    %p105 = scmp.ne.s32.totalorder %s100, %s102
    %p106 = scmp.eq.s32.totalorder %s19, 0
    %p107 = por %p105, %p106
    %p108 = scmp.ne.s32.totalorder %s100, %s102
    %p109 = scmp.eq.s32.totalorder %s24, 1
    %p110 = por %p108, %p109
    %p111 = scmp.ne.s32.totalorder %s102, %s103
    %p112 = scmp.eq.s32.totalorder %s24, 0
    %p113 = por %p111, %p112
    %p114 = scmp.ne.s32.totalorder %s102, %s103
    %p115 = scmp.eq.s32.totalorder %s25, 1
    %p116 = por %p114, %p115
    %p118 = scmp.ne.s32.totalorder %s103, %s117
    %p119 = scmp.eq.s32.totalorder %s25, 0
    %p120 = por %p118, %p119
    %s122 = sadd.s32 %s121, 1
    %p125 = scmp.eq.s32.totalorder %s19, 1
    %p126 = scmp.ne.s32.totalorder %s121, %s123
    %p127 = scmp.eq.s32.totalorder %s19, 0
    %p128 = por %p126, %p127
    %p129 = scmp.ne.s32.totalorder %s121, %s123
    %p130 = scmp.eq.s32.totalorder %s24, 1
    %p131 = por %p129, %p130
    %p132 = scmp.ne.s32.totalorder %s123, %s124
    %p133 = scmp.eq.s32.totalorder %s24, 0
    %p134 = por %p132, %p133
    %p135 = scmp.ne.s32.totalorder %s123, %s124
    %p136 = scmp.eq.s32.totalorder %s25, 1
    %p137 = por %p135, %p136
    %p139 = scmp.ne.s32.totalorder %s124, %s138
    %p140 = scmp.eq.s32.totalorder %s25, 0
    %p141 = por %p139, %p140
    %s143 = sadd.s32 %s142, 1
    %p146 = scmp.eq.s32.totalorder %s19, 1
    %p147 = scmp.ne.s32.totalorder %s142, %s144
    %p148 = scmp.eq.s32.totalorder %s19, 0
    %p149 = por %p147, %p148
    %p150 = scmp.ne.s32.totalorder %s142, %s144
    %p151 = scmp.eq.s32.totalorder %s24, 1
    %p152 = por %p150, %p151
    %p153 = scmp.ne.s32.totalorder %s144, %s145
    %p154 = scmp.eq.s32.totalorder %s24, 0
    %p155 = por %p153, %p154
    %p156 = scmp.ne.s32.totalorder %s144, %s145
    %p157 = scmp.eq.s32.totalorder %s25, 1
    %p158 = por %p156, %p157
    %p160 = scmp.ne.s32.totalorder %s145, %s159
    %p161 = scmp.eq.s32.totalorder %s25, 0
    %p162 = por %p160, %p161
    %s164 = sadd.s32 %s163, 1
    %p167 = scmp.eq.s32.totalorder %s19, 1
    %p168 = scmp.ne.s32.totalorder %s163, %s165
    %p169 = scmp.eq.s32.totalorder %s19, 0
    %p170 = por %p168, %p169
    %p171 = scmp.ne.s32.totalorder %s163, %s165
    %p172 = scmp.eq.s32.totalorder %s24, 1
    %p173 = por %p171, %p172
    %p174 = scmp.ne.s32.totalorder %s165, %s166
    %p175 = scmp.eq.s32.totalorder %s24, 0
    %p176 = por %p174, %p175
    %p177 = scmp.ne.s32.totalorder %s165, %s166
    %p178 = scmp.eq.s32.totalorder %s25, 1
    %p179 = por %p177, %p178
    %p181 = scmp.ne.s32.totalorder %s166, %s180
    %p182 = scmp.eq.s32.totalorder %s25, 0
    %p183 = por %p181, %p182
    %s185 = sadd.s32 %s184, 1
    %p188 = scmp.eq.s32.totalorder %s19, 1
    %p189 = scmp.ne.s32.totalorder %s184, %s186
    %p190 = scmp.eq.s32.totalorder %s19, 0
    %p191 = por %p189, %p190
    %p192 = scmp.ne.s32.totalorder %s184, %s186
    %p193 = scmp.eq.s32.totalorder %s24, 1
    %p194 = por %p192, %p193
    %p195 = scmp.ne.s32.totalorder %s186, %s187
    %p196 = scmp.eq.s32.totalorder %s24, 0
    %p197 = por %p195, %p196
    %p198 = scmp.ne.s32.totalorder %s186, %s187
    %p199 = scmp.eq.s32.totalorder %s25, 1
    %p200 = por %p198, %p199
    %p202 = scmp.ne.s32.totalorder %s187, %s201
    %p203 = scmp.eq.s32.totalorder %s25, 0
    %p204 = por %p202, %p203
    %s206 = sadd.s32 %s205, 1
    %p209 = scmp.eq.s32.totalorder %s19, 1
    %p210 = scmp.ne.s32.totalorder %s205, %s207
    %p211 = scmp.eq.s32.totalorder %s19, 0
    %p212 = por %p210, %p211
    %p213 = scmp.ne.s32.totalorder %s205, %s207
    %p214 = scmp.eq.s32.totalorder %s24, 1
    %p215 = por %p213, %p214
    %p216 = scmp.ne.s32.totalorder %s207, %s208
    %p217 = scmp.eq.s32.totalorder %s24, 0
    %p218 = por %p216, %p217
    %p219 = scmp.ne.s32.totalorder %s207, %s208
    %p220 = scmp.eq.s32.totalorder %s25, 1
    %p221 = por %p219, %p220
    %p223 = scmp.ne.s32.totalorder %s208, %s222
    %p224 = scmp.eq.s32.totalorder %s25, 0
    %p225 = por %p223, %p224
    %s227 = sadd.s32 %s226, 1
    %p230 = scmp.eq.s32.totalorder %s19, 1
    %p231 = scmp.ne.s32.totalorder %s226, %s228
    %p232 = scmp.eq.s32.totalorder %s19, 0
    %p233 = por %p231, %p232
    %p234 = scmp.ne.s32.totalorder %s226, %s228
    %p235 = scmp.eq.s32.totalorder %s24, 1
    %p236 = por %p234, %p235
    %p237 = scmp.ne.s32.totalorder %s228, %s229
    %p238 = scmp.eq.s32.totalorder %s24, 0
    %p239 = por %p237, %p238
    %p240 = scmp.ne.s32.totalorder %s228, %s229
    %p241 = scmp.eq.s32.totalorder %s25, 1
    %p242 = por %p240, %p241
    %p244 = scmp.ne.s32.totalorder %s229, %s243
    %p245 = scmp.eq.s32.totalorder %s25, 0
    %p246 = por %p244, %p245
    %s248 = sadd.s32 %s247, 1
    %p251 = scmp.eq.s32.totalorder %s19, 1
    %p252 = scmp.ne.s32.totalorder %s247, %s249
    %p253 = scmp.eq.s32.totalorder %s19, 0
    %p254 = por %p252, %p253
    %p255 = scmp.ne.s32.totalorder %s247, %s249
    %p256 = scmp.eq.s32.totalorder %s24, 1
    %p257 = por %p255, %p256
    %p258 = scmp.ne.s32.totalorder %s249, %s250
    %p259 = scmp.eq.s32.totalorder %s24, 0
    %p260 = por %p258, %p259
    %p261 = scmp.ne.s32.totalorder %s249, %s250
    %p262 = scmp.eq.s32.totalorder %s25, 1
    %p263 = por %p261, %p262
    %p265 = scmp.ne.s32.totalorder %s250, %s264
    %p266 = scmp.eq.s32.totalorder %s25, 0
    %p267 = por %p265, %p266
    %s268 = ssub.s32 %s19, %s26
    %p269 = scmp.eq.s32.totalorder %s268, 0
    %s271 = sadd.s32 %s270, 1
    %s272 = scalar_select %p269, %s270, %s271
    %p275 = pneg %p269
    %p276 = scmp.eq.s32.totalorder %s19, 1
    %p277 = por %p275, %p276
    %p278 = scmp.ne.s32.totalorder %s270, %s273
    %p279 = scmp.eq.s32.totalorder %s19, 0
    %p280 = por %p278, %p279
    %p281 = scmp.ne.s32.totalorder %s270, %s273
    %p282 = scmp.eq.s32.totalorder %s24, 1
    %p283 = por %p281, %p282
    %p284 = scmp.ne.s32.totalorder %s273, %s274
    %p285 = scmp.eq.s32.totalorder %s24, 0
    %p286 = por %p284, %p285
    %p287 = scmp.ne.s32.totalorder %s273, %s274
    %p288 = scmp.eq.s32.totalorder %s25, 1
    %p289 = por %p287, %p288
    %p291 = scmp.ne.s32.totalorder %s274, %s290
    %p292 = scmp.eq.s32.totalorder %s25, 0
    %p293 = por %p291, %p292
    %s294 = ssub.s32 %s19, %s26
    %p295 = scmp.eq.s32.totalorder %s294, 0
    %s297 = sadd.s32 %s296, 1
    %s298 = scalar_select %p295, %s296, %s297
    %p301 = pneg %p295
    %p302 = scmp.eq.s32.totalorder %s19, 1
    %p303 = por %p301, %p302
    %p304 = scmp.ne.s32.totalorder %s296, %s299
    %p305 = scmp.eq.s32.totalorder %s19, 0
    %p306 = por %p304, %p305
    %p307 = scmp.ne.s32.totalorder %s296, %s299
    %p308 = scmp.eq.s32.totalorder %s24, 1
    %p309 = por %p307, %p308
    %p310 = scmp.ne.s32.totalorder %s299, %s300
    %p311 = scmp.eq.s32.totalorder %s24, 0
    %p312 = por %p310, %p311
    %p313 = scmp.ne.s32.totalorder %s299, %s300
    %p314 = scmp.eq.s32.totalorder %s25, 1
    %p315 = por %p313, %p314
    %p317 = scmp.ne.s32.totalorder %s300, %s316
    %p318 = scmp.eq.s32.totalorder %s25, 0
    %p319 = por %p317, %p318
    %p320 = scmp.le.s32.totalorder 1, %s19
    %p321 = scmp.lt.s32.totalorder %s19, 3
    %p322 = pnand %p320, %p321
    %p323 = pneg %p322
    // Predicated region
    $region9: #{cmdss_forward.3} parent=5 // pred_check
      _
    $region10: #{cmdss_forward.3} parent=5 // pred_check_branch
      %325 = sbr.rel (%p322) target = $region12
    $region11: #{cmdss_forward.3} parent=5 // pred_region
      %s326 = ssub.s32 %s19, 1
      // Predicated region
      $region13: #{cmdss_forward.3} parent=11 // pred_check
        %p327 = pneg %p66
      $region14: #{cmdss_forward.3} parent=11 // pred_check_branch
        %329 = sbr.rel (%p327) target = $region16
      $region15: #{cmdss_forward.3} parent=11 // pred_region
        _
      $region16: #{cmdss_forward.3} parent=11 // pred_fallthru
        _
      // Predicated region
      $region17: #{cmdss_forward.3} parent=11 // pred_check
        %p330 = pneg %p113
      $region18: #{cmdss_forward.3} parent=11 // pred_check_branch
        %332 = sbr.rel (%p330) target = $region20
      $region19: #{cmdss_forward.3} parent=11 // pred_region
        _
      $region20: #{cmdss_forward.3} parent=11 // pred_fallthru
        _
      // Predicated region
      $region21: #{cmdss_forward.3} parent=11 // pred_check
        %p333 = pneg %p134
      $region22: #{cmdss_forward.3} parent=11 // pred_check_branch
        %335 = sbr.rel (%p333) target = $region24
      $region23: #{cmdss_forward.3} parent=11 // pred_region
        _
      $region24: #{cmdss_forward.3} parent=11 // pred_fallthru
        _
      // Predicated region
      $region25: #{cmdss_forward.3} parent=11 // pred_check
        %p336 = pneg %p155
      $region26: #{cmdss_forward.3} parent=11 // pred_check_branch
        %338 = sbr.rel (%p336) target = $region28
      $region27: #{cmdss_forward.3} parent=11 // pred_region
        _
      $region28: #{cmdss_forward.3} parent=11 // pred_fallthru
        _
      // Predicated region
      $region29: #{cmdss_forward.3} parent=11 // pred_check
        %p339 = pneg %p176
      $region30: #{cmdss_forward.3} parent=11 // pred_check_branch
        %341 = sbr.rel (%p339) target = $region32
      $region31: #{cmdss_forward.3} parent=11 // pred_region
        _
      $region32: #{cmdss_forward.3} parent=11 // pred_fallthru
        _
      // Predicated region
      $region33: #{cmdss_forward.3} parent=11 // pred_check
        %p342 = pneg %p197
      $region34: #{cmdss_forward.3} parent=11 // pred_check_branch
        %344 = sbr.rel (%p342) target = $region36
      $region35: #{cmdss_forward.3} parent=11 // pred_region
        _
      $region36: #{cmdss_forward.3} parent=11 // pred_fallthru
        _
      // Predicated region
      $region37: #{cmdss_forward.3} parent=11 // pred_check
        %p345 = pneg %p218
      $region38: #{cmdss_forward.3} parent=11 // pred_check_branch
        %347 = sbr.rel (%p345) target = $region40
      $region39: #{cmdss_forward.3} parent=11 // pred_region
        _
      $region40: #{cmdss_forward.3} parent=11 // pred_fallthru
        _
      // Predicated region
      $region41: #{cmdss_forward.3} parent=11 // pred_check
        %p348 = pneg %p239
      $region42: #{cmdss_forward.3} parent=11 // pred_check_branch
        %350 = sbr.rel (%p348) target = $region44
      $region43: #{cmdss_forward.3} parent=11 // pred_region
        _
      $region44: #{cmdss_forward.3} parent=11 // pred_fallthru
        _
      // Predicated region
      $region45: #{cmdss_forward.3} parent=11 // pred_check
        %p351 = pneg %p260
      $region46: #{cmdss_forward.3} parent=11 // pred_check_branch
        %353 = sbr.rel (%p351) target = $region48
      $region47: #{cmdss_forward.3} parent=11 // pred_region
        _
      $region48: #{cmdss_forward.3} parent=11 // pred_fallthru
        _
    $region12: #{cmdss_forward.3} parent=5 // pred_fallthru
      _
    %p354 = scmp.lt.s32.totalorder %s19, 2
    // Predicated region
    $region49: #{cmdss_forward.3} parent=5 // pred_check
      %p355 = pneg %p354
    $region50: #{cmdss_forward.3} parent=5 // pred_check_branch
      %357 = sbr.rel (%p355) target = $region52
    $region51: #{cmdss_forward.3} parent=5 // pred_region
      // Predicated region
      $region53: #{cmdss_forward.3} parent=51 // pred_check
        %p358 = pneg %p39
      $region54: #{cmdss_forward.3} parent=51 // pred_check_branch
        %360 = sbr.rel (%p358) target = $region56
      $region55: #{cmdss_forward.3} parent=51 // pred_region
        %p361 = scmp.lt.s32.totalorder %s19, 1
        %s362 = scalar_select %p361, %s19, 1
        %s363 = smul.addr %s362, 8
        %s364 = smul.addr %s363, 8
        %s365 = scalar_lea.vmem %s0, %s364
      $region56: #{cmdss_forward.3} parent=51 // pred_fallthru
        _
      // Predicated region
      $region57: #{cmdss_forward.3} parent=51 // pred_check
        %p366 = pneg %p86
      $region58: #{cmdss_forward.3} parent=51 // pred_check_branch
        %368 = sbr.rel (%p366) target = $region60
      $region59: #{cmdss_forward.3} parent=51 // pred_region
        %p369 = scmp.lt.s32.totalorder %s19, 1
        %s370 = scalar_select %p369, %s19, 1
        %s371 = scalar_lea.vmem %s2, %s370
      $region60: #{cmdss_forward.3} parent=51 // pred_fallthru
        _
    $region52: #{cmdss_forward.3} parent=5 // pred_fallthru
      _
    %p372 = scmp.le.s32.totalorder 1, %s19
    %p373 = scmp.lt.s32.totalorder %s19, 3
    %p374 = pnand %p372, %p373
    %p375 = pneg %p374
    // Predicated region
    $region61: #{cmdss_forward.3} parent=5 // pred_check
      _
    $region62: #{cmdss_forward.3} parent=5 // pred_check_branch
      %377 = sbr.rel (%p374) target = $region64
    $region63: #{cmdss_forward.3} parent=5 // pred_region
      %s378 = ssub.s32 %s19, 1
      %p379 = scmp.lt.s32.totalorder %s24, 1
      %s380 = scalar_select %p379, %s24, 1
      %s381 = smul.addr %s380, 8
      %s382 = smul.addr %s381, 8
      %s383 = scalar_lea.vmem %s0, %s382
      %p384 = pneg %p45
      %p385 = pneg %p42
      %p386 = pneg %p66
      %p387 = pneg %p63
      %p388 = scmp.lt.s32.totalorder %s24, 1
      %s389 = scalar_select %p388, %s24, 1
      %s390 = scalar_lea.vmem %s2, %s389
      %p391 = pneg %p92
      %p392 = pneg %p89
      %p393 = pneg %p113
      %p394 = pneg %p110
      %p395 = pneg %p134
      %p396 = pneg %p131
      %p397 = pneg %p155
      %p398 = pneg %p152
      %p399 = pneg %p176
      %p400 = pneg %p173
      %p401 = pneg %p197
      %p402 = pneg %p194
      %p403 = pneg %p218
      %p404 = pneg %p215
      %p405 = pneg %p239
      %p406 = pneg %p236
      %p407 = pneg %p260
      %p408 = pneg %p257
      %p409 = pneg %p286
      %p410 = pneg %p283
      %p411 = scmp.lt.s32.totalorder %s24, 1
      %s412 = scalar_select %p411, %s24, 1
      %s413 = smul.addr %s412, 8
      %s414 = smul.addr %s413, 8
      %s415 = scalar_lea.vmem %s11, %s414
      %p416 = pneg %p312
      %p417 = pneg %p309
      %p418 = scmp.lt.s32.totalorder %s24, 1
      %s419 = scalar_select %p418, %s24, 1
      %s420 = scalar_lea.vmem %s12, %s419
      %p421 = scmp.lt.s32.totalorder %s24, 1
      %s422 = scalar_select %p421, %s24, 1
      %s423 = smul.addr %s422, 8
      %s424 = smul.addr %s423, 8
      %s425 = scalar_lea.vmem %s0, %s424
      %p426 = scmp.lt.s32.totalorder %s24, 1
      %s427 = scalar_select %p426, %s24, 1
      %s428 = scalar_lea.vmem %s2, %s427
      %p429 = scmp.lt.s32.totalorder %s24, 1
      %s430 = scalar_select %p429, %s24, 1
      %s431 = smul.addr %s430, 8
      %s432 = smul.addr %s431, 8
      %s433 = scalar_lea.vmem %s11, %s432
      %p434 = scmp.lt.s32.totalorder %s24, 1
      %s435 = scalar_select %p434, %s24, 1
      %s436 = scalar_lea.vmem %s12, %s435
      %v437 = vld [vmem:[%s425] sm:$0xff]
      %v438 = vld [vmem:[%s425 + $0x8] sm:$0xff]
      %v439 = vld [vmem:[%s425 + $0x10] sm:$0xff]
      %v440 = vld [vmem:[%s425 + $0x18] sm:$0xff]
      %v441 = vld [vmem:[%s425 + $0x20] sm:$0xff]
      %v442 = vld [vmem:[%s425 + $0x28] sm:$0xff]
      %v443 = vld [vmem:[%s425 + $0x30] sm:$0xff]
      %v444 = vld [vmem:[%s425 + $0x38] sm:$0xff]
      %v445 = vld [vmem:[%s1] sm:$0xff]
      %v446 = vld [vmem:[%s1 + $0x8] sm:$0xff]
      %v447 = vld [vmem:[%s1 + $0x10] sm:$0xff]
      %v448 = vld [vmem:[%s1 + $0x18] sm:$0xff]
      %v449 = vld [vmem:[%s1 + $0x20] sm:$0xff]
      %v450 = vld [vmem:[%s1 + $0x28] sm:$0xff]
      %v451 = vld [vmem:[%s1 + $0x30] sm:$0xff]
      %v452 = vld [vmem:[%s1 + $0x38] sm:$0xff]
      %v453 = vadd.f32 %v437, %v445
      %v454 = vadd.f32 %v438, %v446
      %v455 = vadd.f32 %v439, %v447
      %v456 = vadd.f32 %v440, %v448
      %v457 = vadd.f32 %v441, %v449
      %v458 = vadd.f32 %v442, %v450
      %v459 = vadd.f32 %v443, %v451
      %v460 = vadd.f32 %v444, %v452
      %v461 = vld [vmem:[%s5] sm:$0x1]
      %v462 = vld [vmem:[%s6] sm:$0x1]
      %vm463 = vcmask 261120
      %v464 = vsel %vm463, %v453, 0.0
      %465 = vadd.xlane.f32.xlu0 %v464
      %v466 = vpop.xlane.xlu0 %465
      %v467 = vsel %vm463, %v454, 0.0
      %468 = vadd.xlane.f32.xlu0 %v467
      %v469 = vpop.xlane.xlu0 %468
      %v470 = vsel %vm463, %v455, 0.0
      %471 = vadd.xlane.f32.xlu0 %v470
      %v472 = vpop.xlane.xlu0 %471
      %v473 = vsel %vm463, %v456, 0.0
      %474 = vadd.xlane.f32.xlu0 %v473
      %v475 = vpop.xlane.xlu0 %474
      %v476 = vsel %vm463, %v457, 0.0
      %477 = vadd.xlane.f32.xlu0 %v476
      %v478 = vpop.xlane.xlu0 %477
      %v479 = vsel %vm463, %v458, 0.0
      %480 = vadd.xlane.f32.xlu0 %v479
      %v481 = vpop.xlane.xlu0 %480
      %v482 = vsel %vm463, %v459, 0.0
      %483 = vadd.xlane.f32.xlu0 %v482
      %v484 = vpop.xlane.xlu0 %483
      %v485 = vsel %vm463, %v460, 0.0
      %486 = vadd.xlane.f32.xlu0 %v485
      %v487 = vpop.xlane.xlu0 %486
      %v488 = vrcp.pop 32.0
      %v489 = vmul.f32 %v466, %v488
      %v490 = vmul.f32 %v469, %v488
      %v491 = vmul.f32 %v472, %v488
      %v492 = vmul.f32 %v475, %v488
      %v493 = vmul.f32 %v478, %v488
      %v494 = vmul.f32 %v481, %v488
      %v495 = vmul.f32 %v484, %v488
      %v496 = vmul.f32 %v487, %v488
      %v497 = vsub.f32 %v453, %v489
      %v498 = vsub.f32 %v454, %v490
      %v499 = vsub.f32 %v455, %v491
      %v500 = vsub.f32 %v456, %v492
      %v501 = vsub.f32 %v457, %v493
      %v502 = vsub.f32 %v458, %v494
      %v503 = vsub.f32 %v459, %v495
      %v504 = vsub.f32 %v460, %v496
      %v505 = vmul.f32 %v497, %v497
      %v506 = vmul.f32 %v498, %v498
      %v507 = vmul.f32 %v499, %v499
      %v508 = vmul.f32 %v500, %v500
      %v509 = vmul.f32 %v501, %v501
      %v510 = vmul.f32 %v502, %v502
      %v511 = vmul.f32 %v503, %v503
      %v512 = vmul.f32 %v504, %v504
      %v513 = vsel %vm463, %v505, 0.0
      %514 = vadd.xlane.f32.xlu0 %v513
      %v515 = vpop.xlane.xlu0 %514
      %v516 = vsel %vm463, %v506, 0.0
      %517 = vadd.xlane.f32.xlu0 %v516
      %v518 = vpop.xlane.xlu0 %517
      %v519 = vsel %vm463, %v507, 0.0
      %520 = vadd.xlane.f32.xlu0 %v519
      %v521 = vpop.xlane.xlu0 %520
      %v522 = vsel %vm463, %v508, 0.0
      %523 = vadd.xlane.f32.xlu0 %v522
      %v524 = vpop.xlane.xlu0 %523
      %v525 = vsel %vm463, %v509, 0.0
      %526 = vadd.xlane.f32.xlu0 %v525
      %v527 = vpop.xlane.xlu0 %526
      %v528 = vsel %vm463, %v510, 0.0
      %529 = vadd.xlane.f32.xlu0 %v528
      %v530 = vpop.xlane.xlu0 %529
      %v531 = vsel %vm463, %v511, 0.0
      %532 = vadd.xlane.f32.xlu0 %v531
      %v533 = vpop.xlane.xlu0 %532
      %v534 = vsel %vm463, %v512, 0.0
      %535 = vadd.xlane.f32.xlu0 %v534
      %v536 = vpop.xlane.xlu0 %535
      %v537 = vmul.f32 %v515, %v488
      %v538 = vmul.f32 %v518, %v488
      %v539 = vmul.f32 %v521, %v488
      %v540 = vmul.f32 %v524, %v488
      %v541 = vmul.f32 %v527, %v488
      %v542 = vmul.f32 %v530, %v488
      %v543 = vmul.f32 %v533, %v488
      %v544 = vmul.f32 %v536, %v488
      %v545 = vadd.f32 %v537, 1e-12
      %v546 = vadd.f32 %v538, 1e-12
      %v547 = vadd.f32 %v539, 1e-12
      %v548 = vadd.f32 %v540, 1e-12
      %v549 = vadd.f32 %v541, 1e-12
      %v550 = vadd.f32 %v542, 1e-12
      %v551 = vadd.f32 %v543, 1e-12
      %v552 = vadd.f32 %v544, 1e-12
      %v553 = vrsqrt.pop %v545
      %v554 = vmul.f32 %v545, %v553
      %vm555 = vcmp.eq.f32.partialorder %v545, inf
      %v556 = vsel %vm555, %v545, %v554
      %vm557 = vcmp.eq.f32.partialorder %v545, 0.0
      %v558 = vand.u32 %v545, 2147483648
      %v559 = vsel %vm557, %v558, %v556
      %v560 = vrsqrt.pop %v546
      %v561 = vmul.f32 %v546, %v560
      %vm562 = vcmp.eq.f32.partialorder %v546, inf
      %v563 = vsel %vm562, %v546, %v561
      %vm564 = vcmp.eq.f32.partialorder %v546, 0.0
      %v565 = vand.u32 %v546, 2147483648
      %v566 = vsel %vm564, %v565, %v563
      %v567 = vrsqrt.pop %v547
      %v568 = vmul.f32 %v547, %v567
      %vm569 = vcmp.eq.f32.partialorder %v547, inf
      %v570 = vsel %vm569, %v547, %v568
      %vm571 = vcmp.eq.f32.partialorder %v547, 0.0
      %v572 = vand.u32 %v547, 2147483648
      %v573 = vsel %vm571, %v572, %v570
      %v574 = vrsqrt.pop %v548
      %v575 = vmul.f32 %v548, %v574
      %vm576 = vcmp.eq.f32.partialorder %v548, inf
      %v577 = vsel %vm576, %v548, %v575
      %vm578 = vcmp.eq.f32.partialorder %v548, 0.0
      %v579 = vand.u32 %v548, 2147483648
      %v580 = vsel %vm578, %v579, %v577
      %v581 = vrsqrt.pop %v549
      %v582 = vmul.f32 %v549, %v581
      %vm583 = vcmp.eq.f32.partialorder %v549, inf
      %v584 = vsel %vm583, %v549, %v582
      %vm585 = vcmp.eq.f32.partialorder %v549, 0.0
      %v586 = vand.u32 %v549, 2147483648
      %v587 = vsel %vm585, %v586, %v584
      %v588 = vrsqrt.pop %v550
      %v589 = vmul.f32 %v550, %v588
      %vm590 = vcmp.eq.f32.partialorder %v550, inf
      %v591 = vsel %vm590, %v550, %v589
      %vm592 = vcmp.eq.f32.partialorder %v550, 0.0
      %v593 = vand.u32 %v550, 2147483648
      %v594 = vsel %vm592, %v593, %v591
      %v595 = vrsqrt.pop %v551
      %v596 = vmul.f32 %v551, %v595
      %vm597 = vcmp.eq.f32.partialorder %v551, inf
      %v598 = vsel %vm597, %v551, %v596
      %vm599 = vcmp.eq.f32.partialorder %v551, 0.0
      %v600 = vand.u32 %v551, 2147483648
      %v601 = vsel %vm599, %v600, %v598
      %v602 = vrsqrt.pop %v552
      %v603 = vmul.f32 %v552, %v602
      %vm604 = vcmp.eq.f32.partialorder %v552, inf
      %v605 = vsel %vm604, %v552, %v603
      %vm606 = vcmp.eq.f32.partialorder %v552, 0.0
      %v607 = vand.u32 %v552, 2147483648
      %v608 = vsel %vm606, %v607, %v605
      %v609 = vrcp.pop %v559
      %v610 = vmul.f32 %v497, %v609
      %v611 = vrcp.pop %v566
      %v612 = vmul.f32 %v498, %v611
      %v613 = vrcp.pop %v573
      %v614 = vmul.f32 %v499, %v613
      %v615 = vrcp.pop %v580
      %v616 = vmul.f32 %v500, %v615
      %v617 = vrcp.pop %v587
      %v618 = vmul.f32 %v501, %v617
      %v619 = vrcp.pop %v594
      %v620 = vmul.f32 %v502, %v619
      %v621 = vrcp.pop %v601
      %v622 = vmul.f32 %v503, %v621
      %v623 = vrcp.pop %v608
      %v624 = vmul.f32 %v504, %v623
      %v626 = vlaneseq
      %v627 = vshrl.u32 %v626, 7
      %v628 = vsub.s32 0, %v627
      %v629 = vrot.slane %v461, %v628
      %v631 = vmul.f32 %v629, %v610
      %v632 = vmul.f32 %v629, %v612
      %v633 = vmul.f32 %v629, %v614
      %v634 = vmul.f32 %v629, %v616
      %v635 = vmul.f32 %v629, %v618
      %v636 = vmul.f32 %v629, %v620
      %v637 = vmul.f32 %v629, %v622
      %v638 = vmul.f32 %v629, %v624
      %v640 = vlaneseq
      %v641 = vshrl.u32 %v640, 7
      %v642 = vsub.s32 0, %v641
      %v643 = vrot.slane %v462, %v642
      %v645 = vadd.f32 %v631, %v643
      %v646 = vadd.f32 %v632, %v643
      %v647 = vadd.f32 %v633, %v643
      %v648 = vadd.f32 %v634, %v643
      %v649 = vadd.f32 %v635, %v643
      %v650 = vadd.f32 %v636, %v643
      %v651 = vadd.f32 %v637, %v643
      %v652 = vadd.f32 %v638, %v643
      %v653 = vld [vmem:[%s3] sm:$0xff]
      %v654 = vld [vmem:[%s3 + $0x8] sm:$0xff]
      %v655 = vld [vmem:[%s3 + $0x10] sm:$0xff]
      %v656 = vld [vmem:[%s3 + $0x18] sm:$0xff]
      %v658 = vsel %vm463, %v645, 0
      %v661 = vsel %vm463, %v646, 0
      %v664 = vsel %vm463, %v647, 0
      %v667 = vsel %vm463, %v648, 0
      %v670 = vsel %vm463, %v649, 0
      %v673 = vsel %vm463, %v650, 0
      %v676 = vsel %vm463, %v651, 0
      %v679 = vsel %vm463, %v652, 0
      %681 = vmatprep.subr.mxu0 0.0
      %682 = vmatpush1.msra.mxu0 %v653
      %683 = vmatprep.subr.mxu0 0.0
      %684 = vmatpush1.msra.mxu0 %v654
      %685 = vmatprep.subr.mxu0 0.0
      %686 = vmatpush1.msra.mxu0 %v655
      %687 = vmatprep.subr.mxu0 0.0
      %688 = vmatpush1.msra.mxu0 %v656
      %689 = vmatprep.subr.mxu0 0.0
      %690 = vmatpush1.msra.mxu0 0.0
      %691 = vmatprep.subr.mxu0 0.0
      %692 = vmatpush1.msra.mxu0 0.0
      %693 = vmatprep.subr.mxu0 0.0
      %694 = vmatpush1.msra.mxu0 0.0
      %695 = vmatprep.subr.mxu0 0.0
      %696 = vmatpush1.msra.mxu0 0.0
      %697 = vmatprep.subr.mxu0 0.0
      %698 = vmatpush1.msra.mxu0 0.0
      %699 = vmatprep.subr.mxu0 0.0
      %700 = vmatpush1.msra.mxu0 0.0
      %701 = vmatprep.subr.mxu0 0.0
      %702 = vmatpush1.msra.mxu0 0.0
      %703 = vmatprep.subr.mxu0 0.0
      %704 = vmatpush1.msra.mxu0 0.0
      %705 = vmatprep.subr.mxu0 0.0
      %706 = vmatpush1.msra.mxu0 0.0
      %707 = vmatprep.subr.mxu0 0.0
      %708 = vmatpush1.msra.mxu0 0.0
      %709 = vmatprep.subr.mxu0 0.0
      %710 = vmatpush1.msra.mxu0 0.0
      %711 = vmatprep.subr.mxu0 0.0
      %712 = vmatpush1.msra.mxu0 0.0
      %713 = vmatprep.subr.mxu0 0.0
      %714 = vmatpush1.msra.mxu0 0.0
      %715 = vmatprep.subr.mxu0 0.0
      %716 = vmatpush1.msra.mxu0 0.0
      %717 = vmatprep.subr.mxu0 0.0
      %718 = vmatpush1.msra.mxu0 0.0
      %719 = vmatprep.subr.mxu0 0.0
      %720 = vmatpush1.msra.mxu0 0.0
      %721 = vmatprep.subr.mxu0 0.0
      %722 = vmatpush1.msra.mxu0 0.0
      %723 = vmatprep.subr.mxu0 0.0
      %724 = vmatpush1.msra.mxu0 0.0
      %725 = vmatprep.subr.mxu0 0.0
      %726 = vmatpush1.msra.mxu0 0.0
      %727 = vmatprep.subr.mxu0 0.0
      %728 = vmatpush1.msra.mxu0 0.0
      %729 = vmatprep.subr.mxu0 0.0
      %730 = vmatpush1.msra.mxu0 0.0
      %731 = vmatprep.subr.mxu0 0.0
      %732 = vmatpush1.msra.mxu0 0.0
      %733 = vmatprep.subr.mxu0 0.0
      %734 = vmatpush1.msra.mxu0 0.0
      %735 = vmatprep.subr.mxu0 0.0
      %736 = vmatpush1.msra.mxu0 0.0
      %737 = vmatprep.subr.mxu0 0.0
      %738 = vmatpush1.msra.mxu0 0.0
      %739 = vmatprep.subr.mxu0 0.0
      %740 = vmatpush1.msra.mxu0 0.0
      %741 = vmatprep.subr.mxu0 0.0
      %742 = vmatpush1.msra.mxu0 0.0
      %743 = vmatprep.subr.mxu0 0.0
      %744 = vmatpush1.msra.mxu0 0.0
      %745 = vmatprep.mubr.f32.mxu0 0.0
      %746 = vmatmul.mubr.f32.gmra.mrb[0].mxu0 %v658
      %v747 = vpop.f32.mrb[0].mxu0
      %v748 = vadd.f32 0.0, %v747
      %v749 = vpop.f32.mrb[0].mxu0
      %750 = vmatprep.mubr.f32.mxu0 0.0
      %751 = vmatmul.mubr.f32.gmra.mrb[0].mxu0 %v661
      %v752 = vpop.f32.mrb[0].mxu0
      %v753 = vadd.f32 0.0, %v752
      %v754 = vpop.f32.mrb[0].mxu0
      %755 = vmatprep.mubr.f32.mxu0 0.0
      %756 = vmatmul.mubr.f32.gmra.mrb[0].mxu0 %v664
      %v757 = vpop.f32.mrb[0].mxu0
      %v758 = vadd.f32 0.0, %v757
      %v759 = vpop.f32.mrb[0].mxu0
      %760 = vmatprep.mubr.f32.mxu0 0.0
      %761 = vmatmul.mubr.f32.gmra.mrb[0].mxu0 %v667
      %v762 = vpop.f32.mrb[0].mxu0
      %v763 = vadd.f32 0.0, %v762
      %v764 = vpop.f32.mrb[0].mxu0
      %765 = vmatprep.mubr.f32.mxu0 0.0
      %766 = vmatmul.mubr.f32.gmra.mrb[0].mxu0 %v670
      %v767 = vpop.f32.mrb[0].mxu0
      %v768 = vadd.f32 0.0, %v767
      %v769 = vpop.f32.mrb[0].mxu0
      %770 = vmatprep.mubr.f32.mxu0 0.0
      %771 = vmatmul.mubr.f32.gmra.mrb[0].mxu0 %v673
      %v772 = vpop.f32.mrb[0].mxu0
      %v773 = vadd.f32 0.0, %v772
      %v774 = vpop.f32.mrb[0].mxu0
      %775 = vmatprep.mubr.f32.mxu0 0.0
      %776 = vmatmul.mubr.f32.gmra.mrb[0].mxu0 %v676
      %v777 = vpop.f32.mrb[0].mxu0
      %v778 = vadd.f32 0.0, %v777
      %v779 = vpop.f32.mrb[0].mxu0
      %780 = vmatprep.mubr.f32.mxu0 0.0
      %781 = vmatmul.mubr.f32.gmra.mrb[0].mxu0 %v679
      %v782 = vpop.f32.mrb[0].mxu0
      %v783 = vadd.f32 0.0, %v782
      %v784 = vpop.f32.mrb[0].mxu0
      %785 = vdwg.mxu0
      %v786 = vlaneseq
      %v787 = vand.u32 %v786, 127
      %vm788 = vcmp.lt.s32.totalorder %v787, 16
      %v789 = vsel %vm788, 1, 0
      %v790 = vcvt.s32.f32 %v789
      %v791 = vsub.f32 1.0, %v790
      %793 = vrot.lane.b32.xlu0 %v790, 32
      %v794 = vpop.permute.xlu0 %793
      %v796 = vmul.f32 %v748, %v794
      %v797 = vmul.f32 %v753, %v794
      %v798 = vmul.f32 %v758, %v794
      %v799 = vmul.f32 %v763, %v794
      %v800 = vmul.f32 %v768, %v794
      %v801 = vmul.f32 %v773, %v794
      %v802 = vmul.f32 %v778, %v794
      %v803 = vmul.f32 %v783, %v794
      %805 = vrot.lane.b32.xlu0 %v791, 32
      %v806 = vpop.permute.xlu0 %805
      %v808 = vmul.f32 %v748, %v806
      %v809 = vmul.f32 %v753, %v806
      %v810 = vmul.f32 %v758, %v806
      %v811 = vmul.f32 %v763, %v806
      %v812 = vmul.f32 %v768, %v806
      %v813 = vmul.f32 %v773, %v806
      %v814 = vmul.f32 %v778, %v806
      %v815 = vmul.f32 %v783, %v806
      %816 = vrot.lane.b32.xlu0 %v790, 64
      %v817 = vpop.permute.xlu0 %816
      %v819 = vmul.f32 %v748, %v817
      %v820 = vmul.f32 %v753, %v817
      %v821 = vmul.f32 %v758, %v817
      %v822 = vmul.f32 %v763, %v817
      %v823 = vmul.f32 %v768, %v817
      %v824 = vmul.f32 %v773, %v817
      %v825 = vmul.f32 %v778, %v817
      %v826 = vmul.f32 %v783, %v817
      %827 = vrot.lane.b32.xlu0 %v791, 64
      %v828 = vpop.permute.xlu0 %827
      %v830 = vmul.f32 %v748, %v828
      %v831 = vmul.f32 %v753, %v828
      %v832 = vmul.f32 %v758, %v828
      %v833 = vmul.f32 %v763, %v828
      %v834 = vmul.f32 %v768, %v828
      %v835 = vmul.f32 %v773, %v828
      %v836 = vmul.f32 %v778, %v828
      %v837 = vmul.f32 %v783, %v828
      %v838 = vld [vmem:[%s428] sm:$0x1]
      %vm839 = vcmp.gt.f32.partialorder %v838, 0.0
      %v840 = vsel %vm839, 0.0, -1e+09
      %v842 = vlaneseq
      %v843 = vshrl.u32 %v842, 7
      %v844 = vsub.s32 0, %v843
      %v845 = vrot.slane %v840, %v844
      %846 = vrot.lane.b32.xlu0 %v845, 64
      %v847 = vpop.permute.xlu0 %846
      %vm849 = vcmask 523264
      %v850 = vsel %vm849, %v840, %v847
      %867 = vrot.lane.b32.xlu0 %v796, 96
      %v868 = vpop.permute.xlu0 %867
      %869 = vrot.lane.b32.xlu0 %v797, 96
      %v870 = vpop.permute.xlu0 %869
      %871 = vrot.lane.b32.xlu0 %v798, 96
      %v872 = vpop.permute.xlu0 %871
      %873 = vrot.lane.b32.xlu0 %v799, 96
      %v874 = vpop.permute.xlu0 %873
      %875 = vrot.lane.b32.xlu0 %v800, 96
      %v876 = vpop.permute.xlu0 %875
      %877 = vrot.lane.b32.xlu0 %v801, 96
      %v878 = vpop.permute.xlu0 %877
      %879 = vrot.lane.b32.xlu0 %v802, 96
      %v880 = vpop.permute.xlu0 %879
      %881 = vrot.lane.b32.xlu0 %v803, 96
      %v882 = vpop.permute.xlu0 %881
      %883 = vrot.lane.b32.xlu0 %v808, 96
      %v884 = vpop.permute.xlu0 %883
      %885 = vrot.lane.b32.xlu0 %v809, 96
      %v886 = vpop.permute.xlu0 %885
      %887 = vrot.lane.b32.xlu0 %v810, 96
      %v888 = vpop.permute.xlu0 %887
      %889 = vrot.lane.b32.xlu0 %v811, 96
      %v890 = vpop.permute.xlu0 %889
      %891 = vrot.lane.b32.xlu0 %v812, 96
      %v892 = vpop.permute.xlu0 %891
      %893 = vrot.lane.b32.xlu0 %v813, 96
      %v894 = vpop.permute.xlu0 %893
      %895 = vrot.lane.b32.xlu0 %v814, 96
      %v896 = vpop.permute.xlu0 %895
      %897 = vrot.lane.b32.xlu0 %v815, 96
      %v898 = vpop.permute.xlu0 %897
      %v900 = vsel %vm463, %v748, 0
      %v903 = vsel %vm463, %v753, 0
      %v906 = vsel %vm463, %v758, 0
      %v909 = vsel %vm463, %v763, 0
      %v912 = vsel %vm463, %v768, 0
      %v915 = vsel %vm463, %v773, 0
      %v918 = vsel %vm463, %v778, 0
      %v921 = vsel %vm463, %v783, 0
      %v923 = vsel %vm463, %v868, 0
      %v925 = vsel %vm463, %v870, 0
      %v927 = vsel %vm463, %v872, 0
      %v929 = vsel %vm463, %v874, 0
      %v931 = vsel %vm463, %v876, 0
      %v933 = vsel %vm463, %v878, 0
      %v935 = vsel %vm463, %v880, 0
      %v937 = vsel %vm463, %v882, 0
      %v939 = vsel %vm463, %v884, 0
      %v941 = vsel %vm463, %v886, 0
      %v943 = vsel %vm463, %v888, 0
      %v945 = vsel %vm463, %v890, 0
      %v947 = vsel %vm463, %v892, 0
      %v949 = vsel %vm463, %v894, 0
      %v951 = vsel %vm463, %v896, 0
      %v953 = vsel %vm463, %v898, 0
      %955 = vmatprep.subr.mxu0 0.0
      %956 = vmatpush1.xpose.msra.mxu0 %v923
      %957 = vmatprep.subr.mxu0 0.0
      %958 = vmatpush1.xpose.msra.mxu0 %v925
      %959 = vmatprep.subr.mxu0 0.0
      %960 = vmatpush1.xpose.msra.mxu0 %v927
      %961 = vmatprep.subr.mxu0 0.0
      %962 = vmatpush1.xpose.msra.mxu0 %v929
      %963 = vmatprep.subr.mxu0 0.0
      %964 = vmatpush1.xpose.msra.mxu0 %v931
      %965 = vmatprep.subr.mxu0 0.0
      %966 = vmatpush1.xpose.msra.mxu0 %v933
      %967 = vmatprep.subr.mxu0 0.0
      %968 = vmatpush1.xpose.msra.mxu0 %v935
      %969 = vmatprep.subr.mxu0 0.0
      %970 = vmatpush1.xpose.msra.mxu0 %v937
      %971 = vmatprep.subr.mxu0 0.0
      %972 = vmatpush1.xpose.msra.mxu0 %v939
      %973 = vmatprep.subr.mxu0 0.0
      %974 = vmatpush1.xpose.msra.mxu0 %v941
      %975 = vmatprep.subr.mxu0 0.0
      %976 = vmatpush1.xpose.msra.mxu0 %v943
      %977 = vmatprep.subr.mxu0 0.0
      %978 = vmatpush1.xpose.msra.mxu0 %v945
      %979 = vmatprep.subr.mxu0 0.0
      %980 = vmatpush1.xpose.msra.mxu0 %v947
      %981 = vmatprep.subr.mxu0 0.0
      %982 = vmatpush1.xpose.msra.mxu0 %v949
      %983 = vmatprep.subr.mxu0 0.0
      %984 = vmatpush1.xpose.msra.mxu0 %v951
      %985 = vmatprep.subr.mxu0 0.0
      %986 = vmatpush1.xpose.msra.mxu0 %v953
      %987 = vmatprep.subr.mxu0 0.0
      %988 = vmatpush1.xpose.msra.mxu0 0.0
      %989 = vmatprep.subr.mxu0 0.0
      %990 = vmatpush1.xpose.msra.mxu0 0.0
      %991 = vmatprep.subr.mxu0 0.0
      %992 = vmatpush1.xpose.msra.mxu0 0.0
      %993 = vmatprep.subr.mxu0 0.0
      %994 = vmatpush1.xpose.msra.mxu0 0.0
      %995 = vmatprep.subr.mxu0 0.0
      %996 = vmatpush1.xpose.msra.mxu0 0.0
      %997 = vmatprep.subr.mxu0 0.0
      %998 = vmatpush1.xpose.msra.mxu0 0.0
      %999 = vmatprep.subr.mxu0 0.0
      %1000 = vmatpush1.xpose.msra.mxu0 0.0
      %1001 = vmatprep.subr.mxu0 0.0
      %1002 = vmatpush1.xpose.msra.mxu0 0.0
      %1003 = vmatprep.subr.mxu0 0.0
      %1004 = vmatpush1.xpose.msra.mxu0 0.0
      %1005 = vmatprep.subr.mxu0 0.0
      %1006 = vmatpush1.xpose.msra.mxu0 0.0
      %1007 = vmatprep.subr.mxu0 0.0
      %1008 = vmatpush1.xpose.msra.mxu0 0.0
      %1009 = vmatprep.subr.mxu0 0.0
      %1010 = vmatpush1.xpose.msra.mxu0 0.0
      %1011 = vmatprep.subr.mxu0 0.0
      %1012 = vmatpush1.xpose.msra.mxu0 0.0
      %1013 = vmatprep.subr.mxu0 0.0
      %1014 = vmatpush1.xpose.msra.mxu0 0.0
      %1015 = vmatprep.subr.mxu0 0.0
      %1016 = vmatpush1.xpose.msra.mxu0 0.0
      %1017 = vmatprep.subr.mxu0 0.0
      %1018 = vmatpush1.xpose.msra.mxu0 0.0
      %1019 = vmatprep.mubr.f32.mxu0 0.0
      %1020 = vmatmul.mubr.f32.gmra.mrb[0].mxu0 %v900
      %v1021 = vpop.f32.mrb[0].mxu0
      %v1022 = vadd.f32 0.0, %v1021
      %v1023 = vpop.f32.mrb[0].mxu0
      %1024 = vmatprep.mubr.f32.mxu0 0.0
      %1025 = vmatmul.mubr.f32.gmra.mrb[0].mxu0 %v903
      %v1026 = vpop.f32.mrb[0].mxu0
      %v1027 = vadd.f32 0.0, %v1026
      %v1028 = vpop.f32.mrb[0].mxu0
      %1029 = vmatprep.mubr.f32.mxu0 0.0
      %1030 = vmatmul.mubr.f32.gmra.mrb[0].mxu0 %v906
      %v1031 = vpop.f32.mrb[0].mxu0
      %v1032 = vadd.f32 0.0, %v1031
      %v1033 = vpop.f32.mrb[0].mxu0
      %1034 = vmatprep.mubr.f32.mxu0 0.0
      %1035 = vmatmul.mubr.f32.gmra.mrb[0].mxu0 %v909
      %v1036 = vpop.f32.mrb[0].mxu0
      %v1037 = vadd.f32 0.0, %v1036
      %v1038 = vpop.f32.mrb[0].mxu0
      %1039 = vmatprep.mubr.f32.mxu0 0.0
      %1040 = vmatmul.mubr.f32.gmra.mrb[0].mxu0 %v912
      %v1041 = vpop.f32.mrb[0].mxu0
      %v1042 = vadd.f32 0.0, %v1041
      %v1043 = vpop.f32.mrb[0].mxu0
      %1044 = vmatprep.mubr.f32.mxu0 0.0
      %1045 = vmatmul.mubr.f32.gmra.mrb[0].mxu0 %v915
      %v1046 = vpop.f32.mrb[0].mxu0
      %v1047 = vadd.f32 0.0, %v1046
      %v1048 = vpop.f32.mrb[0].mxu0
      %1049 = vmatprep.mubr.f32.mxu0 0.0
      %1050 = vmatmul.mubr.f32.gmra.mrb[0].mxu0 %v918
      %v1051 = vpop.f32.mrb[0].mxu0
      %v1052 = vadd.f32 0.0, %v1051
      %v1053 = vpop.f32.mrb[0].mxu0
      %1054 = vmatprep.mubr.f32.mxu0 0.0
      %1055 = vmatmul.mubr.f32.gmra.mrb[0].mxu0 %v921
      %v1056 = vpop.f32.mrb[0].mxu0
      %v1057 = vadd.f32 0.0, %v1056
      %v1058 = vpop.f32.mrb[0].mxu0
      %1059 = vdwg.mxu0
      %v1060 = vmul.f32 %v1022, 0.25
      %v1061 = vmul.f32 %v1027, 0.25
      %v1062 = vmul.f32 %v1032, 0.25
      %v1063 = vmul.f32 %v1037, 0.25
      %v1064 = vmul.f32 %v1042, 0.25
      %v1065 = vmul.f32 %v1047, 0.25
      %v1066 = vmul.f32 %v1052, 0.25
      %v1067 = vmul.f32 %v1057, 0.25
      %v1068 = vlaneseq
      %v1069 = vshrl.u32 %v1068, 7
      %v1070 = vsub.s32 0, %v1069
      %v1071 = vrot.slane %v850, %v1070
      %v1072 = vadd.f32 %v1060, %v1071
      %v1073 = vadd.f32 %v1061, %v1071
      %v1074 = vadd.f32 %v1062, %v1071
      %v1075 = vadd.f32 %v1063, %v1071
      %v1076 = vadd.f32 %v1064, %v1071
      %v1077 = vadd.f32 %v1065, %v1071
      %v1078 = vadd.f32 %v1066, %v1071
      %v1079 = vadd.f32 %v1067, %v1071
      %vm1080 = vcmp.lt.s32.totalorder %v787, 64
      %v1081 = vsel %vm1080, 1, 0
      %vm1082 = vcmp.eq.s32.totalorder %v1081, 1
      %v1083 = vsel %vm1082, %v1072, -1e+30
      %v1084 = vsel %vm1082, %v1073, -1e+30
      %v1085 = vsel %vm1082, %v1074, -1e+30
      %v1086 = vsel %vm1082, %v1075, -1e+30
      %v1087 = vsel %vm1082, %v1076, -1e+30
      %v1088 = vsel %vm1082, %v1077, -1e+30
      %v1089 = vsel %vm1082, %v1078, -1e+30
      %v1090 = vsel %vm1082, %v1079, -1e+30
      %1091 = vmax.xlane.f32.xlu0 %v1083
      %v1092 = vpop.xlane.xlu0 %1091
      %1093 = vmax.xlane.f32.xlu0 %v1084
      %v1094 = vpop.xlane.xlu0 %1093
      %1095 = vmax.xlane.f32.xlu0 %v1085
      %v1096 = vpop.xlane.xlu0 %1095
      %1097 = vmax.xlane.f32.xlu0 %v1086
      %v1098 = vpop.xlane.xlu0 %1097
      %1099 = vmax.xlane.f32.xlu0 %v1087
      %v1100 = vpop.xlane.xlu0 %1099
      %1101 = vmax.xlane.f32.xlu0 %v1088
      %v1102 = vpop.xlane.xlu0 %1101
      %1103 = vmax.xlane.f32.xlu0 %v1089
      %v1104 = vpop.xlane.xlu0 %1103
      %1105 = vmax.xlane.f32.xlu0 %v1090
      %v1106 = vpop.xlane.xlu0 %1105
      %v1107 = vsel %vm1082, -1e+30, %v1072
      %v1108 = vsel %vm1082, -1e+30, %v1073
      %v1109 = vsel %vm1082, -1e+30, %v1074
      %v1110 = vsel %vm1082, -1e+30, %v1075
      %v1111 = vsel %vm1082, -1e+30, %v1076
      %v1112 = vsel %vm1082, -1e+30, %v1077
      %v1113 = vsel %vm1082, -1e+30, %v1078
      %v1114 = vsel %vm1082, -1e+30, %v1079
      %1115 = vmax.xlane.f32.xlu0 %v1107
      %v1116 = vpop.xlane.xlu0 %1115
      %1117 = vmax.xlane.f32.xlu0 %v1108
      %v1118 = vpop.xlane.xlu0 %1117
      %1119 = vmax.xlane.f32.xlu0 %v1109
      %v1120 = vpop.xlane.xlu0 %1119
      %1121 = vmax.xlane.f32.xlu0 %v1110
      %v1122 = vpop.xlane.xlu0 %1121
      %1123 = vmax.xlane.f32.xlu0 %v1111
      %v1124 = vpop.xlane.xlu0 %1123
      %1125 = vmax.xlane.f32.xlu0 %v1112
      %v1126 = vpop.xlane.xlu0 %1125
      %1127 = vmax.xlane.f32.xlu0 %v1113
      %v1128 = vpop.xlane.xlu0 %1127
      %1129 = vmax.xlane.f32.xlu0 %v1114
      %v1130 = vpop.xlane.xlu0 %1129
      %v1131 = vsel %vm1082, %v1092, %v1116
      %v1132 = vsel %vm1082, %v1094, %v1118
      %v1133 = vsel %vm1082, %v1096, %v1120
      %v1134 = vsel %vm1082, %v1098, %v1122
      %v1135 = vsel %vm1082, %v1100, %v1124
      %v1136 = vsel %vm1082, %v1102, %v1126
      %v1137 = vsel %vm1082, %v1104, %v1128
      %v1138 = vsel %vm1082, %v1106, %v1130
      %v1139 = vsub.f32 %v1072, %v1131
      %v1140 = vsub.f32 %v1073, %v1132
      %v1141 = vsub.f32 %v1074, %v1133
      %v1142 = vsub.f32 %v1075, %v1134
      %v1143 = vsub.f32 %v1076, %v1135
      %v1144 = vsub.f32 %v1077, %v1136
      %v1145 = vsub.f32 %v1078, %v1137
      %v1146 = vsub.f32 %v1079, %v1138
      %v1147 = vmul.f32 %v1139, 1.442695
      %v1148 = vpow.pop %v1147
      %v1149 = vmul.f32 %v1140, 1.442695
      %v1150 = vpow.pop %v1149
      %v1151 = vmul.f32 %v1141, 1.442695
      %v1152 = vpow.pop %v1151
      %v1153 = vmul.f32 %v1142, 1.442695
      %v1154 = vpow.pop %v1153
      %v1155 = vmul.f32 %v1143, 1.442695
      %v1156 = vpow.pop %v1155
      %v1157 = vmul.f32 %v1144, 1.442695
      %v1158 = vpow.pop %v1157
      %v1159 = vmul.f32 %v1145, 1.442695
      %v1160 = vpow.pop %v1159
      %v1161 = vmul.f32 %v1146, 1.442695
      %v1162 = vpow.pop %v1161
      %v1163 = vsel %vm1082, %v1148, 0.0
      %v1164 = vsel %vm1082, %v1150, 0.0
      %v1165 = vsel %vm1082, %v1152, 0.0
      %v1166 = vsel %vm1082, %v1154, 0.0
      %v1167 = vsel %vm1082, %v1156, 0.0
      %v1168 = vsel %vm1082, %v1158, 0.0
      %v1169 = vsel %vm1082, %v1160, 0.0
      %v1170 = vsel %vm1082, %v1162, 0.0
      %1171 = vadd.xlane.f32.xlu0 %v1163
      %v1172 = vpop.xlane.xlu0 %1171
      %1173 = vadd.xlane.f32.xlu0 %v1164
      %v1174 = vpop.xlane.xlu0 %1173
      %1175 = vadd.xlane.f32.xlu0 %v1165
      %v1176 = vpop.xlane.xlu0 %1175
      %1177 = vadd.xlane.f32.xlu0 %v1166
      %v1178 = vpop.xlane.xlu0 %1177
      %1179 = vadd.xlane.f32.xlu0 %v1167
      %v1180 = vpop.xlane.xlu0 %1179
      %1181 = vadd.xlane.f32.xlu0 %v1168
      %v1182 = vpop.xlane.xlu0 %1181
      %1183 = vadd.xlane.f32.xlu0 %v1169
      %v1184 = vpop.xlane.xlu0 %1183
      %1185 = vadd.xlane.f32.xlu0 %v1170
      %v1186 = vpop.xlane.xlu0 %1185
      %v1187 = vsel %vm1082, 0.0, %v1148
      %v1188 = vsel %vm1082, 0.0, %v1150
      %v1189 = vsel %vm1082, 0.0, %v1152
      %v1190 = vsel %vm1082, 0.0, %v1154
      %v1191 = vsel %vm1082, 0.0, %v1156
      %v1192 = vsel %vm1082, 0.0, %v1158
      %v1193 = vsel %vm1082, 0.0, %v1160
      %v1194 = vsel %vm1082, 0.0, %v1162
      %1195 = vadd.xlane.f32.xlu0 %v1187
      %v1196 = vpop.xlane.xlu0 %1195
      %1197 = vadd.xlane.f32.xlu0 %v1188
      %v1198 = vpop.xlane.xlu0 %1197
      %1199 = vadd.xlane.f32.xlu0 %v1189
      %v1200 = vpop.xlane.xlu0 %1199
      %1201 = vadd.xlane.f32.xlu0 %v1190
      %v1202 = vpop.xlane.xlu0 %1201
      %1203 = vadd.xlane.f32.xlu0 %v1191
      %v1204 = vpop.xlane.xlu0 %1203
      %1205 = vadd.xlane.f32.xlu0 %v1192
      %v1206 = vpop.xlane.xlu0 %1205
      %1207 = vadd.xlane.f32.xlu0 %v1193
      %v1208 = vpop.xlane.xlu0 %1207
      %1209 = vadd.xlane.f32.xlu0 %v1194
      %v1210 = vpop.xlane.xlu0 %1209
      %v1211 = vsel %vm1082, %v1172, %v1196
      %v1212 = vsel %vm1082, %v1174, %v1198
      %v1213 = vsel %vm1082, %v1176, %v1200
      %v1214 = vsel %vm1082, %v1178, %v1202
      %v1215 = vsel %vm1082, %v1180, %v1204
      %v1216 = vsel %vm1082, %v1182, %v1206
      %v1217 = vsel %vm1082, %v1184, %v1208
      %v1218 = vsel %vm1082, %v1186, %v1210
      %v1219 = vrcp.pop %v1211
      %v1220 = vmul.f32 %v1148, %v1219
      %v1221 = vrcp.pop %v1212
      %v1222 = vmul.f32 %v1150, %v1221
      %v1223 = vrcp.pop %v1213
      %v1224 = vmul.f32 %v1152, %v1223
      %v1225 = vrcp.pop %v1214
      %v1226 = vmul.f32 %v1154, %v1225
      %v1227 = vrcp.pop %v1215
      %v1228 = vmul.f32 %v1156, %v1227
      %v1229 = vrcp.pop %v1216
      %v1230 = vmul.f32 %v1158, %v1229
      %v1231 = vrcp.pop %v1217
      %v1232 = vmul.f32 %v1160, %v1231
      %v1233 = vrcp.pop %v1218
      %v1234 = vmul.f32 %v1162, %v1233
      %1251 = vrot.lane.b32.xlu0 %v819, 64
      %v1252 = vpop.permute.xlu0 %1251
      %1253 = vrot.lane.b32.xlu0 %v820, 64
      %v1254 = vpop.permute.xlu0 %1253
      %1255 = vrot.lane.b32.xlu0 %v821, 64
      %v1256 = vpop.permute.xlu0 %1255
      %1257 = vrot.lane.b32.xlu0 %v822, 64
      %v1258 = vpop.permute.xlu0 %1257
      %1259 = vrot.lane.b32.xlu0 %v823, 64
      %v1260 = vpop.permute.xlu0 %1259
      %1261 = vrot.lane.b32.xlu0 %v824, 64
      %v1262 = vpop.permute.xlu0 %1261
      %1263 = vrot.lane.b32.xlu0 %v825, 64
      %v1264 = vpop.permute.xlu0 %1263
      %1265 = vrot.lane.b32.xlu0 %v826, 64
      %v1266 = vpop.permute.xlu0 %1265
      %1267 = vrot.lane.b32.xlu0 %v830, 64
      %v1268 = vpop.permute.xlu0 %1267
      %1269 = vrot.lane.b32.xlu0 %v831, 64
      %v1270 = vpop.permute.xlu0 %1269
      %1271 = vrot.lane.b32.xlu0 %v832, 64
      %v1272 = vpop.permute.xlu0 %1271
      %1273 = vrot.lane.b32.xlu0 %v833, 64
      %v1274 = vpop.permute.xlu0 %1273
      %1275 = vrot.lane.b32.xlu0 %v834, 64
      %v1276 = vpop.permute.xlu0 %1275
      %1277 = vrot.lane.b32.xlu0 %v835, 64
      %v1278 = vpop.permute.xlu0 %1277
      %1279 = vrot.lane.b32.xlu0 %v836, 64
      %v1280 = vpop.permute.xlu0 %1279
      %1281 = vrot.lane.b32.xlu0 %v837, 64
      %v1282 = vpop.permute.xlu0 %1281
      %1299 = vmatprep.subr.mxu0 0.0
      %1300 = vmatpush1.msra.mxu0 %v1252
      %1301 = vmatprep.subr.mxu0 0.0
      %1302 = vmatpush1.msra.mxu0 %v1254
      %1303 = vmatprep.subr.mxu0 0.0
      %1304 = vmatpush1.msra.mxu0 %v1256
      %1305 = vmatprep.subr.mxu0 0.0
      %1306 = vmatpush1.msra.mxu0 %v1258
      %1307 = vmatprep.subr.mxu0 0.0
      %1308 = vmatpush1.msra.mxu0 %v1260
      %1309 = vmatprep.subr.mxu0 0.0
      %1310 = vmatpush1.msra.mxu0 %v1262
      %1311 = vmatprep.subr.mxu0 0.0
      %1312 = vmatpush1.msra.mxu0 %v1264
      %1313 = vmatprep.subr.mxu0 0.0
      %1314 = vmatpush1.msra.mxu0 %v1266
      %1315 = vmatprep.subr.mxu0 0.0
      %1316 = vmatpush1.msra.mxu0 %v1268
      %1317 = vmatprep.subr.mxu0 0.0
      %1318 = vmatpush1.msra.mxu0 %v1270
      %1319 = vmatprep.subr.mxu0 0.0
      %1320 = vmatpush1.msra.mxu0 %v1272
      %1321 = vmatprep.subr.mxu0 0.0
      %1322 = vmatpush1.msra.mxu0 %v1274
      %1323 = vmatprep.subr.mxu0 0.0
      %1324 = vmatpush1.msra.mxu0 %v1276
      %1325 = vmatprep.subr.mxu0 0.0
      %1326 = vmatpush1.msra.mxu0 %v1278
      %1327 = vmatprep.subr.mxu0 0.0
      %1328 = vmatpush1.msra.mxu0 %v1280
      %1329 = vmatprep.subr.mxu0 0.0
      %1330 = vmatpush1.msra.mxu0 %v1282
      %1331 = vmatprep.subr.mxu0 0.0
      %1332 = vmatpush1.msra.mxu0 0.0
      %1333 = vmatprep.subr.mxu0 0.0
      %1334 = vmatpush1.msra.mxu0 0.0
      %1335 = vmatprep.subr.mxu0 0.0
      %1336 = vmatpush1.msra.mxu0 0.0
      %1337 = vmatprep.subr.mxu0 0.0
      %1338 = vmatpush1.msra.mxu0 0.0
      %1339 = vmatprep.subr.mxu0 0.0
      %1340 = vmatpush1.msra.mxu0 0.0
      %1341 = vmatprep.subr.mxu0 0.0
      %1342 = vmatpush1.msra.mxu0 0.0
      %1343 = vmatprep.subr.mxu0 0.0
      %1344 = vmatpush1.msra.mxu0 0.0
      %1345 = vmatprep.subr.mxu0 0.0
      %1346 = vmatpush1.msra.mxu0 0.0
      %1347 = vmatprep.subr.mxu0 0.0
      %1348 = vmatpush1.msra.mxu0 0.0
      %1349 = vmatprep.subr.mxu0 0.0
      %1350 = vmatpush1.msra.mxu0 0.0
      %1351 = vmatprep.subr.mxu0 0.0
      %1352 = vmatpush1.msra.mxu0 0.0
      %1353 = vmatprep.subr.mxu0 0.0
      %1354 = vmatpush1.msra.mxu0 0.0
      %1355 = vmatprep.subr.mxu0 0.0
      %1356 = vmatpush1.msra.mxu0 0.0
      %1357 = vmatprep.subr.mxu0 0.0
      %1358 = vmatpush1.msra.mxu0 0.0
      %1359 = vmatprep.subr.mxu0 0.0
      %1360 = vmatpush1.msra.mxu0 0.0
      %1361 = vmatprep.subr.mxu0 0.0
      %1362 = vmatpush1.msra.mxu0 0.0
      %1363 = vmatprep.mubr.f32.mxu0 0.0
      %1364 = vmatmul.mubr.f32.gmra.mrb[0].mxu0 %v1220
      %v1365 = vpop.f32.mrb[0].mxu0
      %v1366 = vadd.f32 0.0, %v1365
      %v1367 = vpop.f32.mrb[0].mxu0
      %1368 = vmatprep.mubr.f32.mxu0 0.0
      %1369 = vmatmul.mubr.f32.gmra.mrb[0].mxu0 %v1222
      %v1370 = vpop.f32.mrb[0].mxu0
      %v1371 = vadd.f32 0.0, %v1370
      %v1372 = vpop.f32.mrb[0].mxu0
      %1373 = vmatprep.mubr.f32.mxu0 0.0
      %1374 = vmatmul.mubr.f32.gmra.mrb[0].mxu0 %v1224
      %v1375 = vpop.f32.mrb[0].mxu0
      %v1376 = vadd.f32 0.0, %v1375
      %v1377 = vpop.f32.mrb[0].mxu0
      %1378 = vmatprep.mubr.f32.mxu0 0.0
      %1379 = vmatmul.mubr.f32.gmra.mrb[0].mxu0 %v1226
      %v1380 = vpop.f32.mrb[0].mxu0
      %v1381 = vadd.f32 0.0, %v1380
      %v1382 = vpop.f32.mrb[0].mxu0
      %1383 = vmatprep.mubr.f32.mxu0 0.0
      %1384 = vmatmul.mubr.f32.gmra.mrb[0].mxu0 %v1228
      %v1385 = vpop.f32.mrb[0].mxu0
      %v1386 = vadd.f32 0.0, %v1385
      %v1387 = vpop.f32.mrb[0].mxu0
      %1388 = vmatprep.mubr.f32.mxu0 0.0
      %1389 = vmatmul.mubr.f32.gmra.mrb[0].mxu0 %v1230
      %v1390 = vpop.f32.mrb[0].mxu0
      %v1391 = vadd.f32 0.0, %v1390
      %v1392 = vpop.f32.mrb[0].mxu0
      %1393 = vmatprep.mubr.f32.mxu0 0.0
      %1394 = vmatmul.mubr.f32.gmra.mrb[0].mxu0 %v1232
      %v1395 = vpop.f32.mrb[0].mxu0
      %v1396 = vadd.f32 0.0, %v1395
      %v1397 = vpop.f32.mrb[0].mxu0
      %1398 = vmatprep.mubr.f32.mxu0 0.0
      %1399 = vmatmul.mubr.f32.gmra.mrb[0].mxu0 %v1234
      %v1400 = vpop.f32.mrb[0].mxu0
      %v1401 = vadd.f32 0.0, %v1400
      %v1402 = vpop.f32.mrb[0].mxu0
      %1403 = vdwg.mxu0
      %v1404 = vld [vmem:[%s4] sm:$0xff]
      %v1405 = vld [vmem:[%s4 + $0x8] sm:$0xff]
      %v1406 = vld [vmem:[%s4 + $0x10] sm:$0xff]
      %v1407 = vld [vmem:[%s4 + $0x18] sm:$0xff]
      %v1409 = vsel %vm463, %v1366, 0
      %v1412 = vsel %vm463, %v1371, 0
      %v1415 = vsel %vm463, %v1376, 0
      %v1418 = vsel %vm463, %v1381, 0
      %v1421 = vsel %vm463, %v1386, 0
      %v1424 = vsel %vm463, %v1391, 0
      %v1427 = vsel %vm463, %v1396, 0
      %v1430 = vsel %vm463, %v1401, 0
      %1432 = vmatprep.subr.mxu0 0.0
      %1433 = vmatpush1.msra.mxu0 %v1404
      %1434 = vmatprep.subr.mxu0 0.0
      %1435 = vmatpush1.msra.mxu0 %v1405
      %1436 = vmatprep.subr.mxu0 0.0
      %1437 = vmatpush1.msra.mxu0 %v1406
      %1438 = vmatprep.subr.mxu0 0.0
      %1439 = vmatpush1.msra.mxu0 %v1407
      %1440 = vmatprep.subr.mxu0 0.0
      %1441 = vmatpush1.msra.mxu0 0.0
      %1442 = vmatprep.subr.mxu0 0.0
      %1443 = vmatpush1.msra.mxu0 0.0
      %1444 = vmatprep.subr.mxu0 0.0
      %1445 = vmatpush1.msra.mxu0 0.0
      %1446 = vmatprep.subr.mxu0 0.0
      %1447 = vmatpush1.msra.mxu0 0.0
      %1448 = vmatprep.subr.mxu0 0.0
      %1449 = vmatpush1.msra.mxu0 0.0
      %1450 = vmatprep.subr.mxu0 0.0
      %1451 = vmatpush1.msra.mxu0 0.0
      %1452 = vmatprep.subr.mxu0 0.0
      %1453 = vmatpush1.msra.mxu0 0.0
      %1454 = vmatprep.subr.mxu0 0.0
      %1455 = vmatpush1.msra.mxu0 0.0
      %1456 = vmatprep.subr.mxu0 0.0
      %1457 = vmatpush1.msra.mxu0 0.0
      %1458 = vmatprep.subr.mxu0 0.0
      %1459 = vmatpush1.msra.mxu0 0.0
      %1460 = vmatprep.subr.mxu0 0.0
      %1461 = vmatpush1.msra.mxu0 0.0
      %1462 = vmatprep.subr.mxu0 0.0
      %1463 = vmatpush1.msra.mxu0 0.0
      %1464 = vmatprep.subr.mxu0 0.0
      %1465 = vmatpush1.msra.mxu0 0.0
      %1466 = vmatprep.subr.mxu0 0.0
      %1467 = vmatpush1.msra.mxu0 0.0
      %1468 = vmatprep.subr.mxu0 0.0
      %1469 = vmatpush1.msra.mxu0 0.0
      %1470 = vmatprep.subr.mxu0 0.0
      %1471 = vmatpush1.msra.mxu0 0.0
      %1472 = vmatprep.subr.mxu0 0.0
      %1473 = vmatpush1.msra.mxu0 0.0
      %1474 = vmatprep.subr.mxu0 0.0
      %1475 = vmatpush1.msra.mxu0 0.0
      %1476 = vmatprep.subr.mxu0 0.0
      %1477 = vmatpush1.msra.mxu0 0.0
      %1478 = vmatprep.subr.mxu0 0.0
      %1479 = vmatpush1.msra.mxu0 0.0
      %1480 = vmatprep.subr.mxu0 0.0
      %1481 = vmatpush1.msra.mxu0 0.0
      %1482 = vmatprep.subr.mxu0 0.0
      %1483 = vmatpush1.msra.mxu0 0.0
      %1484 = vmatprep.subr.mxu0 0.0
      %1485 = vmatpush1.msra.mxu0 0.0
      %1486 = vmatprep.subr.mxu0 0.0
      %1487 = vmatpush1.msra.mxu0 0.0
      %1488 = vmatprep.subr.mxu0 0.0
      %1489 = vmatpush1.msra.mxu0 0.0
      %1490 = vmatprep.subr.mxu0 0.0
      %1491 = vmatpush1.msra.mxu0 0.0
      %1492 = vmatprep.subr.mxu0 0.0
      %1493 = vmatpush1.msra.mxu0 0.0
      %1494 = vmatprep.subr.mxu0 0.0
      %1495 = vmatpush1.msra.mxu0 0.0
      %1496 = vmatprep.mubr.f32.mxu0 0.0
      %1497 = vmatmul.mubr.f32.gmra.mrb[0].mxu0 %v1409
      %v1498 = vpop.f32.mrb[0].mxu0
      %v1499 = vadd.f32 0.0, %v1498
      %v1500 = vpop.f32.mrb[0].mxu0
      %1501 = vmatprep.mubr.f32.mxu0 0.0
      %1502 = vmatmul.mubr.f32.gmra.mrb[0].mxu0 %v1412
      %v1503 = vpop.f32.mrb[0].mxu0
      %v1504 = vadd.f32 0.0, %v1503
      %v1505 = vpop.f32.mrb[0].mxu0
      %1506 = vmatprep.mubr.f32.mxu0 0.0
      %1507 = vmatmul.mubr.f32.gmra.mrb[0].mxu0 %v1415
      %v1508 = vpop.f32.mrb[0].mxu0
      %v1509 = vadd.f32 0.0, %v1508
      %v1510 = vpop.f32.mrb[0].mxu0
      %1511 = vmatprep.mubr.f32.mxu0 0.0
      %1512 = vmatmul.mubr.f32.gmra.mrb[0].mxu0 %v1418
      %v1513 = vpop.f32.mrb[0].mxu0
      %v1514 = vadd.f32 0.0, %v1513
      %v1515 = vpop.f32.mrb[0].mxu0
      %1516 = vmatprep.mubr.f32.mxu0 0.0
      %1517 = vmatmul.mubr.f32.gmra.mrb[0].mxu0 %v1421
      %v1518 = vpop.f32.mrb[0].mxu0
      %v1519 = vadd.f32 0.0, %v1518
      %v1520 = vpop.f32.mrb[0].mxu0
      %1521 = vmatprep.mubr.f32.mxu0 0.0
      %1522 = vmatmul.mubr.f32.gmra.mrb[0].mxu0 %v1424
      %v1523 = vpop.f32.mrb[0].mxu0
      %v1524 = vadd.f32 0.0, %v1523
      %v1525 = vpop.f32.mrb[0].mxu0
      %1526 = vmatprep.mubr.f32.mxu0 0.0
      %1527 = vmatmul.mubr.f32.gmra.mrb[0].mxu0 %v1427
      %v1528 = vpop.f32.mrb[0].mxu0
      %v1529 = vadd.f32 0.0, %v1528
      %v1530 = vpop.f32.mrb[0].mxu0
      %1531 = vmatprep.mubr.f32.mxu0 0.0
      %1532 = vmatmul.mubr.f32.gmra.mrb[0].mxu0 %v1430
      %v1533 = vpop.f32.mrb[0].mxu0
      %v1534 = vadd.f32 0.0, %v1533
      %v1535 = vpop.f32.mrb[0].mxu0
      %1536 = vdwg.mxu0
      %v1537 = vadd.f32 %v645, %v1499
      %v1538 = vadd.f32 %v646, %v1504
      %v1539 = vadd.f32 %v647, %v1509
      %v1540 = vadd.f32 %v648, %v1514
      %v1541 = vadd.f32 %v649, %v1519
      %v1542 = vadd.f32 %v650, %v1524
      %v1543 = vadd.f32 %v651, %v1529
      %v1544 = vadd.f32 %v652, %v1534
      %v1545 = vld [vmem:[%s7] sm:$0x1]
      %v1546 = vld [vmem:[%s8] sm:$0x1]
      %v1547 = vsel %vm463, %v1537, 0.0
      %1548 = vadd.xlane.f32.xlu0 %v1547
      %v1549 = vpop.xlane.xlu0 %1548
      %v1550 = vsel %vm463, %v1538, 0.0
      %1551 = vadd.xlane.f32.xlu0 %v1550
      %v1552 = vpop.xlane.xlu0 %1551
      %v1553 = vsel %vm463, %v1539, 0.0
      %1554 = vadd.xlane.f32.xlu0 %v1553
      %v1555 = vpop.xlane.xlu0 %1554
      %v1556 = vsel %vm463, %v1540, 0.0
      %1557 = vadd.xlane.f32.xlu0 %v1556
      %v1558 = vpop.xlane.xlu0 %1557
      %v1559 = vsel %vm463, %v1541, 0.0
      %1560 = vadd.xlane.f32.xlu0 %v1559
      %v1561 = vpop.xlane.xlu0 %1560
      %v1562 = vsel %vm463, %v1542, 0.0
      %1563 = vadd.xlane.f32.xlu0 %v1562
      %v1564 = vpop.xlane.xlu0 %1563
      %v1565 = vsel %vm463, %v1543, 0.0
      %1566 = vadd.xlane.f32.xlu0 %v1565
      %v1567 = vpop.xlane.xlu0 %1566
      %v1568 = vsel %vm463, %v1544, 0.0
      %1569 = vadd.xlane.f32.xlu0 %v1568
      %v1570 = vpop.xlane.xlu0 %1569
      %v1571 = vmul.f32 %v1549, %v488
      %v1572 = vmul.f32 %v1552, %v488
      %v1573 = vmul.f32 %v1555, %v488
      %v1574 = vmul.f32 %v1558, %v488
      %v1575 = vmul.f32 %v1561, %v488
      %v1576 = vmul.f32 %v1564, %v488
      %v1577 = vmul.f32 %v1567, %v488
      %v1578 = vmul.f32 %v1570, %v488
      %v1579 = vsub.f32 %v1537, %v1571
      %v1580 = vsub.f32 %v1538, %v1572
      %v1581 = vsub.f32 %v1539, %v1573
      %v1582 = vsub.f32 %v1540, %v1574
      %v1583 = vsub.f32 %v1541, %v1575
      %v1584 = vsub.f32 %v1542, %v1576
      %v1585 = vsub.f32 %v1543, %v1577
      %v1586 = vsub.f32 %v1544, %v1578
      %v1587 = vmul.f32 %v1579, %v1579
      %v1588 = vmul.f32 %v1580, %v1580
      %v1589 = vmul.f32 %v1581, %v1581
      %v1590 = vmul.f32 %v1582, %v1582
      %v1591 = vmul.f32 %v1583, %v1583
      %v1592 = vmul.f32 %v1584, %v1584
      %v1593 = vmul.f32 %v1585, %v1585
      %v1594 = vmul.f32 %v1586, %v1586
      %v1595 = vsel %vm463, %v1587, 0.0
      %1596 = vadd.xlane.f32.xlu0 %v1595
      %v1597 = vpop.xlane.xlu0 %1596
      %v1598 = vsel %vm463, %v1588, 0.0
      %1599 = vadd.xlane.f32.xlu0 %v1598
      %v1600 = vpop.xlane.xlu0 %1599
      %v1601 = vsel %vm463, %v1589, 0.0
      %1602 = vadd.xlane.f32.xlu0 %v1601
      %v1603 = vpop.xlane.xlu0 %1602
      %v1604 = vsel %vm463, %v1590, 0.0
      %1605 = vadd.xlane.f32.xlu0 %v1604
      %v1606 = vpop.xlane.xlu0 %1605
      %v1607 = vsel %vm463, %v1591, 0.0
      %1608 = vadd.xlane.f32.xlu0 %v1607
      %v1609 = vpop.xlane.xlu0 %1608
      %v1610 = vsel %vm463, %v1592, 0.0
      %1611 = vadd.xlane.f32.xlu0 %v1610
      %v1612 = vpop.xlane.xlu0 %1611
      %v1613 = vsel %vm463, %v1593, 0.0
      %1614 = vadd.xlane.f32.xlu0 %v1613
      %v1615 = vpop.xlane.xlu0 %1614
      %v1616 = vsel %vm463, %v1594, 0.0
      %1617 = vadd.xlane.f32.xlu0 %v1616
      %v1618 = vpop.xlane.xlu0 %1617
      %v1619 = vmul.f32 %v1597, %v488
      %v1620 = vmul.f32 %v1600, %v488
      %v1621 = vmul.f32 %v1603, %v488
      %v1622 = vmul.f32 %v1606, %v488
      %v1623 = vmul.f32 %v1609, %v488
      %v1624 = vmul.f32 %v1612, %v488
      %v1625 = vmul.f32 %v1615, %v488
      %v1626 = vmul.f32 %v1618, %v488
      %v1627 = vadd.f32 %v1619, 1e-12
      %v1628 = vadd.f32 %v1620, 1e-12
      %v1629 = vadd.f32 %v1621, 1e-12
      %v1630 = vadd.f32 %v1622, 1e-12
      %v1631 = vadd.f32 %v1623, 1e-12
      %v1632 = vadd.f32 %v1624, 1e-12
      %v1633 = vadd.f32 %v1625, 1e-12
      %v1634 = vadd.f32 %v1626, 1e-12
      %v1635 = vrsqrt.pop %v1627
      %v1636 = vmul.f32 %v1627, %v1635
      %vm1637 = vcmp.eq.f32.partialorder %v1627, inf
      %v1638 = vsel %vm1637, %v1627, %v1636
      %vm1639 = vcmp.eq.f32.partialorder %v1627, 0.0
      %v1640 = vand.u32 %v1627, 2147483648
      %v1641 = vsel %vm1639, %v1640, %v1638
      %v1642 = vrsqrt.pop %v1628
      %v1643 = vmul.f32 %v1628, %v1642
      %vm1644 = vcmp.eq.f32.partialorder %v1628, inf
      %v1645 = vsel %vm1644, %v1628, %v1643
      %vm1646 = vcmp.eq.f32.partialorder %v1628, 0.0
      %v1647 = vand.u32 %v1628, 2147483648
      %v1648 = vsel %vm1646, %v1647, %v1645
      %v1649 = vrsqrt.pop %v1629
      %v1650 = vmul.f32 %v1629, %v1649
      %vm1651 = vcmp.eq.f32.partialorder %v1629, inf
      %v1652 = vsel %vm1651, %v1629, %v1650
      %vm1653 = vcmp.eq.f32.partialorder %v1629, 0.0
      %v1654 = vand.u32 %v1629, 2147483648
      %v1655 = vsel %vm1653, %v1654, %v1652
      %v1656 = vrsqrt.pop %v1630
      %v1657 = vmul.f32 %v1630, %v1656
      %vm1658 = vcmp.eq.f32.partialorder %v1630, inf
      %v1659 = vsel %vm1658, %v1630, %v1657
      %vm1660 = vcmp.eq.f32.partialorder %v1630, 0.0
      %v1661 = vand.u32 %v1630, 2147483648
      %v1662 = vsel %vm1660, %v1661, %v1659
      %v1663 = vrsqrt.pop %v1631
      %v1664 = vmul.f32 %v1631, %v1663
      %vm1665 = vcmp.eq.f32.partialorder %v1631, inf
      %v1666 = vsel %vm1665, %v1631, %v1664
      %vm1667 = vcmp.eq.f32.partialorder %v1631, 0.0
      %v1668 = vand.u32 %v1631, 2147483648
      %v1669 = vsel %vm1667, %v1668, %v1666
      %v1670 = vrsqrt.pop %v1632
      %v1671 = vmul.f32 %v1632, %v1670
      %vm1672 = vcmp.eq.f32.partialorder %v1632, inf
      %v1673 = vsel %vm1672, %v1632, %v1671
      %vm1674 = vcmp.eq.f32.partialorder %v1632, 0.0
      %v1675 = vand.u32 %v1632, 2147483648
      %v1676 = vsel %vm1674, %v1675, %v1673
      %v1677 = vrsqrt.pop %v1633
      %v1678 = vmul.f32 %v1633, %v1677
      %vm1679 = vcmp.eq.f32.partialorder %v1633, inf
      %v1680 = vsel %vm1679, %v1633, %v1678
      %vm1681 = vcmp.eq.f32.partialorder %v1633, 0.0
      %v1682 = vand.u32 %v1633, 2147483648
      %v1683 = vsel %vm1681, %v1682, %v1680
      %v1684 = vrsqrt.pop %v1634
      %v1685 = vmul.f32 %v1634, %v1684
      %vm1686 = vcmp.eq.f32.partialorder %v1634, inf
      %v1687 = vsel %vm1686, %v1634, %v1685
      %vm1688 = vcmp.eq.f32.partialorder %v1634, 0.0
      %v1689 = vand.u32 %v1634, 2147483648
      %v1690 = vsel %vm1688, %v1689, %v1687
      %v1691 = vrcp.pop %v1641
      %v1692 = vmul.f32 %v1579, %v1691
      %v1693 = vrcp.pop %v1648
      %v1694 = vmul.f32 %v1580, %v1693
      %v1695 = vrcp.pop %v1655
      %v1696 = vmul.f32 %v1581, %v1695
      %v1697 = vrcp.pop %v1662
      %v1698 = vmul.f32 %v1582, %v1697
      %v1699 = vrcp.pop %v1669
      %v1700 = vmul.f32 %v1583, %v1699
      %v1701 = vrcp.pop %v1676
      %v1702 = vmul.f32 %v1584, %v1701
      %v1703 = vrcp.pop %v1683
      %v1704 = vmul.f32 %v1585, %v1703
      %v1705 = vrcp.pop %v1690
      %v1706 = vmul.f32 %v1586, %v1705
      %v1708 = vlaneseq
      %v1709 = vshrl.u32 %v1708, 7
      %v1710 = vsub.s32 0, %v1709
      %v1711 = vrot.slane %v1545, %v1710
      %v1713 = vmul.f32 %v1711, %v1692
      %v1714 = vmul.f32 %v1711, %v1694
      %v1715 = vmul.f32 %v1711, %v1696
      %v1716 = vmul.f32 %v1711, %v1698
      %v1717 = vmul.f32 %v1711, %v1700
      %v1718 = vmul.f32 %v1711, %v1702
      %v1719 = vmul.f32 %v1711, %v1704
      %v1720 = vmul.f32 %v1711, %v1706
      %v1722 = vlaneseq
      %v1723 = vshrl.u32 %v1722, 7
      %v1724 = vsub.s32 0, %v1723
      %v1725 = vrot.slane %v1546, %v1724
      %v1727 = vadd.f32 %v1713, %v1725
      %v1728 = vadd.f32 %v1714, %v1725
      %v1729 = vadd.f32 %v1715, %v1725
      %v1730 = vadd.f32 %v1716, %v1725
      %v1731 = vadd.f32 %v1717, %v1725
      %v1732 = vadd.f32 %v1718, %v1725
      %v1733 = vadd.f32 %v1719, %v1725
      %v1734 = vadd.f32 %v1720, %v1725
      %v1735 = vsel %vm463, %v1727, -inf
      %v1736 = vsel %vm463, %v1728, -inf
      %v1737 = vsel %vm463, %v1729, -inf
      %v1738 = vsel %vm463, %v1730, -inf
      %v1739 = vsel %vm463, %v1731, -inf
      %v1740 = vmax.f32 %v1735, %v1739
      %v1741 = vsel %vm463, %v1732, -inf
      %v1742 = vmax.f32 %v1736, %v1741
      %v1743 = vsel %vm463, %v1733, -inf
      %v1744 = vmax.f32 %v1737, %v1743
      %v1745 = vsel %vm463, %v1734, -inf
      %v1746 = vmax.f32 %v1738, %v1745
      %v1747 = vmax.f32 %v1740, %v1742
      %v1748 = vmax.f32 %v1744, %v1746
      %v1749 = vmax.f32 %v1747, %v1748
      %v1750 = vrot.slane %v1749, 4
      %v1751 = vmax.f32 %v1749, %v1750
      %v1752 = vrot.slane %v1751, 2
      %v1753 = vmax.f32 %v1751, %v1752
      %v1754 = vrot.slane %v1753, 1
      %v1755 = vmax.f32 %v1753, %v1754
      %v1756 = vld [vmem:[%s9] sm:$0x1]
      %v1757 = vld [vmem:[%s10] sm:$0x1]
      %v1758 = vsel %vm463, %v1755, 0.0
      %1759 = vadd.xlane.f32.xlu0 %v1758
      %v1760 = vpop.xlane.xlu0 %1759
      %v1761 = vmul.f32 %v1760, %v488
      %v1762 = vsub.f32 %v1755, %v1761
      %v1763 = vmul.f32 %v1762, %v1762
      %v1764 = vsel %vm463, %v1763, 0.0
      %1765 = vadd.xlane.f32.xlu0 %v1764
      %v1766 = vpop.xlane.xlu0 %1765
      %v1767 = vmul.f32 %v1766, %v488
      %v1768 = vadd.f32 %v1767, 1e-05
      %v1769 = vrsqrt.pop %v1768
      %v1770 = vmul.f32 %v1768, %v1769
      %vm1771 = vcmp.eq.f32.partialorder %v1768, inf
      %v1772 = vsel %vm1771, %v1768, %v1770
      %vm1773 = vcmp.eq.f32.partialorder %v1768, 0.0
      %v1774 = vand.u32 %v1768, 2147483648
      %v1775 = vsel %vm1773, %v1774, %v1772
      %v1776 = vrcp.pop %v1775
      %v1777 = vmul.f32 %v1762, %v1776
      %v1778 = vmul.f32 %v1756, %v1777
      %v1779 = vadd.f32 %v1778, %v1757
      %vm1780 = vcmask 253952
      %1781 = vst.msk [vmem:[%s436] sm:$0x1] %vm1780, %v1779
      %1782 = vrot.lane.b32.xlu0 %v748, 96
      %v1783 = vpop.permute.xlu0 %1782
      %1784 = vrot.lane.b32.xlu0 %v753, 96
      %v1785 = vpop.permute.xlu0 %1784
      %1786 = vrot.lane.b32.xlu0 %v758, 96
      %v1787 = vpop.permute.xlu0 %1786
      %1788 = vrot.lane.b32.xlu0 %v763, 96
      %v1789 = vpop.permute.xlu0 %1788
      %1790 = vrot.lane.b32.xlu0 %v768, 96
      %v1791 = vpop.permute.xlu0 %1790
      %1792 = vrot.lane.b32.xlu0 %v773, 96
      %v1793 = vpop.permute.xlu0 %1792
      %1794 = vrot.lane.b32.xlu0 %v778, 96
      %v1795 = vpop.permute.xlu0 %1794
      %1796 = vrot.lane.b32.xlu0 %v783, 96
      %v1797 = vpop.permute.xlu0 %1796
      %1806 = vst.msk [vmem:[%s433] sm:$0xff] %vm849, %v1783
      %1807 = vst.msk [vmem:[%s433 + $0x8] sm:$0xff] %vm849, %v1785
      %1808 = vst.msk [vmem:[%s433 + $0x10] sm:$0xff] %vm849, %v1787
      %1809 = vst.msk [vmem:[%s433 + $0x18] sm:$0xff] %vm849, %v1789
      %1810 = vst.msk [vmem:[%s433 + $0x20] sm:$0xff] %vm849, %v1791
      %1811 = vst.msk [vmem:[%s433 + $0x28] sm:$0xff] %vm849, %v1793
      %1812 = vst.msk [vmem:[%s433 + $0x30] sm:$0xff] %vm849, %v1795
      %1813 = vst.msk [vmem:[%s433 + $0x38] sm:$0xff] %vm849, %v1797
      %p1814 = scmp.lt.s32.totalorder %s24, 1
      %s1815 = scalar_select %p1814, %s24, 1
      %s1816 = smul.addr %s1815, 8
      %s1817 = smul.addr %s1816, 8
      %s1818 = scalar_lea.vmem %s11, %s1817
      %p1819 = scmp.lt.s32.totalorder %s24, 1
      %s1820 = scalar_select %p1819, %s24, 1
      %s1821 = scalar_lea.vmem %s12, %s1820
      // Predicated region
      $region65: #{cmdss_forward.3} parent=63 // pred_check
        %p1822 = pneg %p283
      $region66: #{cmdss_forward.3} parent=63 // pred_check_branch
        %1824 = sbr.rel (%p1822) target = $region68
      $region67: #{cmdss_forward.3} parent=63 // pred_region
        _
      $region68: #{cmdss_forward.3} parent=63 // pred_fallthru
        _
      // Predicated region
      $region69: #{cmdss_forward.3} parent=63 // pred_check
        %p1825 = pneg %p309
      $region70: #{cmdss_forward.3} parent=63 // pred_check_branch
        %1827 = sbr.rel (%p1825) target = $region72
      $region71: #{cmdss_forward.3} parent=63 // pred_region
        _
      $region72: #{cmdss_forward.3} parent=63 // pred_fallthru
        _
    $region64: #{cmdss_forward.3} parent=5 // pred_fallthru
      _
    %p1828 = scmp.le.s32.totalorder 2, %s19
    // Predicated region
    $region73: #{cmdss_forward.3} parent=5 // pred_check
      %p1829 = pneg %p1828
    $region74: #{cmdss_forward.3} parent=5 // pred_check_branch
      %1831 = sbr.rel (%p1829) target = $region76
    $region75: #{cmdss_forward.3} parent=5 // pred_region
      %s1832 = ssub.s32 %s19, 2
      // Predicated region
      $region77: #{cmdss_forward.3} parent=75 // pred_check
        %p1833 = pneg %p289
      $region78: #{cmdss_forward.3} parent=75 // pred_check_branch
        %1835 = sbr.rel (%p1833) target = $region80
      $region79: #{cmdss_forward.3} parent=75 // pred_region
        %p1836 = scmp.lt.s32.totalorder %s25, 1
        %s1837 = scalar_select %p1836, %s25, 1
        %s1838 = smul.addr %s1837, 8
        %s1839 = smul.addr %s1838, 8
        %s1840 = scalar_lea.vmem %s11, %s1839
      $region80: #{cmdss_forward.3} parent=75 // pred_fallthru
        _
      // Predicated region
      $region81: #{cmdss_forward.3} parent=75 // pred_check
        %p1841 = pneg %p315
      $region82: #{cmdss_forward.3} parent=75 // pred_check_branch
        %1843 = sbr.rel (%p1841) target = $region84
      $region83: #{cmdss_forward.3} parent=75 // pred_region
        %p1844 = scmp.lt.s32.totalorder %s25, 1
        %s1845 = scalar_select %p1844, %s25, 1
        %s1846 = scalar_lea.vmem %s12, %s1845
      $region84: #{cmdss_forward.3} parent=75 // pred_fallthru
        _
    $region76: #{cmdss_forward.3} parent=5 // pred_fallthru
      _
  $region6: #{cmdss_forward.3} parent=0 // loop_footer
    %s23 = sadd.s32 1, %s19
  $region7: #{cmdss_forward.3} parent=0 // loop_footer_branch
    %18 = sbr.rel target = $region3
  $region8: #{cmdss_forward.3} parent=0 // loop_exit
    _

// kernel: cmdss_forward.5
$region0: #{cmdss_forward.5}
  #allocation0 [shape = 'u32[]', space=smem, size = 0x4, offset = 0x4, fixed_abs, tag = 'smem constant byte address 0x4 - core index']
  #allocation1 [shape = 'u32[144,128]{1,0:T(1,128)}', space=vmem, size = 0x12000, scoped, tag = 'internal scratch']
  %s0 = inlined_call_operand.vmem [shape: f32[2,16,32], index: 0, kind: input, shape index: {}]
  %s1 = inlined_call_operand.vmem [shape: f32[2,3,16,1], index: 1, kind: input, shape index: {}]
  %s2 = inlined_call_operand.vmem [shape: f32[1,32], index: 2, kind: input, shape index: {}]
  %s3 = inlined_call_operand.vmem [shape: f32[80,16], index: 3, kind: input, shape index: {}]
  %s4 = inlined_call_operand.vmem [shape: f32[64,160], index: 4, kind: input, shape index: {}]
  %s5 = inlined_call_operand.vmem [shape: f32[2,64,64], index: 5, kind: input, shape index: {}]
  %s6 = inlined_call_operand.vmem [shape: f32[2,1,64], index: 6, kind: input, shape index: {}]
  %s7 = inlined_call_operand.vmem [shape: f32[2,1,32], index: 7, kind: input, shape index: {}]
  %s8 = inlined_call_operand.vmem [shape: f32[32,32], index: 8, kind: input, shape index: {}]
  %s9 = inlined_call_operand.vmem [shape: f32[32,32], index: 9, kind: input, shape index: {}]
  %s10 = inlined_call_operand.vmem [shape: f32[1,32], index: 10, kind: input, shape index: {}]
  %s11 = inlined_call_operand.vmem [shape: f32[1,32], index: 11, kind: input, shape index: {}]
  %s12 = inlined_call_operand.vmem [shape: f32[32,32], index: 12, kind: input, shape index: {}]
  %s13 = inlined_call_operand.vmem [shape: f32[32,32], index: 13, kind: input, shape index: {}]
  %s14 = inlined_call_operand.vmem [shape: f32[1,32], index: 14, kind: input, shape index: {}]
  %s15 = inlined_call_operand.vmem [shape: f32[1,32], index: 15, kind: input, shape index: {}]
  %s16 = inlined_call_operand.vmem [shape: f32[1,32], index: 16, kind: input, shape index: {}]
  %s17 = inlined_call_operand.vmem [shape: f32[1,32], index: 17, kind: input, shape index: {}]
  %s18 = inlined_call_operand.vmem [shape: f32[32,512], index: 18, kind: input, shape index: {}]
  %s19 = inlined_call_operand.vmem [shape: f32[32,512], index: 19, kind: input, shape index: {}]
  %s20 = inlined_call_operand.vmem [shape: f32[1,512], index: 20, kind: input, shape index: {}]
  %s21 = inlined_call_operand.vmem [shape: f32[512,32], index: 21, kind: input, shape index: {}]
  %s22 = inlined_call_operand.vmem [shape: f32[1,32], index: 22, kind: input, shape index: {}]
  %s23 = inlined_call_operand.vmem [shape: f32[32,2], index: 23, kind: input, shape index: {}]
  %s24 = inlined_call_operand.vmem [shape: f32[1,2], index: 24, kind: input, shape index: {}]
  %s25 = inlined_call_operand.vmem [shape: f32[17], index: 25, kind: input, shape index: {}]
  %s26 = inlined_call_operand.hbm [shape: f32[2,1,2], index: 26, kind: output, shape index: {}]
  %s27 = sld [smem:[#allocation0]]
  $region141: #{cmdss_forward.5} parent=0
    _
  %s29 = ssub.s32 1, %s27
  %s30 = scalar_select 0, %s29, %s27
  $region1: #{cmdss_forward.5} parent=0
    #allocation2 [shape = 'u8[512]{0}', space=smem, size = 0x200, scoped, tag = 'input window, operand 25, single buffered']
    #allocation3 [shape = 's32[2]{0}', space=sflag, size = 0x8, scoped, tag = 'scoped memory for cmdss_forward.5']
    #allocation4 [shape = 's32[2]{0}', space=sflag, size = 0x8, scoped, tag = 'scoped memory for cmdss_forward.5']
    #allocation5 [shape = 'u8[1024]{0}', space=vmem, size = 0x400, scoped, tag = 'output window, operand 0']
    %31 = vsyncpa [#allocation4], 0
    %32 = vsyncpa [#allocation3], 0
    %s33 = scalar_lea.sflag [#allocation3], 1
    %34 = vsyncpa %s33, 0
    loop: start=0, step=1, limit=4
    $region2: #{cmdss_forward.5} parent=1 // loop_pre_header
      _
    $region3: #{cmdss_forward.5} parent=1 // loop_header
      %s36 = sphi 0, %s40
      %p37 = scmp.ge.s32.totalorder %s36, 4
      %s46 = sphi 0, %s48
      %s49 = sphi 0, %s46
      %s50 = sphi 0, %s49
      %s66 = sphi 0, %s50
      %s72 = sphi 0, %s74
      %s75 = sphi 0, %s72
      %s76 = sphi 0, %s75
      %s92 = sphi 0, %s76
      %s96 = sphi 0, %s96
      %s98 = sphi 0, %s96
      %s99 = sphi 0, %s98
      %s113 = sphi 0, %s99
      %s117 = sphi 0, %s117
      %s119 = sphi 0, %s117
      %s120 = sphi 0, %s119
      %s134 = sphi 0, %s120
      %s138 = sphi 0, %s138
      %s140 = sphi 0, %s138
      %s141 = sphi 0, %s140
      %s155 = sphi 0, %s141
      %s161 = sphi 0, %s163
      %s164 = sphi 0, %s161
      %s165 = sphi 0, %s164
      %s181 = sphi 0, %s165
      %s187 = sphi 0, %s189
      %s190 = sphi 0, %s187
      %s191 = sphi 0, %s190
      %s207 = sphi 0, %s191
      %s213 = sphi 0, %s215
      %s216 = sphi 0, %s213
      %s217 = sphi 0, %s216
      %s233 = sphi 0, %s217
      %s237 = sphi 0, %s237
      %s239 = sphi 0, %s237
      %s240 = sphi 0, %s239
      %s254 = sphi 0, %s240
      %s258 = sphi 0, %s258
      %s260 = sphi 0, %s258
      %s261 = sphi 0, %s260
      %s275 = sphi 0, %s261
      %s279 = sphi 0, %s279
      %s281 = sphi 0, %s279
      %s282 = sphi 0, %s281
      %s296 = sphi 0, %s282
      %s300 = sphi 0, %s300
      %s302 = sphi 0, %s300
      %s303 = sphi 0, %s302
      %s317 = sphi 0, %s303
      %s321 = sphi 0, %s321
      %s323 = sphi 0, %s321
      %s324 = sphi 0, %s323
      %s338 = sphi 0, %s324
      %s342 = sphi 0, %s342
      %s344 = sphi 0, %s342
      %s345 = sphi 0, %s344
      %s359 = sphi 0, %s345
      %s363 = sphi 0, %s363
      %s365 = sphi 0, %s363
      %s366 = sphi 0, %s365
      %s380 = sphi 0, %s366
      %s384 = sphi 0, %s384
      %s386 = sphi 0, %s384
      %s387 = sphi 0, %s386
      %s401 = sphi 0, %s387
      %s405 = sphi 0, %s405
      %s407 = sphi 0, %s405
      %s408 = sphi 0, %s407
      %s422 = sphi 0, %s408
      %s426 = sphi 0, %s426
      %s428 = sphi 0, %s426
      %s429 = sphi 0, %s428
      %s443 = sphi 0, %s429
      %s447 = sphi 0, %s447
      %s449 = sphi 0, %s447
      %s450 = sphi 0, %s449
      %s464 = sphi 0, %s450
      %s468 = sphi 0, %s468
      %s470 = sphi 0, %s468
      %s471 = sphi 0, %s470
      %s485 = sphi 0, %s471
      %s489 = sphi 0, %s489
      %s491 = sphi 0, %s489
      %s492 = sphi 0, %s491
      %s506 = sphi 0, %s492
      %s510 = sphi 0, %s510
      %s512 = sphi 0, %s510
      %s513 = sphi 0, %s512
      %s527 = sphi 0, %s513
      %s531 = sphi 0, %s531
      %s533 = sphi 0, %s531
      %s534 = sphi 0, %s533
      %s548 = sphi 0, %s534
      %s552 = sphi 0, %s552
      %s554 = sphi 0, %s552
      %s555 = sphi 0, %s554
      %s569 = sphi 0, %s555
      %s573 = sphi 0, %s573
      %s575 = sphi 0, %s573
      %s576 = sphi 0, %s575
      %s590 = sphi 0, %s576
      %s594 = sphi 0, %s594
      %s596 = sphi 0, %s594
      %s597 = sphi 0, %s596
      %s611 = sphi 0, %s597
      %s617 = sphi 0, %s619
      %s620 = sphi 0, %s617
      %s621 = sphi 0, %s620
      %s637 = sphi 0, %s621
    $region4: #{cmdss_forward.5} parent=1 // loop_header_branch
      %39 = sbr.rel (%p37) target = $region8
    $region5: #{cmdss_forward.5} parent=1 // loop_body
      %s41 = ssub.s32 %s36, 1
      %s42 = ssub.s32 %s36, 2
      %s43 = sadd.s32 %s36, 1
      %s44 = ssub.s32 %s36, %s43
      %p45 = scmp.eq.s32.totalorder %s44, 0
      %s47 = sadd.s32 %s46, 1
      %s48 = scalar_select %p45, %s46, %s47
      %p51 = pneg %p45
      %p52 = scmp.eq.s32.totalorder %s36, 1
      %p53 = por %p51, %p52
      %p54 = scmp.ne.s32.totalorder %s46, %s49
      %p55 = scmp.eq.s32.totalorder %s36, 0
      %p56 = por %p54, %p55
      %p57 = scmp.ne.s32.totalorder %s46, %s49
      %p58 = scmp.eq.s32.totalorder %s41, 1
      %p59 = por %p57, %p58
      %p60 = scmp.ne.s32.totalorder %s49, %s50
      %p61 = scmp.eq.s32.totalorder %s41, 0
      %p62 = por %p60, %p61
      %p63 = scmp.ne.s32.totalorder %s49, %s50
      %p64 = scmp.eq.s32.totalorder %s42, 1
      %p65 = por %p63, %p64
      %p67 = scmp.ne.s32.totalorder %s50, %s66
      %p68 = scmp.eq.s32.totalorder %s42, 0
      %p69 = por %p67, %p68
      %s70 = ssub.s32 %s36, %s43
      %p71 = scmp.eq.s32.totalorder %s70, 0
      %s73 = sadd.s32 %s72, 1
      %s74 = scalar_select %p71, %s72, %s73
      %p77 = pneg %p71
      %p78 = scmp.eq.s32.totalorder %s36, 1
      %p79 = por %p77, %p78
      %p80 = scmp.ne.s32.totalorder %s72, %s75
      %p81 = scmp.eq.s32.totalorder %s36, 0
      %p82 = por %p80, %p81
      %p83 = scmp.ne.s32.totalorder %s72, %s75
      %p84 = scmp.eq.s32.totalorder %s41, 1
      %p85 = por %p83, %p84
      %p86 = scmp.ne.s32.totalorder %s75, %s76
      %p87 = scmp.eq.s32.totalorder %s41, 0
      %p88 = por %p86, %p87
      %p89 = scmp.ne.s32.totalorder %s75, %s76
      %p90 = scmp.eq.s32.totalorder %s42, 1
      %p91 = por %p89, %p90
      %p93 = scmp.ne.s32.totalorder %s76, %s92
      %p94 = scmp.eq.s32.totalorder %s42, 0
      %p95 = por %p93, %p94
      %s97 = sadd.s32 %s96, 1
      %p100 = scmp.eq.s32.totalorder %s36, 1
      %p101 = scmp.ne.s32.totalorder %s96, %s98
      %p102 = scmp.eq.s32.totalorder %s36, 0
      %p103 = por %p101, %p102
      %p104 = scmp.ne.s32.totalorder %s96, %s98
      %p105 = scmp.eq.s32.totalorder %s41, 1
      %p106 = por %p104, %p105
      %p107 = scmp.ne.s32.totalorder %s98, %s99
      %p108 = scmp.eq.s32.totalorder %s41, 0
      %p109 = por %p107, %p108
      %p110 = scmp.ne.s32.totalorder %s98, %s99
      %p111 = scmp.eq.s32.totalorder %s42, 1
      %p112 = por %p110, %p111
      %p114 = scmp.ne.s32.totalorder %s99, %s113
      %p115 = scmp.eq.s32.totalorder %s42, 0
      %p116 = por %p114, %p115
      %s118 = sadd.s32 %s117, 1
      %p121 = scmp.eq.s32.totalorder %s36, 1
      %p122 = scmp.ne.s32.totalorder %s117, %s119
      %p123 = scmp.eq.s32.totalorder %s36, 0
      %p124 = por %p122, %p123
      %p125 = scmp.ne.s32.totalorder %s117, %s119
      %p126 = scmp.eq.s32.totalorder %s41, 1
      %p127 = por %p125, %p126
      %p128 = scmp.ne.s32.totalorder %s119, %s120
      %p129 = scmp.eq.s32.totalorder %s41, 0
      %p130 = por %p128, %p129
      %p131 = scmp.ne.s32.totalorder %s119, %s120
      %p132 = scmp.eq.s32.totalorder %s42, 1
      %p133 = por %p131, %p132
      %p135 = scmp.ne.s32.totalorder %s120, %s134
      %p136 = scmp.eq.s32.totalorder %s42, 0
      %p137 = por %p135, %p136
      %s139 = sadd.s32 %s138, 1
      %p142 = scmp.eq.s32.totalorder %s36, 1
      %p143 = scmp.ne.s32.totalorder %s138, %s140
      %p144 = scmp.eq.s32.totalorder %s36, 0
      %p145 = por %p143, %p144
      %p146 = scmp.ne.s32.totalorder %s138, %s140
      %p147 = scmp.eq.s32.totalorder %s41, 1
      %p148 = por %p146, %p147
      %p149 = scmp.ne.s32.totalorder %s140, %s141
      %p150 = scmp.eq.s32.totalorder %s41, 0
      %p151 = por %p149, %p150
      %p152 = scmp.ne.s32.totalorder %s140, %s141
      %p153 = scmp.eq.s32.totalorder %s42, 1
      %p154 = por %p152, %p153
      %p156 = scmp.ne.s32.totalorder %s141, %s155
      %p157 = scmp.eq.s32.totalorder %s42, 0
      %p158 = por %p156, %p157
      %s159 = ssub.s32 %s36, %s43
      %p160 = scmp.eq.s32.totalorder %s159, 0
      %s162 = sadd.s32 %s161, 1
      %s163 = scalar_select %p160, %s161, %s162
      %p166 = pneg %p160
      %p167 = scmp.eq.s32.totalorder %s36, 1
      %p168 = por %p166, %p167
      %p169 = scmp.ne.s32.totalorder %s161, %s164
      %p170 = scmp.eq.s32.totalorder %s36, 0
      %p171 = por %p169, %p170
      %p172 = scmp.ne.s32.totalorder %s161, %s164
      %p173 = scmp.eq.s32.totalorder %s41, 1
      %p174 = por %p172, %p173
      %p175 = scmp.ne.s32.totalorder %s164, %s165
      %p176 = scmp.eq.s32.totalorder %s41, 0
      %p177 = por %p175, %p176
      %p178 = scmp.ne.s32.totalorder %s164, %s165
      %p179 = scmp.eq.s32.totalorder %s42, 1
      %p180 = por %p178, %p179
      %p182 = scmp.ne.s32.totalorder %s165, %s181
      %p183 = scmp.eq.s32.totalorder %s42, 0
      %p184 = por %p182, %p183
      %s185 = ssub.s32 %s36, %s43
      %p186 = scmp.eq.s32.totalorder %s185, 0
      %s188 = sadd.s32 %s187, 1
      %s189 = scalar_select %p186, %s187, %s188
      %p192 = pneg %p186
      %p193 = scmp.eq.s32.totalorder %s36, 1
      %p194 = por %p192, %p193
      %p195 = scmp.ne.s32.totalorder %s187, %s190
      %p196 = scmp.eq.s32.totalorder %s36, 0
      %p197 = por %p195, %p196
      %p198 = scmp.ne.s32.totalorder %s187, %s190
      %p199 = scmp.eq.s32.totalorder %s41, 1
      %p200 = por %p198, %p199
      %p201 = scmp.ne.s32.totalorder %s190, %s191
      %p202 = scmp.eq.s32.totalorder %s41, 0
      %p203 = por %p201, %p202
      %p204 = scmp.ne.s32.totalorder %s190, %s191
      %p205 = scmp.eq.s32.totalorder %s42, 1
      %p206 = por %p204, %p205
      %p208 = scmp.ne.s32.totalorder %s191, %s207
      %p209 = scmp.eq.s32.totalorder %s42, 0
      %p210 = por %p208, %p209
      %s211 = ssub.s32 %s36, %s43
      %p212 = scmp.eq.s32.totalorder %s211, 0
      %s214 = sadd.s32 %s213, 1
      %s215 = scalar_select %p212, %s213, %s214
      %p218 = pneg %p212
      %p219 = scmp.eq.s32.totalorder %s36, 1
      %p220 = por %p218, %p219
      %p221 = scmp.ne.s32.totalorder %s213, %s216
      %p222 = scmp.eq.s32.totalorder %s36, 0
      %p223 = por %p221, %p222
      %p224 = scmp.ne.s32.totalorder %s213, %s216
      %p225 = scmp.eq.s32.totalorder %s41, 1
      %p226 = por %p224, %p225
      %p227 = scmp.ne.s32.totalorder %s216, %s217
      %p228 = scmp.eq.s32.totalorder %s41, 0
      %p229 = por %p227, %p228
      %p230 = scmp.ne.s32.totalorder %s216, %s217
      %p231 = scmp.eq.s32.totalorder %s42, 1
      %p232 = por %p230, %p231
      %p234 = scmp.ne.s32.totalorder %s217, %s233
      %p235 = scmp.eq.s32.totalorder %s42, 0
      %p236 = por %p234, %p235
      %s238 = sadd.s32 %s237, 1
      %p241 = scmp.eq.s32.totalorder %s36, 1
      %p242 = scmp.ne.s32.totalorder %s237, %s239
      %p243 = scmp.eq.s32.totalorder %s36, 0
      %p244 = por %p242, %p243
      %p245 = scmp.ne.s32.totalorder %s237, %s239
      %p246 = scmp.eq.s32.totalorder %s41, 1
      %p247 = por %p245, %p246
      %p248 = scmp.ne.s32.totalorder %s239, %s240
      %p249 = scmp.eq.s32.totalorder %s41, 0
      %p250 = por %p248, %p249
      %p251 = scmp.ne.s32.totalorder %s239, %s240
      %p252 = scmp.eq.s32.totalorder %s42, 1
      %p253 = por %p251, %p252
      %p255 = scmp.ne.s32.totalorder %s240, %s254
      %p256 = scmp.eq.s32.totalorder %s42, 0
      %p257 = por %p255, %p256
      %s259 = sadd.s32 %s258, 1
      %p262 = scmp.eq.s32.totalorder %s36, 1
      %p263 = scmp.ne.s32.totalorder %s258, %s260
      %p264 = scmp.eq.s32.totalorder %s36, 0
      %p265 = por %p263, %p264
      %p266 = scmp.ne.s32.totalorder %s258, %s260
      %p267 = scmp.eq.s32.totalorder %s41, 1
      %p268 = por %p266, %p267
      %p269 = scmp.ne.s32.totalorder %s260, %s261
      %p270 = scmp.eq.s32.totalorder %s41, 0
      %p271 = por %p269, %p270
      %p272 = scmp.ne.s32.totalorder %s260, %s261
      %p273 = scmp.eq.s32.totalorder %s42, 1
      %p274 = por %p272, %p273
      %p276 = scmp.ne.s32.totalorder %s261, %s275
      %p277 = scmp.eq.s32.totalorder %s42, 0
      %p278 = por %p276, %p277
      %s280 = sadd.s32 %s279, 1
      %p283 = scmp.eq.s32.totalorder %s36, 1
      %p284 = scmp.ne.s32.totalorder %s279, %s281
      %p285 = scmp.eq.s32.totalorder %s36, 0
      %p286 = por %p284, %p285
      %p287 = scmp.ne.s32.totalorder %s279, %s281
      %p288 = scmp.eq.s32.totalorder %s41, 1
      %p289 = por %p287, %p288
      %p290 = scmp.ne.s32.totalorder %s281, %s282
      %p291 = scmp.eq.s32.totalorder %s41, 0
      %p292 = por %p290, %p291
      %p293 = scmp.ne.s32.totalorder %s281, %s282
      %p294 = scmp.eq.s32.totalorder %s42, 1
      %p295 = por %p293, %p294
      %p297 = scmp.ne.s32.totalorder %s282, %s296
      %p298 = scmp.eq.s32.totalorder %s42, 0
      %p299 = por %p297, %p298
      %s301 = sadd.s32 %s300, 1
      %p304 = scmp.eq.s32.totalorder %s36, 1
      %p305 = scmp.ne.s32.totalorder %s300, %s302
      %p306 = scmp.eq.s32.totalorder %s36, 0
      %p307 = por %p305, %p306
      %p308 = scmp.ne.s32.totalorder %s300, %s302
      %p309 = scmp.eq.s32.totalorder %s41, 1
      %p310 = por %p308, %p309
      %p311 = scmp.ne.s32.totalorder %s302, %s303
      %p312 = scmp.eq.s32.totalorder %s41, 0
      %p313 = por %p311, %p312
      %p314 = scmp.ne.s32.totalorder %s302, %s303
      %p315 = scmp.eq.s32.totalorder %s42, 1
      %p316 = por %p314, %p315
      %p318 = scmp.ne.s32.totalorder %s303, %s317
      %p319 = scmp.eq.s32.totalorder %s42, 0
      %p320 = por %p318, %p319
      %s322 = sadd.s32 %s321, 1
      %p325 = scmp.eq.s32.totalorder %s36, 1
      %p326 = scmp.ne.s32.totalorder %s321, %s323
      %p327 = scmp.eq.s32.totalorder %s36, 0
      %p328 = por %p326, %p327
      %p329 = scmp.ne.s32.totalorder %s321, %s323
      %p330 = scmp.eq.s32.totalorder %s41, 1
      %p331 = por %p329, %p330
      %p332 = scmp.ne.s32.totalorder %s323, %s324
      %p333 = scmp.eq.s32.totalorder %s41, 0
      %p334 = por %p332, %p333
      %p335 = scmp.ne.s32.totalorder %s323, %s324
      %p336 = scmp.eq.s32.totalorder %s42, 1
      %p337 = por %p335, %p336
      %p339 = scmp.ne.s32.totalorder %s324, %s338
      %p340 = scmp.eq.s32.totalorder %s42, 0
      %p341 = por %p339, %p340
      %s343 = sadd.s32 %s342, 1
      %p346 = scmp.eq.s32.totalorder %s36, 1
      %p347 = scmp.ne.s32.totalorder %s342, %s344
      %p348 = scmp.eq.s32.totalorder %s36, 0
      %p349 = por %p347, %p348
      %p350 = scmp.ne.s32.totalorder %s342, %s344
      %p351 = scmp.eq.s32.totalorder %s41, 1
      %p352 = por %p350, %p351
      %p353 = scmp.ne.s32.totalorder %s344, %s345
      %p354 = scmp.eq.s32.totalorder %s41, 0
      %p355 = por %p353, %p354
      %p356 = scmp.ne.s32.totalorder %s344, %s345
      %p357 = scmp.eq.s32.totalorder %s42, 1
      %p358 = por %p356, %p357
      %p360 = scmp.ne.s32.totalorder %s345, %s359
      %p361 = scmp.eq.s32.totalorder %s42, 0
      %p362 = por %p360, %p361
      %s364 = sadd.s32 %s363, 1
      %p367 = scmp.eq.s32.totalorder %s36, 1
      %p368 = scmp.ne.s32.totalorder %s363, %s365
      %p369 = scmp.eq.s32.totalorder %s36, 0
      %p370 = por %p368, %p369
      %p371 = scmp.ne.s32.totalorder %s363, %s365
      %p372 = scmp.eq.s32.totalorder %s41, 1
      %p373 = por %p371, %p372
      %p374 = scmp.ne.s32.totalorder %s365, %s366
      %p375 = scmp.eq.s32.totalorder %s41, 0
      %p376 = por %p374, %p375
      %p377 = scmp.ne.s32.totalorder %s365, %s366
      %p378 = scmp.eq.s32.totalorder %s42, 1
      %p379 = por %p377, %p378
      %p381 = scmp.ne.s32.totalorder %s366, %s380
      %p382 = scmp.eq.s32.totalorder %s42, 0
      %p383 = por %p381, %p382
      %s385 = sadd.s32 %s384, 1
      %p388 = scmp.eq.s32.totalorder %s36, 1
      %p389 = scmp.ne.s32.totalorder %s384, %s386
      %p390 = scmp.eq.s32.totalorder %s36, 0
      %p391 = por %p389, %p390
      %p392 = scmp.ne.s32.totalorder %s384, %s386
      %p393 = scmp.eq.s32.totalorder %s41, 1
      %p394 = por %p392, %p393
      %p395 = scmp.ne.s32.totalorder %s386, %s387
      %p396 = scmp.eq.s32.totalorder %s41, 0
      %p397 = por %p395, %p396
      %p398 = scmp.ne.s32.totalorder %s386, %s387
      %p399 = scmp.eq.s32.totalorder %s42, 1
      %p400 = por %p398, %p399
      %p402 = scmp.ne.s32.totalorder %s387, %s401
      %p403 = scmp.eq.s32.totalorder %s42, 0
      %p404 = por %p402, %p403
      %s406 = sadd.s32 %s405, 1
      %p409 = scmp.eq.s32.totalorder %s36, 1
      %p410 = scmp.ne.s32.totalorder %s405, %s407
      %p411 = scmp.eq.s32.totalorder %s36, 0
      %p412 = por %p410, %p411
      %p413 = scmp.ne.s32.totalorder %s405, %s407
      %p414 = scmp.eq.s32.totalorder %s41, 1
      %p415 = por %p413, %p414
      %p416 = scmp.ne.s32.totalorder %s407, %s408
      %p417 = scmp.eq.s32.totalorder %s41, 0
      %p418 = por %p416, %p417
      %p419 = scmp.ne.s32.totalorder %s407, %s408
      %p420 = scmp.eq.s32.totalorder %s42, 1
      %p421 = por %p419, %p420
      %p423 = scmp.ne.s32.totalorder %s408, %s422
      %p424 = scmp.eq.s32.totalorder %s42, 0
      %p425 = por %p423, %p424
      %s427 = sadd.s32 %s426, 1
      %p430 = scmp.eq.s32.totalorder %s36, 1
      %p431 = scmp.ne.s32.totalorder %s426, %s428
      %p432 = scmp.eq.s32.totalorder %s36, 0
      %p433 = por %p431, %p432
      %p434 = scmp.ne.s32.totalorder %s426, %s428
      %p435 = scmp.eq.s32.totalorder %s41, 1
      %p436 = por %p434, %p435
      %p437 = scmp.ne.s32.totalorder %s428, %s429
      %p438 = scmp.eq.s32.totalorder %s41, 0
      %p439 = por %p437, %p438
      %p440 = scmp.ne.s32.totalorder %s428, %s429
      %p441 = scmp.eq.s32.totalorder %s42, 1
      %p442 = por %p440, %p441
      %p444 = scmp.ne.s32.totalorder %s429, %s443
      %p445 = scmp.eq.s32.totalorder %s42, 0
      %p446 = por %p444, %p445
      %s448 = sadd.s32 %s447, 1
      %p451 = scmp.eq.s32.totalorder %s36, 1
      %p452 = scmp.ne.s32.totalorder %s447, %s449
      %p453 = scmp.eq.s32.totalorder %s36, 0
      %p454 = por %p452, %p453
      %p455 = scmp.ne.s32.totalorder %s447, %s449
      %p456 = scmp.eq.s32.totalorder %s41, 1
      %p457 = por %p455, %p456
      %p458 = scmp.ne.s32.totalorder %s449, %s450
      %p459 = scmp.eq.s32.totalorder %s41, 0
      %p460 = por %p458, %p459
      %p461 = scmp.ne.s32.totalorder %s449, %s450
      %p462 = scmp.eq.s32.totalorder %s42, 1
      %p463 = por %p461, %p462
      %p465 = scmp.ne.s32.totalorder %s450, %s464
      %p466 = scmp.eq.s32.totalorder %s42, 0
      %p467 = por %p465, %p466
      %s469 = sadd.s32 %s468, 1
      %p472 = scmp.eq.s32.totalorder %s36, 1
      %p473 = scmp.ne.s32.totalorder %s468, %s470
      %p474 = scmp.eq.s32.totalorder %s36, 0
      %p475 = por %p473, %p474
      %p476 = scmp.ne.s32.totalorder %s468, %s470
      %p477 = scmp.eq.s32.totalorder %s41, 1
      %p478 = por %p476, %p477
      %p479 = scmp.ne.s32.totalorder %s470, %s471
      %p480 = scmp.eq.s32.totalorder %s41, 0
      %p481 = por %p479, %p480
      %p482 = scmp.ne.s32.totalorder %s470, %s471
      %p483 = scmp.eq.s32.totalorder %s42, 1
      %p484 = por %p482, %p483
      %p486 = scmp.ne.s32.totalorder %s471, %s485
      %p487 = scmp.eq.s32.totalorder %s42, 0
      %p488 = por %p486, %p487
      %s490 = sadd.s32 %s489, 1
      %p493 = scmp.eq.s32.totalorder %s36, 1
      %p494 = scmp.ne.s32.totalorder %s489, %s491
      %p495 = scmp.eq.s32.totalorder %s36, 0
      %p496 = por %p494, %p495
      %p497 = scmp.ne.s32.totalorder %s489, %s491
      %p498 = scmp.eq.s32.totalorder %s41, 1
      %p499 = por %p497, %p498
      %p500 = scmp.ne.s32.totalorder %s491, %s492
      %p501 = scmp.eq.s32.totalorder %s41, 0
      %p502 = por %p500, %p501
      %p503 = scmp.ne.s32.totalorder %s491, %s492
      %p504 = scmp.eq.s32.totalorder %s42, 1
      %p505 = por %p503, %p504
      %p507 = scmp.ne.s32.totalorder %s492, %s506
      %p508 = scmp.eq.s32.totalorder %s42, 0
      %p509 = por %p507, %p508
      %s511 = sadd.s32 %s510, 1
      %p514 = scmp.eq.s32.totalorder %s36, 1
      %p515 = scmp.ne.s32.totalorder %s510, %s512
      %p516 = scmp.eq.s32.totalorder %s36, 0
      %p517 = por %p515, %p516
      %p518 = scmp.ne.s32.totalorder %s510, %s512
      %p519 = scmp.eq.s32.totalorder %s41, 1
      %p520 = por %p518, %p519
      %p521 = scmp.ne.s32.totalorder %s512, %s513
      %p522 = scmp.eq.s32.totalorder %s41, 0
      %p523 = por %p521, %p522
      %p524 = scmp.ne.s32.totalorder %s512, %s513
      %p525 = scmp.eq.s32.totalorder %s42, 1
      %p526 = por %p524, %p525
      %p528 = scmp.ne.s32.totalorder %s513, %s527
      %p529 = scmp.eq.s32.totalorder %s42, 0
      %p530 = por %p528, %p529
      %s532 = sadd.s32 %s531, 1
      %p535 = scmp.eq.s32.totalorder %s36, 1
      %p536 = scmp.ne.s32.totalorder %s531, %s533
      %p537 = scmp.eq.s32.totalorder %s36, 0
      %p538 = por %p536, %p537
      %p539 = scmp.ne.s32.totalorder %s531, %s533
      %p540 = scmp.eq.s32.totalorder %s41, 1
      %p541 = por %p539, %p540
      %p542 = scmp.ne.s32.totalorder %s533, %s534
      %p543 = scmp.eq.s32.totalorder %s41, 0
      %p544 = por %p542, %p543
      %p545 = scmp.ne.s32.totalorder %s533, %s534
      %p546 = scmp.eq.s32.totalorder %s42, 1
      %p547 = por %p545, %p546
      %p549 = scmp.ne.s32.totalorder %s534, %s548
      %p550 = scmp.eq.s32.totalorder %s42, 0
      %p551 = por %p549, %p550
      %s553 = sadd.s32 %s552, 1
      %p556 = scmp.eq.s32.totalorder %s36, 1
      %p557 = scmp.ne.s32.totalorder %s552, %s554
      %p558 = scmp.eq.s32.totalorder %s36, 0
      %p559 = por %p557, %p558
      %p560 = scmp.ne.s32.totalorder %s552, %s554
      %p561 = scmp.eq.s32.totalorder %s41, 1
      %p562 = por %p560, %p561
      %p563 = scmp.ne.s32.totalorder %s554, %s555
      %p564 = scmp.eq.s32.totalorder %s41, 0
      %p565 = por %p563, %p564
      %p566 = scmp.ne.s32.totalorder %s554, %s555
      %p567 = scmp.eq.s32.totalorder %s42, 1
      %p568 = por %p566, %p567
      %p570 = scmp.ne.s32.totalorder %s555, %s569
      %p571 = scmp.eq.s32.totalorder %s42, 0
      %p572 = por %p570, %p571
      %s574 = sadd.s32 %s573, 1
      %p577 = scmp.eq.s32.totalorder %s36, 1
      %p578 = scmp.ne.s32.totalorder %s573, %s575
      %p579 = scmp.eq.s32.totalorder %s36, 0
      %p580 = por %p578, %p579
      %p581 = scmp.ne.s32.totalorder %s573, %s575
      %p582 = scmp.eq.s32.totalorder %s41, 1
      %p583 = por %p581, %p582
      %p584 = scmp.ne.s32.totalorder %s575, %s576
      %p585 = scmp.eq.s32.totalorder %s41, 0
      %p586 = por %p584, %p585
      %p587 = scmp.ne.s32.totalorder %s575, %s576
      %p588 = scmp.eq.s32.totalorder %s42, 1
      %p589 = por %p587, %p588
      %p591 = scmp.ne.s32.totalorder %s576, %s590
      %p592 = scmp.eq.s32.totalorder %s42, 0
      %p593 = por %p591, %p592
      %s595 = sadd.s32 %s594, 1
      %p598 = scmp.eq.s32.totalorder %s36, 1
      %p599 = scmp.ne.s32.totalorder %s594, %s596
      %p600 = scmp.eq.s32.totalorder %s36, 0
      %p601 = por %p599, %p600
      %p602 = scmp.ne.s32.totalorder %s594, %s596
      %p603 = scmp.eq.s32.totalorder %s41, 1
      %p604 = por %p602, %p603
      %p605 = scmp.ne.s32.totalorder %s596, %s597
      %p606 = scmp.eq.s32.totalorder %s41, 0
      %p607 = por %p605, %p606
      %p608 = scmp.ne.s32.totalorder %s596, %s597
      %p609 = scmp.eq.s32.totalorder %s42, 1
      %p610 = por %p608, %p609
      %p612 = scmp.ne.s32.totalorder %s597, %s611
      %p613 = scmp.eq.s32.totalorder %s42, 0
      %p614 = por %p612, %p613
      %s615 = ssub.s32 %s36, %s43
      %p616 = scmp.eq.s32.totalorder %s615, 0
      %s618 = sadd.s32 %s617, 1
      %s619 = scalar_select %p616, %s617, %s618
      %p622 = pneg %p616
      %p623 = scmp.eq.s32.totalorder %s36, 1
      %p624 = por %p622, %p623
      %p625 = scmp.ne.s32.totalorder %s617, %s620
      %p626 = scmp.eq.s32.totalorder %s36, 0
      %p627 = por %p625, %p626
      %p628 = scmp.ne.s32.totalorder %s617, %s620
      %p629 = scmp.eq.s32.totalorder %s41, 1
      %p630 = por %p628, %p629
      %p631 = scmp.ne.s32.totalorder %s620, %s621
      %p632 = scmp.eq.s32.totalorder %s41, 0
      %p633 = por %p631, %p632
      %p634 = scmp.ne.s32.totalorder %s620, %s621
      %p635 = scmp.eq.s32.totalorder %s42, 1
      %p636 = por %p634, %p635
      %p638 = scmp.ne.s32.totalorder %s621, %s637
      %p639 = scmp.eq.s32.totalorder %s42, 0
      %p640 = por %p638, %p639
      %p641 = scmp.le.s32.totalorder 1, %s36
      %p642 = scmp.lt.s32.totalorder %s36, 3
      %p643 = pnand %p641, %p642
      %p644 = pneg %p643
      // Predicated region
      $region9: #{cmdss_forward.5} parent=5 // pred_check
        _
      $region10: #{cmdss_forward.5} parent=5 // pred_check_branch
        %646 = sbr.rel (%p643) target = $region12
      $region11: #{cmdss_forward.5} parent=5 // pred_region
        %s647 = ssub.s32 %s36, 1
        // Predicated region
        $region13: #{cmdss_forward.5} parent=11 // pred_check
          %p648 = pneg %p109
        $region14: #{cmdss_forward.5} parent=11 // pred_check_branch
          %650 = sbr.rel (%p648) target = $region16
        $region15: #{cmdss_forward.5} parent=11 // pred_region
          _
        $region16: #{cmdss_forward.5} parent=11 // pred_fallthru
          _
        // Predicated region
        $region17: #{cmdss_forward.5} parent=11 // pred_check
          %p651 = pneg %p130
        $region18: #{cmdss_forward.5} parent=11 // pred_check_branch
          %653 = sbr.rel (%p651) target = $region20
        $region19: #{cmdss_forward.5} parent=11 // pred_region
          _
        $region20: #{cmdss_forward.5} parent=11 // pred_fallthru
          _
        // Predicated region
        $region21: #{cmdss_forward.5} parent=11 // pred_check
          %p654 = pneg %p151
        $region22: #{cmdss_forward.5} parent=11 // pred_check_branch
          %656 = sbr.rel (%p654) target = $region24
        $region23: #{cmdss_forward.5} parent=11 // pred_region
          _
        $region24: #{cmdss_forward.5} parent=11 // pred_fallthru
          _
        // Predicated region
        $region25: #{cmdss_forward.5} parent=11 // pred_check
          %p657 = pneg %p250
        $region26: #{cmdss_forward.5} parent=11 // pred_check_branch
          %659 = sbr.rel (%p657) target = $region28
        $region27: #{cmdss_forward.5} parent=11 // pred_region
          _
        $region28: #{cmdss_forward.5} parent=11 // pred_fallthru
          _
        // Predicated region
        $region29: #{cmdss_forward.5} parent=11 // pred_check
          %p660 = pneg %p271
        $region30: #{cmdss_forward.5} parent=11 // pred_check_branch
          %662 = sbr.rel (%p660) target = $region32
        $region31: #{cmdss_forward.5} parent=11 // pred_region
          _
        $region32: #{cmdss_forward.5} parent=11 // pred_fallthru
          _
        // Predicated region
        $region33: #{cmdss_forward.5} parent=11 // pred_check
          %p663 = pneg %p292
        $region34: #{cmdss_forward.5} parent=11 // pred_check_branch
          %665 = sbr.rel (%p663) target = $region36
        $region35: #{cmdss_forward.5} parent=11 // pred_region
          _
        $region36: #{cmdss_forward.5} parent=11 // pred_fallthru
          _
        // Predicated region
        $region37: #{cmdss_forward.5} parent=11 // pred_check
          %p666 = pneg %p313
        $region38: #{cmdss_forward.5} parent=11 // pred_check_branch
          %668 = sbr.rel (%p666) target = $region40
        $region39: #{cmdss_forward.5} parent=11 // pred_region
          _
        $region40: #{cmdss_forward.5} parent=11 // pred_fallthru
          _
        // Predicated region
        $region41: #{cmdss_forward.5} parent=11 // pred_check
          %p669 = pneg %p334
        $region42: #{cmdss_forward.5} parent=11 // pred_check_branch
          %671 = sbr.rel (%p669) target = $region44
        $region43: #{cmdss_forward.5} parent=11 // pred_region
          _
        $region44: #{cmdss_forward.5} parent=11 // pred_fallthru
          _
        // Predicated region
        $region45: #{cmdss_forward.5} parent=11 // pred_check
          %p672 = pneg %p355
        $region46: #{cmdss_forward.5} parent=11 // pred_check_branch
          %674 = sbr.rel (%p672) target = $region48
        $region47: #{cmdss_forward.5} parent=11 // pred_region
          _
        $region48: #{cmdss_forward.5} parent=11 // pred_fallthru
          _
        // Predicated region
        $region49: #{cmdss_forward.5} parent=11 // pred_check
          %p675 = pneg %p376
        $region50: #{cmdss_forward.5} parent=11 // pred_check_branch
          %677 = sbr.rel (%p675) target = $region52
        $region51: #{cmdss_forward.5} parent=11 // pred_region
          _
        $region52: #{cmdss_forward.5} parent=11 // pred_fallthru
          _
        // Predicated region
        $region53: #{cmdss_forward.5} parent=11 // pred_check
          %p678 = pneg %p397
        $region54: #{cmdss_forward.5} parent=11 // pred_check_branch
          %680 = sbr.rel (%p678) target = $region56
        $region55: #{cmdss_forward.5} parent=11 // pred_region
          _
        $region56: #{cmdss_forward.5} parent=11 // pred_fallthru
          _
        // Predicated region
        $region57: #{cmdss_forward.5} parent=11 // pred_check
          %p681 = pneg %p418
        $region58: #{cmdss_forward.5} parent=11 // pred_check_branch
          %683 = sbr.rel (%p681) target = $region60
        $region59: #{cmdss_forward.5} parent=11 // pred_region
          _
        $region60: #{cmdss_forward.5} parent=11 // pred_fallthru
          _
        // Predicated region
        $region61: #{cmdss_forward.5} parent=11 // pred_check
          %p684 = pneg %p439
        $region62: #{cmdss_forward.5} parent=11 // pred_check_branch
          %686 = sbr.rel (%p684) target = $region64
        $region63: #{cmdss_forward.5} parent=11 // pred_region
          _
        $region64: #{cmdss_forward.5} parent=11 // pred_fallthru
          _
        // Predicated region
        $region65: #{cmdss_forward.5} parent=11 // pred_check
          %p687 = pneg %p460
        $region66: #{cmdss_forward.5} parent=11 // pred_check_branch
          %689 = sbr.rel (%p687) target = $region68
        $region67: #{cmdss_forward.5} parent=11 // pred_region
          _
        $region68: #{cmdss_forward.5} parent=11 // pred_fallthru
          _
        // Predicated region
        $region69: #{cmdss_forward.5} parent=11 // pred_check
          %p690 = pneg %p481
        $region70: #{cmdss_forward.5} parent=11 // pred_check_branch
          %692 = sbr.rel (%p690) target = $region72
        $region71: #{cmdss_forward.5} parent=11 // pred_region
          _
        $region72: #{cmdss_forward.5} parent=11 // pred_fallthru
          _
        // Predicated region
        $region73: #{cmdss_forward.5} parent=11 // pred_check
          %p693 = pneg %p502
        $region74: #{cmdss_forward.5} parent=11 // pred_check_branch
          %695 = sbr.rel (%p693) target = $region76
        $region75: #{cmdss_forward.5} parent=11 // pred_region
          _
        $region76: #{cmdss_forward.5} parent=11 // pred_fallthru
          _
        // Predicated region
        $region77: #{cmdss_forward.5} parent=11 // pred_check
          %p696 = pneg %p523
        $region78: #{cmdss_forward.5} parent=11 // pred_check_branch
          %698 = sbr.rel (%p696) target = $region80
        $region79: #{cmdss_forward.5} parent=11 // pred_region
          _
        $region80: #{cmdss_forward.5} parent=11 // pred_fallthru
          _
        // Predicated region
        $region81: #{cmdss_forward.5} parent=11 // pred_check
          %p699 = pneg %p544
        $region82: #{cmdss_forward.5} parent=11 // pred_check_branch
          %701 = sbr.rel (%p699) target = $region84
        $region83: #{cmdss_forward.5} parent=11 // pred_region
          _
        $region84: #{cmdss_forward.5} parent=11 // pred_fallthru
          _
        // Predicated region
        $region85: #{cmdss_forward.5} parent=11 // pred_check
          %p702 = pneg %p565
        $region86: #{cmdss_forward.5} parent=11 // pred_check_branch
          %704 = sbr.rel (%p702) target = $region88
        $region87: #{cmdss_forward.5} parent=11 // pred_region
          _
        $region88: #{cmdss_forward.5} parent=11 // pred_fallthru
          _
        // Predicated region
        $region89: #{cmdss_forward.5} parent=11 // pred_check
          %p705 = pneg %p586
        $region90: #{cmdss_forward.5} parent=11 // pred_check_branch
          %707 = sbr.rel (%p705) target = $region92
        $region91: #{cmdss_forward.5} parent=11 // pred_region
          _
        $region92: #{cmdss_forward.5} parent=11 // pred_fallthru
          _
        // Predicated region
        $region93: #{cmdss_forward.5} parent=11 // pred_check
          %p708 = pneg %p607
        $region94: #{cmdss_forward.5} parent=11 // pred_check_branch
          %710 = sbr.rel (%p708) target = $region96
        $region95: #{cmdss_forward.5} parent=11 // pred_region
          %s712 = ssub.s32 16, 16
          %713 = vsyncadd [#allocation4], %s712
          %s715 = sshll.u32 %s25, 4
          %s716 = int_to_ptr.vmem [resolvable:$true] %s715
          %718 = dma.vmem_to_smem %s716, 16, [#allocation2], [#allocation4]
        $region96: #{cmdss_forward.5} parent=11 // pred_fallthru
          _
      $region12: #{cmdss_forward.5} parent=5 // pred_fallthru
        _
      %p719 = scmp.lt.s32.totalorder %s36, 2
      // Predicated region
      $region97: #{cmdss_forward.5} parent=5 // pred_check
        %p720 = pneg %p719
      $region98: #{cmdss_forward.5} parent=5 // pred_check_branch
        %722 = sbr.rel (%p720) target = $region100
      $region99: #{cmdss_forward.5} parent=5 // pred_region
        // Predicated region
        $region101: #{cmdss_forward.5} parent=99 // pred_check
          %p723 = pneg %p56
        $region102: #{cmdss_forward.5} parent=99 // pred_check_branch
          %725 = sbr.rel (%p723) target = $region104
        $region103: #{cmdss_forward.5} parent=99 // pred_region
          %p726 = scmp.lt.s32.totalorder %s36, 1
          %s727 = scalar_select %p726, %s36, 1
          %s728 = smul.addr %s727, 2
          %s729 = smul.addr %s728, 8
          %s730 = scalar_lea.vmem %s0, %s729
        $region104: #{cmdss_forward.5} parent=99 // pred_fallthru
          _
        // Predicated region
        $region105: #{cmdss_forward.5} parent=99 // pred_check
          %p731 = pneg %p82
        $region106: #{cmdss_forward.5} parent=99 // pred_check_branch
          %733 = sbr.rel (%p731) target = $region108
        $region107: #{cmdss_forward.5} parent=99 // pred_region
          %p734 = scmp.lt.s32.totalorder %s36, 1
          %s735 = scalar_select %p734, %s36, 1
          %s736 = smul.addr %s735, 6
          %s737 = smul.addr %s736, 8
          %s738 = scalar_lea.vmem %s1, %s737
        $region108: #{cmdss_forward.5} parent=99 // pred_fallthru
          _
        // Predicated region
        $region109: #{cmdss_forward.5} parent=99 // pred_check
          %p739 = pneg %p171
        $region110: #{cmdss_forward.5} parent=99 // pred_check_branch
          %741 = sbr.rel (%p739) target = $region112
        $region111: #{cmdss_forward.5} parent=99 // pred_region
          %p742 = scmp.lt.s32.totalorder %s36, 1
          %s743 = scalar_select %p742, %s36, 1
          %s744 = smul.addr %s743, 8
          %s745 = smul.addr %s744, 8
          %s746 = scalar_lea.vmem %s5, %s745
        $region112: #{cmdss_forward.5} parent=99 // pred_fallthru
          _
        // Predicated region
        $region113: #{cmdss_forward.5} parent=99 // pred_check
          %p747 = pneg %p197
        $region114: #{cmdss_forward.5} parent=99 // pred_check_branch
          %749 = sbr.rel (%p747) target = $region116
        $region115: #{cmdss_forward.5} parent=99 // pred_region
          %p750 = scmp.lt.s32.totalorder %s36, 1
          %s751 = scalar_select %p750, %s36, 1
          %s752 = scalar_lea.vmem %s6, %s751
        $region116: #{cmdss_forward.5} parent=99 // pred_fallthru
          _
        // Predicated region
        $region117: #{cmdss_forward.5} parent=99 // pred_check
          %p753 = pneg %p223
        $region118: #{cmdss_forward.5} parent=99 // pred_check_branch
          %755 = sbr.rel (%p753) target = $region120
        $region119: #{cmdss_forward.5} parent=99 // pred_region
          %p756 = scmp.lt.s32.totalorder %s36, 1
          %s757 = scalar_select %p756, %s36, 1
          %s758 = scalar_lea.vmem %s7, %s757
        $region120: #{cmdss_forward.5} parent=99 // pred_fallthru
          _
      $region100: #{cmdss_forward.5} parent=5 // pred_fallthru
        _
      %p759 = scmp.le.s32.totalorder 1, %s36
      %p760 = scmp.lt.s32.totalorder %s36, 3
      %p761 = pnand %p759, %p760
      %p762 = pneg %p761
      // Predicated region
      $region121: #{cmdss_forward.5} parent=5 // pred_check
        _
      $region122: #{cmdss_forward.5} parent=5 // pred_check_branch
        %764 = sbr.rel (%p761) target = $region124
      $region123: #{cmdss_forward.5} parent=5 // pred_region
        %s765 = ssub.s32 %s36, 1
        // Predicated region
        $region125: #{cmdss_forward.5} parent=123 // pred_check
          %p766 = pneg %p607
        $region126: #{cmdss_forward.5} parent=123 // pred_check_branch
          %768 = sbr.rel (%p766) target = $region128
        $region127: #{cmdss_forward.5} parent=123 // pred_region
          %769 = dma.done [#allocation4], 16
        $region128: #{cmdss_forward.5} parent=123 // pred_fallthru
          _
        %770 = sfence
        %p771 = scmp.lt.s32.totalorder %s41, 1
        %s772 = scalar_select %p771, %s41, 1
        %s773 = smul.addr %s772, 2
        %s774 = smul.addr %s773, 8
        %s775 = scalar_lea.vmem %s0, %s774
        %p776 = pneg %p62
        %p777 = pneg %p59
        %p778 = scmp.lt.s32.totalorder %s41, 1
        %s779 = scalar_select %p778, %s41, 1
        %s780 = smul.addr %s779, 6
        %s781 = smul.addr %s780, 8
        %s782 = scalar_lea.vmem %s1, %s781
        %p783 = pneg %p88
        %p784 = pneg %p85
        %p785 = pneg %p109
        %p786 = pneg %p106
        %p787 = pneg %p130
        %p788 = pneg %p127
        %p789 = pneg %p151
        %p790 = pneg %p148
        %p791 = scmp.lt.s32.totalorder %s41, 1
        %s792 = scalar_select %p791, %s41, 1
        %s793 = smul.addr %s792, 8
        %s794 = smul.addr %s793, 8
        %s795 = scalar_lea.vmem %s5, %s794
        %p796 = pneg %p177
        %p797 = pneg %p174
        %p798 = scmp.lt.s32.totalorder %s41, 1
        %s799 = scalar_select %p798, %s41, 1
        %s800 = scalar_lea.vmem %s6, %s799
        %p801 = pneg %p203
        %p802 = pneg %p200
        %p803 = scmp.lt.s32.totalorder %s41, 1
        %s804 = scalar_select %p803, %s41, 1
        %s805 = scalar_lea.vmem %s7, %s804
        %p806 = pneg %p229
        %p807 = pneg %p226
        %p808 = pneg %p250
        %p809 = pneg %p247
        %p810 = pneg %p271
        %p811 = pneg %p268
        %p812 = pneg %p292
        %p813 = pneg %p289
        %p814 = pneg %p313
        %p815 = pneg %p310
        %p816 = pneg %p334
        %p817 = pneg %p331
        %p818 = pneg %p355
        %p819 = pneg %p352
        %p820 = pneg %p376
        %p821 = pneg %p373
        %p822 = pneg %p397
        %p823 = pneg %p394
        %p824 = pneg %p418
        %p825 = pneg %p415
        %p826 = pneg %p439
        %p827 = pneg %p436
        %p828 = pneg %p460
        %p829 = pneg %p457
        %p830 = pneg %p481
        %p831 = pneg %p478
        %p832 = pneg %p502
        %p833 = pneg %p499
        %p834 = pneg %p523
        %p835 = pneg %p520
        %p836 = pneg %p544
        %p837 = pneg %p541
        %p838 = pneg %p565
        %p839 = pneg %p562
        %p840 = pneg %p586
        %p841 = pneg %p583
        %p842 = pneg %p607
        %p843 = pneg %p604
        %p844 = pneg %p633
        %p845 = pneg %p630
        %s846 = sand.u32 %s620, 1
        %s847 = scalar_lea.sflag [#allocation3], %s846
        %s848 = sand.u32 %s620, 1
        %s849 = scalar_lea.vmem [#allocation5], %s848
        %p850 = scmp.lt.s32.totalorder %s41, 1
        %s851 = scalar_select %p850, %s41, 1
        %s852 = smul.addr %s851, 2
        %s853 = smul.addr %s852, 8
        %s854 = scalar_lea.vmem %s0, %s853
        %p855 = scmp.lt.s32.totalorder %s41, 1
        %s856 = scalar_select %p855, %s41, 1
        %s857 = smul.addr %s856, 6
        %s858 = smul.addr %s857, 8
        %s859 = scalar_lea.vmem %s1, %s858
        %p860 = scmp.lt.s32.totalorder %s41, 1
        %s861 = scalar_select %p860, %s41, 1
        %s862 = smul.addr %s861, 8
        %s863 = smul.addr %s862, 8
        %s864 = scalar_lea.vmem %s5, %s863
        %p865 = scmp.lt.s32.totalorder %s41, 1
        %s866 = scalar_select %p865, %s41, 1
        %s867 = scalar_lea.vmem %s6, %s866
        %p868 = scmp.lt.s32.totalorder %s41, 1
        %s869 = scalar_select %p868, %s41, 1
        %s870 = scalar_lea.vmem %s7, %s869
        %v871 = vld [vmem:[%s854] sm:$0xff]
        %v872 = vld [vmem:[%s854 + $0x8] sm:$0xff]
        %v873 = vld [vmem:[%s2] sm:$0x1]
        %v874 = vlaneseq
        %v875 = vand.u32 %v874, 127
        %vm876 = vcmp.lt.s32.totalorder %v875, 0
        %v877 = vsub.s32 0, %v875
        %v878 = vsel %vm876, %v877, %v875
        %v879 = vshrl.u32 %v878, 1
        %v880 = vand.u32 %v878, 1
        %v881 = vsub.s32 0, %v880
        %v882 = vsel %vm876, %v881, %v880
        %vm883 = vcmp.ne.s32.totalorder %v882, 0
        %vm884 = vcmp.lt.s32.totalorder %v882, 0
        %vm885 = vmand %vm884, %vm883
        %v886 = vadd.s32 %v882, 2
        %v887 = vsel %vm885, %v886, %v882
        %vm888 = vcmp.eq.s32.totalorder %v887, 0
        %v889 = vld [vmem:[%s859] sm:$0xff]
        %v890 = vld [vmem:[%s859 + $0x8] sm:$0xff]
        %892 = vset.pattern.permute.xlu0 0
        %893 = vperm.xlu0 %892, %v889
        %v894 = vpop.permute.xlu0 %893
        %897 = vset.pattern.permute.xlu0 0
        %898 = vperm.xlu0 %897, %v890
        %v899 = vpop.permute.xlu0 %898
        %v902 = vlaneseq
        %v903 = vshrl.u32 %v902, 7
        %v904 = vsub.s32 0, %v903
        %v905 = vrot.slane %v873, %v904
        %v907 = vmul.f32 %v894, %v905
        %v908 = vmul.f32 %v899, %v905
        %v909 = vand.u32 2147483647, %v907
        %vm910 = vcmp.le.f32.partialorder %v909, 0.7853982
        %vm911 = vcmp.lt.s32.totalorder %v907, 0
        %v912 = vand.u32 %v907, 2139095040
        %v913 = vshrl.u32 %v912, 23
        %v914 = vsub.s32 %v913, 127
        %v915 = vand.u32 2147483647, %v907
        %v916 = vand.u32 %v915, 8388607
        %v917 = vor.u32 %v916, 8388608
        %v918 = vsub.s32 0, %v917
        %v919 = vadd.s32 %v914, 1
        %vm920 = vcmp.gt.s32.totalorder %v919, 0
        %v921 = vsel %vm920, %v919, 0
        %v922 = vshrl.u32 %v921, 5
        %v923 = vand.u32 %v921, 31
        %v924 = vsub.s32 32, %v923
        %v925 = vshrl.u32 683565275, %v924
        %v926 = vshll.u32 683565275, %v923
        %v927 = vshrl.u32 2475754826, %v924
        %v928 = vor.u32 %v926, %v927
        %v929 = vshll.u32 2475754826, %v923
        %v930 = vshrl.u32 2131351028, %v924
        %v931 = vor.u32 %v929, %v930
        %v932 = vshll.u32 2131351028, %v923
        %v933 = vshrl.u32 2102212464, %v924
        %v934 = vor.u32 %v932, %v933
        %v935 = vshll.u32 2102212464, %v923
        %v936 = vshrl.u32 920167782, %v924
        %v937 = vor.u32 %v935, %v936
        %v938 = vshll.u32 920167782, %v923
        %v939 = vshrl.u32 1326507024, %v924
        %v940 = vor.u32 %v938, %v939
        %vm941 = vcmp.lt.s32.totalorder %v922, 1
        %vm942 = vcmp.lt.s32.totalorder %v922, 2
        %vm943 = vcmp.lt.s32.totalorder %v922, 3
        %vm944 = vcmp.lt.s32.totalorder %v922, 4
        %v945 = vsel %vm941, %v925, %v928
        %v946 = vsel %vm944, %v934, 2102212464
        %v947 = vsel %vm943, %v931, %v946
        %v948 = vsel %vm942, %v945, %v947
        %v949 = vsel %vm941, %v928, %v931
        %v950 = vsel %vm944, %v937, 920167782
        %v951 = vsel %vm943, %v934, %v950
        %v952 = vsel %vm942, %v949, %v951
        %v953 = vsel %vm941, %v931, %v934
        %v954 = vsel %vm944, %v940, 1326507024
        %v955 = vsel %vm943, %v937, %v954
        %v956 = vsel %vm942, %v953, %v955
        %v957 = vshll.u32 %v917, 8
        %v958 = vmul.u32.u64.compose %v957, %v956
        %v959 = vextract.low.u32 %v958
        %v960 = vextract.high.u32 %v958
        %v961 = vmul.u32.u64.compose %v957, %v952
        %v962 = vextract.low.u32 %v961
        %v963 = vextract.high.u32 %v961
        %v964 = vmul.u32 %v957, %v948
        %v965 = vadd.s32 %v960, %v962
        %vm966 = vc.u32 %v960, %v962
        %v967 = vadd.s32 %v963, 1
        %v968 = vsel %vm966, %v967, %v963
        %v969 = vadd.s32 %v964, %v968
        %v970 = vadd.s32 %v969, 536870912
        %v971 = vshrl.u32 %v970, 30
        %v972 = vshll.u32 %v971, 30
        %v973 = vsub.s32 %v969, %v972
        %vm974 = vcmp.lt.s32.totalorder %v973, 0
        %v975 = vsub.s32 0, %v973
        %v976 = vsel %vm974, %v975, %v973
        %v977 = vclz %v976
        %v978 = vsub.s32 %v977, 2
        %vm979 = vcmp.gt.s32.totalorder 0, %v978
        %v980 = vsel %vm979, 0, %v978
        %v981 = vsub.s32 32, %v980
        %v982 = vshll.u32 %v973, %v980
        %v983 = vshrl.u32 %v965, %v981
        %v984 = vor.u32 %v982, %v983
        %v985 = vsub.s32 4294967266, %v980
        %v986 = vadd.s32 %v985, 127
        %v987 = vshll.u32 %v986, 23
        %v988 = vor.u32 4788187, %v987
        %v989 = vand.u32 2147483647, %v988
        %v991 = vcvt.s32.f32 %v984
        %v992 = vmul.f32 %v991, %v989
        %v993 = vxor.u32 %v992, 2147483648
        %v994 = vsel %vm911, %v993, %v992
        %v995 = vsub.s32 4, %v971
        %v996 = vsel %vm911, %v995, %v971
        %v997 = vsel %vm910, %v907, %v994
        %v998 = vsel %vm910, 0, %v996
        %v999 = vcosq.f32.pop %v997
        %v1000 = vsinq.f32.pop %v997
        %vm1001 = vweird.f32 %v907
        %v1002 = vadd.s32 %v998, 3
        %v1003 = vand.u32 %v1002, 3
        %vm1004 = vcmp.lt.s32.totalorder %v1003, 2
        %vm1005 = vcmp.eq.s32.totalorder %v1003, 0
        %v1006 = vxor.u32 %v1000, 2147483648
        %v1007 = vsel %vm1005, %v999, %v1006
        %vm1008 = vcmp.eq.s32.totalorder %v1003, 2
        %v1009 = vxor.u32 %v999, 2147483648
        %v1010 = vsel %vm1008, %v1009, %v1000
        %v1011 = vsel %vm1004, %v1007, %v1010
        %v1012 = vsel %vm1001, nan, %v1011
        %v1013 = vand.u32 2147483647, %v908
        %vm1014 = vcmp.le.f32.partialorder %v1013, 0.7853982
        %vm1015 = vcmp.lt.s32.totalorder %v908, 0
        %v1016 = vand.u32 %v908, 2139095040
        %v1017 = vshrl.u32 %v1016, 23
        %v1018 = vsub.s32 %v1017, 127
        %v1019 = vand.u32 2147483647, %v908
        %v1020 = vand.u32 %v1019, 8388607
        %v1021 = vor.u32 %v1020, 8388608
        %v1022 = vsub.s32 0, %v1021
        %v1023 = vadd.s32 %v1018, 1
        %vm1024 = vcmp.gt.s32.totalorder %v1023, 0
        %v1025 = vsel %vm1024, %v1023, 0
        %v1026 = vshrl.u32 %v1025, 5
        %v1027 = vand.u32 %v1025, 31
        %v1028 = vsub.s32 32, %v1027
        %v1029 = vshrl.u32 683565275, %v1028
        %v1030 = vshll.u32 683565275, %v1027
        %v1031 = vshrl.u32 2475754826, %v1028
        %v1032 = vor.u32 %v1030, %v1031
        %v1033 = vshll.u32 2475754826, %v1027
        %v1034 = vshrl.u32 2131351028, %v1028
        %v1035 = vor.u32 %v1033, %v1034
        %v1036 = vshll.u32 2131351028, %v1027
        %v1037 = vshrl.u32 2102212464, %v1028
        %v1038 = vor.u32 %v1036, %v1037
        %v1039 = vshll.u32 2102212464, %v1027
        %v1040 = vshrl.u32 920167782, %v1028
        %v1041 = vor.u32 %v1039, %v1040
        %v1042 = vshll.u32 920167782, %v1027
        %v1043 = vshrl.u32 1326507024, %v1028
        %v1044 = vor.u32 %v1042, %v1043
        %vm1045 = vcmp.lt.s32.totalorder %v1026, 1
        %vm1046 = vcmp.lt.s32.totalorder %v1026, 2
        %vm1047 = vcmp.lt.s32.totalorder %v1026, 3
        %vm1048 = vcmp.lt.s32.totalorder %v1026, 4
        %v1049 = vsel %vm1045, %v1029, %v1032
        %v1050 = vsel %vm1048, %v1038, 2102212464
        %v1051 = vsel %vm1047, %v1035, %v1050
        %v1052 = vsel %vm1046, %v1049, %v1051
        %v1053 = vsel %vm1045, %v1032, %v1035
        %v1054 = vsel %vm1048, %v1041, 920167782
        %v1055 = vsel %vm1047, %v1038, %v1054
        %v1056 = vsel %vm1046, %v1053, %v1055
        %v1057 = vsel %vm1045, %v1035, %v1038
        %v1058 = vsel %vm1048, %v1044, 1326507024
        %v1059 = vsel %vm1047, %v1041, %v1058
        %v1060 = vsel %vm1046, %v1057, %v1059
        %v1061 = vshll.u32 %v1021, 8
        %v1062 = vmul.u32.u64.compose %v1061, %v1060
        %v1063 = vextract.low.u32 %v1062
        %v1064 = vextract.high.u32 %v1062
        %v1065 = vmul.u32.u64.compose %v1061, %v1056
        %v1066 = vextract.low.u32 %v1065
        %v1067 = vextract.high.u32 %v1065
        %v1068 = vmul.u32 %v1061, %v1052
        %v1069 = vadd.s32 %v1064, %v1066
        %vm1070 = vc.u32 %v1064, %v1066
        %v1071 = vadd.s32 %v1067, 1
        %v1072 = vsel %vm1070, %v1071, %v1067
        %v1073 = vadd.s32 %v1068, %v1072
        %v1074 = vadd.s32 %v1073, 536870912
        %v1075 = vshrl.u32 %v1074, 30
        %v1076 = vshll.u32 %v1075, 30
        %v1077 = vsub.s32 %v1073, %v1076
        %vm1078 = vcmp.lt.s32.totalorder %v1077, 0
        %v1079 = vsub.s32 0, %v1077
        %v1080 = vsel %vm1078, %v1079, %v1077
        %v1081 = vclz %v1080
        %v1082 = vsub.s32 %v1081, 2
        %vm1083 = vcmp.gt.s32.totalorder 0, %v1082
        %v1084 = vsel %vm1083, 0, %v1082
        %v1085 = vsub.s32 32, %v1084
        %v1086 = vshll.u32 %v1077, %v1084
        %v1087 = vshrl.u32 %v1069, %v1085
        %v1088 = vor.u32 %v1086, %v1087
        %v1089 = vsub.s32 4294967266, %v1084
        %v1090 = vadd.s32 %v1089, 127
        %v1091 = vshll.u32 %v1090, 23
        %v1092 = vor.u32 4788187, %v1091
        %v1093 = vand.u32 2147483647, %v1092
        %v1095 = vcvt.s32.f32 %v1088
        %v1096 = vmul.f32 %v1095, %v1093
        %v1097 = vxor.u32 %v1096, 2147483648
        %v1098 = vsel %vm1015, %v1097, %v1096
        %v1099 = vsub.s32 4, %v1075
        %v1100 = vsel %vm1015, %v1099, %v1075
        %v1101 = vsel %vm1014, %v908, %v1098
        %v1102 = vsel %vm1014, 0, %v1100
        %v1103 = vcosq.f32.pop %v1101
        %v1104 = vsinq.f32.pop %v1101
        %vm1105 = vweird.f32 %v908
        %v1106 = vadd.s32 %v1102, 3
        %v1107 = vand.u32 %v1106, 3
        %vm1108 = vcmp.lt.s32.totalorder %v1107, 2
        %vm1109 = vcmp.eq.s32.totalorder %v1107, 0
        %v1110 = vxor.u32 %v1104, 2147483648
        %v1111 = vsel %vm1109, %v1103, %v1110
        %vm1112 = vcmp.eq.s32.totalorder %v1107, 2
        %v1113 = vxor.u32 %v1103, 2147483648
        %v1114 = vsel %vm1112, %v1113, %v1104
        %v1115 = vsel %vm1108, %v1111, %v1114
        %v1116 = vsel %vm1105, nan, %v1115
        %v1117 = vand.u32 2147483647, %v907
        %vm1118 = vcmp.le.f32.partialorder %v1117, 0.7853982
        %vm1119 = vcmp.lt.s32.totalorder %v907, 0
        %v1120 = vand.u32 %v907, 2139095040
        %v1121 = vshrl.u32 %v1120, 23
        %v1122 = vsub.s32 %v1121, 127
        %v1123 = vand.u32 2147483647, %v907
        %v1124 = vand.u32 %v1123, 8388607
        %v1125 = vor.u32 %v1124, 8388608
        %v1126 = vsub.s32 0, %v1125
        %v1127 = vadd.s32 %v1122, 1
        %vm1128 = vcmp.gt.s32.totalorder %v1127, 0
        %v1129 = vsel %vm1128, %v1127, 0
        %v1130 = vshrl.u32 %v1129, 5
        %v1131 = vand.u32 %v1129, 31
        %v1132 = vsub.s32 32, %v1131
        %v1133 = vshrl.u32 683565275, %v1132
        %v1134 = vshll.u32 683565275, %v1131
        %v1135 = vshrl.u32 2475754826, %v1132
        %v1136 = vor.u32 %v1134, %v1135
        %v1137 = vshll.u32 2475754826, %v1131
        %v1138 = vshrl.u32 2131351028, %v1132
        %v1139 = vor.u32 %v1137, %v1138
        %v1140 = vshll.u32 2131351028, %v1131
        %v1141 = vshrl.u32 2102212464, %v1132
        %v1142 = vor.u32 %v1140, %v1141
        %v1143 = vshll.u32 2102212464, %v1131
        %v1144 = vshrl.u32 920167782, %v1132
        %v1145 = vor.u32 %v1143, %v1144
        %v1146 = vshll.u32 920167782, %v1131
        %v1147 = vshrl.u32 1326507024, %v1132
        %v1148 = vor.u32 %v1146, %v1147
        %vm1149 = vcmp.lt.s32.totalorder %v1130, 1
        %vm1150 = vcmp.lt.s32.totalorder %v1130, 2
        %vm1151 = vcmp.lt.s32.totalorder %v1130, 3
        %vm1152 = vcmp.lt.s32.totalorder %v1130, 4
        %v1153 = vsel %vm1149, %v1133, %v1136
        %v1154 = vsel %vm1152, %v1142, 2102212464
        %v1155 = vsel %vm1151, %v1139, %v1154
        %v1156 = vsel %vm1150, %v1153, %v1155
        %v1157 = vsel %vm1149, %v1136, %v1139
        %v1158 = vsel %vm1152, %v1145, 920167782
        %v1159 = vsel %vm1151, %v1142, %v1158
        %v1160 = vsel %vm1150, %v1157, %v1159
        %v1161 = vsel %vm1149, %v1139, %v1142
        %v1162 = vsel %vm1152, %v1148, 1326507024
        %v1163 = vsel %vm1151, %v1145, %v1162
        %v1164 = vsel %vm1150, %v1161, %v1163
        %v1165 = vshll.u32 %v1125, 8
        %v1166 = vmul.u32.u64.compose %v1165, %v1164
        %v1167 = vextract.low.u32 %v1166
        %v1168 = vextract.high.u32 %v1166
        %v1169 = vmul.u32.u64.compose %v1165, %v1160
        %v1170 = vextract.low.u32 %v1169
        %v1171 = vextract.high.u32 %v1169
        %v1172 = vmul.u32 %v1165, %v1156
        %v1173 = vadd.s32 %v1168, %v1170
        %vm1174 = vc.u32 %v1168, %v1170
        %v1175 = vadd.s32 %v1171, 1
        %v1176 = vsel %vm1174, %v1175, %v1171
        %v1177 = vadd.s32 %v1172, %v1176
        %v1178 = vadd.s32 %v1177, 536870912
        %v1179 = vshrl.u32 %v1178, 30
        %v1180 = vshll.u32 %v1179, 30
        %v1181 = vsub.s32 %v1177, %v1180
        %vm1182 = vcmp.lt.s32.totalorder %v1181, 0
        %v1183 = vsub.s32 0, %v1181
        %v1184 = vsel %vm1182, %v1183, %v1181
        %v1185 = vclz %v1184
        %v1186 = vsub.s32 %v1185, 2
        %vm1187 = vcmp.gt.s32.totalorder 0, %v1186
        %v1188 = vsel %vm1187, 0, %v1186
        %v1189 = vsub.s32 32, %v1188
        %v1190 = vshll.u32 %v1181, %v1188
        %v1191 = vshrl.u32 %v1173, %v1189
        %v1192 = vor.u32 %v1190, %v1191
        %v1193 = vsub.s32 4294967266, %v1188
        %v1194 = vadd.s32 %v1193, 127
        %v1195 = vshll.u32 %v1194, 23
        %v1196 = vor.u32 4788187, %v1195
        %v1197 = vand.u32 2147483647, %v1196
        %v1199 = vcvt.s32.f32 %v1192
        %v1200 = vmul.f32 %v1199, %v1197
        %v1201 = vxor.u32 %v1200, 2147483648
        %v1202 = vsel %vm1119, %v1201, %v1200
        %v1203 = vsub.s32 4, %v1179
        %v1204 = vsel %vm1119, %v1203, %v1179
        %v1205 = vsel %vm1118, %v907, %v1202
        %v1206 = vsel %vm1118, 0, %v1204
        %v1207 = vcosq.f32.pop %v1205
        %v1208 = vsinq.f32.pop %v1205
        %vm1209 = vweird.f32 %v907
        %v1210 = vand.u32 %v1206, 3
        %vm1211 = vcmp.lt.s32.totalorder %v1210, 2
        %vm1212 = vcmp.eq.s32.totalorder %v1210, 0
        %v1213 = vxor.u32 %v1208, 2147483648
        %v1214 = vsel %vm1212, %v1207, %v1213
        %vm1215 = vcmp.eq.s32.totalorder %v1210, 2
        %v1216 = vxor.u32 %v1207, 2147483648
        %v1217 = vsel %vm1215, %v1216, %v1208
        %v1218 = vsel %vm1211, %v1214, %v1217
        %v1219 = vsel %vm1209, nan, %v1218
        %v1220 = vand.u32 2147483647, %v908
        %vm1221 = vcmp.le.f32.partialorder %v1220, 0.7853982
        %vm1222 = vcmp.lt.s32.totalorder %v908, 0
        %v1223 = vand.u32 %v908, 2139095040
        %v1224 = vshrl.u32 %v1223, 23
        %v1225 = vsub.s32 %v1224, 127
        %v1226 = vand.u32 2147483647, %v908
        %v1227 = vand.u32 %v1226, 8388607
        %v1228 = vor.u32 %v1227, 8388608
        %v1229 = vsub.s32 0, %v1228
        %v1230 = vadd.s32 %v1225, 1
        %vm1231 = vcmp.gt.s32.totalorder %v1230, 0
        %v1232 = vsel %vm1231, %v1230, 0
        %v1233 = vshrl.u32 %v1232, 5
        %v1234 = vand.u32 %v1232, 31
        %v1235 = vsub.s32 32, %v1234
        %v1236 = vshrl.u32 683565275, %v1235
        %v1237 = vshll.u32 683565275, %v1234
        %v1238 = vshrl.u32 2475754826, %v1235
        %v1239 = vor.u32 %v1237, %v1238
        %v1240 = vshll.u32 2475754826, %v1234
        %v1241 = vshrl.u32 2131351028, %v1235
        %v1242 = vor.u32 %v1240, %v1241
        %v1243 = vshll.u32 2131351028, %v1234
        %v1244 = vshrl.u32 2102212464, %v1235
        %v1245 = vor.u32 %v1243, %v1244
        %v1246 = vshll.u32 2102212464, %v1234
        %v1247 = vshrl.u32 920167782, %v1235
        %v1248 = vor.u32 %v1246, %v1247
        %v1249 = vshll.u32 920167782, %v1234
        %v1250 = vshrl.u32 1326507024, %v1235
        %v1251 = vor.u32 %v1249, %v1250
        %vm1252 = vcmp.lt.s32.totalorder %v1233, 1
        %vm1253 = vcmp.lt.s32.totalorder %v1233, 2
        %vm1254 = vcmp.lt.s32.totalorder %v1233, 3
        %vm1255 = vcmp.lt.s32.totalorder %v1233, 4
        %v1256 = vsel %vm1252, %v1236, %v1239
        %v1257 = vsel %vm1255, %v1245, 2102212464
        %v1258 = vsel %vm1254, %v1242, %v1257
        %v1259 = vsel %vm1253, %v1256, %v1258
        %v1260 = vsel %vm1252, %v1239, %v1242
        %v1261 = vsel %vm1255, %v1248, 920167782
        %v1262 = vsel %vm1254, %v1245, %v1261
        %v1263 = vsel %vm1253, %v1260, %v1262
        %v1264 = vsel %vm1252, %v1242, %v1245
        %v1265 = vsel %vm1255, %v1251, 1326507024
        %v1266 = vsel %vm1254, %v1248, %v1265
        %v1267 = vsel %vm1253, %v1264, %v1266
        %v1268 = vshll.u32 %v1228, 8
        %v1269 = vmul.u32.u64.compose %v1268, %v1267
        %v1270 = vextract.low.u32 %v1269
        %v1271 = vextract.high.u32 %v1269
        %v1272 = vmul.u32.u64.compose %v1268, %v1263
        %v1273 = vextract.low.u32 %v1272
        %v1274 = vextract.high.u32 %v1272
        %v1275 = vmul.u32 %v1268, %v1259
        %v1276 = vadd.s32 %v1271, %v1273
        %vm1277 = vc.u32 %v1271, %v1273
        %v1278 = vadd.s32 %v1274, 1
        %v1279 = vsel %vm1277, %v1278, %v1274
        %v1280 = vadd.s32 %v1275, %v1279
        %v1281 = vadd.s32 %v1280, 536870912
        %v1282 = vshrl.u32 %v1281, 30
        %v1283 = vshll.u32 %v1282, 30
        %v1284 = vsub.s32 %v1280, %v1283
        %vm1285 = vcmp.lt.s32.totalorder %v1284, 0
        %v1286 = vsub.s32 0, %v1284
        %v1287 = vsel %vm1285, %v1286, %v1284
        %v1288 = vclz %v1287
        %v1289 = vsub.s32 %v1288, 2
        %vm1290 = vcmp.gt.s32.totalorder 0, %v1289
        %v1291 = vsel %vm1290, 0, %v1289
        %v1292 = vsub.s32 32, %v1291
        %v1293 = vshll.u32 %v1284, %v1291
        %v1294 = vshrl.u32 %v1276, %v1292
        %v1295 = vor.u32 %v1293, %v1294
        %v1296 = vsub.s32 4294967266, %v1291
        %v1297 = vadd.s32 %v1296, 127
        %v1298 = vshll.u32 %v1297, 23
        %v1299 = vor.u32 4788187, %v1298
        %v1300 = vand.u32 2147483647, %v1299
        %v1302 = vcvt.s32.f32 %v1295
        %v1303 = vmul.f32 %v1302, %v1300
        %v1304 = vxor.u32 %v1303, 2147483648
        %v1305 = vsel %vm1222, %v1304, %v1303
        %v1306 = vsub.s32 4, %v1282
        %v1307 = vsel %vm1222, %v1306, %v1282
        %v1308 = vsel %vm1221, %v908, %v1305
        %v1309 = vsel %vm1221, 0, %v1307
        %v1310 = vcosq.f32.pop %v1308
        %v1311 = vsinq.f32.pop %v1308
        %vm1312 = vweird.f32 %v908
        %v1313 = vand.u32 %v1309, 3
        %vm1314 = vcmp.lt.s32.totalorder %v1313, 2
        %vm1315 = vcmp.eq.s32.totalorder %v1313, 0
        %v1316 = vxor.u32 %v1311, 2147483648
        %v1317 = vsel %vm1315, %v1310, %v1316
        %vm1318 = vcmp.eq.s32.totalorder %v1313, 2
        %v1319 = vxor.u32 %v1310, 2147483648
        %v1320 = vsel %vm1318, %v1319, %v1311
        %v1321 = vsel %vm1314, %v1317, %v1320
        %v1322 = vsel %vm1312, nan, %v1321
        %v1323 = vsel %vm888, 1, 0
        %vm1324 = vcmp.eq.s32.totalorder %v1323, 1
        %v1325 = vsel %vm1324, %v1012, %v1219
        %v1326 = vsel %vm1324, %v1116, %v1322
        %v1327 = vmul.f32 %v871, %v1325
        %v1328 = vmul.f32 %v872, %v1326
        %s1329 = scalar_lea.vmem %s859, 16
        %v1330 = vld [vmem:[%s1329] sm:$0xff]
        %v1331 = vld [vmem:[%s1329 + $0x8] sm:$0xff]
        %1333 = vset.pattern.permute.xlu0 0
        %1334 = vperm.xlu0 %1333, %v1330
        %v1335 = vpop.permute.xlu0 %1334
        %1338 = vset.pattern.permute.xlu0 0
        %1339 = vperm.xlu0 %1338, %v1331
        %v1340 = vpop.permute.xlu0 %1339
        %v1342 = vmul.f32 %v1335, %v905
        %v1343 = vmul.f32 %v1340, %v905
        %v1344 = vand.u32 2147483647, %v1342
        %vm1345 = vcmp.le.f32.partialorder %v1344, 0.7853982
        %vm1346 = vcmp.lt.s32.totalorder %v1342, 0
        %v1347 = vand.u32 %v1342, 2139095040
        %v1348 = vshrl.u32 %v1347, 23
        %v1349 = vsub.s32 %v1348, 127
        %v1350 = vand.u32 2147483647, %v1342
        %v1351 = vand.u32 %v1350, 8388607
        %v1352 = vor.u32 %v1351, 8388608
        %v1353 = vsub.s32 0, %v1352
        %v1354 = vadd.s32 %v1349, 1
        %vm1355 = vcmp.gt.s32.totalorder %v1354, 0
        %v1356 = vsel %vm1355, %v1354, 0
        %v1357 = vshrl.u32 %v1356, 5
        %v1358 = vand.u32 %v1356, 31
        %v1359 = vsub.s32 32, %v1358
        %v1360 = vshrl.u32 683565275, %v1359
        %v1361 = vshll.u32 683565275, %v1358
        %v1362 = vshrl.u32 2475754826, %v1359
        %v1363 = vor.u32 %v1361, %v1362
        %v1364 = vshll.u32 2475754826, %v1358
        %v1365 = vshrl.u32 2131351028, %v1359
        %v1366 = vor.u32 %v1364, %v1365
        %v1367 = vshll.u32 2131351028, %v1358
        %v1368 = vshrl.u32 2102212464, %v1359
        %v1369 = vor.u32 %v1367, %v1368
        %v1370 = vshll.u32 2102212464, %v1358
        %v1371 = vshrl.u32 920167782, %v1359
        %v1372 = vor.u32 %v1370, %v1371
        %v1373 = vshll.u32 920167782, %v1358
        %v1374 = vshrl.u32 1326507024, %v1359
        %v1375 = vor.u32 %v1373, %v1374
        %vm1376 = vcmp.lt.s32.totalorder %v1357, 1
        %vm1377 = vcmp.lt.s32.totalorder %v1357, 2
        %vm1378 = vcmp.lt.s32.totalorder %v1357, 3
        %vm1379 = vcmp.lt.s32.totalorder %v1357, 4
        %v1380 = vsel %vm1376, %v1360, %v1363
        %v1381 = vsel %vm1379, %v1369, 2102212464
        %v1382 = vsel %vm1378, %v1366, %v1381
        %v1383 = vsel %vm1377, %v1380, %v1382
        %v1384 = vsel %vm1376, %v1363, %v1366
        %v1385 = vsel %vm1379, %v1372, 920167782
        %v1386 = vsel %vm1378, %v1369, %v1385
        %v1387 = vsel %vm1377, %v1384, %v1386
        %v1388 = vsel %vm1376, %v1366, %v1369
        %v1389 = vsel %vm1379, %v1375, 1326507024
        %v1390 = vsel %vm1378, %v1372, %v1389
        %v1391 = vsel %vm1377, %v1388, %v1390
        %v1392 = vshll.u32 %v1352, 8
        %v1393 = vmul.u32.u64.compose %v1392, %v1391
        %v1394 = vextract.low.u32 %v1393
        %v1395 = vextract.high.u32 %v1393
        %v1396 = vmul.u32.u64.compose %v1392, %v1387
        %v1397 = vextract.low.u32 %v1396
        %v1398 = vextract.high.u32 %v1396
        %v1399 = vmul.u32 %v1392, %v1383
        %v1400 = vadd.s32 %v1395, %v1397
        %vm1401 = vc.u32 %v1395, %v1397
        %v1402 = vadd.s32 %v1398, 1
        %v1403 = vsel %vm1401, %v1402, %v1398
        %v1404 = vadd.s32 %v1399, %v1403
        %v1405 = vadd.s32 %v1404, 536870912
        %v1406 = vshrl.u32 %v1405, 30
        %v1407 = vshll.u32 %v1406, 30
        %v1408 = vsub.s32 %v1404, %v1407
        %vm1409 = vcmp.lt.s32.totalorder %v1408, 0
        %v1410 = vsub.s32 0, %v1408
        %v1411 = vsel %vm1409, %v1410, %v1408
        %v1412 = vclz %v1411
        %v1413 = vsub.s32 %v1412, 2
        %vm1414 = vcmp.gt.s32.totalorder 0, %v1413
        %v1415 = vsel %vm1414, 0, %v1413
        %v1416 = vsub.s32 32, %v1415
        %v1417 = vshll.u32 %v1408, %v1415
        %v1418 = vshrl.u32 %v1400, %v1416
        %v1419 = vor.u32 %v1417, %v1418
        %v1420 = vsub.s32 4294967266, %v1415
        %v1421 = vadd.s32 %v1420, 127
        %v1422 = vshll.u32 %v1421, 23
        %v1423 = vor.u32 4788187, %v1422
        %v1424 = vand.u32 2147483647, %v1423
        %v1426 = vcvt.s32.f32 %v1419
        %v1427 = vmul.f32 %v1426, %v1424
        %v1428 = vxor.u32 %v1427, 2147483648
        %v1429 = vsel %vm1346, %v1428, %v1427
        %v1430 = vsub.s32 4, %v1406
        %v1431 = vsel %vm1346, %v1430, %v1406
        %v1432 = vsel %vm1345, %v1342, %v1429
        %v1433 = vsel %vm1345, 0, %v1431
        %v1434 = vcosq.f32.pop %v1432
        %v1435 = vsinq.f32.pop %v1432
        %vm1436 = vweird.f32 %v1342
        %v1437 = vadd.s32 %v1433, 3
        %v1438 = vand.u32 %v1437, 3
        %vm1439 = vcmp.lt.s32.totalorder %v1438, 2
        %vm1440 = vcmp.eq.s32.totalorder %v1438, 0
        %v1441 = vxor.u32 %v1435, 2147483648
        %v1442 = vsel %vm1440, %v1434, %v1441
        %vm1443 = vcmp.eq.s32.totalorder %v1438, 2
        %v1444 = vxor.u32 %v1434, 2147483648
        %v1445 = vsel %vm1443, %v1444, %v1435
        %v1446 = vsel %vm1439, %v1442, %v1445
        %v1447 = vsel %vm1436, nan, %v1446
        %v1448 = vand.u32 2147483647, %v1343
        %vm1449 = vcmp.le.f32.partialorder %v1448, 0.7853982
        %vm1450 = vcmp.lt.s32.totalorder %v1343, 0
        %v1451 = vand.u32 %v1343, 2139095040
        %v1452 = vshrl.u32 %v1451, 23
        %v1453 = vsub.s32 %v1452, 127
        %v1454 = vand.u32 2147483647, %v1343
        %v1455 = vand.u32 %v1454, 8388607
        %v1456 = vor.u32 %v1455, 8388608
        %v1457 = vsub.s32 0, %v1456
        %v1458 = vadd.s32 %v1453, 1
        %vm1459 = vcmp.gt.s32.totalorder %v1458, 0
        %v1460 = vsel %vm1459, %v1458, 0
        %v1461 = vshrl.u32 %v1460, 5
        %v1462 = vand.u32 %v1460, 31
        %v1463 = vsub.s32 32, %v1462
        %v1464 = vshrl.u32 683565275, %v1463
        %v1465 = vshll.u32 683565275, %v1462
        %v1466 = vshrl.u32 2475754826, %v1463
        %v1467 = vor.u32 %v1465, %v1466
        %v1468 = vshll.u32 2475754826, %v1462
        %v1469 = vshrl.u32 2131351028, %v1463
        %v1470 = vor.u32 %v1468, %v1469
        %v1471 = vshll.u32 2131351028, %v1462
        %v1472 = vshrl.u32 2102212464, %v1463
        %v1473 = vor.u32 %v1471, %v1472
        %v1474 = vshll.u32 2102212464, %v1462
        %v1475 = vshrl.u32 920167782, %v1463
        %v1476 = vor.u32 %v1474, %v1475
        %v1477 = vshll.u32 920167782, %v1462
        %v1478 = vshrl.u32 1326507024, %v1463
        %v1479 = vor.u32 %v1477, %v1478
        %vm1480 = vcmp.lt.s32.totalorder %v1461, 1
        %vm1481 = vcmp.lt.s32.totalorder %v1461, 2
        %vm1482 = vcmp.lt.s32.totalorder %v1461, 3
        %vm1483 = vcmp.lt.s32.totalorder %v1461, 4
        %v1484 = vsel %vm1480, %v1464, %v1467
        %v1485 = vsel %vm1483, %v1473, 2102212464
        %v1486 = vsel %vm1482, %v1470, %v1485
        %v1487 = vsel %vm1481, %v1484, %v1486
        %v1488 = vsel %vm1480, %v1467, %v1470
        %v1489 = vsel %vm1483, %v1476, 920167782
        %v1490 = vsel %vm1482, %v1473, %v1489
        %v1491 = vsel %vm1481, %v1488, %v1490
        %v1492 = vsel %vm1480, %v1470, %v1473
        %v1493 = vsel %vm1483, %v1479, 1326507024
        %v1494 = vsel %vm1482, %v1476, %v1493
        %v1495 = vsel %vm1481, %v1492, %v1494
        %v1496 = vshll.u32 %v1456, 8
        %v1497 = vmul.u32.u64.compose %v1496, %v1495
        %v1498 = vextract.low.u32 %v1497
        %v1499 = vextract.high.u32 %v1497
        %v1500 = vmul.u32.u64.compose %v1496, %v1491
        %v1501 = vextract.low.u32 %v1500
        %v1502 = vextract.high.u32 %v1500
        %v1503 = vmul.u32 %v1496, %v1487
        %v1504 = vadd.s32 %v1499, %v1501
        %vm1505 = vc.u32 %v1499, %v1501
        %v1506 = vadd.s32 %v1502, 1
        %v1507 = vsel %vm1505, %v1506, %v1502
        %v1508 = vadd.s32 %v1503, %v1507
        %v1509 = vadd.s32 %v1508, 536870912
        %v1510 = vshrl.u32 %v1509, 30
        %v1511 = vshll.u32 %v1510, 30
        %v1512 = vsub.s32 %v1508, %v1511
        %vm1513 = vcmp.lt.s32.totalorder %v1512, 0
        %v1514 = vsub.s32 0, %v1512
        %v1515 = vsel %vm1513, %v1514, %v1512
        %v1516 = vclz %v1515
        %v1517 = vsub.s32 %v1516, 2
        %vm1518 = vcmp.gt.s32.totalorder 0, %v1517
        %v1519 = vsel %vm1518, 0, %v1517
        %v1520 = vsub.s32 32, %v1519
        %v1521 = vshll.u32 %v1512, %v1519
        %v1522 = vshrl.u32 %v1504, %v1520
        %v1523 = vor.u32 %v1521, %v1522
        %v1524 = vsub.s32 4294967266, %v1519
        %v1525 = vadd.s32 %v1524, 127
        %v1526 = vshll.u32 %v1525, 23
        %v1527 = vor.u32 4788187, %v1526
        %v1528 = vand.u32 2147483647, %v1527
        %v1530 = vcvt.s32.f32 %v1523
        %v1531 = vmul.f32 %v1530, %v1528
        %v1532 = vxor.u32 %v1531, 2147483648
        %v1533 = vsel %vm1450, %v1532, %v1531
        %v1534 = vsub.s32 4, %v1510
        %v1535 = vsel %vm1450, %v1534, %v1510
        %v1536 = vsel %vm1449, %v1343, %v1533
        %v1537 = vsel %vm1449, 0, %v1535
        %v1538 = vcosq.f32.pop %v1536
        %v1539 = vsinq.f32.pop %v1536
        %vm1540 = vweird.f32 %v1343
        %v1541 = vadd.s32 %v1537, 3
        %v1542 = vand.u32 %v1541, 3
        %vm1543 = vcmp.lt.s32.totalorder %v1542, 2
        %vm1544 = vcmp.eq.s32.totalorder %v1542, 0
        %v1545 = vxor.u32 %v1539, 2147483648
        %v1546 = vsel %vm1544, %v1538, %v1545
        %vm1547 = vcmp.eq.s32.totalorder %v1542, 2
        %v1548 = vxor.u32 %v1538, 2147483648
        %v1549 = vsel %vm1547, %v1548, %v1539
        %v1550 = vsel %vm1543, %v1546, %v1549
        %v1551 = vsel %vm1540, nan, %v1550
        %v1552 = vand.u32 2147483647, %v1342
        %vm1553 = vcmp.le.f32.partialorder %v1552, 0.7853982
        %vm1554 = vcmp.lt.s32.totalorder %v1342, 0
        %v1555 = vand.u32 %v1342, 2139095040
        %v1556 = vshrl.u32 %v1555, 23
        %v1557 = vsub.s32 %v1556, 127
        %v1558 = vand.u32 2147483647, %v1342
        %v1559 = vand.u32 %v1558, 8388607
        %v1560 = vor.u32 %v1559, 8388608
        %v1561 = vsub.s32 0, %v1560
        %v1562 = vadd.s32 %v1557, 1
        %vm1563 = vcmp.gt.s32.totalorder %v1562, 0
        %v1564 = vsel %vm1563, %v1562, 0
        %v1565 = vshrl.u32 %v1564, 5
        %v1566 = vand.u32 %v1564, 31
        %v1567 = vsub.s32 32, %v1566
        %v1568 = vshrl.u32 683565275, %v1567
        %v1569 = vshll.u32 683565275, %v1566
        %v1570 = vshrl.u32 2475754826, %v1567
        %v1571 = vor.u32 %v1569, %v1570
        %v1572 = vshll.u32 2475754826, %v1566
        %v1573 = vshrl.u32 2131351028, %v1567
        %v1574 = vor.u32 %v1572, %v1573
        %v1575 = vshll.u32 2131351028, %v1566
        %v1576 = vshrl.u32 2102212464, %v1567
        %v1577 = vor.u32 %v1575, %v1576
        %v1578 = vshll.u32 2102212464, %v1566
        %v1579 = vshrl.u32 920167782, %v1567
        %v1580 = vor.u32 %v1578, %v1579
        %v1581 = vshll.u32 920167782, %v1566
        %v1582 = vshrl.u32 1326507024, %v1567
        %v1583 = vor.u32 %v1581, %v1582
        %vm1584 = vcmp.lt.s32.totalorder %v1565, 1
        %vm1585 = vcmp.lt.s32.totalorder %v1565, 2
        %vm1586 = vcmp.lt.s32.totalorder %v1565, 3
        %vm1587 = vcmp.lt.s32.totalorder %v1565, 4
        %v1588 = vsel %vm1584, %v1568, %v1571
        %v1589 = vsel %vm1587, %v1577, 2102212464
        %v1590 = vsel %vm1586, %v1574, %v1589
        %v1591 = vsel %vm1585, %v1588, %v1590
        %v1592 = vsel %vm1584, %v1571, %v1574
        %v1593 = vsel %vm1587, %v1580, 920167782
        %v1594 = vsel %vm1586, %v1577, %v1593
        %v1595 = vsel %vm1585, %v1592, %v1594
        %v1596 = vsel %vm1584, %v1574, %v1577
        %v1597 = vsel %vm1587, %v1583, 1326507024
        %v1598 = vsel %vm1586, %v1580, %v1597
        %v1599 = vsel %vm1585, %v1596, %v1598
        %v1600 = vshll.u32 %v1560, 8
        %v1601 = vmul.u32.u64.compose %v1600, %v1599
        %v1602 = vextract.low.u32 %v1601
        %v1603 = vextract.high.u32 %v1601
        %v1604 = vmul.u32.u64.compose %v1600, %v1595
        %v1605 = vextract.low.u32 %v1604
        %v1606 = vextract.high.u32 %v1604
        %v1607 = vmul.u32 %v1600, %v1591
        %v1608 = vadd.s32 %v1603, %v1605
        %vm1609 = vc.u32 %v1603, %v1605
        %v1610 = vadd.s32 %v1606, 1
        %v1611 = vsel %vm1609, %v1610, %v1606
        %v1612 = vadd.s32 %v1607, %v1611
        %v1613 = vadd.s32 %v1612, 536870912
        %v1614 = vshrl.u32 %v1613, 30
        %v1615 = vshll.u32 %v1614, 30
        %v1616 = vsub.s32 %v1612, %v1615
        %vm1617 = vcmp.lt.s32.totalorder %v1616, 0
        %v1618 = vsub.s32 0, %v1616
        %v1619 = vsel %vm1617, %v1618, %v1616
        %v1620 = vclz %v1619
        %v1621 = vsub.s32 %v1620, 2
        %vm1622 = vcmp.gt.s32.totalorder 0, %v1621
        %v1623 = vsel %vm1622, 0, %v1621
        %v1624 = vsub.s32 32, %v1623
        %v1625 = vshll.u32 %v1616, %v1623
        %v1626 = vshrl.u32 %v1608, %v1624
        %v1627 = vor.u32 %v1625, %v1626
        %v1628 = vsub.s32 4294967266, %v1623
        %v1629 = vadd.s32 %v1628, 127
        %v1630 = vshll.u32 %v1629, 23
        %v1631 = vor.u32 4788187, %v1630
        %v1632 = vand.u32 2147483647, %v1631
        %v1634 = vcvt.s32.f32 %v1627
        %v1635 = vmul.f32 %v1634, %v1632
        %v1636 = vxor.u32 %v1635, 2147483648
        %v1637 = vsel %vm1554, %v1636, %v1635
        %v1638 = vsub.s32 4, %v1614
        %v1639 = vsel %vm1554, %v1638, %v1614
        %v1640 = vsel %vm1553, %v1342, %v1637
        %v1641 = vsel %vm1553, 0, %v1639
        %v1642 = vcosq.f32.pop %v1640
        %v1643 = vsinq.f32.pop %v1640
        %vm1644 = vweird.f32 %v1342
        %v1645 = vand.u32 %v1641, 3
        %vm1646 = vcmp.lt.s32.totalorder %v1645, 2
        %vm1647 = vcmp.eq.s32.totalorder %v1645, 0
        %v1648 = vxor.u32 %v1643, 2147483648
        %v1649 = vsel %vm1647, %v1642, %v1648
        %vm1650 = vcmp.eq.s32.totalorder %v1645, 2
        %v1651 = vxor.u32 %v1642, 2147483648
        %v1652 = vsel %vm1650, %v1651, %v1643
        %v1653 = vsel %vm1646, %v1649, %v1652
        %v1654 = vsel %vm1644, nan, %v1653
        %v1655 = vand.u32 2147483647, %v1343
        %vm1656 = vcmp.le.f32.partialorder %v1655, 0.7853982
        %vm1657 = vcmp.lt.s32.totalorder %v1343, 0
        %v1658 = vand.u32 %v1343, 2139095040
        %v1659 = vshrl.u32 %v1658, 23
        %v1660 = vsub.s32 %v1659, 127
        %v1661 = vand.u32 2147483647, %v1343
        %v1662 = vand.u32 %v1661, 8388607
        %v1663 = vor.u32 %v1662, 8388608
        %v1664 = vsub.s32 0, %v1663
        %v1665 = vadd.s32 %v1660, 1
        %vm1666 = vcmp.gt.s32.totalorder %v1665, 0
        %v1667 = vsel %vm1666, %v1665, 0
        %v1668 = vshrl.u32 %v1667, 5
        %v1669 = vand.u32 %v1667, 31
        %v1670 = vsub.s32 32, %v1669
        %v1671 = vshrl.u32 683565275, %v1670
        %v1672 = vshll.u32 683565275, %v1669
        %v1673 = vshrl.u32 2475754826, %v1670
        %v1674 = vor.u32 %v1672, %v1673
        %v1675 = vshll.u32 2475754826, %v1669
        %v1676 = vshrl.u32 2131351028, %v1670
        %v1677 = vor.u32 %v1675, %v1676
        %v1678 = vshll.u32 2131351028, %v1669
        %v1679 = vshrl.u32 2102212464, %v1670
        %v1680 = vor.u32 %v1678, %v1679
        %v1681 = vshll.u32 2102212464, %v1669
        %v1682 = vshrl.u32 920167782, %v1670
        %v1683 = vor.u32 %v1681, %v1682
        %v1684 = vshll.u32 920167782, %v1669
        %v1685 = vshrl.u32 1326507024, %v1670
        %v1686 = vor.u32 %v1684, %v1685
        %vm1687 = vcmp.lt.s32.totalorder %v1668, 1
        %vm1688 = vcmp.lt.s32.totalorder %v1668, 2
        %vm1689 = vcmp.lt.s32.totalorder %v1668, 3
        %vm1690 = vcmp.lt.s32.totalorder %v1668, 4
        %v1691 = vsel %vm1687, %v1671, %v1674
        %v1692 = vsel %vm1690, %v1680, 2102212464
        %v1693 = vsel %vm1689, %v1677, %v1692
        %v1694 = vsel %vm1688, %v1691, %v1693
        %v1695 = vsel %vm1687, %v1674, %v1677
        %v1696 = vsel %vm1690, %v1683, 920167782
        %v1697 = vsel %vm1689, %v1680, %v1696
        %v1698 = vsel %vm1688, %v1695, %v1697
        %v1699 = vsel %vm1687, %v1677, %v1680
        %v1700 = vsel %vm1690, %v1686, 1326507024
        %v1701 = vsel %vm1689, %v1683, %v1700
        %v1702 = vsel %vm1688, %v1699, %v1701
        %v1703 = vshll.u32 %v1663, 8
        %v1704 = vmul.u32.u64.compose %v1703, %v1702
        %v1705 = vextract.low.u32 %v1704
        %v1706 = vextract.high.u32 %v1704
        %v1707 = vmul.u32.u64.compose %v1703, %v1698
        %v1708 = vextract.low.u32 %v1707
        %v1709 = vextract.high.u32 %v1707
        %v1710 = vmul.u32 %v1703, %v1694
        %v1711 = vadd.s32 %v1706, %v1708
        %vm1712 = vc.u32 %v1706, %v1708
        %v1713 = vadd.s32 %v1709, 1
        %v1714 = vsel %vm1712, %v1713, %v1709
        %v1715 = vadd.s32 %v1710, %v1714
        %v1716 = vadd.s32 %v1715, 536870912
        %v1717 = vshrl.u32 %v1716, 30
        %v1718 = vshll.u32 %v1717, 30
        %v1719 = vsub.s32 %v1715, %v1718
        %vm1720 = vcmp.lt.s32.totalorder %v1719, 0
        %v1721 = vsub.s32 0, %v1719
        %v1722 = vsel %vm1720, %v1721, %v1719
        %v1723 = vclz %v1722
        %v1724 = vsub.s32 %v1723, 2
        %vm1725 = vcmp.gt.s32.totalorder 0, %v1724
        %v1726 = vsel %vm1725, 0, %v1724
        %v1727 = vsub.s32 32, %v1726
        %v1728 = vshll.u32 %v1719, %v1726
        %v1729 = vshrl.u32 %v1711, %v1727
        %v1730 = vor.u32 %v1728, %v1729
        %v1731 = vsub.s32 4294967266, %v1726
        %v1732 = vadd.s32 %v1731, 127
        %v1733 = vshll.u32 %v1732, 23
        %v1734 = vor.u32 4788187, %v1733
        %v1735 = vand.u32 2147483647, %v1734
        %v1737 = vcvt.s32.f32 %v1730
        %v1738 = vmul.f32 %v1737, %v1735
        %v1739 = vxor.u32 %v1738, 2147483648
        %v1740 = vsel %vm1657, %v1739, %v1738
        %v1741 = vsub.s32 4, %v1717
        %v1742 = vsel %vm1657, %v1741, %v1717
        %v1743 = vsel %vm1656, %v1343, %v1740
        %v1744 = vsel %vm1656, 0, %v1742
        %v1745 = vcosq.f32.pop %v1743
        %v1746 = vsinq.f32.pop %v1743
        %vm1747 = vweird.f32 %v1343
        %v1748 = vand.u32 %v1744, 3
        %vm1749 = vcmp.lt.s32.totalorder %v1748, 2
        %vm1750 = vcmp.eq.s32.totalorder %v1748, 0
        %v1751 = vxor.u32 %v1746, 2147483648
        %v1752 = vsel %vm1750, %v1745, %v1751
        %vm1753 = vcmp.eq.s32.totalorder %v1748, 2
        %v1754 = vxor.u32 %v1745, 2147483648
        %v1755 = vsel %vm1753, %v1754, %v1746
        %v1756 = vsel %vm1749, %v1752, %v1755
        %v1757 = vsel %vm1747, nan, %v1756
        %v1758 = vsel %vm1324, %v1447, %v1654
        %v1759 = vsel %vm1324, %v1551, %v1757
        %v1760 = vmul.f32 %v871, %v1758
        %v1761 = vmul.f32 %v872, %v1759
        %s1762 = scalar_lea.vmem %s859, 32
        %v1763 = vld [vmem:[%s1762] sm:$0xff]
        %v1764 = vld [vmem:[%s1762 + $0x8] sm:$0xff]
        %1766 = vset.pattern.permute.xlu0 0
        %1767 = vperm.xlu0 %1766, %v1763
        %v1768 = vpop.permute.xlu0 %1767
        %1771 = vset.pattern.permute.xlu0 0
        %1772 = vperm.xlu0 %1771, %v1764
        %v1773 = vpop.permute.xlu0 %1772
        %v1775 = vmul.f32 %v1768, %v905
        %v1776 = vmul.f32 %v1773, %v905
        %v1777 = vand.u32 2147483647, %v1775
        %vm1778 = vcmp.le.f32.partialorder %v1777, 0.7853982
        %vm1779 = vcmp.lt.s32.totalorder %v1775, 0
        %v1780 = vand.u32 %v1775, 2139095040
        %v1781 = vshrl.u32 %v1780, 23
        %v1782 = vsub.s32 %v1781, 127
        %v1783 = vand.u32 2147483647, %v1775
        %v1784 = vand.u32 %v1783, 8388607
        %v1785 = vor.u32 %v1784, 8388608
        %v1786 = vsub.s32 0, %v1785
        %v1787 = vadd.s32 %v1782, 1
        %vm1788 = vcmp.gt.s32.totalorder %v1787, 0
        %v1789 = vsel %vm1788, %v1787, 0
        %v1790 = vshrl.u32 %v1789, 5
        %v1791 = vand.u32 %v1789, 31
        %v1792 = vsub.s32 32, %v1791
        %v1793 = vshrl.u32 683565275, %v1792
        %v1794 = vshll.u32 683565275, %v1791
        %v1795 = vshrl.u32 2475754826, %v1792
        %v1796 = vor.u32 %v1794, %v1795
        %v1797 = vshll.u32 2475754826, %v1791
        %v1798 = vshrl.u32 2131351028, %v1792
        %v1799 = vor.u32 %v1797, %v1798
        %v1800 = vshll.u32 2131351028, %v1791
        %v1801 = vshrl.u32 2102212464, %v1792
        %v1802 = vor.u32 %v1800, %v1801
        %v1803 = vshll.u32 2102212464, %v1791
        %v1804 = vshrl.u32 920167782, %v1792
        %v1805 = vor.u32 %v1803, %v1804
        %v1806 = vshll.u32 920167782, %v1791
        %v1807 = vshrl.u32 1326507024, %v1792
        %v1808 = vor.u32 %v1806, %v1807
        %vm1809 = vcmp.lt.s32.totalorder %v1790, 1
        %vm1810 = vcmp.lt.s32.totalorder %v1790, 2
        %vm1811 = vcmp.lt.s32.totalorder %v1790, 3
        %vm1812 = vcmp.lt.s32.totalorder %v1790, 4
        %v1813 = vsel %vm1809, %v1793, %v1796
        %v1814 = vsel %vm1812, %v1802, 2102212464
        %v1815 = vsel %vm1811, %v1799, %v1814
        %v1816 = vsel %vm1810, %v1813, %v1815
        %v1817 = vsel %vm1809, %v1796, %v1799
        %v1818 = vsel %vm1812, %v1805, 920167782
        %v1819 = vsel %vm1811, %v1802, %v1818
        %v1820 = vsel %vm1810, %v1817, %v1819
        %v1821 = vsel %vm1809, %v1799, %v1802
        %v1822 = vsel %vm1812, %v1808, 1326507024
        %v1823 = vsel %vm1811, %v1805, %v1822
        %v1824 = vsel %vm1810, %v1821, %v1823
        %v1825 = vshll.u32 %v1785, 8
        %v1826 = vmul.u32.u64.compose %v1825, %v1824
        %v1827 = vextract.low.u32 %v1826
        %v1828 = vextract.high.u32 %v1826
        %v1829 = vmul.u32.u64.compose %v1825, %v1820
        %v1830 = vextract.low.u32 %v1829
        %v1831 = vextract.high.u32 %v1829
        %v1832 = vmul.u32 %v1825, %v1816
        %v1833 = vadd.s32 %v1828, %v1830
        %vm1834 = vc.u32 %v1828, %v1830
        %v1835 = vadd.s32 %v1831, 1
        %v1836 = vsel %vm1834, %v1835, %v1831
        %v1837 = vadd.s32 %v1832, %v1836
        %v1838 = vadd.s32 %v1837, 536870912
        %v1839 = vshrl.u32 %v1838, 30
        %v1840 = vshll.u32 %v1839, 30
        %v1841 = vsub.s32 %v1837, %v1840
        %vm1842 = vcmp.lt.s32.totalorder %v1841, 0
        %v1843 = vsub.s32 0, %v1841
        %v1844 = vsel %vm1842, %v1843, %v1841
        %v1845 = vclz %v1844
        %v1846 = vsub.s32 %v1845, 2
        %vm1847 = vcmp.gt.s32.totalorder 0, %v1846
        %v1848 = vsel %vm1847, 0, %v1846
        %v1849 = vsub.s32 32, %v1848
        %v1850 = vshll.u32 %v1841, %v1848
        %v1851 = vshrl.u32 %v1833, %v1849
        %v1852 = vor.u32 %v1850, %v1851
        %v1853 = vsub.s32 4294967266, %v1848
        %v1854 = vadd.s32 %v1853, 127
        %v1855 = vshll.u32 %v1854, 23
        %v1856 = vor.u32 4788187, %v1855
        %v1857 = vand.u32 2147483647, %v1856
        %v1859 = vcvt.s32.f32 %v1852
        %v1860 = vmul.f32 %v1859, %v1857
        %v1861 = vxor.u32 %v1860, 2147483648
        %v1862 = vsel %vm1779, %v1861, %v1860
        %v1863 = vsub.s32 4, %v1839
        %v1864 = vsel %vm1779, %v1863, %v1839
        %v1865 = vsel %vm1778, %v1775, %v1862
        %v1866 = vsel %vm1778, 0, %v1864
        %v1867 = vcosq.f32.pop %v1865
        %v1868 = vsinq.f32.pop %v1865
        %vm1869 = vweird.f32 %v1775
        %v1870 = vadd.s32 %v1866, 3
        %v1871 = vand.u32 %v1870, 3
        %vm1872 = vcmp.lt.s32.totalorder %v1871, 2
        %vm1873 = vcmp.eq.s32.totalorder %v1871, 0
        %v1874 = vxor.u32 %v1868, 2147483648
        %v1875 = vsel %vm1873, %v1867, %v1874
        %vm1876 = vcmp.eq.s32.totalorder %v1871, 2
        %v1877 = vxor.u32 %v1867, 2147483648
        %v1878 = vsel %vm1876, %v1877, %v1868
        %v1879 = vsel %vm1872, %v1875, %v1878
        %v1880 = vsel %vm1869, nan, %v1879
        %v1881 = vand.u32 2147483647, %v1776
        %vm1882 = vcmp.le.f32.partialorder %v1881, 0.7853982
        %vm1883 = vcmp.lt.s32.totalorder %v1776, 0
        %v1884 = vand.u32 %v1776, 2139095040
        %v1885 = vshrl.u32 %v1884, 23
        %v1886 = vsub.s32 %v1885, 127
        %v1887 = vand.u32 2147483647, %v1776
        %v1888 = vand.u32 %v1887, 8388607
        %v1889 = vor.u32 %v1888, 8388608
        %v1890 = vsub.s32 0, %v1889
        %v1891 = vadd.s32 %v1886, 1
        %vm1892 = vcmp.gt.s32.totalorder %v1891, 0
        %v1893 = vsel %vm1892, %v1891, 0
        %v1894 = vshrl.u32 %v1893, 5
        %v1895 = vand.u32 %v1893, 31
        %v1896 = vsub.s32 32, %v1895
        %v1897 = vshrl.u32 683565275, %v1896
        %v1898 = vshll.u32 683565275, %v1895
        %v1899 = vshrl.u32 2475754826, %v1896
        %v1900 = vor.u32 %v1898, %v1899
        %v1901 = vshll.u32 2475754826, %v1895
        %v1902 = vshrl.u32 2131351028, %v1896
        %v1903 = vor.u32 %v1901, %v1902
        %v1904 = vshll.u32 2131351028, %v1895
        %v1905 = vshrl.u32 2102212464, %v1896
        %v1906 = vor.u32 %v1904, %v1905
        %v1907 = vshll.u32 2102212464, %v1895
        %v1908 = vshrl.u32 920167782, %v1896
        %v1909 = vor.u32 %v1907, %v1908
        %v1910 = vshll.u32 920167782, %v1895
        %v1911 = vshrl.u32 1326507024, %v1896
        %v1912 = vor.u32 %v1910, %v1911
        %vm1913 = vcmp.lt.s32.totalorder %v1894, 1
        %vm1914 = vcmp.lt.s32.totalorder %v1894, 2
        %vm1915 = vcmp.lt.s32.totalorder %v1894, 3
        %vm1916 = vcmp.lt.s32.totalorder %v1894, 4
        %v1917 = vsel %vm1913, %v1897, %v1900
        %v1918 = vsel %vm1916, %v1906, 2102212464
        %v1919 = vsel %vm1915, %v1903, %v1918
        %v1920 = vsel %vm1914, %v1917, %v1919
        %v1921 = vsel %vm1913, %v1900, %v1903
        %v1922 = vsel %vm1916, %v1909, 920167782
        %v1923 = vsel %vm1915, %v1906, %v1922
        %v1924 = vsel %vm1914, %v1921, %v1923
        %v1925 = vsel %vm1913, %v1903, %v1906
        %v1926 = vsel %vm1916, %v1912, 1326507024
        %v1927 = vsel %vm1915, %v1909, %v1926
        %v1928 = vsel %vm1914, %v1925, %v1927
        %v1929 = vshll.u32 %v1889, 8
        %v1930 = vmul.u32.u64.compose %v1929, %v1928
        %v1931 = vextract.low.u32 %v1930
        %v1932 = vextract.high.u32 %v1930
        %v1933 = vmul.u32.u64.compose %v1929, %v1924
        %v1934 = vextract.low.u32 %v1933
        %v1935 = vextract.high.u32 %v1933
        %v1936 = vmul.u32 %v1929, %v1920
        %v1937 = vadd.s32 %v1932, %v1934
        %vm1938 = vc.u32 %v1932, %v1934
        %v1939 = vadd.s32 %v1935, 1
        %v1940 = vsel %vm1938, %v1939, %v1935
        %v1941 = vadd.s32 %v1936, %v1940
        %v1942 = vadd.s32 %v1941, 536870912
        %v1943 = vshrl.u32 %v1942, 30
        %v1944 = vshll.u32 %v1943, 30
        %v1945 = vsub.s32 %v1941, %v1944
        %vm1946 = vcmp.lt.s32.totalorder %v1945, 0
        %v1947 = vsub.s32 0, %v1945
        %v1948 = vsel %vm1946, %v1947, %v1945
        %v1949 = vclz %v1948
        %v1950 = vsub.s32 %v1949, 2
        %vm1951 = vcmp.gt.s32.totalorder 0, %v1950
        %v1952 = vsel %vm1951, 0, %v1950
        %v1953 = vsub.s32 32, %v1952
        %v1954 = vshll.u32 %v1945, %v1952
        %v1955 = vshrl.u32 %v1937, %v1953
        %v1956 = vor.u32 %v1954, %v1955
        %v1957 = vsub.s32 4294967266, %v1952
        %v1958 = vadd.s32 %v1957, 127
        %v1959 = vshll.u32 %v1958, 23
        %v1960 = vor.u32 4788187, %v1959
        %v1961 = vand.u32 2147483647, %v1960
        %v1963 = vcvt.s32.f32 %v1956
        %v1964 = vmul.f32 %v1963, %v1961
        %v1965 = vxor.u32 %v1964, 2147483648
        %v1966 = vsel %vm1883, %v1965, %v1964
        %v1967 = vsub.s32 4, %v1943
        %v1968 = vsel %vm1883, %v1967, %v1943
        %v1969 = vsel %vm1882, %v1776, %v1966
        %v1970 = vsel %vm1882, 0, %v1968
        %v1971 = vcosq.f32.pop %v1969
        %v1972 = vsinq.f32.pop %v1969
        %vm1973 = vweird.f32 %v1776
        %v1974 = vadd.s32 %v1970, 3
        %v1975 = vand.u32 %v1974, 3
        %vm1976 = vcmp.lt.s32.totalorder %v1975, 2
        %vm1977 = vcmp.eq.s32.totalorder %v1975, 0
        %v1978 = vxor.u32 %v1972, 2147483648
        %v1979 = vsel %vm1977, %v1971, %v1978
        %vm1980 = vcmp.eq.s32.totalorder %v1975, 2
        %v1981 = vxor.u32 %v1971, 2147483648
        %v1982 = vsel %vm1980, %v1981, %v1972
        %v1983 = vsel %vm1976, %v1979, %v1982
        %v1984 = vsel %vm1973, nan, %v1983
        %v1985 = vand.u32 2147483647, %v1775
        %vm1986 = vcmp.le.f32.partialorder %v1985, 0.7853982
        %vm1987 = vcmp.lt.s32.totalorder %v1775, 0
        %v1988 = vand.u32 %v1775, 2139095040
        %v1989 = vshrl.u32 %v1988, 23
        %v1990 = vsub.s32 %v1989, 127
        %v1991 = vand.u32 2147483647, %v1775
        %v1992 = vand.u32 %v1991, 8388607
        %v1993 = vor.u32 %v1992, 8388608
        %v1994 = vsub.s32 0, %v1993
        %v1995 = vadd.s32 %v1990, 1
        %vm1996 = vcmp.gt.s32.totalorder %v1995, 0
        %v1997 = vsel %vm1996, %v1995, 0
        %v1998 = vshrl.u32 %v1997, 5
        %v1999 = vand.u32 %v1997, 31
        %v2000 = vsub.s32 32, %v1999
        %v2001 = vshrl.u32 683565275, %v2000
        %v2002 = vshll.u32 683565275, %v1999
        %v2003 = vshrl.u32 2475754826, %v2000
        %v2004 = vor.u32 %v2002, %v2003
        %v2005 = vshll.u32 2475754826, %v1999
        %v2006 = vshrl.u32 2131351028, %v2000
        %v2007 = vor.u32 %v2005, %v2006
        %v2008 = vshll.u32 2131351028, %v1999
        %v2009 = vshrl.u32 2102212464, %v2000
        %v2010 = vor.u32 %v2008, %v2009
        %v2011 = vshll.u32 2102212464, %v1999
        %v2012 = vshrl.u32 920167782, %v2000
        %v2013 = vor.u32 %v2011, %v2012
        %v2014 = vshll.u32 920167782, %v1999
        %v2015 = vshrl.u32 1326507024, %v2000
        %v2016 = vor.u32 %v2014, %v2015
        %vm2017 = vcmp.lt.s32.totalorder %v1998, 1
        %vm2018 = vcmp.lt.s32.totalorder %v1998, 2
        %vm2019 = vcmp.lt.s32.totalorder %v1998, 3
        %vm2020 = vcmp.lt.s32.totalorder %v1998, 4
        %v2021 = vsel %vm2017, %v2001, %v2004
        %v2022 = vsel %vm2020, %v2010, 2102212464
        %v2023 = vsel %vm2019, %v2007, %v2022
        %v2024 = vsel %vm2018, %v2021, %v2023
        %v2025 = vsel %vm2017, %v2004, %v2007
        %v2026 = vsel %vm2020, %v2013, 920167782
        %v2027 = vsel %vm2019, %v2010, %v2026
        %v2028 = vsel %vm2018, %v2025, %v2027
        %v2029 = vsel %vm2017, %v2007, %v2010
        %v2030 = vsel %vm2020, %v2016, 1326507024
        %v2031 = vsel %vm2019, %v2013, %v2030
        %v2032 = vsel %vm2018, %v2029, %v2031
        %v2033 = vshll.u32 %v1993, 8
        %v2034 = vmul.u32.u64.compose %v2033, %v2032
        %v2035 = vextract.low.u32 %v2034
        %v2036 = vextract.high.u32 %v2034
        %v2037 = vmul.u32.u64.compose %v2033, %v2028
        %v2038 = vextract.low.u32 %v2037
        %v2039 = vextract.high.u32 %v2037
        %v2040 = vmul.u32 %v2033, %v2024
        %v2041 = vadd.s32 %v2036, %v2038
        %vm2042 = vc.u32 %v2036, %v2038
        %v2043 = vadd.s32 %v2039, 1
        %v2044 = vsel %vm2042, %v2043, %v2039
        %v2045 = vadd.s32 %v2040, %v2044
        %v2046 = vadd.s32 %v2045, 536870912
        %v2047 = vshrl.u32 %v2046, 30
        %v2048 = vshll.u32 %v2047, 30
        %v2049 = vsub.s32 %v2045, %v2048
        %vm2050 = vcmp.lt.s32.totalorder %v2049, 0
        %v2051 = vsub.s32 0, %v2049
        %v2052 = vsel %vm2050, %v2051, %v2049
        %v2053 = vclz %v2052
        %v2054 = vsub.s32 %v2053, 2
        %vm2055 = vcmp.gt.s32.totalorder 0, %v2054
        %v2056 = vsel %vm2055, 0, %v2054
        %v2057 = vsub.s32 32, %v2056
        %v2058 = vshll.u32 %v2049, %v2056
        %v2059 = vshrl.u32 %v2041, %v2057
        %v2060 = vor.u32 %v2058, %v2059
        %v2061 = vsub.s32 4294967266, %v2056
        %v2062 = vadd.s32 %v2061, 127
        %v2063 = vshll.u32 %v2062, 23
        %v2064 = vor.u32 4788187, %v2063
        %v2065 = vand.u32 2147483647, %v2064
        %v2067 = vcvt.s32.f32 %v2060
        %v2068 = vmul.f32 %v2067, %v2065
        %v2069 = vxor.u32 %v2068, 2147483648
        %v2070 = vsel %vm1987, %v2069, %v2068
        %v2071 = vsub.s32 4, %v2047
        %v2072 = vsel %vm1987, %v2071, %v2047
        %v2073 = vsel %vm1986, %v1775, %v2070
        %v2074 = vsel %vm1986, 0, %v2072
        %v2075 = vcosq.f32.pop %v2073
        %v2076 = vsinq.f32.pop %v2073
        %vm2077 = vweird.f32 %v1775
        %v2078 = vand.u32 %v2074, 3
        %vm2079 = vcmp.lt.s32.totalorder %v2078, 2
        %vm2080 = vcmp.eq.s32.totalorder %v2078, 0
        %v2081 = vxor.u32 %v2076, 2147483648
        %v2082 = vsel %vm2080, %v2075, %v2081
        %vm2083 = vcmp.eq.s32.totalorder %v2078, 2
        %v2084 = vxor.u32 %v2075, 2147483648
        %v2085 = vsel %vm2083, %v2084, %v2076
        %v2086 = vsel %vm2079, %v2082, %v2085
        %v2087 = vsel %vm2077, nan, %v2086
        %v2088 = vand.u32 2147483647, %v1776
        %vm2089 = vcmp.le.f32.partialorder %v2088, 0.7853982
        %vm2090 = vcmp.lt.s32.totalorder %v1776, 0
        %v2091 = vand.u32 %v1776, 2139095040
        %v2092 = vshrl.u32 %v2091, 23
        %v2093 = vsub.s32 %v2092, 127
        %v2094 = vand.u32 2147483647, %v1776
        %v2095 = vand.u32 %v2094, 8388607
        %v2096 = vor.u32 %v2095, 8388608
        %v2097 = vsub.s32 0, %v2096
        %v2098 = vadd.s32 %v2093, 1
        %vm2099 = vcmp.gt.s32.totalorder %v2098, 0
        %v2100 = vsel %vm2099, %v2098, 0
        %v2101 = vshrl.u32 %v2100, 5
        %v2102 = vand.u32 %v2100, 31
        %v2103 = vsub.s32 32, %v2102
        %v2104 = vshrl.u32 683565275, %v2103
        %v2105 = vshll.u32 683565275, %v2102
        %v2106 = vshrl.u32 2475754826, %v2103
        %v2107 = vor.u32 %v2105, %v2106
        %v2108 = vshll.u32 2475754826, %v2102
        %v2109 = vshrl.u32 2131351028, %v2103
        %v2110 = vor.u32 %v2108, %v2109
        %v2111 = vshll.u32 2131351028, %v2102
        %v2112 = vshrl.u32 2102212464, %v2103
        %v2113 = vor.u32 %v2111, %v2112
        %v2114 = vshll.u32 2102212464, %v2102
        %v2115 = vshrl.u32 920167782, %v2103
        %v2116 = vor.u32 %v2114, %v2115
        %v2117 = vshll.u32 920167782, %v2102
        %v2118 = vshrl.u32 1326507024, %v2103
        %v2119 = vor.u32 %v2117, %v2118
        %vm2120 = vcmp.lt.s32.totalorder %v2101, 1
        %vm2121 = vcmp.lt.s32.totalorder %v2101, 2
        %vm2122 = vcmp.lt.s32.totalorder %v2101, 3
        %vm2123 = vcmp.lt.s32.totalorder %v2101, 4
        %v2124 = vsel %vm2120, %v2104, %v2107
        %v2125 = vsel %vm2123, %v2113, 2102212464
        %v2126 = vsel %vm2122, %v2110, %v2125
        %v2127 = vsel %vm2121, %v2124, %v2126
        %v2128 = vsel %vm2120, %v2107, %v2110
        %v2129 = vsel %vm2123, %v2116, 920167782
        %v2130 = vsel %vm2122, %v2113, %v2129
        %v2131 = vsel %vm2121, %v2128, %v2130
        %v2132 = vsel %vm2120, %v2110, %v2113
        %v2133 = vsel %vm2123, %v2119, 1326507024
        %v2134 = vsel %vm2122, %v2116, %v2133
        %v2135 = vsel %vm2121, %v2132, %v2134
        %v2136 = vshll.u32 %v2096, 8
        %v2137 = vmul.u32.u64.compose %v2136, %v2135
        %v2138 = vextract.low.u32 %v2137
        %v2139 = vextract.high.u32 %v2137
        %v2140 = vmul.u32.u64.compose %v2136, %v2131
        %v2141 = vextract.low.u32 %v2140
        %v2142 = vextract.high.u32 %v2140
        %v2143 = vmul.u32 %v2136, %v2127
        %v2144 = vadd.s32 %v2139, %v2141
        %vm2145 = vc.u32 %v2139, %v2141
        %v2146 = vadd.s32 %v2142, 1
        %v2147 = vsel %vm2145, %v2146, %v2142
        %v2148 = vadd.s32 %v2143, %v2147
        %v2149 = vadd.s32 %v2148, 536870912
        %v2150 = vshrl.u32 %v2149, 30
        %v2151 = vshll.u32 %v2150, 30
        %v2152 = vsub.s32 %v2148, %v2151
        %vm2153 = vcmp.lt.s32.totalorder %v2152, 0
        %v2154 = vsub.s32 0, %v2152
        %v2155 = vsel %vm2153, %v2154, %v2152
        %v2156 = vclz %v2155
        %v2157 = vsub.s32 %v2156, 2
        %vm2158 = vcmp.gt.s32.totalorder 0, %v2157
        %v2159 = vsel %vm2158, 0, %v2157
        %v2160 = vsub.s32 32, %v2159
        %v2161 = vshll.u32 %v2152, %v2159
        %v2162 = vshrl.u32 %v2144, %v2160
        %v2163 = vor.u32 %v2161, %v2162
        %v2164 = vsub.s32 4294967266, %v2159
        %v2165 = vadd.s32 %v2164, 127
        %v2166 = vshll.u32 %v2165, 23
        %v2167 = vor.u32 4788187, %v2166
        %v2168 = vand.u32 2147483647, %v2167
        %v2170 = vcvt.s32.f32 %v2163
        %v2171 = vmul.f32 %v2170, %v2168
        %v2172 = vxor.u32 %v2171, 2147483648
        %v2173 = vsel %vm2090, %v2172, %v2171
        %v2174 = vsub.s32 4, %v2150
        %v2175 = vsel %vm2090, %v2174, %v2150
        %v2176 = vsel %vm2089, %v1776, %v2173
        %v2177 = vsel %vm2089, 0, %v2175
        %v2178 = vcosq.f32.pop %v2176
        %v2179 = vsinq.f32.pop %v2176
        %vm2180 = vweird.f32 %v1776
        %v2181 = vand.u32 %v2177, 3
        %vm2182 = vcmp.lt.s32.totalorder %v2181, 2
        %vm2183 = vcmp.eq.s32.totalorder %v2181, 0
        %v2184 = vxor.u32 %v2179, 2147483648
        %v2185 = vsel %vm2183, %v2178, %v2184
        %vm2186 = vcmp.eq.s32.totalorder %v2181, 2
        %v2187 = vxor.u32 %v2178, 2147483648
        %v2188 = vsel %vm2186, %v2187, %v2179
        %v2189 = vsel %vm2182, %v2185, %v2188
        %v2190 = vsel %vm2180, nan, %v2189
        %v2191 = vsel %vm1324, %v1880, %v2087
        %v2192 = vsel %vm1324, %v1984, %v2190
        %v2193 = vmul.f32 %v871, %v2191
        %v2194 = vmul.f32 %v872, %v2192
        %vm2195 = vcmask 261120
        %v2196 = vsel %vm2195, %v1327, -inf
        %2197 = vmax.xlane.f32.xlu0 %v2196
        %v2198 = vpop.xlane.xlu0 %2197
        %v2199 = vsel %vm2195, %v1328, -inf
        %2200 = vmax.xlane.f32.xlu0 %v2199
        %v2201 = vpop.xlane.xlu0 %2200
        %v2202 = vmax.f32 %v2198, %v2201
        %v2203 = vrot.slane %v2202, 4
        %v2204 = vmax.f32 %v2202, %v2203
        %v2205 = vrot.slane %v2204, 2
        %v2206 = vmax.f32 %v2204, %v2205
        %v2207 = vrot.slane %v2206, 1
        %v2208 = vmax.f32 %v2206, %v2207
        %v2209 = vsel %vm2195, %v1327, 0.0
        %2210 = vadd.xlane.f32.xlu0 %v2209
        %v2211 = vpop.xlane.xlu0 %2210
        %v2212 = vsel %vm2195, %v1328, 0.0
        %2213 = vadd.xlane.f32.xlu0 %v2212
        %v2214 = vpop.xlane.xlu0 %2213
        %v2215 = vadd.f32 %v2211, %v2214
        %v2216 = vrot.slane %v2215, 4
        %v2217 = vadd.f32 %v2215, %v2216
        %v2218 = vrot.slane %v2217, 2
        %v2219 = vadd.f32 %v2217, %v2218
        %v2220 = vrot.slane %v2219, 1
        %v2221 = vadd.f32 %v2219, %v2220
        %v2222 = vmul.f32 %v2221, 0.001953125
        %v2223 = vadd.f32 %v2208, %v2222
        %v2224 = vsel %vm2195, %v1760, -inf
        %2225 = vmax.xlane.f32.xlu0 %v2224
        %v2226 = vpop.xlane.xlu0 %2225
        %v2227 = vsel %vm2195, %v1761, -inf
        %2228 = vmax.xlane.f32.xlu0 %v2227
        %v2229 = vpop.xlane.xlu0 %2228
        %v2230 = vmax.f32 %v2226, %v2229
        %v2231 = vrot.slane %v2230, 4
        %v2232 = vmax.f32 %v2230, %v2231
        %v2233 = vrot.slane %v2232, 2
        %v2234 = vmax.f32 %v2232, %v2233
        %v2235 = vrot.slane %v2234, 1
        %v2236 = vmax.f32 %v2234, %v2235
        %v2237 = vsel %vm2195, %v1760, 0.0
        %2238 = vadd.xlane.f32.xlu0 %v2237
        %v2239 = vpop.xlane.xlu0 %2238
        %v2240 = vsel %vm2195, %v1761, 0.0
        %2241 = vadd.xlane.f32.xlu0 %v2240
        %v2242 = vpop.xlane.xlu0 %2241
        %v2243 = vadd.f32 %v2239, %v2242
        %v2244 = vrot.slane %v2243, 4
        %v2245 = vadd.f32 %v2243, %v2244
        %v2246 = vrot.slane %v2245, 2
        %v2247 = vadd.f32 %v2245, %v2246
        %v2248 = vrot.slane %v2247, 1
        %v2249 = vadd.f32 %v2247, %v2248
        %v2250 = vmul.f32 %v2249, 0.001953125
        %v2251 = vadd.f32 %v2236, %v2250
        %v2252 = vsel %vm2195, %v2193, -inf
        %2253 = vmax.xlane.f32.xlu0 %v2252
        %v2254 = vpop.xlane.xlu0 %2253
        %v2255 = vsel %vm2195, %v2194, -inf
        %2256 = vmax.xlane.f32.xlu0 %v2255
        %v2257 = vpop.xlane.xlu0 %2256
        %v2258 = vmax.f32 %v2254, %v2257
        %v2259 = vrot.slane %v2258, 4
        %v2260 = vmax.f32 %v2258, %v2259
        %v2261 = vrot.slane %v2260, 2
        %v2262 = vmax.f32 %v2260, %v2261
        %v2263 = vrot.slane %v2262, 1
        %v2264 = vmax.f32 %v2262, %v2263
        %v2265 = vsel %vm2195, %v2193, 0.0
        %2266 = vadd.xlane.f32.xlu0 %v2265
        %v2267 = vpop.xlane.xlu0 %2266
        %v2268 = vsel %vm2195, %v2194, 0.0
        %2269 = vadd.xlane.f32.xlu0 %v2268
        %v2270 = vpop.xlane.xlu0 %2269
        %v2271 = vadd.f32 %v2267, %v2270
        %v2272 = vrot.slane %v2271, 4
        %v2273 = vadd.f32 %v2271, %v2272
        %v2274 = vrot.slane %v2273, 2
        %v2275 = vadd.f32 %v2273, %v2274
        %v2276 = vrot.slane %v2275, 1
        %v2277 = vadd.f32 %v2275, %v2276
        %v2278 = vmul.f32 %v2277, 0.001953125
        %v2279 = vadd.f32 %v2264, %v2278
        %s2280 = sld [smem:[#allocation2]]
        %v2281 = vstv %s2280
        %v2282 = vmul.f32 %v2223, %v2281
        %s2283 = sld [smem:[#allocation2 + $0x3]]
        %v2284 = vstv %s2283
        %v2285 = vmul.f32 %v2251, %v2284
        %v2286 = vadd.f32 %v2282, %v2285
        %s2287 = sld [smem:[#allocation2 + $0x6]]
        %v2288 = vstv %s2287
        %v2289 = vmul.f32 %v2279, %v2288
        %v2290 = vadd.f32 %v2286, %v2289
        %s2291 = sld [smem:[#allocation2 + $0x9]]
        %v2292 = vstv %s2291
        %v2293 = vadd.f32 %v2290, %v2292
        %v2294 = vmax.f32 %v2293, 0.0
        %v2295 = vmul.f32 %v1327, %v2294
        %v2296 = vmul.f32 %v1328, %v2294
        %s2297 = sld [smem:[#allocation2 + $0x1]]
        %v2298 = vstv %s2297
        %v2299 = vmul.f32 %v2223, %v2298
        %s2300 = sld [smem:[#allocation2 + $0x4]]
        %v2301 = vstv %s2300
        %v2302 = vmul.f32 %v2251, %v2301
        %v2303 = vadd.f32 %v2299, %v2302
        %s2304 = sld [smem:[#allocation2 + $0x7]]
        %v2305 = vstv %s2304
        %v2306 = vmul.f32 %v2279, %v2305
        %v2307 = vadd.f32 %v2303, %v2306
        %s2308 = sld [smem:[#allocation2 + $0xa]]
        %v2309 = vstv %s2308
        %v2310 = vadd.f32 %v2307, %v2309
        %v2311 = vmax.f32 %v2310, 0.0
        %v2312 = vmul.f32 %v1760, %v2311
        %v2313 = vmul.f32 %v1761, %v2311
        %s2314 = sld [smem:[#allocation2 + $0x2]]
        %v2315 = vstv %s2314
        %v2316 = vmul.f32 %v2223, %v2315
        %s2317 = sld [smem:[#allocation2 + $0x5]]
        %v2318 = vstv %s2317
        %v2319 = vmul.f32 %v2251, %v2318
        %v2320 = vadd.f32 %v2316, %v2319
        %s2321 = sld [smem:[#allocation2 + $0x8]]
        %v2322 = vstv %s2321
        %v2323 = vmul.f32 %v2279, %v2322
        %v2324 = vadd.f32 %v2320, %v2323
        %s2325 = sld [smem:[#allocation2 + $0xb]]
        %v2326 = vstv %s2325
        %v2327 = vadd.f32 %v2324, %v2326
        %v2328 = vmax.f32 %v2327, 0.0
        %v2329 = vmul.f32 %v2193, %v2328
        %v2330 = vmul.f32 %v2194, %v2328
        %v2331 = vmax.f32 %v2295, %v2312
        %v2332 = vmax.f32 %v2296, %v2313
        %v2333 = vmax.f32 %v2331, %v2329
        %v2334 = vmax.f32 %v2332, %v2330
        %v2335 = vadd.f32 %v2295, %v2312
        %v2336 = vadd.f32 %v2296, %v2313
        %v2337 = vadd.f32 %v2335, %v2329
        %v2338 = vadd.f32 %v2336, %v2330
        %v2339 = vmul.f32 %v2337, 0.33333334
        %v2340 = vmul.f32 %v2338, 0.33333334
        %2343 = vrot.lane.b32.xlu0 %v2339, 32
        %v2344 = vpop.permute.xlu0 %2343
        %2345 = vrot.lane.b32.xlu0 %v2340, 32
        %v2346 = vpop.permute.xlu0 %2345
        %v2349 = vsel %vm2195, %v2333, %v2344
        %v2350 = vsel %vm2195, %v2334, %v2346
        %v2351 = vld [vmem:[%s4] sm:$0xff]
        %v2352 = vld [vmem:[%s4 + $0x8] sm:$0xff]
        %v2353 = vld [vmem:[%s4 + $0x10] sm:$0xff]
        %v2354 = vld [vmem:[%s4 + $0x18] sm:$0xff]
        %v2355 = vld [vmem:[%s4 + $0x20] sm:$0xff]
        %v2356 = vld [vmem:[%s4 + $0x28] sm:$0xff]
        %v2357 = vld [vmem:[%s4 + $0x30] sm:$0xff]
        %v2358 = vld [vmem:[%s4 + $0x38] sm:$0xff]
        %v2359 = vld [vmem:[%s4 + $0x40] sm:$0xff]
        %v2360 = vld [vmem:[%s4 + $0x48] sm:$0xff]
        %v2361 = vld [vmem:[%s4 + $0x50] sm:$0xff]
        %v2362 = vld [vmem:[%s4 + $0x58] sm:$0xff]
        %v2363 = vld [vmem:[%s4 + $0x60] sm:$0xff]
        %v2364 = vld [vmem:[%s4 + $0x68] sm:$0xff]
        %v2365 = vld [vmem:[%s4 + $0x70] sm:$0xff]
        %v2366 = vld [vmem:[%s4 + $0x78] sm:$0xff]
        %vm2367 = vcmask 523264
        %v2369 = vsel %vm2367, %v2349, 0
        %v2372 = vsel %vm2367, %v2350, 0
        %2374 = vmatprep.subr.mxu0 %v2352
        %2375 = vmatpush1.msra.mxu0 %v2351
        %2376 = vmatprep.subr.mxu0 %v2354
        %2377 = vmatpush1.msra.mxu0 %v2353
        %2378 = vmatprep.subr.mxu0 %v2356
        %2379 = vmatpush1.msra.mxu0 %v2355
        %2380 = vmatprep.subr.mxu0 %v2358
        %2381 = vmatpush1.msra.mxu0 %v2357
        %2382 = vmatprep.subr.mxu0 %v2360
        %2383 = vmatpush1.msra.mxu0 %v2359
        %2384 = vmatprep.subr.mxu0 %v2362
        %2385 = vmatpush1.msra.mxu0 %v2361
        %2386 = vmatprep.subr.mxu0 %v2364
        %2387 = vmatpush1.msra.mxu0 %v2363
        %2388 = vmatprep.subr.mxu0 %v2366
        %2389 = vmatpush1.msra.mxu0 %v2365
        %2390 = vmatprep.subr.mxu0 0.0
        %2391 = vmatpush1.msra.mxu0 0.0
        %2392 = vmatprep.subr.mxu0 0.0
        %2393 = vmatpush1.msra.mxu0 0.0
        %2394 = vmatprep.subr.mxu0 0.0
        %2395 = vmatpush1.msra.mxu0 0.0
        %2396 = vmatprep.subr.mxu0 0.0
        %2397 = vmatpush1.msra.mxu0 0.0
        %2398 = vmatprep.subr.mxu0 0.0
        %2399 = vmatpush1.msra.mxu0 0.0
        %2400 = vmatprep.subr.mxu0 0.0
        %2401 = vmatpush1.msra.mxu0 0.0
        %2402 = vmatprep.subr.mxu0 0.0
        %2403 = vmatpush1.msra.mxu0 0.0
        %2404 = vmatprep.subr.mxu0 0.0
        %2405 = vmatpush1.msra.mxu0 0.0
        %2406 = vmatprep.subr.mxu0 0.0
        %2407 = vmatpush1.msra.mxu0 0.0
        %2408 = vmatprep.subr.mxu0 0.0
        %2409 = vmatpush1.msra.mxu0 0.0
        %2410 = vmatprep.subr.mxu0 0.0
        %2411 = vmatpush1.msra.mxu0 0.0
        %2412 = vmatprep.subr.mxu0 0.0
        %2413 = vmatpush1.msra.mxu0 0.0
        %2414 = vmatprep.subr.mxu0 0.0
        %2415 = vmatpush1.msra.mxu0 0.0
        %2416 = vmatprep.subr.mxu0 0.0
        %2417 = vmatpush1.msra.mxu0 0.0
        %2418 = vmatprep.subr.mxu0 0.0
        %2419 = vmatpush1.msra.mxu0 0.0
        %2420 = vmatprep.subr.mxu0 0.0
        %2421 = vmatpush1.msra.mxu0 0.0
        %2422 = vmatprep.subr.mxu0 0.0
        %2423 = vmatpush1.msra.mxu0 0.0
        %2424 = vmatprep.subr.mxu0 0.0
        %2425 = vmatpush1.msra.mxu0 0.0
        %2426 = vmatprep.subr.mxu0 0.0
        %2427 = vmatpush1.msra.mxu0 0.0
        %2428 = vmatprep.subr.mxu0 0.0
        %2429 = vmatpush1.msra.mxu0 0.0
        %2430 = vmatprep.subr.mxu0 0.0
        %2431 = vmatpush1.msra.mxu0 0.0
        %2432 = vmatprep.subr.mxu0 0.0
        %2433 = vmatpush1.msra.mxu0 0.0
        %2434 = vmatprep.subr.mxu0 0.0
        %2435 = vmatpush1.msra.mxu0 0.0
        %2436 = vmatprep.subr.mxu0 0.0
        %2437 = vmatpush1.msra.mxu0 0.0
        %2438 = vmatprep.mubr.f32.mxu0 0.0
        %2439 = vmatmul.mubr.f32.gmra.mrb[0].mxu0 %v2369
        %v2440 = vpop.f32.mrb[0].mxu0
        %v2441 = vadd.f32 0.0, %v2440
        %v2442 = vpop.f32.mrb[0].mxu0
        %v2443 = vadd.f32 0.0, %v2442
        %2444 = vmatprep.mubr.f32.mxu0 0.0
        %2445 = vmatmul.mubr.f32.gmra.mrb[0].mxu0 %v2372
        %v2446 = vpop.f32.mrb[0].mxu0
        %v2447 = vadd.f32 0.0, %v2446
        %v2448 = vpop.f32.mrb[0].mxu0
        %v2449 = vadd.f32 0.0, %v2448
        %2450 = vdwg.mxu0
        %v2451 = vld [vmem:[%s3] sm:$0xff]
        %v2452 = vld [vmem:[%s3 + $0x8] sm:$0xff]
        %v2453 = vld [vmem:[%s3 + $0x10] sm:$0xff]
        %v2454 = vld [vmem:[%s3 + $0x18] sm:$0xff]
        %2457 = vrot.lane.b32.xlu0 %v2441, 96
        %v2458 = vpop.permute.xlu0 %2457
        %2459 = vrot.lane.b32.xlu0 %v2447, 96
        %v2460 = vpop.permute.xlu0 %2459
        %vm2463 = vcmask 130048
        %v2465 = vsel %vm2463, %v2453, 0
        %v2468 = vsel %vm2463, %v2454, 0
        %2470 = vmatprep.subr.mxu0 0.0
        %2471 = vmatpush1.msra.mxu0 %v2458
        %2472 = vmatprep.subr.mxu0 0.0
        %2473 = vmatpush1.msra.mxu0 %v2460
        %2474 = vmatprep.subr.mxu0 0.0
        %2475 = vmatpush1.msra.mxu0 0.0
        %2476 = vmatprep.subr.mxu0 0.0
        %2477 = vmatpush1.msra.mxu0 0.0
        %2478 = vmatprep.subr.mxu0 0.0
        %2479 = vmatpush1.msra.mxu0 0.0
        %2480 = vmatprep.subr.mxu0 0.0
        %2481 = vmatpush1.msra.mxu0 0.0
        %2482 = vmatprep.subr.mxu0 0.0
        %2483 = vmatpush1.msra.mxu0 0.0
        %2484 = vmatprep.subr.mxu0 0.0
        %2485 = vmatpush1.msra.mxu0 0.0
        %2486 = vmatprep.subr.mxu0 0.0
        %2487 = vmatpush1.msra.mxu0 0.0
        %2488 = vmatprep.subr.mxu0 0.0
        %2489 = vmatpush1.msra.mxu0 0.0
        %2490 = vmatprep.subr.mxu0 0.0
        %2491 = vmatpush1.msra.mxu0 0.0
        %2492 = vmatprep.subr.mxu0 0.0
        %2493 = vmatpush1.msra.mxu0 0.0
        %2494 = vmatprep.subr.mxu0 0.0
        %2495 = vmatpush1.msra.mxu0 0.0
        %2496 = vmatprep.subr.mxu0 0.0
        %2497 = vmatpush1.msra.mxu0 0.0
        %2498 = vmatprep.subr.mxu0 0.0
        %2499 = vmatpush1.msra.mxu0 0.0
        %2500 = vmatprep.subr.mxu0 0.0
        %2501 = vmatpush1.msra.mxu0 0.0
        %2502 = vmatprep.subr.mxu0 0.0
        %2503 = vmatpush1.msra.mxu0 0.0
        %2504 = vmatprep.subr.mxu0 0.0
        %2505 = vmatpush1.msra.mxu0 0.0
        %2506 = vmatprep.subr.mxu0 0.0
        %2507 = vmatpush1.msra.mxu0 0.0
        %2508 = vmatprep.subr.mxu0 0.0
        %2509 = vmatpush1.msra.mxu0 0.0
        %2510 = vmatprep.subr.mxu0 0.0
        %2511 = vmatpush1.msra.mxu0 0.0
        %2512 = vmatprep.subr.mxu0 0.0
        %2513 = vmatpush1.msra.mxu0 0.0
        %2514 = vmatprep.subr.mxu0 0.0
        %2515 = vmatpush1.msra.mxu0 0.0
        %2516 = vmatprep.subr.mxu0 0.0
        %2517 = vmatpush1.msra.mxu0 0.0
        %2518 = vmatprep.subr.mxu0 0.0
        %2519 = vmatpush1.msra.mxu0 0.0
        %2520 = vmatprep.subr.mxu0 0.0
        %2521 = vmatpush1.msra.mxu0 0.0
        %2522 = vmatprep.subr.mxu0 0.0
        %2523 = vmatpush1.msra.mxu0 0.0
        %2524 = vmatprep.subr.mxu0 0.0
        %2525 = vmatpush1.msra.mxu0 0.0
        %2526 = vmatprep.subr.mxu0 0.0
        %2527 = vmatpush1.msra.mxu0 0.0
        %2528 = vmatprep.subr.mxu0 0.0
        %2529 = vmatpush1.msra.mxu0 0.0
        %2530 = vmatprep.subr.mxu0 0.0
        %2531 = vmatpush1.msra.mxu0 0.0
        %2532 = vmatprep.subr.mxu0 0.0
        %2533 = vmatpush1.msra.mxu0 0.0
        %2534 = vmatprep.mubr.f32.mxu0 0.0
        %2535 = vmatmul.mubr.f32.gmra.mrb[0].mxu0 %v2465
        %v2536 = vpop.f32.mrb[0].mxu0
        %v2537 = vadd.f32 0.0, %v2536
        %v2538 = vpop.f32.mrb[0].mxu0
        %2539 = vmatprep.mubr.f32.mxu0 0.0
        %2540 = vmatmul.mubr.f32.gmra.mrb[0].mxu0 %v2468
        %v2541 = vpop.f32.mrb[0].mxu0
        %v2542 = vadd.f32 0.0, %v2541
        %v2543 = vpop.f32.mrb[0].mxu0
        %2544 = vdwg.mxu0
        %v2546 = vsel %vm2463, %v2451, 0
        %v2549 = vsel %vm2463, %v2452, 0
        %2551 = vmatprep.subr.mxu0 0.0
        %2552 = vmatpush1.msra.mxu0 %v2441
        %2553 = vmatprep.subr.mxu0 0.0
        %2554 = vmatpush1.msra.mxu0 %v2447
        %2555 = vmatprep.subr.mxu0 0.0
        %2556 = vmatpush1.msra.mxu0 0.0
        %2557 = vmatprep.subr.mxu0 0.0
        %2558 = vmatpush1.msra.mxu0 0.0
        %2559 = vmatprep.subr.mxu0 0.0
        %2560 = vmatpush1.msra.mxu0 0.0
        %2561 = vmatprep.subr.mxu0 0.0
        %2562 = vmatpush1.msra.mxu0 0.0
        %2563 = vmatprep.subr.mxu0 0.0
        %2564 = vmatpush1.msra.mxu0 0.0
        %2565 = vmatprep.subr.mxu0 0.0
        %2566 = vmatpush1.msra.mxu0 0.0
        %2567 = vmatprep.subr.mxu0 0.0
        %2568 = vmatpush1.msra.mxu0 0.0
        %2569 = vmatprep.subr.mxu0 0.0
        %2570 = vmatpush1.msra.mxu0 0.0
        %2571 = vmatprep.subr.mxu0 0.0
        %2572 = vmatpush1.msra.mxu0 0.0
        %2573 = vmatprep.subr.mxu0 0.0
        %2574 = vmatpush1.msra.mxu0 0.0
        %2575 = vmatprep.subr.mxu0 0.0
        %2576 = vmatpush1.msra.mxu0 0.0
        %2577 = vmatprep.subr.mxu0 0.0
        %2578 = vmatpush1.msra.mxu0 0.0
        %2579 = vmatprep.subr.mxu0 0.0
        %2580 = vmatpush1.msra.mxu0 0.0
        %2581 = vmatprep.subr.mxu0 0.0
        %2582 = vmatpush1.msra.mxu0 0.0
        %2583 = vmatprep.subr.mxu0 0.0
        %2584 = vmatpush1.msra.mxu0 0.0
        %2585 = vmatprep.subr.mxu0 0.0
        %2586 = vmatpush1.msra.mxu0 0.0
        %2587 = vmatprep.subr.mxu0 0.0
        %2588 = vmatpush1.msra.mxu0 0.0
        %2589 = vmatprep.subr.mxu0 0.0
        %2590 = vmatpush1.msra.mxu0 0.0
        %2591 = vmatprep.subr.mxu0 0.0
        %2592 = vmatpush1.msra.mxu0 0.0
        %2593 = vmatprep.subr.mxu0 0.0
        %2594 = vmatpush1.msra.mxu0 0.0
        %2595 = vmatprep.subr.mxu0 0.0
        %2596 = vmatpush1.msra.mxu0 0.0
        %2597 = vmatprep.subr.mxu0 0.0
        %2598 = vmatpush1.msra.mxu0 0.0
        %2599 = vmatprep.subr.mxu0 0.0
        %2600 = vmatpush1.msra.mxu0 0.0
        %2601 = vmatprep.subr.mxu0 0.0
        %2602 = vmatpush1.msra.mxu0 0.0
        %2603 = vmatprep.subr.mxu0 0.0
        %2604 = vmatpush1.msra.mxu0 0.0
        %2605 = vmatprep.subr.mxu0 0.0
        %2606 = vmatpush1.msra.mxu0 0.0
        %2607 = vmatprep.subr.mxu0 0.0
        %2608 = vmatpush1.msra.mxu0 0.0
        %2609 = vmatprep.subr.mxu0 0.0
        %2610 = vmatpush1.msra.mxu0 0.0
        %2611 = vmatprep.subr.mxu0 0.0
        %2612 = vmatpush1.msra.mxu0 0.0
        %2613 = vmatprep.subr.mxu0 0.0
        %2614 = vmatpush1.msra.mxu0 0.0
        %2615 = vmatprep.mubr.f32.mxu0 0.0
        %2616 = vmatmul.mubr.f32.gmra.mrb[0].mxu0 %v2546
        %v2617 = vpop.f32.mrb[0].mxu0
        %v2618 = vadd.f32 %v2537, %v2617
        %v2619 = vpop.f32.mrb[0].mxu0
        %2620 = vmatprep.mubr.f32.mxu0 0.0
        %2621 = vmatmul.mubr.f32.gmra.mrb[0].mxu0 %v2549
        %v2622 = vpop.f32.mrb[0].mxu0
        %v2623 = vadd.f32 %v2542, %v2622
        %v2624 = vpop.f32.mrb[0].mxu0
        %2625 = vdwg.mxu0
        %v2626 = vld [vmem:[%s3 + $0x20] sm:$0xff]
        %v2627 = vld [vmem:[%s3 + $0x28] sm:$0xff]
        %2628 = vrot.lane.b32.xlu0 %v2441, 64
        %v2629 = vpop.permute.xlu0 %2628
        %2630 = vrot.lane.b32.xlu0 %v2447, 64
        %v2631 = vpop.permute.xlu0 %2630
        %v2635 = vsel %vm2463, %v2626, 0
        %v2638 = vsel %vm2463, %v2627, 0
        %2640 = vmatprep.subr.mxu0 0.0
        %2641 = vmatpush1.msra.mxu0 %v2629
        %2642 = vmatprep.subr.mxu0 0.0
        %2643 = vmatpush1.msra.mxu0 %v2631
        %2644 = vmatprep.subr.mxu0 0.0
        %2645 = vmatpush1.msra.mxu0 0.0
        %2646 = vmatprep.subr.mxu0 0.0
        %2647 = vmatpush1.msra.mxu0 0.0
        %2648 = vmatprep.subr.mxu0 0.0
        %2649 = vmatpush1.msra.mxu0 0.0
        %2650 = vmatprep.subr.mxu0 0.0
        %2651 = vmatpush1.msra.mxu0 0.0
        %2652 = vmatprep.subr.mxu0 0.0
        %2653 = vmatpush1.msra.mxu0 0.0
        %2654 = vmatprep.subr.mxu0 0.0
        %2655 = vmatpush1.msra.mxu0 0.0
        %2656 = vmatprep.subr.mxu0 0.0
        %2657 = vmatpush1.msra.mxu0 0.0
        %2658 = vmatprep.subr.mxu0 0.0
        %2659 = vmatpush1.msra.mxu0 0.0
        %2660 = vmatprep.subr.mxu0 0.0
        %2661 = vmatpush1.msra.mxu0 0.0
        %2662 = vmatprep.subr.mxu0 0.0
        %2663 = vmatpush1.msra.mxu0 0.0
        %2664 = vmatprep.subr.mxu0 0.0
        %2665 = vmatpush1.msra.mxu0 0.0
        %2666 = vmatprep.subr.mxu0 0.0
        %2667 = vmatpush1.msra.mxu0 0.0
        %2668 = vmatprep.subr.mxu0 0.0
        %2669 = vmatpush1.msra.mxu0 0.0
        %2670 = vmatprep.subr.mxu0 0.0
        %2671 = vmatpush1.msra.mxu0 0.0
        %2672 = vmatprep.subr.mxu0 0.0
        %2673 = vmatpush1.msra.mxu0 0.0
        %2674 = vmatprep.subr.mxu0 0.0
        %2675 = vmatpush1.msra.mxu0 0.0
        %2676 = vmatprep.subr.mxu0 0.0
        %2677 = vmatpush1.msra.mxu0 0.0
        %2678 = vmatprep.subr.mxu0 0.0
        %2679 = vmatpush1.msra.mxu0 0.0
        %2680 = vmatprep.subr.mxu0 0.0
        %2681 = vmatpush1.msra.mxu0 0.0
        %2682 = vmatprep.subr.mxu0 0.0
        %2683 = vmatpush1.msra.mxu0 0.0
        %2684 = vmatprep.subr.mxu0 0.0
        %2685 = vmatpush1.msra.mxu0 0.0
        %2686 = vmatprep.subr.mxu0 0.0
        %2687 = vmatpush1.msra.mxu0 0.0
        %2688 = vmatprep.subr.mxu0 0.0
        %2689 = vmatpush1.msra.mxu0 0.0
        %2690 = vmatprep.subr.mxu0 0.0
        %2691 = vmatpush1.msra.mxu0 0.0
        %2692 = vmatprep.subr.mxu0 0.0
        %2693 = vmatpush1.msra.mxu0 0.0
        %2694 = vmatprep.subr.mxu0 0.0
        %2695 = vmatpush1.msra.mxu0 0.0
        %2696 = vmatprep.subr.mxu0 0.0
        %2697 = vmatpush1.msra.mxu0 0.0
        %2698 = vmatprep.subr.mxu0 0.0
        %2699 = vmatpush1.msra.mxu0 0.0
        %2700 = vmatprep.subr.mxu0 0.0
        %2701 = vmatpush1.msra.mxu0 0.0
        %2702 = vmatprep.subr.mxu0 0.0
        %2703 = vmatpush1.msra.mxu0 0.0
        %2704 = vmatprep.mubr.f32.mxu0 0.0
        %2705 = vmatmul.mubr.f32.gmra.mrb[0].mxu0 %v2635
        %v2706 = vpop.f32.mrb[0].mxu0
        %v2707 = vadd.f32 0.0, %v2706
        %v2708 = vpop.f32.mrb[0].mxu0
        %2709 = vmatprep.mubr.f32.mxu0 0.0
        %2710 = vmatmul.mubr.f32.gmra.mrb[0].mxu0 %v2638
        %v2711 = vpop.f32.mrb[0].mxu0
        %v2712 = vadd.f32 0.0, %v2711
        %v2713 = vpop.f32.mrb[0].mxu0
        %2714 = vdwg.mxu0
        %v2715 = vadd.f32 %v2618, %v2707
        %v2716 = vadd.f32 %v2623, %v2712
        %v2717 = vld [vmem:[%s3 + $0x30] sm:$0xff]
        %v2718 = vld [vmem:[%s3 + $0x38] sm:$0xff]
        %2719 = vrot.lane.b32.xlu0 %v2441, 32
        %v2720 = vpop.permute.xlu0 %2719
        %2721 = vrot.lane.b32.xlu0 %v2447, 32
        %v2722 = vpop.permute.xlu0 %2721
        %v2726 = vsel %vm2463, %v2717, 0
        %v2729 = vsel %vm2463, %v2718, 0
        %2731 = vmatprep.subr.mxu0 0.0
        %2732 = vmatpush1.msra.mxu0 %v2720
        %2733 = vmatprep.subr.mxu0 0.0
        %2734 = vmatpush1.msra.mxu0 %v2722
        %2735 = vmatprep.subr.mxu0 0.0
        %2736 = vmatpush1.msra.mxu0 0.0
        %2737 = vmatprep.subr.mxu0 0.0
        %2738 = vmatpush1.msra.mxu0 0.0
        %2739 = vmatprep.subr.mxu0 0.0
        %2740 = vmatpush1.msra.mxu0 0.0
        %2741 = vmatprep.subr.mxu0 0.0
        %2742 = vmatpush1.msra.mxu0 0.0
        %2743 = vmatprep.subr.mxu0 0.0
        %2744 = vmatpush1.msra.mxu0 0.0
        %2745 = vmatprep.subr.mxu0 0.0
        %2746 = vmatpush1.msra.mxu0 0.0
        %2747 = vmatprep.subr.mxu0 0.0
        %2748 = vmatpush1.msra.mxu0 0.0
        %2749 = vmatprep.subr.mxu0 0.0
        %2750 = vmatpush1.msra.mxu0 0.0
        %2751 = vmatprep.subr.mxu0 0.0
        %2752 = vmatpush1.msra.mxu0 0.0
        %2753 = vmatprep.subr.mxu0 0.0
        %2754 = vmatpush1.msra.mxu0 0.0
        %2755 = vmatprep.subr.mxu0 0.0
        %2756 = vmatpush1.msra.mxu0 0.0
        %2757 = vmatprep.subr.mxu0 0.0
        %2758 = vmatpush1.msra.mxu0 0.0
        %2759 = vmatprep.subr.mxu0 0.0
        %2760 = vmatpush1.msra.mxu0 0.0
        %2761 = vmatprep.subr.mxu0 0.0
        %2762 = vmatpush1.msra.mxu0 0.0
        %2763 = vmatprep.subr.mxu0 0.0
        %2764 = vmatpush1.msra.mxu0 0.0
        %2765 = vmatprep.subr.mxu0 0.0
        %2766 = vmatpush1.msra.mxu0 0.0
        %2767 = vmatprep.subr.mxu0 0.0
        %2768 = vmatpush1.msra.mxu0 0.0
        %2769 = vmatprep.subr.mxu0 0.0
        %2770 = vmatpush1.msra.mxu0 0.0
        %2771 = vmatprep.subr.mxu0 0.0
        %2772 = vmatpush1.msra.mxu0 0.0
        %2773 = vmatprep.subr.mxu0 0.0
        %2774 = vmatpush1.msra.mxu0 0.0
        %2775 = vmatprep.subr.mxu0 0.0
        %2776 = vmatpush1.msra.mxu0 0.0
        %2777 = vmatprep.subr.mxu0 0.0
        %2778 = vmatpush1.msra.mxu0 0.0
        %2779 = vmatprep.subr.mxu0 0.0
        %2780 = vmatpush1.msra.mxu0 0.0
        %2781 = vmatprep.subr.mxu0 0.0
        %2782 = vmatpush1.msra.mxu0 0.0
        %2783 = vmatprep.subr.mxu0 0.0
        %2784 = vmatpush1.msra.mxu0 0.0
        %2785 = vmatprep.subr.mxu0 0.0
        %2786 = vmatpush1.msra.mxu0 0.0
        %2787 = vmatprep.subr.mxu0 0.0
        %2788 = vmatpush1.msra.mxu0 0.0
        %2789 = vmatprep.subr.mxu0 0.0
        %2790 = vmatpush1.msra.mxu0 0.0
        %2791 = vmatprep.subr.mxu0 0.0
        %2792 = vmatpush1.msra.mxu0 0.0
        %2793 = vmatprep.subr.mxu0 0.0
        %2794 = vmatpush1.msra.mxu0 0.0
        %2795 = vmatprep.mubr.f32.mxu0 0.0
        %2796 = vmatmul.mubr.f32.gmra.mrb[0].mxu0 %v2726
        %v2797 = vpop.f32.mrb[0].mxu0
        %v2798 = vadd.f32 0.0, %v2797
        %v2799 = vpop.f32.mrb[0].mxu0
        %2800 = vmatprep.mubr.f32.mxu0 0.0
        %2801 = vmatmul.mubr.f32.gmra.mrb[0].mxu0 %v2729
        %v2802 = vpop.f32.mrb[0].mxu0
        %v2803 = vadd.f32 0.0, %v2802
        %v2804 = vpop.f32.mrb[0].mxu0
        %2805 = vdwg.mxu0
        %v2806 = vadd.f32 %v2715, %v2798
        %v2807 = vadd.f32 %v2716, %v2803
        %v2808 = vld [vmem:[%s3 + $0x40] sm:$0xff]
        %v2809 = vld [vmem:[%s3 + $0x48] sm:$0xff]
        %v2811 = vsel %vm2463, %v2808, 0
        %v2814 = vsel %vm2463, %v2809, 0
        %2816 = vmatprep.subr.mxu0 0.0
        %2817 = vmatpush1.msra.mxu0 %v2443
        %2818 = vmatprep.subr.mxu0 0.0
        %2819 = vmatpush1.msra.mxu0 %v2449
        %2820 = vmatprep.subr.mxu0 0.0
        %2821 = vmatpush1.msra.mxu0 0.0
        %2822 = vmatprep.subr.mxu0 0.0
        %2823 = vmatpush1.msra.mxu0 0.0
        %2824 = vmatprep.subr.mxu0 0.0
        %2825 = vmatpush1.msra.mxu0 0.0
        %2826 = vmatprep.subr.mxu0 0.0
        %2827 = vmatpush1.msra.mxu0 0.0
        %2828 = vmatprep.subr.mxu0 0.0
        %2829 = vmatpush1.msra.mxu0 0.0
        %2830 = vmatprep.subr.mxu0 0.0
        %2831 = vmatpush1.msra.mxu0 0.0
        %2832 = vmatprep.subr.mxu0 0.0
        %2833 = vmatpush1.msra.mxu0 0.0
        %2834 = vmatprep.subr.mxu0 0.0
        %2835 = vmatpush1.msra.mxu0 0.0
        %2836 = vmatprep.subr.mxu0 0.0
        %2837 = vmatpush1.msra.mxu0 0.0
        %2838 = vmatprep.subr.mxu0 0.0
        %2839 = vmatpush1.msra.mxu0 0.0
        %2840 = vmatprep.subr.mxu0 0.0
        %2841 = vmatpush1.msra.mxu0 0.0
        %2842 = vmatprep.subr.mxu0 0.0
        %2843 = vmatpush1.msra.mxu0 0.0
        %2844 = vmatprep.subr.mxu0 0.0
        %2845 = vmatpush1.msra.mxu0 0.0
        %2846 = vmatprep.subr.mxu0 0.0
        %2847 = vmatpush1.msra.mxu0 0.0
        %2848 = vmatprep.subr.mxu0 0.0
        %2849 = vmatpush1.msra.mxu0 0.0
        %2850 = vmatprep.subr.mxu0 0.0
        %2851 = vmatpush1.msra.mxu0 0.0
        %2852 = vmatprep.subr.mxu0 0.0
        %2853 = vmatpush1.msra.mxu0 0.0
        %2854 = vmatprep.subr.mxu0 0.0
        %2855 = vmatpush1.msra.mxu0 0.0
        %2856 = vmatprep.subr.mxu0 0.0
        %2857 = vmatpush1.msra.mxu0 0.0
        %2858 = vmatprep.subr.mxu0 0.0
        %2859 = vmatpush1.msra.mxu0 0.0
        %2860 = vmatprep.subr.mxu0 0.0
        %2861 = vmatpush1.msra.mxu0 0.0
        %2862 = vmatprep.subr.mxu0 0.0
        %2863 = vmatpush1.msra.mxu0 0.0
        %2864 = vmatprep.subr.mxu0 0.0
        %2865 = vmatpush1.msra.mxu0 0.0
        %2866 = vmatprep.subr.mxu0 0.0
        %2867 = vmatpush1.msra.mxu0 0.0
        %2868 = vmatprep.subr.mxu0 0.0
        %2869 = vmatpush1.msra.mxu0 0.0
        %2870 = vmatprep.subr.mxu0 0.0
        %2871 = vmatpush1.msra.mxu0 0.0
        %2872 = vmatprep.subr.mxu0 0.0
        %2873 = vmatpush1.msra.mxu0 0.0
        %2874 = vmatprep.subr.mxu0 0.0
        %2875 = vmatpush1.msra.mxu0 0.0
        %2876 = vmatprep.subr.mxu0 0.0
        %2877 = vmatpush1.msra.mxu0 0.0
        %2878 = vmatprep.subr.mxu0 0.0
        %2879 = vmatpush1.msra.mxu0 0.0
        %2880 = vmatprep.mubr.f32.mxu0 0.0
        %2881 = vmatmul.mubr.f32.gmra.mrb[0].mxu0 %v2811
        %v2882 = vpop.f32.mrb[0].mxu0
        %v2883 = vadd.f32 0.0, %v2882
        %v2884 = vpop.f32.mrb[0].mxu0
        %2885 = vmatprep.mubr.f32.mxu0 0.0
        %2886 = vmatmul.mubr.f32.gmra.mrb[0].mxu0 %v2814
        %v2887 = vpop.f32.mrb[0].mxu0
        %v2888 = vadd.f32 0.0, %v2887
        %v2889 = vpop.f32.mrb[0].mxu0
        %2890 = vdwg.mxu0
        %v2891 = vadd.f32 %v2806, %v2883
        %v2892 = vadd.f32 %v2807, %v2888
        %s2893 = sld [smem:[#allocation2 + $0x10]]
        %v2894 = vstv %s2893
        %v2895 = vadd.f32 %v2891, %v2894
        %v2896 = vadd.f32 %v2892, %v2894
        %v2897 = vsub.f32 0.0, %v2895
        %v2898 = vsub.f32 0.0, %v2896
        %v2899 = vmul.f32 %v2897, 1.442695
        %v2900 = vpow.pop %v2899
        %v2901 = vmul.f32 %v2898, 1.442695
        %v2902 = vpow.pop %v2901
        %v2903 = vadd.f32 %v2900, 1.0
        %v2904 = vadd.f32 %v2902, 1.0
        %v2905 = vrcp.pop %v2903
        %v2906 = vmul.f32 1.0, %v2905
        %v2907 = vrcp.pop %v2904
        %v2908 = vmul.f32 1.0, %v2907
        %s2909 = sld [smem:[#allocation2 + $0xc]]
        %v2910 = vstv %s2909
        %v2911 = vmul.f32 %v2295, %v2910
        %v2912 = vmul.f32 %v2296, %v2910
        %s2913 = sld [smem:[#allocation2 + $0xd]]
        %v2914 = vstv %s2913
        %v2915 = vmul.f32 %v2312, %v2914
        %v2916 = vmul.f32 %v2313, %v2914
        %v2917 = vadd.f32 %v2911, %v2915
        %v2918 = vadd.f32 %v2912, %v2916
        %s2919 = sld [smem:[#allocation2 + $0xe]]
        %v2920 = vstv %s2919
        %v2921 = vmul.f32 %v2329, %v2920
        %v2922 = vmul.f32 %v2330, %v2920
        %v2923 = vadd.f32 %v2917, %v2921
        %v2924 = vadd.f32 %v2918, %v2922
        %v2925 = vmul.f32 %v2923, %v2906
        %v2926 = vmul.f32 %v2924, %v2908
        %s2927 = sld [smem:[#allocation2 + $0xf]]
        %v2928 = vstv %s2927
        %v2929 = vadd.f32 %v2925, %v2928
        %v2930 = vadd.f32 %v2926, %v2928
        %v2931 = vld [vmem:[%s864] sm:$0xff]
        %v2932 = vld [vmem:[%s864 + $0x8] sm:$0xff]
        %v2933 = vld [vmem:[%s864 + $0x10] sm:$0xff]
        %v2934 = vld [vmem:[%s864 + $0x18] sm:$0xff]
        %v2935 = vld [vmem:[%s864 + $0x20] sm:$0xff]
        %v2936 = vld [vmem:[%s864 + $0x28] sm:$0xff]
        %v2937 = vld [vmem:[%s864 + $0x30] sm:$0xff]
        %v2938 = vld [vmem:[%s864 + $0x38] sm:$0xff]
        %vm2939 = vcmp.lt.s32.totalorder %v875, 16
        %v2940 = vsel %vm2939, 1, 0
        %v2941 = vcvt.s32.f32 %v2940
        %v2942 = vsub.f32 1.0, %v2941
        %v2943 = vmul.f32 %v2931, %v2941
        %v2944 = vmul.f32 %v2932, %v2941
        %v2945 = vmul.f32 %v2933, %v2941
        %v2946 = vmul.f32 %v2934, %v2941
        %v2947 = vmul.f32 %v2935, %v2941
        %v2948 = vmul.f32 %v2936, %v2941
        %v2949 = vmul.f32 %v2937, %v2941
        %v2950 = vmul.f32 %v2938, %v2941
        %v2951 = vmul.f32 %v2931, %v2942
        %v2952 = vmul.f32 %v2932, %v2942
        %v2953 = vmul.f32 %v2933, %v2942
        %v2954 = vmul.f32 %v2934, %v2942
        %v2955 = vmul.f32 %v2935, %v2942
        %v2956 = vmul.f32 %v2936, %v2942
        %v2957 = vmul.f32 %v2937, %v2942
        %v2958 = vmul.f32 %v2938, %v2942
        %2960 = vrot.lane.b32.xlu0 %v2941, 32
        %v2961 = vpop.permute.xlu0 %2960
        %v2963 = vmul.f32 %v2931, %v2961
        %v2964 = vmul.f32 %v2932, %v2961
        %v2965 = vmul.f32 %v2933, %v2961
        %v2966 = vmul.f32 %v2934, %v2961
        %v2967 = vmul.f32 %v2935, %v2961
        %v2968 = vmul.f32 %v2936, %v2961
        %v2969 = vmul.f32 %v2937, %v2961
        %v2970 = vmul.f32 %v2938, %v2961
        %2972 = vrot.lane.b32.xlu0 %v2942, 32
        %v2973 = vpop.permute.xlu0 %2972
        %v2975 = vmul.f32 %v2931, %v2973
        %v2976 = vmul.f32 %v2932, %v2973
        %v2977 = vmul.f32 %v2933, %v2973
        %v2978 = vmul.f32 %v2934, %v2973
        %v2979 = vmul.f32 %v2935, %v2973
        %v2980 = vmul.f32 %v2936, %v2973
        %v2981 = vmul.f32 %v2937, %v2973
        %v2982 = vmul.f32 %v2938, %v2973
        %v2983 = vld [vmem:[%s867] sm:$0x1]
        %vm2984 = vcmp.gt.f32.partialorder %v2983, 0.0
        %v2985 = vsel %vm2984, 0.0, -1e+09
        %v2987 = vlaneseq
        %v2988 = vshrl.u32 %v2987, 7
        %v2989 = vsub.s32 0, %v2988
        %v2990 = vrot.slane %v2985, %v2989
        %2991 = vrot.lane.b32.xlu0 %v2990, 64
        %v2992 = vpop.permute.xlu0 %2991
        %v2994 = vsel %vm2367, %v2985, %v2992
        %v2995 = vld [vmem:[%s8] sm:$0xff]
        %v2996 = vld [vmem:[%s8 + $0x8] sm:$0xff]
        %v2997 = vld [vmem:[%s8 + $0x10] sm:$0xff]
        %v2998 = vld [vmem:[%s8 + $0x18] sm:$0xff]
        %v3000 = vsel %vm2195, %v871, 0
        %v3003 = vsel %vm2195, %v872, 0
        %3005 = vmatprep.subr.mxu0 0.0
        %3006 = vmatpush1.msra.mxu0 %v2995
        %3007 = vmatprep.subr.mxu0 0.0
        %3008 = vmatpush1.msra.mxu0 %v2996
        %3009 = vmatprep.subr.mxu0 0.0
        %3010 = vmatpush1.msra.mxu0 %v2997
        %3011 = vmatprep.subr.mxu0 0.0
        %3012 = vmatpush1.msra.mxu0 %v2998
        %3013 = vmatprep.subr.mxu0 0.0
        %3014 = vmatpush1.msra.mxu0 0.0
        %3015 = vmatprep.subr.mxu0 0.0
        %3016 = vmatpush1.msra.mxu0 0.0
        %3017 = vmatprep.subr.mxu0 0.0
        %3018 = vmatpush1.msra.mxu0 0.0
        %3019 = vmatprep.subr.mxu0 0.0
        %3020 = vmatpush1.msra.mxu0 0.0
        %3021 = vmatprep.subr.mxu0 0.0
        %3022 = vmatpush1.msra.mxu0 0.0
        %3023 = vmatprep.subr.mxu0 0.0
        %3024 = vmatpush1.msra.mxu0 0.0
        %3025 = vmatprep.subr.mxu0 0.0
        %3026 = vmatpush1.msra.mxu0 0.0
        %3027 = vmatprep.subr.mxu0 0.0
        %3028 = vmatpush1.msra.mxu0 0.0
        %3029 = vmatprep.subr.mxu0 0.0
        %3030 = vmatpush1.msra.mxu0 0.0
        %3031 = vmatprep.subr.mxu0 0.0
        %3032 = vmatpush1.msra.mxu0 0.0
        %3033 = vmatprep.subr.mxu0 0.0
        %3034 = vmatpush1.msra.mxu0 0.0
        %3035 = vmatprep.subr.mxu0 0.0
        %3036 = vmatpush1.msra.mxu0 0.0
        %3037 = vmatprep.subr.mxu0 0.0
        %3038 = vmatpush1.msra.mxu0 0.0
        %3039 = vmatprep.subr.mxu0 0.0
        %3040 = vmatpush1.msra.mxu0 0.0
        %3041 = vmatprep.subr.mxu0 0.0
        %3042 = vmatpush1.msra.mxu0 0.0
        %3043 = vmatprep.subr.mxu0 0.0
        %3044 = vmatpush1.msra.mxu0 0.0
        %3045 = vmatprep.subr.mxu0 0.0
        %3046 = vmatpush1.msra.mxu0 0.0
        %3047 = vmatprep.subr.mxu0 0.0
        %3048 = vmatpush1.msra.mxu0 0.0
        %3049 = vmatprep.subr.mxu0 0.0
        %3050 = vmatpush1.msra.mxu0 0.0
        %3051 = vmatprep.subr.mxu0 0.0
        %3052 = vmatpush1.msra.mxu0 0.0
        %3053 = vmatprep.subr.mxu0 0.0
        %3054 = vmatpush1.msra.mxu0 0.0
        %3055 = vmatprep.subr.mxu0 0.0
        %3056 = vmatpush1.msra.mxu0 0.0
        %3057 = vmatprep.subr.mxu0 0.0
        %3058 = vmatpush1.msra.mxu0 0.0
        %3059 = vmatprep.subr.mxu0 0.0
        %3060 = vmatpush1.msra.mxu0 0.0
        %3061 = vmatprep.subr.mxu0 0.0
        %3062 = vmatpush1.msra.mxu0 0.0
        %3063 = vmatprep.subr.mxu0 0.0
        %3064 = vmatpush1.msra.mxu0 0.0
        %3065 = vmatprep.subr.mxu0 0.0
        %3066 = vmatpush1.msra.mxu0 0.0
        %3067 = vmatprep.subr.mxu0 0.0
        %3068 = vmatpush1.msra.mxu0 0.0
        %3069 = vmatprep.mubr.f32.mxu0 0.0
        %3070 = vmatmul.mubr.f32.gmra.mrb[0].mxu0 %v3000
        %v3071 = vpop.f32.mrb[0].mxu0
        %v3072 = vadd.f32 0.0, %v3071
        %v3073 = vpop.f32.mrb[0].mxu0
        %3074 = vmatprep.mubr.f32.mxu0 0.0
        %3075 = vmatmul.mubr.f32.gmra.mrb[0].mxu0 %v3003
        %v3076 = vpop.f32.mrb[0].mxu0
        %v3077 = vadd.f32 0.0, %v3076
        %v3078 = vpop.f32.mrb[0].mxu0
        %3079 = vdwg.mxu0
        %v3081 = vsel %vm2195, %v3072, 0
        %v3084 = vsel %vm2195, %v3077, 0
        %v3087 = vsel %vm2195, %v2943, 0
        %v3090 = vsel %vm2195, %v2944, 0
        %v3093 = vsel %vm2195, %v2945, 0
        %v3096 = vsel %vm2195, %v2946, 0
        %v3099 = vsel %vm2195, %v2947, 0
        %v3102 = vsel %vm2195, %v2948, 0
        %v3105 = vsel %vm2195, %v2949, 0
        %v3108 = vsel %vm2195, %v2950, 0
        %v3111 = vsel %vm2195, %v2951, 0
        %v3114 = vsel %vm2195, %v2952, 0
        %v3117 = vsel %vm2195, %v2953, 0
        %v3120 = vsel %vm2195, %v2954, 0
        %v3123 = vsel %vm2195, %v2955, 0
        %v3126 = vsel %vm2195, %v2956, 0
        %v3129 = vsel %vm2195, %v2957, 0
        %v3132 = vsel %vm2195, %v2958, 0
        %3134 = vmatprep.subr.mxu0 0.0
        %3135 = vmatpush1.xpose.msra.mxu0 %v3087
        %3136 = vmatprep.subr.mxu0 0.0
        %3137 = vmatpush1.xpose.msra.mxu0 %v3090
        %3138 = vmatprep.subr.mxu0 0.0
        %3139 = vmatpush1.xpose.msra.mxu0 %v3093
        %3140 = vmatprep.subr.mxu0 0.0
        %3141 = vmatpush1.xpose.msra.mxu0 %v3096
        %3142 = vmatprep.subr.mxu0 0.0
        %3143 = vmatpush1.xpose.msra.mxu0 %v3099
        %3144 = vmatprep.subr.mxu0 0.0
        %3145 = vmatpush1.xpose.msra.mxu0 %v3102
        %3146 = vmatprep.subr.mxu0 0.0
        %3147 = vmatpush1.xpose.msra.mxu0 %v3105
        %3148 = vmatprep.subr.mxu0 0.0
        %3149 = vmatpush1.xpose.msra.mxu0 %v3108
        %3150 = vmatprep.subr.mxu0 0.0
        %3151 = vmatpush1.xpose.msra.mxu0 %v3111
        %3152 = vmatprep.subr.mxu0 0.0
        %3153 = vmatpush1.xpose.msra.mxu0 %v3114
        %3154 = vmatprep.subr.mxu0 0.0
        %3155 = vmatpush1.xpose.msra.mxu0 %v3117
        %3156 = vmatprep.subr.mxu0 0.0
        %3157 = vmatpush1.xpose.msra.mxu0 %v3120
        %3158 = vmatprep.subr.mxu0 0.0
        %3159 = vmatpush1.xpose.msra.mxu0 %v3123
        %3160 = vmatprep.subr.mxu0 0.0
        %3161 = vmatpush1.xpose.msra.mxu0 %v3126
        %3162 = vmatprep.subr.mxu0 0.0
        %3163 = vmatpush1.xpose.msra.mxu0 %v3129
        %3164 = vmatprep.subr.mxu0 0.0
        %3165 = vmatpush1.xpose.msra.mxu0 %v3132
        %3166 = vmatprep.subr.mxu0 0.0
        %3167 = vmatpush1.xpose.msra.mxu0 0.0
        %3168 = vmatprep.subr.mxu0 0.0
        %3169 = vmatpush1.xpose.msra.mxu0 0.0
        %3170 = vmatprep.subr.mxu0 0.0
        %3171 = vmatpush1.xpose.msra.mxu0 0.0
        %3172 = vmatprep.subr.mxu0 0.0
        %3173 = vmatpush1.xpose.msra.mxu0 0.0
        %3174 = vmatprep.subr.mxu0 0.0
        %3175 = vmatpush1.xpose.msra.mxu0 0.0
        %3176 = vmatprep.subr.mxu0 0.0
        %3177 = vmatpush1.xpose.msra.mxu0 0.0
        %3178 = vmatprep.subr.mxu0 0.0
        %3179 = vmatpush1.xpose.msra.mxu0 0.0
        %3180 = vmatprep.subr.mxu0 0.0
        %3181 = vmatpush1.xpose.msra.mxu0 0.0
        %3182 = vmatprep.subr.mxu0 0.0
        %3183 = vmatpush1.xpose.msra.mxu0 0.0
        %3184 = vmatprep.subr.mxu0 0.0
        %3185 = vmatpush1.xpose.msra.mxu0 0.0
        %3186 = vmatprep.subr.mxu0 0.0
        %3187 = vmatpush1.xpose.msra.mxu0 0.0
        %3188 = vmatprep.subr.mxu0 0.0
        %3189 = vmatpush1.xpose.msra.mxu0 0.0
        %3190 = vmatprep.subr.mxu0 0.0
        %3191 = vmatpush1.xpose.msra.mxu0 0.0
        %3192 = vmatprep.subr.mxu0 0.0
        %3193 = vmatpush1.xpose.msra.mxu0 0.0
        %3194 = vmatprep.subr.mxu0 0.0
        %3195 = vmatpush1.xpose.msra.mxu0 0.0
        %3196 = vmatprep.subr.mxu0 0.0
        %3197 = vmatpush1.xpose.msra.mxu0 0.0
        %3198 = vmatprep.mubr.f32.mxu0 0.0
        %3199 = vmatmul.mubr.f32.gmra.mrb[0].mxu0 %v3081
        %v3200 = vpop.f32.mrb[0].mxu0
        %v3201 = vadd.f32 0.0, %v3200
        %v3202 = vpop.f32.mrb[0].mxu0
        %3203 = vmatprep.mubr.f32.mxu0 0.0
        %3204 = vmatmul.mubr.f32.gmra.mrb[0].mxu0 %v3084
        %v3205 = vpop.f32.mrb[0].mxu0
        %v3206 = vadd.f32 0.0, %v3205
        %v3207 = vpop.f32.mrb[0].mxu0
        %3208 = vdwg.mxu0
        %v3209 = vmul.f32 %v3201, 0.25
        %v3210 = vmul.f32 %v3206, 0.25
        %v3211 = vlaneseq
        %v3212 = vshrl.u32 %v3211, 7
        %v3213 = vsub.s32 0, %v3212
        %v3214 = vrot.slane %v2994, %v3213
        %v3215 = vadd.f32 %v3209, %v3214
        %v3216 = vadd.f32 %v3210, %v3214
        %vm3217 = vcmp.lt.s32.totalorder %v875, 64
        %v3218 = vsel %vm3217, 1, 0
        %vm3219 = vcmp.eq.s32.totalorder %v3218, 1
        %v3220 = vsel %vm3219, %v3215, -1e+30
        %v3221 = vsel %vm3219, %v3216, -1e+30
        %3222 = vmax.xlane.f32.xlu0 %v3220
        %v3223 = vpop.xlane.xlu0 %3222
        %3224 = vmax.xlane.f32.xlu0 %v3221
        %v3225 = vpop.xlane.xlu0 %3224
        %v3226 = vsel %vm3219, -1e+30, %v3215
        %v3227 = vsel %vm3219, -1e+30, %v3216
        %3228 = vmax.xlane.f32.xlu0 %v3226
        %v3229 = vpop.xlane.xlu0 %3228
        %3230 = vmax.xlane.f32.xlu0 %v3227
        %v3231 = vpop.xlane.xlu0 %3230
        %v3232 = vsel %vm3219, %v3223, %v3229
        %v3233 = vsel %vm3219, %v3225, %v3231
        %v3234 = vsub.f32 %v3215, %v3232
        %v3235 = vsub.f32 %v3216, %v3233
        %v3236 = vmul.f32 %v3234, 1.442695
        %v3237 = vpow.pop %v3236
        %v3238 = vmul.f32 %v3235, 1.442695
        %v3239 = vpow.pop %v3238
        %v3240 = vsel %vm3219, %v3237, 0.0
        %v3241 = vsel %vm3219, %v3239, 0.0
        %3242 = vadd.xlane.f32.xlu0 %v3240
        %v3243 = vpop.xlane.xlu0 %3242
        %3244 = vadd.xlane.f32.xlu0 %v3241
        %v3245 = vpop.xlane.xlu0 %3244
        %v3246 = vsel %vm3219, 0.0, %v3237
        %v3247 = vsel %vm3219, 0.0, %v3239
        %3248 = vadd.xlane.f32.xlu0 %v3246
        %v3249 = vpop.xlane.xlu0 %3248
        %3250 = vadd.xlane.f32.xlu0 %v3247
        %v3251 = vpop.xlane.xlu0 %3250
        %v3252 = vsel %vm3219, %v3243, %v3249
        %v3253 = vsel %vm3219, %v3245, %v3251
        %v3254 = vrcp.pop %v3252
        %v3255 = vmul.f32 %v3237, %v3254
        %v3256 = vrcp.pop %v3253
        %v3257 = vmul.f32 %v3239, %v3256
        %3274 = vrot.lane.b32.xlu0 %v2963, 96
        %v3275 = vpop.permute.xlu0 %3274
        %3276 = vrot.lane.b32.xlu0 %v2964, 96
        %v3277 = vpop.permute.xlu0 %3276
        %3278 = vrot.lane.b32.xlu0 %v2965, 96
        %v3279 = vpop.permute.xlu0 %3278
        %3280 = vrot.lane.b32.xlu0 %v2966, 96
        %v3281 = vpop.permute.xlu0 %3280
        %3282 = vrot.lane.b32.xlu0 %v2967, 96
        %v3283 = vpop.permute.xlu0 %3282
        %3284 = vrot.lane.b32.xlu0 %v2968, 96
        %v3285 = vpop.permute.xlu0 %3284
        %3286 = vrot.lane.b32.xlu0 %v2969, 96
        %v3287 = vpop.permute.xlu0 %3286
        %3288 = vrot.lane.b32.xlu0 %v2970, 96
        %v3289 = vpop.permute.xlu0 %3288
        %3290 = vrot.lane.b32.xlu0 %v2975, 96
        %v3291 = vpop.permute.xlu0 %3290
        %3292 = vrot.lane.b32.xlu0 %v2976, 96
        %v3293 = vpop.permute.xlu0 %3292
        %3294 = vrot.lane.b32.xlu0 %v2977, 96
        %v3295 = vpop.permute.xlu0 %3294
        %3296 = vrot.lane.b32.xlu0 %v2978, 96
        %v3297 = vpop.permute.xlu0 %3296
        %3298 = vrot.lane.b32.xlu0 %v2979, 96
        %v3299 = vpop.permute.xlu0 %3298
        %3300 = vrot.lane.b32.xlu0 %v2980, 96
        %v3301 = vpop.permute.xlu0 %3300
        %3302 = vrot.lane.b32.xlu0 %v2981, 96
        %v3303 = vpop.permute.xlu0 %3302
        %3304 = vrot.lane.b32.xlu0 %v2982, 96
        %v3305 = vpop.permute.xlu0 %3304
        %3322 = vmatprep.subr.mxu0 0.0
        %3323 = vmatpush1.msra.mxu0 %v3275
        %3324 = vmatprep.subr.mxu0 0.0
        %3325 = vmatpush1.msra.mxu0 %v3277
        %3326 = vmatprep.subr.mxu0 0.0
        %3327 = vmatpush1.msra.mxu0 %v3279
        %3328 = vmatprep.subr.mxu0 0.0
        %3329 = vmatpush1.msra.mxu0 %v3281
        %3330 = vmatprep.subr.mxu0 0.0
        %3331 = vmatpush1.msra.mxu0 %v3283
        %3332 = vmatprep.subr.mxu0 0.0
        %3333 = vmatpush1.msra.mxu0 %v3285
        %3334 = vmatprep.subr.mxu0 0.0
        %3335 = vmatpush1.msra.mxu0 %v3287
        %3336 = vmatprep.subr.mxu0 0.0
        %3337 = vmatpush1.msra.mxu0 %v3289
        %3338 = vmatprep.subr.mxu0 0.0
        %3339 = vmatpush1.msra.mxu0 %v3291
        %3340 = vmatprep.subr.mxu0 0.0
        %3341 = vmatpush1.msra.mxu0 %v3293
        %3342 = vmatprep.subr.mxu0 0.0
        %3343 = vmatpush1.msra.mxu0 %v3295
        %3344 = vmatprep.subr.mxu0 0.0
        %3345 = vmatpush1.msra.mxu0 %v3297
        %3346 = vmatprep.subr.mxu0 0.0
        %3347 = vmatpush1.msra.mxu0 %v3299
        %3348 = vmatprep.subr.mxu0 0.0
        %3349 = vmatpush1.msra.mxu0 %v3301
        %3350 = vmatprep.subr.mxu0 0.0
        %3351 = vmatpush1.msra.mxu0 %v3303
        %3352 = vmatprep.subr.mxu0 0.0
        %3353 = vmatpush1.msra.mxu0 %v3305
        %3354 = vmatprep.subr.mxu0 0.0
        %3355 = vmatpush1.msra.mxu0 0.0
        %3356 = vmatprep.subr.mxu0 0.0
        %3357 = vmatpush1.msra.mxu0 0.0
        %3358 = vmatprep.subr.mxu0 0.0
        %3359 = vmatpush1.msra.mxu0 0.0
        %3360 = vmatprep.subr.mxu0 0.0
        %3361 = vmatpush1.msra.mxu0 0.0
        %3362 = vmatprep.subr.mxu0 0.0
        %3363 = vmatpush1.msra.mxu0 0.0
        %3364 = vmatprep.subr.mxu0 0.0
        %3365 = vmatpush1.msra.mxu0 0.0
        %3366 = vmatprep.subr.mxu0 0.0
        %3367 = vmatpush1.msra.mxu0 0.0
        %3368 = vmatprep.subr.mxu0 0.0
        %3369 = vmatpush1.msra.mxu0 0.0
        %3370 = vmatprep.subr.mxu0 0.0
        %3371 = vmatpush1.msra.mxu0 0.0
        %3372 = vmatprep.subr.mxu0 0.0
        %3373 = vmatpush1.msra.mxu0 0.0
        %3374 = vmatprep.subr.mxu0 0.0
        %3375 = vmatpush1.msra.mxu0 0.0
        %3376 = vmatprep.subr.mxu0 0.0
        %3377 = vmatpush1.msra.mxu0 0.0
        %3378 = vmatprep.subr.mxu0 0.0
        %3379 = vmatpush1.msra.mxu0 0.0
        %3380 = vmatprep.subr.mxu0 0.0
        %3381 = vmatpush1.msra.mxu0 0.0
        %3382 = vmatprep.subr.mxu0 0.0
        %3383 = vmatpush1.msra.mxu0 0.0
        %3384 = vmatprep.subr.mxu0 0.0
        %3385 = vmatpush1.msra.mxu0 0.0
        %3386 = vmatprep.mubr.f32.mxu0 0.0
        %3387 = vmatmul.mubr.f32.gmra.mrb[0].mxu0 %v3255
        %v3388 = vpop.f32.mrb[0].mxu0
        %v3389 = vadd.f32 0.0, %v3388
        %v3390 = vpop.f32.mrb[0].mxu0
        %3391 = vmatprep.mubr.f32.mxu0 0.0
        %3392 = vmatmul.mubr.f32.gmra.mrb[0].mxu0 %v3257
        %v3393 = vpop.f32.mrb[0].mxu0
        %v3394 = vadd.f32 0.0, %v3393
        %v3395 = vpop.f32.mrb[0].mxu0
        %3396 = vdwg.mxu0
        %v3397 = vld [vmem:[%s9] sm:$0xff]
        %v3398 = vld [vmem:[%s9 + $0x8] sm:$0xff]
        %v3399 = vld [vmem:[%s9 + $0x10] sm:$0xff]
        %v3400 = vld [vmem:[%s9 + $0x18] sm:$0xff]
        %v3402 = vsel %vm2195, %v3389, 0
        %v3405 = vsel %vm2195, %v3394, 0
        %3407 = vmatprep.subr.mxu0 0.0
        %3408 = vmatpush1.msra.mxu0 %v3397
        %3409 = vmatprep.subr.mxu0 0.0
        %3410 = vmatpush1.msra.mxu0 %v3398
        %3411 = vmatprep.subr.mxu0 0.0
        %3412 = vmatpush1.msra.mxu0 %v3399
        %3413 = vmatprep.subr.mxu0 0.0
        %3414 = vmatpush1.msra.mxu0 %v3400
        %3415 = vmatprep.subr.mxu0 0.0
        %3416 = vmatpush1.msra.mxu0 0.0
        %3417 = vmatprep.subr.mxu0 0.0
        %3418 = vmatpush1.msra.mxu0 0.0
        %3419 = vmatprep.subr.mxu0 0.0
        %3420 = vmatpush1.msra.mxu0 0.0
        %3421 = vmatprep.subr.mxu0 0.0
        %3422 = vmatpush1.msra.mxu0 0.0
        %3423 = vmatprep.subr.mxu0 0.0
        %3424 = vmatpush1.msra.mxu0 0.0
        %3425 = vmatprep.subr.mxu0 0.0
        %3426 = vmatpush1.msra.mxu0 0.0
        %3427 = vmatprep.subr.mxu0 0.0
        %3428 = vmatpush1.msra.mxu0 0.0
        %3429 = vmatprep.subr.mxu0 0.0
        %3430 = vmatpush1.msra.mxu0 0.0
        %3431 = vmatprep.subr.mxu0 0.0
        %3432 = vmatpush1.msra.mxu0 0.0
        %3433 = vmatprep.subr.mxu0 0.0
        %3434 = vmatpush1.msra.mxu0 0.0
        %3435 = vmatprep.subr.mxu0 0.0
        %3436 = vmatpush1.msra.mxu0 0.0
        %3437 = vmatprep.subr.mxu0 0.0
        %3438 = vmatpush1.msra.mxu0 0.0
        %3439 = vmatprep.subr.mxu0 0.0
        %3440 = vmatpush1.msra.mxu0 0.0
        %3441 = vmatprep.subr.mxu0 0.0
        %3442 = vmatpush1.msra.mxu0 0.0
        %3443 = vmatprep.subr.mxu0 0.0
        %3444 = vmatpush1.msra.mxu0 0.0
        %3445 = vmatprep.subr.mxu0 0.0
        %3446 = vmatpush1.msra.mxu0 0.0
        %3447 = vmatprep.subr.mxu0 0.0
        %3448 = vmatpush1.msra.mxu0 0.0
        %3449 = vmatprep.subr.mxu0 0.0
        %3450 = vmatpush1.msra.mxu0 0.0
        %3451 = vmatprep.subr.mxu0 0.0
        %3452 = vmatpush1.msra.mxu0 0.0
        %3453 = vmatprep.subr.mxu0 0.0
        %3454 = vmatpush1.msra.mxu0 0.0
        %3455 = vmatprep.subr.mxu0 0.0
        %3456 = vmatpush1.msra.mxu0 0.0
        %3457 = vmatprep.subr.mxu0 0.0
        %3458 = vmatpush1.msra.mxu0 0.0
        %3459 = vmatprep.subr.mxu0 0.0
        %3460 = vmatpush1.msra.mxu0 0.0
        %3461 = vmatprep.subr.mxu0 0.0
        %3462 = vmatpush1.msra.mxu0 0.0
        %3463 = vmatprep.subr.mxu0 0.0
        %3464 = vmatpush1.msra.mxu0 0.0
        %3465 = vmatprep.subr.mxu0 0.0
        %3466 = vmatpush1.msra.mxu0 0.0
        %3467 = vmatprep.subr.mxu0 0.0
        %3468 = vmatpush1.msra.mxu0 0.0
        %3469 = vmatprep.subr.mxu0 0.0
        %3470 = vmatpush1.msra.mxu0 0.0
        %3471 = vmatprep.mubr.f32.mxu0 0.0
        %3472 = vmatmul.mubr.f32.gmra.mrb[0].mxu0 %v3402
        %v3473 = vpop.f32.mrb[0].mxu0
        %v3474 = vadd.f32 0.0, %v3473
        %v3475 = vpop.f32.mrb[0].mxu0
        %3476 = vmatprep.mubr.f32.mxu0 0.0
        %3477 = vmatmul.mubr.f32.gmra.mrb[0].mxu0 %v3405
        %v3478 = vpop.f32.mrb[0].mxu0
        %v3479 = vadd.f32 0.0, %v3478
        %v3480 = vpop.f32.mrb[0].mxu0
        %3481 = vdwg.mxu0
        %v3482 = vadd.f32 %v871, %v3474
        %v3483 = vadd.f32 %v872, %v3479
        %v3484 = vld [vmem:[%s10] sm:$0x1]
        %v3485 = vld [vmem:[%s11] sm:$0x1]
        %v3486 = vsel %vm2195, %v3482, 0.0
        %3487 = vadd.xlane.f32.xlu0 %v3486
        %v3488 = vpop.xlane.xlu0 %3487
        %v3489 = vsel %vm2195, %v3483, 0.0
        %3490 = vadd.xlane.f32.xlu0 %v3489
        %v3491 = vpop.xlane.xlu0 %3490
        %v3492 = vrcp.pop 32.0
        %v3493 = vmul.f32 %v3488, %v3492
        %v3494 = vmul.f32 %v3491, %v3492
        %v3495 = vsub.f32 %v3482, %v3493
        %v3496 = vsub.f32 %v3483, %v3494
        %v3497 = vmul.f32 %v3495, %v3495
        %v3498 = vmul.f32 %v3496, %v3496
        %v3499 = vsel %vm2195, %v3497, 0.0
        %3500 = vadd.xlane.f32.xlu0 %v3499
        %v3501 = vpop.xlane.xlu0 %3500
        %v3502 = vsel %vm2195, %v3498, 0.0
        %3503 = vadd.xlane.f32.xlu0 %v3502
        %v3504 = vpop.xlane.xlu0 %3503
        %v3505 = vmul.f32 %v3501, %v3492
        %v3506 = vmul.f32 %v3504, %v3492
        %v3507 = vadd.f32 %v3505, 1e-12
        %v3508 = vadd.f32 %v3506, 1e-12
        %v3509 = vrsqrt.pop %v3507
        %v3510 = vmul.f32 %v3507, %v3509
        %vm3511 = vcmp.eq.f32.partialorder %v3507, inf
        %v3512 = vsel %vm3511, %v3507, %v3510
        %vm3513 = vcmp.eq.f32.partialorder %v3507, 0.0
        %v3514 = vand.u32 %v3507, 2147483648
        %v3515 = vsel %vm3513, %v3514, %v3512
        %v3516 = vrsqrt.pop %v3508
        %v3517 = vmul.f32 %v3508, %v3516
        %vm3518 = vcmp.eq.f32.partialorder %v3508, inf
        %v3519 = vsel %vm3518, %v3508, %v3517
        %vm3520 = vcmp.eq.f32.partialorder %v3508, 0.0
        %v3521 = vand.u32 %v3508, 2147483648
        %v3522 = vsel %vm3520, %v3521, %v3519
        %v3523 = vrcp.pop %v3515
        %v3524 = vmul.f32 %v3495, %v3523
        %v3525 = vrcp.pop %v3522
        %v3526 = vmul.f32 %v3496, %v3525
        %v3528 = vlaneseq
        %v3529 = vshrl.u32 %v3528, 7
        %v3530 = vsub.s32 0, %v3529
        %v3531 = vrot.slane %v3484, %v3530
        %v3533 = vmul.f32 %v3531, %v3524
        %v3534 = vmul.f32 %v3531, %v3526
        %v3536 = vlaneseq
        %v3537 = vshrl.u32 %v3536, 7
        %v3538 = vsub.s32 0, %v3537
        %v3539 = vrot.slane %v3485, %v3538
        %v3541 = vadd.f32 %v3533, %v3539
        %v3542 = vadd.f32 %v3534, %v3539
        %v3543 = vsel %vm2195, %v3541, -inf
        %v3544 = vsel %vm2195, %v3542, -inf
        %v3545 = vmax.f32 %v3543, %v3544
        %v3546 = vrot.slane %v3545, 4
        %v3547 = vmax.f32 %v3545, %v3546
        %v3548 = vrot.slane %v3547, 2
        %v3549 = vmax.f32 %v3547, %v3548
        %v3550 = vrot.slane %v3549, 1
        %v3551 = vmax.f32 %v3549, %v3550
        %v3552 = vld [vmem:[%s16] sm:$0x1]
        %v3553 = vld [vmem:[%s17] sm:$0x1]
        %v3554 = vsel %vm2195, %v3551, 0.0
        %3555 = vadd.xlane.f32.xlu0 %v3554
        %v3556 = vpop.xlane.xlu0 %3555
        %v3557 = vmul.f32 %v3556, %v3492
        %v3558 = vsub.f32 %v3551, %v3557
        %v3559 = vmul.f32 %v3558, %v3558
        %v3560 = vsel %vm2195, %v3559, 0.0
        %3561 = vadd.xlane.f32.xlu0 %v3560
        %v3562 = vpop.xlane.xlu0 %3561
        %v3563 = vmul.f32 %v3562, %v3492
        %v3564 = vadd.f32 %v3563, 1e-05
        %v3565 = vrsqrt.pop %v3564
        %v3566 = vmul.f32 %v3564, %v3565
        %vm3567 = vcmp.eq.f32.partialorder %v3564, inf
        %v3568 = vsel %vm3567, %v3564, %v3566
        %vm3569 = vcmp.eq.f32.partialorder %v3564, 0.0
        %v3570 = vand.u32 %v3564, 2147483648
        %v3571 = vsel %vm3569, %v3570, %v3568
        %v3572 = vrcp.pop %v3571
        %v3573 = vmul.f32 %v3558, %v3572
        %v3574 = vmul.f32 %v3552, %v3573
        %v3575 = vadd.f32 %v3574, %v3553
        %v3576 = vld [vmem:[%s12] sm:$0xff]
        %v3577 = vld [vmem:[%s12 + $0x8] sm:$0xff]
        %v3578 = vld [vmem:[%s12 + $0x10] sm:$0xff]
        %v3579 = vld [vmem:[%s12 + $0x18] sm:$0xff]
        %v3581 = vsel %vm2195, %v2929, 0
        %v3584 = vsel %vm2195, %v2930, 0
        %3586 = vmatprep.subr.mxu0 0.0
        %3587 = vmatpush1.msra.mxu0 %v3576
        %3588 = vmatprep.subr.mxu0 0.0
        %3589 = vmatpush1.msra.mxu0 %v3577
        %3590 = vmatprep.subr.mxu0 0.0
        %3591 = vmatpush1.msra.mxu0 %v3578
        %3592 = vmatprep.subr.mxu0 0.0
        %3593 = vmatpush1.msra.mxu0 %v3579
        %3594 = vmatprep.subr.mxu0 0.0
        %3595 = vmatpush1.msra.mxu0 0.0
        %3596 = vmatprep.subr.mxu0 0.0
        %3597 = vmatpush1.msra.mxu0 0.0
        %3598 = vmatprep.subr.mxu0 0.0
        %3599 = vmatpush1.msra.mxu0 0.0
        %3600 = vmatprep.subr.mxu0 0.0
        %3601 = vmatpush1.msra.mxu0 0.0
        %3602 = vmatprep.subr.mxu0 0.0
        %3603 = vmatpush1.msra.mxu0 0.0
        %3604 = vmatprep.subr.mxu0 0.0
        %3605 = vmatpush1.msra.mxu0 0.0
        %3606 = vmatprep.subr.mxu0 0.0
        %3607 = vmatpush1.msra.mxu0 0.0
        %3608 = vmatprep.subr.mxu0 0.0
        %3609 = vmatpush1.msra.mxu0 0.0
        %3610 = vmatprep.subr.mxu0 0.0
        %3611 = vmatpush1.msra.mxu0 0.0
        %3612 = vmatprep.subr.mxu0 0.0
        %3613 = vmatpush1.msra.mxu0 0.0
        %3614 = vmatprep.subr.mxu0 0.0
        %3615 = vmatpush1.msra.mxu0 0.0
        %3616 = vmatprep.subr.mxu0 0.0
        %3617 = vmatpush1.msra.mxu0 0.0
        %3618 = vmatprep.subr.mxu0 0.0
        %3619 = vmatpush1.msra.mxu0 0.0
        %3620 = vmatprep.subr.mxu0 0.0
        %3621 = vmatpush1.msra.mxu0 0.0
        %3622 = vmatprep.subr.mxu0 0.0
        %3623 = vmatpush1.msra.mxu0 0.0
        %3624 = vmatprep.subr.mxu0 0.0
        %3625 = vmatpush1.msra.mxu0 0.0
        %3626 = vmatprep.subr.mxu0 0.0
        %3627 = vmatpush1.msra.mxu0 0.0
        %3628 = vmatprep.subr.mxu0 0.0
        %3629 = vmatpush1.msra.mxu0 0.0
        %3630 = vmatprep.subr.mxu0 0.0
        %3631 = vmatpush1.msra.mxu0 0.0
        %3632 = vmatprep.subr.mxu0 0.0
        %3633 = vmatpush1.msra.mxu0 0.0
        %3634 = vmatprep.subr.mxu0 0.0
        %3635 = vmatpush1.msra.mxu0 0.0
        %3636 = vmatprep.subr.mxu0 0.0
        %3637 = vmatpush1.msra.mxu0 0.0
        %3638 = vmatprep.subr.mxu0 0.0
        %3639 = vmatpush1.msra.mxu0 0.0
        %3640 = vmatprep.subr.mxu0 0.0
        %3641 = vmatpush1.msra.mxu0 0.0
        %3642 = vmatprep.subr.mxu0 0.0
        %3643 = vmatpush1.msra.mxu0 0.0
        %3644 = vmatprep.subr.mxu0 0.0
        %3645 = vmatpush1.msra.mxu0 0.0
        %3646 = vmatprep.subr.mxu0 0.0
        %3647 = vmatpush1.msra.mxu0 0.0
        %3648 = vmatprep.subr.mxu0 0.0
        %3649 = vmatpush1.msra.mxu0 0.0
        %3650 = vmatprep.mubr.f32.mxu0 0.0
        %3651 = vmatmul.mubr.f32.gmra.mrb[0].mxu0 %v3581
        %v3652 = vpop.f32.mrb[0].mxu0
        %v3653 = vadd.f32 0.0, %v3652
        %v3654 = vpop.f32.mrb[0].mxu0
        %3655 = vmatprep.mubr.f32.mxu0 0.0
        %3656 = vmatmul.mubr.f32.gmra.mrb[0].mxu0 %v3584
        %v3657 = vpop.f32.mrb[0].mxu0
        %v3658 = vadd.f32 0.0, %v3657
        %v3659 = vpop.f32.mrb[0].mxu0
        %3660 = vdwg.mxu0
        %v3662 = vsel %vm2195, %v3653, 0
        %v3665 = vsel %vm2195, %v3658, 0
        %3667 = vmatprep.subr.mxu0 0.0
        %3668 = vmatpush1.xpose.msra.mxu0 %v3087
        %3669 = vmatprep.subr.mxu0 0.0
        %3670 = vmatpush1.xpose.msra.mxu0 %v3090
        %3671 = vmatprep.subr.mxu0 0.0
        %3672 = vmatpush1.xpose.msra.mxu0 %v3093
        %3673 = vmatprep.subr.mxu0 0.0
        %3674 = vmatpush1.xpose.msra.mxu0 %v3096
        %3675 = vmatprep.subr.mxu0 0.0
        %3676 = vmatpush1.xpose.msra.mxu0 %v3099
        %3677 = vmatprep.subr.mxu0 0.0
        %3678 = vmatpush1.xpose.msra.mxu0 %v3102
        %3679 = vmatprep.subr.mxu0 0.0
        %3680 = vmatpush1.xpose.msra.mxu0 %v3105
        %3681 = vmatprep.subr.mxu0 0.0
        %3682 = vmatpush1.xpose.msra.mxu0 %v3108
        %3683 = vmatprep.subr.mxu0 0.0
        %3684 = vmatpush1.xpose.msra.mxu0 %v3111
        %3685 = vmatprep.subr.mxu0 0.0
        %3686 = vmatpush1.xpose.msra.mxu0 %v3114
        %3687 = vmatprep.subr.mxu0 0.0
        %3688 = vmatpush1.xpose.msra.mxu0 %v3117
        %3689 = vmatprep.subr.mxu0 0.0
        %3690 = vmatpush1.xpose.msra.mxu0 %v3120
        %3691 = vmatprep.subr.mxu0 0.0
        %3692 = vmatpush1.xpose.msra.mxu0 %v3123
        %3693 = vmatprep.subr.mxu0 0.0
        %3694 = vmatpush1.xpose.msra.mxu0 %v3126
        %3695 = vmatprep.subr.mxu0 0.0
        %3696 = vmatpush1.xpose.msra.mxu0 %v3129
        %3697 = vmatprep.subr.mxu0 0.0
        %3698 = vmatpush1.xpose.msra.mxu0 %v3132
        %3699 = vmatprep.subr.mxu0 0.0
        %3700 = vmatpush1.xpose.msra.mxu0 0.0
        %3701 = vmatprep.subr.mxu0 0.0
        %3702 = vmatpush1.xpose.msra.mxu0 0.0
        %3703 = vmatprep.subr.mxu0 0.0
        %3704 = vmatpush1.xpose.msra.mxu0 0.0
        %3705 = vmatprep.subr.mxu0 0.0
        %3706 = vmatpush1.xpose.msra.mxu0 0.0
        %3707 = vmatprep.subr.mxu0 0.0
        %3708 = vmatpush1.xpose.msra.mxu0 0.0
        %3709 = vmatprep.subr.mxu0 0.0
        %3710 = vmatpush1.xpose.msra.mxu0 0.0
        %3711 = vmatprep.subr.mxu0 0.0
        %3712 = vmatpush1.xpose.msra.mxu0 0.0
        %3713 = vmatprep.subr.mxu0 0.0
        %3714 = vmatpush1.xpose.msra.mxu0 0.0
        %3715 = vmatprep.subr.mxu0 0.0
        %3716 = vmatpush1.xpose.msra.mxu0 0.0
        %3717 = vmatprep.subr.mxu0 0.0
        %3718 = vmatpush1.xpose.msra.mxu0 0.0
        %3719 = vmatprep.subr.mxu0 0.0
        %3720 = vmatpush1.xpose.msra.mxu0 0.0
        %3721 = vmatprep.subr.mxu0 0.0
        %3722 = vmatpush1.xpose.msra.mxu0 0.0
        %3723 = vmatprep.subr.mxu0 0.0
        %3724 = vmatpush1.xpose.msra.mxu0 0.0
        %3725 = vmatprep.subr.mxu0 0.0
        %3726 = vmatpush1.xpose.msra.mxu0 0.0
        %3727 = vmatprep.subr.mxu0 0.0
        %3728 = vmatpush1.xpose.msra.mxu0 0.0
        %3729 = vmatprep.subr.mxu0 0.0
        %3730 = vmatpush1.xpose.msra.mxu0 0.0
        %3731 = vmatprep.mubr.f32.mxu0 0.0
        %3732 = vmatmul.mubr.f32.gmra.mrb[0].mxu0 %v3662
        %v3733 = vpop.f32.mrb[0].mxu0
        %v3734 = vadd.f32 0.0, %v3733
        %v3735 = vpop.f32.mrb[0].mxu0
        %3736 = vmatprep.mubr.f32.mxu0 0.0
        %3737 = vmatmul.mubr.f32.gmra.mrb[0].mxu0 %v3665
        %v3738 = vpop.f32.mrb[0].mxu0
        %v3739 = vadd.f32 0.0, %v3738
        %v3740 = vpop.f32.mrb[0].mxu0
        %3741 = vdwg.mxu0
        %v3742 = vmul.f32 %v3734, 0.25
        %v3743 = vmul.f32 %v3739, 0.25
        %v3744 = vadd.f32 %v3742, %v3214
        %v3745 = vadd.f32 %v3743, %v3214
        %v3746 = vsel %vm3219, %v3744, -1e+30
        %v3747 = vsel %vm3219, %v3745, -1e+30
        %3748 = vmax.xlane.f32.xlu0 %v3746
        %v3749 = vpop.xlane.xlu0 %3748
        %3750 = vmax.xlane.f32.xlu0 %v3747
        %v3751 = vpop.xlane.xlu0 %3750
        %v3752 = vsel %vm3219, -1e+30, %v3744
        %v3753 = vsel %vm3219, -1e+30, %v3745
        %3754 = vmax.xlane.f32.xlu0 %v3752
        %v3755 = vpop.xlane.xlu0 %3754
        %3756 = vmax.xlane.f32.xlu0 %v3753
        %v3757 = vpop.xlane.xlu0 %3756
        %v3758 = vsel %vm3219, %v3749, %v3755
        %v3759 = vsel %vm3219, %v3751, %v3757
        %v3760 = vsub.f32 %v3744, %v3758
        %v3761 = vsub.f32 %v3745, %v3759
        %v3762 = vmul.f32 %v3760, 1.442695
        %v3763 = vpow.pop %v3762
        %v3764 = vmul.f32 %v3761, 1.442695
        %v3765 = vpow.pop %v3764
        %v3766 = vsel %vm3219, %v3763, 0.0
        %v3767 = vsel %vm3219, %v3765, 0.0
        %3768 = vadd.xlane.f32.xlu0 %v3766
        %v3769 = vpop.xlane.xlu0 %3768
        %3770 = vadd.xlane.f32.xlu0 %v3767
        %v3771 = vpop.xlane.xlu0 %3770
        %v3772 = vsel %vm3219, 0.0, %v3763
        %v3773 = vsel %vm3219, 0.0, %v3765
        %3774 = vadd.xlane.f32.xlu0 %v3772
        %v3775 = vpop.xlane.xlu0 %3774
        %3776 = vadd.xlane.f32.xlu0 %v3773
        %v3777 = vpop.xlane.xlu0 %3776
        %v3778 = vsel %vm3219, %v3769, %v3775
        %v3779 = vsel %vm3219, %v3771, %v3777
        %v3780 = vrcp.pop %v3778
        %v3781 = vmul.f32 %v3763, %v3780
        %v3782 = vrcp.pop %v3779
        %v3783 = vmul.f32 %v3765, %v3782
        %3784 = vmatprep.subr.mxu0 0.0
        %3785 = vmatpush1.msra.mxu0 %v3275
        %3786 = vmatprep.subr.mxu0 0.0
        %3787 = vmatpush1.msra.mxu0 %v3277
        %3788 = vmatprep.subr.mxu0 0.0
        %3789 = vmatpush1.msra.mxu0 %v3279
        %3790 = vmatprep.subr.mxu0 0.0
        %3791 = vmatpush1.msra.mxu0 %v3281
        %3792 = vmatprep.subr.mxu0 0.0
        %3793 = vmatpush1.msra.mxu0 %v3283
        %3794 = vmatprep.subr.mxu0 0.0
        %3795 = vmatpush1.msra.mxu0 %v3285
        %3796 = vmatprep.subr.mxu0 0.0
        %3797 = vmatpush1.msra.mxu0 %v3287
        %3798 = vmatprep.subr.mxu0 0.0
        %3799 = vmatpush1.msra.mxu0 %v3289
        %3800 = vmatprep.subr.mxu0 0.0
        %3801 = vmatpush1.msra.mxu0 %v3291
        %3802 = vmatprep.subr.mxu0 0.0
        %3803 = vmatpush1.msra.mxu0 %v3293
        %3804 = vmatprep.subr.mxu0 0.0
        %3805 = vmatpush1.msra.mxu0 %v3295
        %3806 = vmatprep.subr.mxu0 0.0
        %3807 = vmatpush1.msra.mxu0 %v3297
        %3808 = vmatprep.subr.mxu0 0.0
        %3809 = vmatpush1.msra.mxu0 %v3299
        %3810 = vmatprep.subr.mxu0 0.0
        %3811 = vmatpush1.msra.mxu0 %v3301
        %3812 = vmatprep.subr.mxu0 0.0
        %3813 = vmatpush1.msra.mxu0 %v3303
        %3814 = vmatprep.subr.mxu0 0.0
        %3815 = vmatpush1.msra.mxu0 %v3305
        %3816 = vmatprep.subr.mxu0 0.0
        %3817 = vmatpush1.msra.mxu0 0.0
        %3818 = vmatprep.subr.mxu0 0.0
        %3819 = vmatpush1.msra.mxu0 0.0
        %3820 = vmatprep.subr.mxu0 0.0
        %3821 = vmatpush1.msra.mxu0 0.0
        %3822 = vmatprep.subr.mxu0 0.0
        %3823 = vmatpush1.msra.mxu0 0.0
        %3824 = vmatprep.subr.mxu0 0.0
        %3825 = vmatpush1.msra.mxu0 0.0
        %3826 = vmatprep.subr.mxu0 0.0
        %3827 = vmatpush1.msra.mxu0 0.0
        %3828 = vmatprep.subr.mxu0 0.0
        %3829 = vmatpush1.msra.mxu0 0.0
        %3830 = vmatprep.subr.mxu0 0.0
        %3831 = vmatpush1.msra.mxu0 0.0
        %3832 = vmatprep.subr.mxu0 0.0
        %3833 = vmatpush1.msra.mxu0 0.0
        %3834 = vmatprep.subr.mxu0 0.0
        %3835 = vmatpush1.msra.mxu0 0.0
        %3836 = vmatprep.subr.mxu0 0.0
        %3837 = vmatpush1.msra.mxu0 0.0
        %3838 = vmatprep.subr.mxu0 0.0
        %3839 = vmatpush1.msra.mxu0 0.0
        %3840 = vmatprep.subr.mxu0 0.0
        %3841 = vmatpush1.msra.mxu0 0.0
        %3842 = vmatprep.subr.mxu0 0.0
        %3843 = vmatpush1.msra.mxu0 0.0
        %3844 = vmatprep.subr.mxu0 0.0
        %3845 = vmatpush1.msra.mxu0 0.0
        %3846 = vmatprep.subr.mxu0 0.0
        %3847 = vmatpush1.msra.mxu0 0.0
        %3848 = vmatprep.mubr.f32.mxu0 0.0
        %3849 = vmatmul.mubr.f32.gmra.mrb[0].mxu0 %v3781
        %v3850 = vpop.f32.mrb[0].mxu0
        %v3851 = vadd.f32 0.0, %v3850
        %v3852 = vpop.f32.mrb[0].mxu0
        %3853 = vmatprep.mubr.f32.mxu0 0.0
        %3854 = vmatmul.mubr.f32.gmra.mrb[0].mxu0 %v3783
        %v3855 = vpop.f32.mrb[0].mxu0
        %v3856 = vadd.f32 0.0, %v3855
        %v3857 = vpop.f32.mrb[0].mxu0
        %3858 = vdwg.mxu0
        %v3859 = vld [vmem:[%s13] sm:$0xff]
        %v3860 = vld [vmem:[%s13 + $0x8] sm:$0xff]
        %v3861 = vld [vmem:[%s13 + $0x10] sm:$0xff]
        %v3862 = vld [vmem:[%s13 + $0x18] sm:$0xff]
        %v3864 = vsel %vm2195, %v3851, 0
        %v3867 = vsel %vm2195, %v3856, 0
        %3869 = vmatprep.subr.mxu0 0.0
        %3870 = vmatpush1.msra.mxu0 %v3859
        %3871 = vmatprep.subr.mxu0 0.0
        %3872 = vmatpush1.msra.mxu0 %v3860
        %3873 = vmatprep.subr.mxu0 0.0
        %3874 = vmatpush1.msra.mxu0 %v3861
        %3875 = vmatprep.subr.mxu0 0.0
        %3876 = vmatpush1.msra.mxu0 %v3862
        %3877 = vmatprep.subr.mxu0 0.0
        %3878 = vmatpush1.msra.mxu0 0.0
        %3879 = vmatprep.subr.mxu0 0.0
        %3880 = vmatpush1.msra.mxu0 0.0
        %3881 = vmatprep.subr.mxu0 0.0
        %3882 = vmatpush1.msra.mxu0 0.0
        %3883 = vmatprep.subr.mxu0 0.0
        %3884 = vmatpush1.msra.mxu0 0.0
        %3885 = vmatprep.subr.mxu0 0.0
        %3886 = vmatpush1.msra.mxu0 0.0
        %3887 = vmatprep.subr.mxu0 0.0
        %3888 = vmatpush1.msra.mxu0 0.0
        %3889 = vmatprep.subr.mxu0 0.0
        %3890 = vmatpush1.msra.mxu0 0.0
        %3891 = vmatprep.subr.mxu0 0.0
        %3892 = vmatpush1.msra.mxu0 0.0
        %3893 = vmatprep.subr.mxu0 0.0
        %3894 = vmatpush1.msra.mxu0 0.0
        %3895 = vmatprep.subr.mxu0 0.0
        %3896 = vmatpush1.msra.mxu0 0.0
        %3897 = vmatprep.subr.mxu0 0.0
        %3898 = vmatpush1.msra.mxu0 0.0
        %3899 = vmatprep.subr.mxu0 0.0
        %3900 = vmatpush1.msra.mxu0 0.0
        %3901 = vmatprep.subr.mxu0 0.0
        %3902 = vmatpush1.msra.mxu0 0.0
        %3903 = vmatprep.subr.mxu0 0.0
        %3904 = vmatpush1.msra.mxu0 0.0
        %3905 = vmatprep.subr.mxu0 0.0
        %3906 = vmatpush1.msra.mxu0 0.0
        %3907 = vmatprep.subr.mxu0 0.0
        %3908 = vmatpush1.msra.mxu0 0.0
        %3909 = vmatprep.subr.mxu0 0.0
        %3910 = vmatpush1.msra.mxu0 0.0
        %3911 = vmatprep.subr.mxu0 0.0
        %3912 = vmatpush1.msra.mxu0 0.0
        %3913 = vmatprep.subr.mxu0 0.0
        %3914 = vmatpush1.msra.mxu0 0.0
        %3915 = vmatprep.subr.mxu0 0.0
        %3916 = vmatpush1.msra.mxu0 0.0
        %3917 = vmatprep.subr.mxu0 0.0
        %3918 = vmatpush1.msra.mxu0 0.0
        %3919 = vmatprep.subr.mxu0 0.0
        %3920 = vmatpush1.msra.mxu0 0.0
        %3921 = vmatprep.subr.mxu0 0.0
        %3922 = vmatpush1.msra.mxu0 0.0
        %3923 = vmatprep.subr.mxu0 0.0
        %3924 = vmatpush1.msra.mxu0 0.0
        %3925 = vmatprep.subr.mxu0 0.0
        %3926 = vmatpush1.msra.mxu0 0.0
        %3927 = vmatprep.subr.mxu0 0.0
        %3928 = vmatpush1.msra.mxu0 0.0
        %3929 = vmatprep.subr.mxu0 0.0
        %3930 = vmatpush1.msra.mxu0 0.0
        %3931 = vmatprep.subr.mxu0 0.0
        %3932 = vmatpush1.msra.mxu0 0.0
        %3933 = vmatprep.mubr.f32.mxu0 0.0
        %3934 = vmatmul.mubr.f32.gmra.mrb[0].mxu0 %v3864
        %v3935 = vpop.f32.mrb[0].mxu0
        %v3936 = vadd.f32 0.0, %v3935
        %v3937 = vpop.f32.mrb[0].mxu0
        %3938 = vmatprep.mubr.f32.mxu0 0.0
        %3939 = vmatmul.mubr.f32.gmra.mrb[0].mxu0 %v3867
        %v3940 = vpop.f32.mrb[0].mxu0
        %v3941 = vadd.f32 0.0, %v3940
        %v3942 = vpop.f32.mrb[0].mxu0
        %3943 = vdwg.mxu0
        %v3944 = vadd.f32 %v2929, %v3936
        %v3945 = vadd.f32 %v2930, %v3941
        %v3946 = vld [vmem:[%s14] sm:$0x1]
        %v3947 = vld [vmem:[%s15] sm:$0x1]
        %v3948 = vsel %vm2195, %v3944, 0.0
        %3949 = vadd.xlane.f32.xlu0 %v3948
        %v3950 = vpop.xlane.xlu0 %3949
        %v3951 = vsel %vm2195, %v3945, 0.0
        %3952 = vadd.xlane.f32.xlu0 %v3951
        %v3953 = vpop.xlane.xlu0 %3952
        %v3954 = vmul.f32 %v3950, %v3492
        %v3955 = vmul.f32 %v3953, %v3492
        %v3956 = vsub.f32 %v3944, %v3954
        %v3957 = vsub.f32 %v3945, %v3955
        %v3958 = vmul.f32 %v3956, %v3956
        %v3959 = vmul.f32 %v3957, %v3957
        %v3960 = vsel %vm2195, %v3958, 0.0
        %3961 = vadd.xlane.f32.xlu0 %v3960
        %v3962 = vpop.xlane.xlu0 %3961
        %v3963 = vsel %vm2195, %v3959, 0.0
        %3964 = vadd.xlane.f32.xlu0 %v3963
        %v3965 = vpop.xlane.xlu0 %3964
        %v3966 = vmul.f32 %v3962, %v3492
        %v3967 = vmul.f32 %v3965, %v3492
        %v3968 = vadd.f32 %v3966, 1e-12
        %v3969 = vadd.f32 %v3967, 1e-12
        %v3970 = vrsqrt.pop %v3968
        %v3971 = vmul.f32 %v3968, %v3970
        %vm3972 = vcmp.eq.f32.partialorder %v3968, inf
        %v3973 = vsel %vm3972, %v3968, %v3971
        %vm3974 = vcmp.eq.f32.partialorder %v3968, 0.0
        %v3975 = vand.u32 %v3968, 2147483648
        %v3976 = vsel %vm3974, %v3975, %v3973
        %v3977 = vrsqrt.pop %v3969
        %v3978 = vmul.f32 %v3969, %v3977
        %vm3979 = vcmp.eq.f32.partialorder %v3969, inf
        %v3980 = vsel %vm3979, %v3969, %v3978
        %vm3981 = vcmp.eq.f32.partialorder %v3969, 0.0
        %v3982 = vand.u32 %v3969, 2147483648
        %v3983 = vsel %vm3981, %v3982, %v3980
        %v3984 = vrcp.pop %v3976
        %v3985 = vmul.f32 %v3956, %v3984
        %v3986 = vrcp.pop %v3983
        %v3987 = vmul.f32 %v3957, %v3986
        %v3989 = vlaneseq
        %v3990 = vshrl.u32 %v3989, 7
        %v3991 = vsub.s32 0, %v3990
        %v3992 = vrot.slane %v3946, %v3991
        %v3994 = vmul.f32 %v3992, %v3985
        %v3995 = vmul.f32 %v3992, %v3987
        %v3997 = vlaneseq
        %v3998 = vshrl.u32 %v3997, 7
        %v3999 = vsub.s32 0, %v3998
        %v4000 = vrot.slane %v3947, %v3999
        %v4002 = vadd.f32 %v3994, %v4000
        %v4003 = vadd.f32 %v3995, %v4000
        %v4004 = vsel %vm2195, %v4002, -inf
        %v4005 = vsel %vm2195, %v4003, -inf
        %v4006 = vmax.f32 %v4004, %v4005
        %v4007 = vrot.slane %v4006, 4
        %v4008 = vmax.f32 %v4006, %v4007
        %v4009 = vrot.slane %v4008, 2
        %v4010 = vmax.f32 %v4008, %v4009
        %v4011 = vrot.slane %v4010, 1
        %v4012 = vmax.f32 %v4010, %v4011
        %v4013 = vsel %vm2195, %v4012, 0.0
        %4014 = vadd.xlane.f32.xlu0 %v4013
        %v4015 = vpop.xlane.xlu0 %4014
        %v4016 = vmul.f32 %v4015, %v3492
        %v4017 = vsub.f32 %v4012, %v4016
        %v4018 = vmul.f32 %v4017, %v4017
        %v4019 = vsel %vm2195, %v4018, 0.0
        %4020 = vadd.xlane.f32.xlu0 %v4019
        %v4021 = vpop.xlane.xlu0 %4020
        %v4022 = vmul.f32 %v4021, %v3492
        %v4023 = vadd.f32 %v4022, 1e-05
        %v4024 = vrsqrt.pop %v4023
        %v4025 = vmul.f32 %v4023, %v4024
        %vm4026 = vcmp.eq.f32.partialorder %v4023, inf
        %v4027 = vsel %vm4026, %v4023, %v4025
        %vm4028 = vcmp.eq.f32.partialorder %v4023, 0.0
        %v4029 = vand.u32 %v4023, 2147483648
        %v4030 = vsel %vm4028, %v4029, %v4027
        %v4031 = vrcp.pop %v4030
        %v4032 = vmul.f32 %v4017, %v4031
        %v4033 = vmul.f32 %v3552, %v4032
        %v4034 = vadd.f32 %v4033, %v3553
        %v4035 = vadd.f32 %v3575, %v4034
        %v4036 = vld [vmem:[%s870] sm:$0x1]
        %v4037 = vld [vmem:[%s18] sm:$0xff]
        %v4038 = vld [vmem:[%s18 + $0x8] sm:$0xff]
        %v4039 = vld [vmem:[%s18 + $0x10] sm:$0xff]
        %v4040 = vld [vmem:[%s18 + $0x18] sm:$0xff]
        %v4041 = vld [vmem:[%s18 + $0x20] sm:$0xff]
        %v4042 = vld [vmem:[%s18 + $0x28] sm:$0xff]
        %v4043 = vld [vmem:[%s18 + $0x30] sm:$0xff]
        %v4044 = vld [vmem:[%s18 + $0x38] sm:$0xff]
        %v4045 = vld [vmem:[%s18 + $0x40] sm:$0xff]
        %v4046 = vld [vmem:[%s18 + $0x48] sm:$0xff]
        %v4047 = vld [vmem:[%s18 + $0x50] sm:$0xff]
        %v4048 = vld [vmem:[%s18 + $0x58] sm:$0xff]
        %v4049 = vld [vmem:[%s18 + $0x60] sm:$0xff]
        %v4050 = vld [vmem:[%s18 + $0x68] sm:$0xff]
        %v4051 = vld [vmem:[%s18 + $0x70] sm:$0xff]
        %v4052 = vld [vmem:[%s18 + $0x78] sm:$0xff]
        %v4053 = vld [vmem:[%s19] sm:$0xff]
        %v4054 = vld [vmem:[%s19 + $0x8] sm:$0xff]
        %v4055 = vld [vmem:[%s19 + $0x10] sm:$0xff]
        %v4056 = vld [vmem:[%s19 + $0x18] sm:$0xff]
        %v4057 = vld [vmem:[%s19 + $0x20] sm:$0xff]
        %v4058 = vld [vmem:[%s19 + $0x28] sm:$0xff]
        %v4059 = vld [vmem:[%s19 + $0x30] sm:$0xff]
        %v4060 = vld [vmem:[%s19 + $0x38] sm:$0xff]
        %v4061 = vld [vmem:[%s19 + $0x40] sm:$0xff]
        %v4062 = vld [vmem:[%s19 + $0x48] sm:$0xff]
        %v4063 = vld [vmem:[%s19 + $0x50] sm:$0xff]
        %v4064 = vld [vmem:[%s19 + $0x58] sm:$0xff]
        %v4065 = vld [vmem:[%s19 + $0x60] sm:$0xff]
        %v4066 = vld [vmem:[%s19 + $0x68] sm:$0xff]
        %v4067 = vld [vmem:[%s19 + $0x70] sm:$0xff]
        %v4068 = vld [vmem:[%s19 + $0x78] sm:$0xff]
        %v4070 = vsel %vm2195, %v4035, 0
        %4072 = vmatprep.subr.mxu0 %v4054
        %4073 = vmatpush1.msra.mxu0 %v4053
        %4074 = vmatprep.subr.mxu0 %v4058
        %4075 = vmatpush1.msra.mxu0 %v4057
        %4076 = vmatprep.subr.mxu0 %v4062
        %4077 = vmatpush1.msra.mxu0 %v4061
        %4078 = vmatprep.subr.mxu0 %v4066
        %4079 = vmatpush1.msra.mxu0 %v4065
        %4080 = vmatprep.subr.mxu0 0.0
        %4081 = vmatpush1.msra.mxu0 0.0
        %4082 = vmatprep.subr.mxu0 0.0
        %4083 = vmatpush1.msra.mxu0 0.0
        %4084 = vmatprep.subr.mxu0 0.0
        %4085 = vmatpush1.msra.mxu0 0.0
        %4086 = vmatprep.subr.mxu0 0.0
        %4087 = vmatpush1.msra.mxu0 0.0
        %4088 = vmatprep.subr.mxu0 0.0
        %4089 = vmatpush1.msra.mxu0 0.0
        %4090 = vmatprep.subr.mxu0 0.0
        %4091 = vmatpush1.msra.mxu0 0.0
        %4092 = vmatprep.subr.mxu0 0.0
        %4093 = vmatpush1.msra.mxu0 0.0
        %4094 = vmatprep.subr.mxu0 0.0
        %4095 = vmatpush1.msra.mxu0 0.0
        %4096 = vmatprep.subr.mxu0 0.0
        %4097 = vmatpush1.msra.mxu0 0.0
        %4098 = vmatprep.subr.mxu0 0.0
        %4099 = vmatpush1.msra.mxu0 0.0
        %4100 = vmatprep.subr.mxu0 0.0
        %4101 = vmatpush1.msra.mxu0 0.0
        %4102 = vmatprep.subr.mxu0 0.0
        %4103 = vmatpush1.msra.mxu0 0.0
        %4104 = vmatprep.subr.mxu0 0.0
        %4105 = vmatpush1.msra.mxu0 0.0
        %4106 = vmatprep.subr.mxu0 0.0
        %4107 = vmatpush1.msra.mxu0 0.0
        %4108 = vmatprep.subr.mxu0 0.0
        %4109 = vmatpush1.msra.mxu0 0.0
        %4110 = vmatprep.subr.mxu0 0.0
        %4111 = vmatpush1.msra.mxu0 0.0
        %4112 = vmatprep.subr.mxu0 0.0
        %4113 = vmatpush1.msra.mxu0 0.0
        %4114 = vmatprep.subr.mxu0 0.0
        %4115 = vmatpush1.msra.mxu0 0.0
        %4116 = vmatprep.subr.mxu0 0.0
        %4117 = vmatpush1.msra.mxu0 0.0
        %4118 = vmatprep.subr.mxu0 0.0
        %4119 = vmatpush1.msra.mxu0 0.0
        %4120 = vmatprep.subr.mxu0 0.0
        %4121 = vmatpush1.msra.mxu0 0.0
        %4122 = vmatprep.subr.mxu0 0.0
        %4123 = vmatpush1.msra.mxu0 0.0
        %4124 = vmatprep.subr.mxu0 0.0
        %4125 = vmatpush1.msra.mxu0 0.0
        %4126 = vmatprep.subr.mxu0 0.0
        %4127 = vmatpush1.msra.mxu0 0.0
        %4128 = vmatprep.subr.mxu0 0.0
        %4129 = vmatpush1.msra.mxu0 0.0
        %4130 = vmatprep.subr.mxu0 0.0
        %4131 = vmatpush1.msra.mxu0 0.0
        %4132 = vmatprep.subr.mxu0 0.0
        %4133 = vmatpush1.msra.mxu0 0.0
        %4134 = vmatprep.subr.mxu0 0.0
        %4135 = vmatpush1.msra.mxu0 0.0
        %4136 = vmatprep.mubr.f32.mxu0 0.0
        %4137 = vmatmul.mubr.f32.gmra.mrb[0].mxu0 %v4070
        %v4138 = vpop.f32.mrb[0].mxu0
        %v4139 = vadd.f32 0.0, %v4138
        %v4140 = vpop.f32.mrb[0].mxu0
        %v4141 = vadd.f32 0.0, %v4140
        %4142 = vdwg.mxu0
        %4143 = vmatprep.subr.mxu0 %v4056
        %4144 = vmatpush1.msra.mxu0 %v4055
        %4145 = vmatprep.subr.mxu0 %v4060
        %4146 = vmatpush1.msra.mxu0 %v4059
        %4147 = vmatprep.subr.mxu0 %v4064
        %4148 = vmatpush1.msra.mxu0 %v4063
        %4149 = vmatprep.subr.mxu0 %v4068
        %4150 = vmatpush1.msra.mxu0 %v4067
        %4151 = vmatprep.subr.mxu0 0.0
        %4152 = vmatpush1.msra.mxu0 0.0
        %4153 = vmatprep.subr.mxu0 0.0
        %4154 = vmatpush1.msra.mxu0 0.0
        %4155 = vmatprep.subr.mxu0 0.0
        %4156 = vmatpush1.msra.mxu0 0.0
        %4157 = vmatprep.subr.mxu0 0.0
        %4158 = vmatpush1.msra.mxu0 0.0
        %4159 = vmatprep.subr.mxu0 0.0
        %4160 = vmatpush1.msra.mxu0 0.0
        %4161 = vmatprep.subr.mxu0 0.0
        %4162 = vmatpush1.msra.mxu0 0.0
        %4163 = vmatprep.subr.mxu0 0.0
        %4164 = vmatpush1.msra.mxu0 0.0
        %4165 = vmatprep.subr.mxu0 0.0
        %4166 = vmatpush1.msra.mxu0 0.0
        %4167 = vmatprep.subr.mxu0 0.0
        %4168 = vmatpush1.msra.mxu0 0.0
        %4169 = vmatprep.subr.mxu0 0.0
        %4170 = vmatpush1.msra.mxu0 0.0
        %4171 = vmatprep.subr.mxu0 0.0
        %4172 = vmatpush1.msra.mxu0 0.0
        %4173 = vmatprep.subr.mxu0 0.0
        %4174 = vmatpush1.msra.mxu0 0.0
        %4175 = vmatprep.subr.mxu0 0.0
        %4176 = vmatpush1.msra.mxu0 0.0
        %4177 = vmatprep.subr.mxu0 0.0
        %4178 = vmatpush1.msra.mxu0 0.0
        %4179 = vmatprep.subr.mxu0 0.0
        %4180 = vmatpush1.msra.mxu0 0.0
        %4181 = vmatprep.subr.mxu0 0.0
        %4182 = vmatpush1.msra.mxu0 0.0
        %4183 = vmatprep.subr.mxu0 0.0
        %4184 = vmatpush1.msra.mxu0 0.0
        %4185 = vmatprep.subr.mxu0 0.0
        %4186 = vmatpush1.msra.mxu0 0.0
        %4187 = vmatprep.subr.mxu0 0.0
        %4188 = vmatpush1.msra.mxu0 0.0
        %4189 = vmatprep.subr.mxu0 0.0
        %4190 = vmatpush1.msra.mxu0 0.0
        %4191 = vmatprep.subr.mxu0 0.0
        %4192 = vmatpush1.msra.mxu0 0.0
        %4193 = vmatprep.subr.mxu0 0.0
        %4194 = vmatpush1.msra.mxu0 0.0
        %4195 = vmatprep.subr.mxu0 0.0
        %4196 = vmatpush1.msra.mxu0 0.0
        %4197 = vmatprep.subr.mxu0 0.0
        %4198 = vmatpush1.msra.mxu0 0.0
        %4199 = vmatprep.subr.mxu0 0.0
        %4200 = vmatpush1.msra.mxu0 0.0
        %4201 = vmatprep.subr.mxu0 0.0
        %4202 = vmatpush1.msra.mxu0 0.0
        %4203 = vmatprep.subr.mxu0 0.0
        %4204 = vmatpush1.msra.mxu0 0.0
        %4205 = vmatprep.subr.mxu0 0.0
        %4206 = vmatpush1.msra.mxu0 0.0
        %4207 = vmatprep.mubr.f32.mxu0 0.0
        %4208 = vmatmul.mubr.f32.gmra.mrb[0].mxu0 %v4070
        %v4209 = vpop.f32.mrb[0].mxu0
        %v4210 = vadd.f32 0.0, %v4209
        %v4211 = vpop.f32.mrb[0].mxu0
        %v4212 = vadd.f32 0.0, %v4211
        %4213 = vdwg.mxu0
        %v4215 = vsel %vm2195, %v4036, 0
        %4217 = vmatprep.subr.mxu0 %v4038
        %4218 = vmatpush1.msra.mxu0 %v4037
        %4219 = vmatprep.subr.mxu0 %v4042
        %4220 = vmatpush1.msra.mxu0 %v4041
        %4221 = vmatprep.subr.mxu0 %v4046
        %4222 = vmatpush1.msra.mxu0 %v4045
        %4223 = vmatprep.subr.mxu0 %v4050
        %4224 = vmatpush1.msra.mxu0 %v4049
        %4225 = vmatprep.subr.mxu0 0.0
        %4226 = vmatpush1.msra.mxu0 0.0
        %4227 = vmatprep.subr.mxu0 0.0
        %4228 = vmatpush1.msra.mxu0 0.0
        %4229 = vmatprep.subr.mxu0 0.0
        %4230 = vmatpush1.msra.mxu0 0.0
        %4231 = vmatprep.subr.mxu0 0.0
        %4232 = vmatpush1.msra.mxu0 0.0
        %4233 = vmatprep.subr.mxu0 0.0
        %4234 = vmatpush1.msra.mxu0 0.0
        %4235 = vmatprep.subr.mxu0 0.0
        %4236 = vmatpush1.msra.mxu0 0.0
        %4237 = vmatprep.subr.mxu0 0.0
        %4238 = vmatpush1.msra.mxu0 0.0
        %4239 = vmatprep.subr.mxu0 0.0
        %4240 = vmatpush1.msra.mxu0 0.0
        %4241 = vmatprep.subr.mxu0 0.0
        %4242 = vmatpush1.msra.mxu0 0.0
        %4243 = vmatprep.subr.mxu0 0.0
        %4244 = vmatpush1.msra.mxu0 0.0
        %4245 = vmatprep.subr.mxu0 0.0
        %4246 = vmatpush1.msra.mxu0 0.0
        %4247 = vmatprep.subr.mxu0 0.0
        %4248 = vmatpush1.msra.mxu0 0.0
        %4249 = vmatprep.subr.mxu0 0.0
        %4250 = vmatpush1.msra.mxu0 0.0
        %4251 = vmatprep.subr.mxu0 0.0
        %4252 = vmatpush1.msra.mxu0 0.0
        %4253 = vmatprep.subr.mxu0 0.0
        %4254 = vmatpush1.msra.mxu0 0.0
        %4255 = vmatprep.subr.mxu0 0.0
        %4256 = vmatpush1.msra.mxu0 0.0
        %4257 = vmatprep.subr.mxu0 0.0
        %4258 = vmatpush1.msra.mxu0 0.0
        %4259 = vmatprep.subr.mxu0 0.0
        %4260 = vmatpush1.msra.mxu0 0.0
        %4261 = vmatprep.subr.mxu0 0.0
        %4262 = vmatpush1.msra.mxu0 0.0
        %4263 = vmatprep.subr.mxu0 0.0
        %4264 = vmatpush1.msra.mxu0 0.0
        %4265 = vmatprep.subr.mxu0 0.0
        %4266 = vmatpush1.msra.mxu0 0.0
        %4267 = vmatprep.subr.mxu0 0.0
        %4268 = vmatpush1.msra.mxu0 0.0
        %4269 = vmatprep.subr.mxu0 0.0
        %4270 = vmatpush1.msra.mxu0 0.0
        %4271 = vmatprep.subr.mxu0 0.0
        %4272 = vmatpush1.msra.mxu0 0.0
        %4273 = vmatprep.subr.mxu0 0.0
        %4274 = vmatpush1.msra.mxu0 0.0
        %4275 = vmatprep.subr.mxu0 0.0
        %4276 = vmatpush1.msra.mxu0 0.0
        %4277 = vmatprep.subr.mxu0 0.0
        %4278 = vmatpush1.msra.mxu0 0.0
        %4279 = vmatprep.subr.mxu0 0.0
        %4280 = vmatpush1.msra.mxu0 0.0
        %4281 = vmatprep.mubr.f32.mxu0 0.0
        %4282 = vmatmul.mubr.f32.gmra.mrb[0].mxu0 %v4215
        %v4283 = vpop.f32.mrb[0].mxu0
        %v4284 = vadd.f32 %v4139, %v4283
        %v4285 = vpop.f32.mrb[0].mxu0
        %v4286 = vadd.f32 %v4141, %v4285
        %4287 = vdwg.mxu0
        %4288 = vmatprep.subr.mxu0 %v4040
        %4289 = vmatpush1.msra.mxu0 %v4039
        %4290 = vmatprep.subr.mxu0 %v4044
        %4291 = vmatpush1.msra.mxu0 %v4043
        %4292 = vmatprep.subr.mxu0 %v4048
        %4293 = vmatpush1.msra.mxu0 %v4047
        %4294 = vmatprep.subr.mxu0 %v4052
        %4295 = vmatpush1.msra.mxu0 %v4051
        %4296 = vmatprep.subr.mxu0 0.0
        %4297 = vmatpush1.msra.mxu0 0.0
        %4298 = vmatprep.subr.mxu0 0.0
        %4299 = vmatpush1.msra.mxu0 0.0
        %4300 = vmatprep.subr.mxu0 0.0
        %4301 = vmatpush1.msra.mxu0 0.0
        %4302 = vmatprep.subr.mxu0 0.0
        %4303 = vmatpush1.msra.mxu0 0.0
        %4304 = vmatprep.subr.mxu0 0.0
        %4305 = vmatpush1.msra.mxu0 0.0
        %4306 = vmatprep.subr.mxu0 0.0
        %4307 = vmatpush1.msra.mxu0 0.0
        %4308 = vmatprep.subr.mxu0 0.0
        %4309 = vmatpush1.msra.mxu0 0.0
        %4310 = vmatprep.subr.mxu0 0.0
        %4311 = vmatpush1.msra.mxu0 0.0
        %4312 = vmatprep.subr.mxu0 0.0
        %4313 = vmatpush1.msra.mxu0 0.0
        %4314 = vmatprep.subr.mxu0 0.0
        %4315 = vmatpush1.msra.mxu0 0.0
        %4316 = vmatprep.subr.mxu0 0.0
        %4317 = vmatpush1.msra.mxu0 0.0
        %4318 = vmatprep.subr.mxu0 0.0
        %4319 = vmatpush1.msra.mxu0 0.0
        %4320 = vmatprep.subr.mxu0 0.0
        %4321 = vmatpush1.msra.mxu0 0.0
        %4322 = vmatprep.subr.mxu0 0.0
        %4323 = vmatpush1.msra.mxu0 0.0
        %4324 = vmatprep.subr.mxu0 0.0
        %4325 = vmatpush1.msra.mxu0 0.0
        %4326 = vmatprep.subr.mxu0 0.0
        %4327 = vmatpush1.msra.mxu0 0.0
        %4328 = vmatprep.subr.mxu0 0.0
        %4329 = vmatpush1.msra.mxu0 0.0
        %4330 = vmatprep.subr.mxu0 0.0
        %4331 = vmatpush1.msra.mxu0 0.0
        %4332 = vmatprep.subr.mxu0 0.0
        %4333 = vmatpush1.msra.mxu0 0.0
        %4334 = vmatprep.subr.mxu0 0.0
        %4335 = vmatpush1.msra.mxu0 0.0
        %4336 = vmatprep.subr.mxu0 0.0
        %4337 = vmatpush1.msra.mxu0 0.0
        %4338 = vmatprep.subr.mxu0 0.0
        %4339 = vmatpush1.msra.mxu0 0.0
        %4340 = vmatprep.subr.mxu0 0.0
        %4341 = vmatpush1.msra.mxu0 0.0
        %4342 = vmatprep.subr.mxu0 0.0
        %4343 = vmatpush1.msra.mxu0 0.0
        %4344 = vmatprep.subr.mxu0 0.0
        %4345 = vmatpush1.msra.mxu0 0.0
        %4346 = vmatprep.subr.mxu0 0.0
        %4347 = vmatpush1.msra.mxu0 0.0
        %4348 = vmatprep.subr.mxu0 0.0
        %4349 = vmatpush1.msra.mxu0 0.0
        %4350 = vmatprep.subr.mxu0 0.0
        %4351 = vmatpush1.msra.mxu0 0.0
        %4352 = vmatprep.mubr.f32.mxu0 0.0
        %4353 = vmatmul.mubr.f32.gmra.mrb[0].mxu0 %v4215
        %v4354 = vpop.f32.mrb[0].mxu0
        %v4355 = vadd.f32 %v4210, %v4354
        %v4356 = vpop.f32.mrb[0].mxu0
        %v4357 = vadd.f32 %v4212, %v4356
        %4358 = vdwg.mxu0
        %v4359 = vld [vmem:[%s20] sm:$0xf]
        %v4361 = vlaneseq
        %v4362 = vshrl.u32 %v4361, 7
        %v4363 = vsub.s32 0, %v4362
        %v4364 = vrot.slane %v4359, %v4363
        %v4365 = vlaneseq
        %v4366 = vshrl.u32 %v4365, 7
        %v4367 = vsub.s32 1, %v4366
        %v4368 = vrot.slane %v4359, %v4367
        %v4369 = vlaneseq
        %v4370 = vshrl.u32 %v4369, 7
        %v4371 = vsub.s32 2, %v4370
        %v4372 = vrot.slane %v4359, %v4371
        %v4373 = vlaneseq
        %v4374 = vshrl.u32 %v4373, 7
        %v4375 = vsub.s32 3, %v4374
        %v4376 = vrot.slane %v4359, %v4375
        %v4381 = vadd.f32 %v4284, %v4364
        %v4382 = vadd.f32 %v4286, %v4368
        %v4383 = vadd.f32 %v4355, %v4372
        %v4384 = vadd.f32 %v4357, %v4376
        %v4385 = vmax.f32 %v4381, 0.0
        %v4386 = vmax.f32 %v4382, 0.0
        %v4387 = vmax.f32 %v4383, 0.0
        %v4388 = vmax.f32 %v4384, 0.0
        %v4389 = vld [vmem:[%s21] sm:$0xff]
        %v4390 = vld [vmem:[%s21 + $0x8] sm:$0xff]
        %v4391 = vld [vmem:[%s21 + $0x10] sm:$0xff]
        %v4392 = vld [vmem:[%s21 + $0x18] sm:$0xff]
        %v4393 = vld [vmem:[%s21 + $0x20] sm:$0xff]
        %v4394 = vld [vmem:[%s21 + $0x28] sm:$0xff]
        %v4395 = vld [vmem:[%s21 + $0x30] sm:$0xff]
        %v4396 = vld [vmem:[%s21 + $0x38] sm:$0xff]
        %v4397 = vld [vmem:[%s21 + $0x40] sm:$0xff]
        %v4398 = vld [vmem:[%s21 + $0x48] sm:$0xff]
        %v4399 = vld [vmem:[%s21 + $0x50] sm:$0xff]
        %v4400 = vld [vmem:[%s21 + $0x58] sm:$0xff]
        %v4401 = vld [vmem:[%s21 + $0x60] sm:$0xff]
        %v4402 = vld [vmem:[%s21 + $0x68] sm:$0xff]
        %v4403 = vld [vmem:[%s21 + $0x70] sm:$0xff]
        %v4404 = vld [vmem:[%s21 + $0x78] sm:$0xff]
        %v4405 = vld [vmem:[%s21 + $0x80] sm:$0xff]
        %v4406 = vld [vmem:[%s21 + $0x88] sm:$0xff]
        %v4407 = vld [vmem:[%s21 + $0x90] sm:$0xff]
        %v4408 = vld [vmem:[%s21 + $0x98] sm:$0xff]
        %v4409 = vld [vmem:[%s21 + $0xa0] sm:$0xff]
        %v4410 = vld [vmem:[%s21 + $0xa8] sm:$0xff]
        %v4411 = vld [vmem:[%s21 + $0xb0] sm:$0xff]
        %v4412 = vld [vmem:[%s21 + $0xb8] sm:$0xff]
        %v4413 = vld [vmem:[%s21 + $0xc0] sm:$0xff]
        %v4414 = vld [vmem:[%s21 + $0xc8] sm:$0xff]
        %v4415 = vld [vmem:[%s21 + $0xd0] sm:$0xff]
        %v4416 = vld [vmem:[%s21 + $0xd8] sm:$0xff]
        %v4417 = vld [vmem:[%s21 + $0xe0] sm:$0xff]
        %v4418 = vld [vmem:[%s21 + $0xe8] sm:$0xff]
        %v4419 = vld [vmem:[%s21 + $0xf0] sm:$0xff]
        %v4420 = vld [vmem:[%s21 + $0xf8] sm:$0xff]
        %v4421 = vld [vmem:[%s21 + $0x100] sm:$0xff]
        %v4422 = vld [vmem:[%s21 + $0x108] sm:$0xff]
        %v4423 = vld [vmem:[%s21 + $0x110] sm:$0xff]
        %v4424 = vld [vmem:[%s21 + $0x118] sm:$0xff]
        %v4425 = vld [vmem:[%s21 + $0x120] sm:$0xff]
        %v4426 = vld [vmem:[%s21 + $0x128] sm:$0xff]
        %v4427 = vld [vmem:[%s21 + $0x130] sm:$0xff]
        %v4428 = vld [vmem:[%s21 + $0x138] sm:$0xff]
        %v4429 = vld [vmem:[%s21 + $0x140] sm:$0xff]
        %v4430 = vld [vmem:[%s21 + $0x148] sm:$0xff]
        %v4431 = vld [vmem:[%s21 + $0x150] sm:$0xff]
        %v4432 = vld [vmem:[%s21 + $0x158] sm:$0xff]
        %v4433 = vld [vmem:[%s21 + $0x160] sm:$0xff]
        %v4434 = vld [vmem:[%s21 + $0x168] sm:$0xff]
        %v4435 = vld [vmem:[%s21 + $0x170] sm:$0xff]
        %v4436 = vld [vmem:[%s21 + $0x178] sm:$0xff]
        %v4437 = vld [vmem:[%s21 + $0x180] sm:$0xff]
        %v4438 = vld [vmem:[%s21 + $0x188] sm:$0xff]
        %v4439 = vld [vmem:[%s21 + $0x190] sm:$0xff]
        %v4440 = vld [vmem:[%s21 + $0x198] sm:$0xff]
        %v4441 = vld [vmem:[%s21 + $0x1a0] sm:$0xff]
        %v4442 = vld [vmem:[%s21 + $0x1a8] sm:$0xff]
        %v4443 = vld [vmem:[%s21 + $0x1b0] sm:$0xff]
        %v4444 = vld [vmem:[%s21 + $0x1b8] sm:$0xff]
        %v4445 = vld [vmem:[%s21 + $0x1c0] sm:$0xff]
        %v4446 = vld [vmem:[%s21 + $0x1c8] sm:$0xff]
        %v4447 = vld [vmem:[%s21 + $0x1d0] sm:$0xff]
        %v4448 = vld [vmem:[%s21 + $0x1d8] sm:$0xff]
        %v4449 = vld [vmem:[%s21 + $0x1e0] sm:$0xff]
        %v4450 = vld [vmem:[%s21 + $0x1e8] sm:$0xff]
        %v4451 = vld [vmem:[%s21 + $0x1f0] sm:$0xff]
        %v4452 = vld [vmem:[%s21 + $0x1f8] sm:$0xff]
        %v4453 = vld [vmem:[%s22] sm:$0x1]
        %4454 = vmatprep.subr.mxu0 0.0
        %4455 = vmatpush1.msra.mxu0 %v4389
        %4456 = vmatprep.subr.mxu0 0.0
        %4457 = vmatpush1.msra.mxu0 %v4390
        %4458 = vmatprep.subr.mxu0 0.0
        %4459 = vmatpush1.msra.mxu0 %v4391
        %4460 = vmatprep.subr.mxu0 0.0
        %4461 = vmatpush1.msra.mxu0 %v4392
        %4462 = vmatprep.subr.mxu0 0.0
        %4463 = vmatpush1.msra.mxu0 %v4393
        %4464 = vmatprep.subr.mxu0 0.0
        %4465 = vmatpush1.msra.mxu0 %v4394
        %4466 = vmatprep.subr.mxu0 0.0
        %4467 = vmatpush1.msra.mxu0 %v4395
        %4468 = vmatprep.subr.mxu0 0.0
        %4469 = vmatpush1.msra.mxu0 %v4396
        %4470 = vmatprep.subr.mxu0 0.0
        %4471 = vmatpush1.msra.mxu0 %v4397
        %4472 = vmatprep.subr.mxu0 0.0
        %4473 = vmatpush1.msra.mxu0 %v4398
        %4474 = vmatprep.subr.mxu0 0.0
        %4475 = vmatpush1.msra.mxu0 %v4399
        %4476 = vmatprep.subr.mxu0 0.0
        %4477 = vmatpush1.msra.mxu0 %v4400
        %4478 = vmatprep.subr.mxu0 0.0
        %4479 = vmatpush1.msra.mxu0 %v4401
        %4480 = vmatprep.subr.mxu0 0.0
        %4481 = vmatpush1.msra.mxu0 %v4402
        %4482 = vmatprep.subr.mxu0 0.0
        %4483 = vmatpush1.msra.mxu0 %v4403
        %4484 = vmatprep.subr.mxu0 0.0
        %4485 = vmatpush1.msra.mxu0 %v4404
        %4486 = vmatprep.subr.mxu0 0.0
        %4487 = vmatpush1.msra.mxu0 %v4405
        %4488 = vmatprep.subr.mxu0 0.0
        %4489 = vmatpush1.msra.mxu0 %v4406
        %4490 = vmatprep.subr.mxu0 0.0
        %4491 = vmatpush1.msra.mxu0 %v4407
        %4492 = vmatprep.subr.mxu0 0.0
        %4493 = vmatpush1.msra.mxu0 %v4408
        %4494 = vmatprep.subr.mxu0 0.0
        %4495 = vmatpush1.msra.mxu0 %v4409
        %4496 = vmatprep.subr.mxu0 0.0
        %4497 = vmatpush1.msra.mxu0 %v4410
        %4498 = vmatprep.subr.mxu0 0.0
        %4499 = vmatpush1.msra.mxu0 %v4411
        %4500 = vmatprep.subr.mxu0 0.0
        %4501 = vmatpush1.msra.mxu0 %v4412
        %4502 = vmatprep.subr.mxu0 0.0
        %4503 = vmatpush1.msra.mxu0 %v4413
        %4504 = vmatprep.subr.mxu0 0.0
        %4505 = vmatpush1.msra.mxu0 %v4414
        %4506 = vmatprep.subr.mxu0 0.0
        %4507 = vmatpush1.msra.mxu0 %v4415
        %4508 = vmatprep.subr.mxu0 0.0
        %4509 = vmatpush1.msra.mxu0 %v4416
        %4510 = vmatprep.subr.mxu0 0.0
        %4511 = vmatpush1.msra.mxu0 %v4417
        %4512 = vmatprep.subr.mxu0 0.0
        %4513 = vmatpush1.msra.mxu0 %v4418
        %4514 = vmatprep.subr.mxu0 0.0
        %4515 = vmatpush1.msra.mxu0 %v4419
        %4516 = vmatprep.subr.mxu0 0.0
        %4517 = vmatpush1.msra.mxu0 %v4420
        %4518 = vmatprep.mubr.f32.mxu0 %v4386
        %4519 = vmatmul.mubr.f32.gmra.mrb[0].mxu0 %v4385
        %v4520 = vpop.f32.mrb[0].mxu0
        %v4521 = vadd.f32 %v4453, %v4520
        %v4522 = vpop.f32.mrb[0].mxu0
        %4523 = vdwg.mxu0
        %4524 = vmatprep.subr.mxu0 0.0
        %4525 = vmatpush1.msra.mxu0 %v4421
        %4526 = vmatprep.subr.mxu0 0.0
        %4527 = vmatpush1.msra.mxu0 %v4422
        %4528 = vmatprep.subr.mxu0 0.0
        %4529 = vmatpush1.msra.mxu0 %v4423
        %4530 = vmatprep.subr.mxu0 0.0
        %4531 = vmatpush1.msra.mxu0 %v4424
        %4532 = vmatprep.subr.mxu0 0.0
        %4533 = vmatpush1.msra.mxu0 %v4425
        %4534 = vmatprep.subr.mxu0 0.0
        %4535 = vmatpush1.msra.mxu0 %v4426
        %4536 = vmatprep.subr.mxu0 0.0
        %4537 = vmatpush1.msra.mxu0 %v4427
        %4538 = vmatprep.subr.mxu0 0.0
        %4539 = vmatpush1.msra.mxu0 %v4428
        %4540 = vmatprep.subr.mxu0 0.0
        %4541 = vmatpush1.msra.mxu0 %v4429
        %4542 = vmatprep.subr.mxu0 0.0
        %4543 = vmatpush1.msra.mxu0 %v4430
        %4544 = vmatprep.subr.mxu0 0.0
        %4545 = vmatpush1.msra.mxu0 %v4431
        %4546 = vmatprep.subr.mxu0 0.0
        %4547 = vmatpush1.msra.mxu0 %v4432
        %4548 = vmatprep.subr.mxu0 0.0
        %4549 = vmatpush1.msra.mxu0 %v4433
        %4550 = vmatprep.subr.mxu0 0.0
        %4551 = vmatpush1.msra.mxu0 %v4434
        %4552 = vmatprep.subr.mxu0 0.0
        %4553 = vmatpush1.msra.mxu0 %v4435
        %4554 = vmatprep.subr.mxu0 0.0
        %4555 = vmatpush1.msra.mxu0 %v4436
        %4556 = vmatprep.subr.mxu0 0.0
        %4557 = vmatpush1.msra.mxu0 %v4437
        %4558 = vmatprep.subr.mxu0 0.0
        %4559 = vmatpush1.msra.mxu0 %v4438
        %4560 = vmatprep.subr.mxu0 0.0
        %4561 = vmatpush1.msra.mxu0 %v4439
        %4562 = vmatprep.subr.mxu0 0.0
        %4563 = vmatpush1.msra.mxu0 %v4440
        %4564 = vmatprep.subr.mxu0 0.0
        %4565 = vmatpush1.msra.mxu0 %v4441
        %4566 = vmatprep.subr.mxu0 0.0
        %4567 = vmatpush1.msra.mxu0 %v4442
        %4568 = vmatprep.subr.mxu0 0.0
        %4569 = vmatpush1.msra.mxu0 %v4443
        %4570 = vmatprep.subr.mxu0 0.0
        %4571 = vmatpush1.msra.mxu0 %v4444
        %4572 = vmatprep.subr.mxu0 0.0
        %4573 = vmatpush1.msra.mxu0 %v4445
        %4574 = vmatprep.subr.mxu0 0.0
        %4575 = vmatpush1.msra.mxu0 %v4446
        %4576 = vmatprep.subr.mxu0 0.0
        %4577 = vmatpush1.msra.mxu0 %v4447
        %4578 = vmatprep.subr.mxu0 0.0
        %4579 = vmatpush1.msra.mxu0 %v4448
        %4580 = vmatprep.subr.mxu0 0.0
        %4581 = vmatpush1.msra.mxu0 %v4449
        %4582 = vmatprep.subr.mxu0 0.0
        %4583 = vmatpush1.msra.mxu0 %v4450
        %4584 = vmatprep.subr.mxu0 0.0
        %4585 = vmatpush1.msra.mxu0 %v4451
        %4586 = vmatprep.subr.mxu0 0.0
        %4587 = vmatpush1.msra.mxu0 %v4452
        %4588 = vmatprep.mubr.f32.mxu0 %v4388
        %4589 = vmatmul.mubr.f32.gmra.mrb[0].mxu0 %v4387
        %v4590 = vpop.f32.mrb[0].mxu0
        %v4591 = vadd.f32 %v4521, %v4590
        %v4592 = vpop.f32.mrb[0].mxu0
        %4593 = vdwg.mxu0
        %v4594 = vmax.f32 %v4591, 0.0
        %v4595 = vld [vmem:[%s23] sm:$0xff]
        %v4596 = vld [vmem:[%s23 + $0x8] sm:$0xff]
        %v4597 = vld [vmem:[%s23 + $0x10] sm:$0xff]
        %v4598 = vld [vmem:[%s23 + $0x18] sm:$0xff]
        %v4599 = vld [vmem:[%s24] sm:$0x1]
        %v4601 = vsel %vm2195, %v4594, 0
        %4603 = vmatprep.subr.mxu0 0.0
        %4604 = vmatpush1.msra.mxu0 %v4595
        %4605 = vmatprep.subr.mxu0 0.0
        %4606 = vmatpush1.msra.mxu0 %v4596
        %4607 = vmatprep.subr.mxu0 0.0
        %4608 = vmatpush1.msra.mxu0 %v4597
        %4609 = vmatprep.subr.mxu0 0.0
        %4610 = vmatpush1.msra.mxu0 %v4598
        %4611 = vmatprep.subr.mxu0 0.0
        %4612 = vmatpush1.msra.mxu0 0.0
        %4613 = vmatprep.subr.mxu0 0.0
        %4614 = vmatpush1.msra.mxu0 0.0
        %4615 = vmatprep.subr.mxu0 0.0
        %4616 = vmatpush1.msra.mxu0 0.0
        %4617 = vmatprep.subr.mxu0 0.0
        %4618 = vmatpush1.msra.mxu0 0.0
        %4619 = vmatprep.subr.mxu0 0.0
        %4620 = vmatpush1.msra.mxu0 0.0
        %4621 = vmatprep.subr.mxu0 0.0
        %4622 = vmatpush1.msra.mxu0 0.0
        %4623 = vmatprep.subr.mxu0 0.0
        %4624 = vmatpush1.msra.mxu0 0.0
        %4625 = vmatprep.subr.mxu0 0.0
        %4626 = vmatpush1.msra.mxu0 0.0
        %4627 = vmatprep.subr.mxu0 0.0
        %4628 = vmatpush1.msra.mxu0 0.0
        %4629 = vmatprep.subr.mxu0 0.0
        %4630 = vmatpush1.msra.mxu0 0.0
        %4631 = vmatprep.subr.mxu0 0.0
        %4632 = vmatpush1.msra.mxu0 0.0
        %4633 = vmatprep.subr.mxu0 0.0
        %4634 = vmatpush1.msra.mxu0 0.0
        %4635 = vmatprep.subr.mxu0 0.0
        %4636 = vmatpush1.msra.mxu0 0.0
        %4637 = vmatprep.subr.mxu0 0.0
        %4638 = vmatpush1.msra.mxu0 0.0
        %4639 = vmatprep.subr.mxu0 0.0
        %4640 = vmatpush1.msra.mxu0 0.0
        %4641 = vmatprep.subr.mxu0 0.0
        %4642 = vmatpush1.msra.mxu0 0.0
        %4643 = vmatprep.subr.mxu0 0.0
        %4644 = vmatpush1.msra.mxu0 0.0
        %4645 = vmatprep.subr.mxu0 0.0
        %4646 = vmatpush1.msra.mxu0 0.0
        %4647 = vmatprep.subr.mxu0 0.0
        %4648 = vmatpush1.msra.mxu0 0.0
        %4649 = vmatprep.subr.mxu0 0.0
        %4650 = vmatpush1.msra.mxu0 0.0
        %4651 = vmatprep.subr.mxu0 0.0
        %4652 = vmatpush1.msra.mxu0 0.0
        %4653 = vmatprep.subr.mxu0 0.0
        %4654 = vmatpush1.msra.mxu0 0.0
        %4655 = vmatprep.subr.mxu0 0.0
        %4656 = vmatpush1.msra.mxu0 0.0
        %4657 = vmatprep.subr.mxu0 0.0
        %4658 = vmatpush1.msra.mxu0 0.0
        %4659 = vmatprep.subr.mxu0 0.0
        %4660 = vmatpush1.msra.mxu0 0.0
        %4661 = vmatprep.subr.mxu0 0.0
        %4662 = vmatpush1.msra.mxu0 0.0
        %4663 = vmatprep.subr.mxu0 0.0
        %4664 = vmatpush1.msra.mxu0 0.0
        %4665 = vmatprep.subr.mxu0 0.0
        %4666 = vmatpush1.msra.mxu0 0.0
        %4667 = vmatprep.mubr.f32.mxu0 0.0
        %4668 = vmatmul.mubr.f32.gmra.mrb[0].mxu0 %v4601
        %v4669 = vpop.f32.mrb[0].mxu0
        %v4670 = vadd.f32 %v4599, %v4669
        %v4671 = vpop.f32.mrb[0].mxu0
        %4672 = vdwg.mxu0
        %vm4673 = vcmask 8192
        %4674 = vst.msk [vmem:[%s849] sm:$0x1] %vm4673, %v4670
        %s4675 = sand.u32 %s620, 1
        %s4676 = scalar_lea.sflag [#allocation3], %s4675
        %s4677 = sand.u32 %s620, 1
        %s4678 = scalar_lea.vmem [#allocation5], %s4677
        // Predicated region
        $region129: #{cmdss_forward.5} parent=123 // pred_check
          %p4679 = pneg %p630
        $region130: #{cmdss_forward.5} parent=123 // pred_check_branch
          %4681 = sbr.rel (%p4679) target = $region132
        $region131: #{cmdss_forward.5} parent=123 // pred_region
          %s4683 = ssub.s32 16, 16
          %4684 = vsyncadd %s4676, %s4683
          %s4685 = smul.addr %s41, 16
          %s4686 = scalar_lea.hbm %s26, %s4685
          %s4688 = sshll.u32 %s4678, 4
          %s4689 = int_to_ptr.vmem [resolvable:$true] %s4688
          %4691 = dma.vmem_to_hbm [thread:$0]  %s4689, 16, %s4686, %s4676
        $region132: #{cmdss_forward.5} parent=123 // pred_fallthru
          _
      $region124: #{cmdss_forward.5} parent=5 // pred_fallthru
        _
      %p4692 = scmp.le.s32.totalorder 2, %s36
      // Predicated region
      $region133: #{cmdss_forward.5} parent=5 // pred_check
        %p4693 = pneg %p4692
      $region134: #{cmdss_forward.5} parent=5 // pred_check_branch
        %4695 = sbr.rel (%p4693) target = $region136
      $region135: #{cmdss_forward.5} parent=5 // pred_region
        %s4696 = ssub.s32 %s36, 2
        // Predicated region
        $region137: #{cmdss_forward.5} parent=135 // pred_check
          %p4697 = pneg %p636
        $region138: #{cmdss_forward.5} parent=135 // pred_check_branch
          %4699 = sbr.rel (%p4697) target = $region140
        $region139: #{cmdss_forward.5} parent=135 // pred_region
          %s4700 = sand.u32 %s621, 1
          %s4701 = scalar_lea.sflag [#allocation3], %s4700
          %s4702 = sand.u32 %s621, 1
          %s4703 = scalar_lea.vmem [#allocation5], %s4702
          %4704 = dma.done %s4701, 16
        $region140: #{cmdss_forward.5} parent=135 // pred_fallthru
          _
      $region136: #{cmdss_forward.5} parent=5 // pred_fallthru
        _
    $region6: #{cmdss_forward.5} parent=1 // loop_footer
      %s40 = sadd.s32 1, %s36
    $region7: #{cmdss_forward.5} parent=1 // loop_footer_branch
      %35 = sbr.rel target = $region3
    $region8: #{cmdss_forward.5} parent=1 // loop_exit
      _
    %4705 = vsyncpa [#allocation3], 1
    %s4706 = scalar_lea.sflag [#allocation3], 1
    %4707 = vsyncpa %s4706, 1
    %4708 = vsyncpa [#allocation4], 1
    %s4709 = scalar_lea.sflag [#allocation4], 1
    %4710 = vsyncpa %s4709, 1

</llo_original>
